<compile_context>
chip_gen: v7x
topology: tpu7x:2x2x1
jax: 0.10.0
libtpu: 0.0.40
codegen_flags: <defaults>
</compile_context>

<pallas_src>
import math
import jax
import jax.numpy as jnp
from jax.experimental import pallas as pl
from jax.experimental.pallas import tpu as pltpu


def _gelu_tanh(x):
    # tanh-approximate GELU (EUP transcendental; review-approved numerics change,
    # covered by the validation tolerance).
    c = 0.7978845608028654  # sqrt(2/pi)
    return 0.5 * x * (1.0 + jnp.tanh(c * (x + 0.044715 * x * x * x)))


def convnext_block_kernel(x_ref, dww_ref, dwb_ref, lnw_ref, lnb_ref,
                          w1_ref, b1_ref, w2_ref, b2_ref, gamma_ref,
                          out_ref, xpad_ref):
    # x_ref / out_ref block: (1, H, W, C); xpad_ref scratch: (H+6, W+6, C) f32
    _, H, W, C = out_ref.shape

    xf = x_ref[0].astype(jnp.float32)                    # (H, W, C) unpadded input

    # ---- build zero halo in VMEM (replaces host-side jnp.pad) ----
    xpad_ref[...] = jnp.zeros(xpad_ref.shape, xpad_ref.dtype)
    xpad_ref[3:3 + H, 3:3 + W, :] = xf
    xpad = xpad_ref[...]                                  # (H+6, W+6, C)

    # ---- depthwise 7x7 conv ----
    # Pre-shift along W: 7 aligned copies (7 misaligned slices instead of 49);
    # inner taps then slice only the leading (vreg-granular) H dimension.
    xsh = [xpad[:, kx:kx + W, :] for kx in range(7)]      # each (H+6, W, C)

    w_all = dww_ref[...]                                  # (49, C) f32, loaded once
    acc = jnp.zeros((H, W, C), jnp.float32)
    for ky in range(7):
        for kx in range(7):
            acc = acc + xsh[kx][ky:ky + H] * w_all[ky * 7 + kx]
    dw = acc + dwb_ref[...]                               # (1, C) broadcast

    # ---- LayerNorm over channels (channels_last, eps=1e-6) ----
    u = jnp.mean(dw, axis=-1, keepdims=True)
    d = dw - u
    s = jnp.mean(d * d, axis=-1, keepdims=True)
    y = d * jax.lax.rsqrt(s + 1e-6)
    y = y * lnw_ref[...] + lnb_ref[...]

    # ---- pointwise MLP: Linear(C->4C) -> GELU -> Linear(4C->C) ----
    # bf16 operands on the MXU, f32 accumulation.
    y2 = y.reshape(H * W, C).astype(jnp.bfloat16)
    h = jnp.dot(y2, w1_ref[...], preferred_element_type=jnp.float32) + b1_ref[...]
    h = _gelu_tanh(h)
    z = jnp.dot(h.astype(jnp.bfloat16), w2_ref[...],
                preferred_element_type=jnp.float32) + b2_ref[...]

    # ---- layer scale + residual (drop_path = Identity) ----
    z = z * gamma_ref[...]
    out_ref[0] = (xf + z.reshape(H, W, C)).astype(out_ref.dtype)


def convnext_block_nhwc(x_nhwc, params):
    """Primary fused path: x_nhwc (B, H, W, C) -> (B, H, W, C). No layout ops."""
    B, H, W, C = x_nhwc.shape
    dww, dwb, lnw, lnb, w1, b1, w2, b2, gamma = params

    return pl.pallas_call(
        convnext_block_kernel,
        out_shape=jax.ShapeDtypeStruct((B, H, W, C), x_nhwc.dtype),
        grid_spec=pltpu.PrefetchScalarGridSpec(
            num_scalar_prefetch=0,
            grid=(B,),
            in_specs=[
                pl.BlockSpec((1, H, W, C), lambda b: (b, 0, 0, 0)),   # input (unpadded)
                pl.BlockSpec((49, C),      lambda b: (0, 0)),          # dw weights (49, C)
                pl.BlockSpec((1, C),       lambda b: (0, 0)),          # dw bias
                pl.BlockSpec((1, C),       lambda b: (0, 0)),          # LN weight
                pl.BlockSpec((1, C),       lambda b: (0, 0)),          # LN bias
                pl.BlockSpec((C, 4 * C),   lambda b: (0, 0)),          # pwconv1 W^T (bf16)
                pl.BlockSpec((1, 4 * C),   lambda b: (0, 0)),          # pwconv1 b
                pl.BlockSpec((4 * C, C),   lambda b: (0, 0)),          # pwconv2 W^T (bf16)
                pl.BlockSpec((1, C),       lambda b: (0, 0)),          # pwconv2 b
                pl.BlockSpec((1, C),       lambda b: (0, 0)),          # gamma
            ],
            out_specs=pl.BlockSpec((1, H, W, C), lambda b: (b, 0, 0, 0)),
            scratch_shapes=[pltpu.VMEM((H + 6, W + 6, C), jnp.float32)],
        ),
        compiler_params=pltpu.CompilerParams(
            dimension_semantics=("parallel",),
            vmem_limit_bytes=32 * 1024 * 1024,
        ),
    )(x_nhwc, dww, dwb, lnw, lnb, w1, b1, w2, b2, gamma)


def convnext_block(x_nchw, params):
    """Drop-in NCHW wrapper matching the PyTorch module signature.
    (Prefer convnext_block_nhwc in NHWC-resident models to avoid the layout passes.)"""
    x_nhwc = jnp.transpose(x_nchw, (0, 2, 3, 1))
    out = convnext_block_nhwc(x_nhwc, params)
    return jnp.transpose(out, (0, 3, 1, 2))


def init_params(key, dim, layer_scale_init_value=1e-2):
    """Deterministic synthetic init following the module's parameter shapes."""
    k1, k2, k3, k4, k5 = jax.random.split(key, 5)
    # dwconv: Conv2d(dim, dim, 7, groups=dim) -> weight (dim, 1, 7, 7), bias (dim,)
    dw_oihw = jax.random.normal(k1, (dim, 1, 7, 7), jnp.float32) * (1.0 / 7.0)
    dwb = jax.random.normal(k2, (dim,), jnp.float32) * 0.02
    # LayerNorm(dim)
    lnw = jnp.ones((dim,), jnp.float32)
    lnb = jnp.zeros((dim,), jnp.float32)
    # pwconv1: Linear(dim, 4*dim) -> weight (4d, d), bias (4d,)
    w1_t = jax.random.normal(k3, (4 * dim, dim), jnp.float32) * (1.0 / math.sqrt(dim))
    b1 = jax.random.normal(k4, (4 * dim,), jnp.float32) * 0.02
    # pwconv2: Linear(4*dim, dim) -> weight (d, 4d), bias (d,)
    w2_t = jax.random.normal(k5, (dim, 4 * dim), jnp.float32) * (1.0 / math.sqrt(4 * dim))
    b2 = jnp.zeros((dim,), jnp.float32)
    gamma = layer_scale_init_value * jnp.ones((dim,), jnp.float32)

    # Repack for the kernel: dww[ky*7+kx, c] = dw_oihw[c, 0, ky, kx]
    dww = jnp.transpose(dw_oihw[:, 0], (1, 2, 0)).reshape(49, dim)
    params = (dww,
              dwb.reshape(1, dim), lnw.reshape(1, dim), lnb.reshape(1, dim),
              w1_t.T.astype(jnp.bfloat16), b1.reshape(1, 4 * dim),
              w2_t.T.astype(jnp.bfloat16), b2.reshape(1, dim),
              gamma.reshape(1, dim))
    raw = (dw_oihw, dwb, lnw, lnb, w1_t, b1, w2_t, b2, gamma)
    return params, raw


def ref_forward(x_nchw, raw):
    """Pure-JAX f32 reference of the PyTorch Block.forward (exact erf GELU)."""
    dw_oihw, dwb, lnw, lnb, w1_t, b1, w2_t, b2, gamma = raw
    C = x_nchw.shape[1]
    hp = jax.lax.Precision.HIGHEST
    y = jax.lax.conv_general_dilated(
        x_nchw, dw_oihw, window_strides=(1, 1), padding=((3, 3), (3, 3)),
        dimension_numbers=("NCHW", "OIHW", "NCHW"),
        feature_group_count=C, precision=hp)
    y = y + dwb[None, :, None, None]
    y = jnp.transpose(y, (0, 2, 3, 1))
    u = y.mean(-1, keepdims=True)
    s = ((y - u) ** 2).mean(-1, keepdims=True)
    y = (y - u) / jnp.sqrt(s + 1e-6) * lnw + lnb
    h = jnp.dot(y, w1_t.T, precision=hp) + b1
    h = 0.5 * h * (1.0 + jax.lax.erf(h / jnp.sqrt(2.0)))
    z = jnp.dot(h, w2_t.T, precision=hp) + b2
    z = gamma * z
    return x_nchw + jnp.transpose(z, (0, 3, 1, 2))


if __name__ == "__main__":
    key = jax.random.PRNGKey(0)
    kx_, kp_ = jax.random.split(key)

    B, dim, H, W = 2, 32, 16, 16
    x_nchw = jax.random.normal(kx_, (B, dim, H, W), jnp.float32)
    params, raw = init_params(kp_, dim)

    # One-time layout conversion; an NHWC-resident pipeline would skip this entirely.
    x_nhwc = jnp.transpose(x_nchw, (0, 2, 3, 1))

    out_nhwc = convnext_block_nhwc(x_nhwc, params)
    out_nhwc = jax.block_until_ready(out_nhwc)

    ref_nhwc = jnp.transpose(ref_forward(x_nchw, raw), (0, 2, 3, 1))
    max_err = float(jnp.max(jnp.abs(out_nhwc - ref_nhwc)))
    assert out_nhwc.shape == (B, H, W, dim) and out_nhwc.dtype == x_nchw.dtype
    # bf16 MXU operands + tanh GELU vs f32/erf reference (errors attenuated by gamma=1e-2)
    assert max_err < 2e-3, f"mismatch vs reference: {max_err}"

    print("KERNEL_OK")
</pallas_src>

<mosaic_0001>
module attributes {stable_mosaic.version = 11 : i64} {
  func.func @convnext_block_kernel(%arg0: i32, %arg1: memref<1x16x16x32xf32, #tpu.memory_space<vmem>>, %arg2: memref<49x32xf32, #tpu.memory_space<vmem>>, %arg3: memref<1x32xf32, #tpu.memory_space<vmem>>, %arg4: memref<1x32xf32, #tpu.memory_space<vmem>>, %arg5: memref<1x32xf32, #tpu.memory_space<vmem>>, %arg6: memref<32x128xbf16, #tpu.memory_space<vmem>>, %arg7: memref<1x128xf32, #tpu.memory_space<vmem>>, %arg8: memref<128x32xbf16, #tpu.memory_space<vmem>>, %arg9: memref<1x32xf32, #tpu.memory_space<vmem>>, %arg10: memref<1x32xf32, #tpu.memory_space<vmem>>, %arg11: memref<1x16x16x32xf32, #tpu.memory_space<vmem>>, %arg12: memref<22x22x32xf32, #tpu.memory_space<vmem>>) attributes {dimension_semantics = [#tpu.dimension_semantics<parallel>], iteration_bounds = array<i64: 2>, scalar_prefetch = 0 : i64, scratch_operands = 1 : i64, tpu.core_type = #tpu.core_type<tc>, window_params = [{transform_indices = @transform_0, window_bounds = array<i64: 1, 16, 16, 32>}, {pipeline_mode = #tpu.pipeline_mode<synchronous>, transform_indices = @transform_1, window_bounds = array<i64: 49, 32>}, {pipeline_mode = #tpu.pipeline_mode<synchronous>, transform_indices = @transform_2, window_bounds = array<i64: 1, 32>}, {pipeline_mode = #tpu.pipeline_mode<synchronous>, transform_indices = @transform_3, window_bounds = array<i64: 1, 32>}, {pipeline_mode = #tpu.pipeline_mode<synchronous>, transform_indices = @transform_4, window_bounds = array<i64: 1, 32>}, {pipeline_mode = #tpu.pipeline_mode<synchronous>, transform_indices = @transform_5, window_bounds = array<i64: 32, 128>}, {pipeline_mode = #tpu.pipeline_mode<synchronous>, transform_indices = @transform_6, window_bounds = array<i64: 1, 128>}, {pipeline_mode = #tpu.pipeline_mode<synchronous>, transform_indices = @transform_7, window_bounds = array<i64: 128, 32>}, {pipeline_mode = #tpu.pipeline_mode<synchronous>, transform_indices = @transform_8, window_bounds = array<i64: 1, 32>}, {pipeline_mode = #tpu.pipeline_mode<synchronous>, transform_indices = @transform_9, window_bounds = array<i64: 1, 32>}, {transform_indices = @transform_10, window_bounds = array<i64: 1, 16, 16, 32>}]} {
    %c0 = arith.constant 0 : index
    %c0_0 = arith.constant 0 : index
    %c0_1 = arith.constant 0 : index
    %c0_2 = arith.constant 0 : index
    %0 = vector.load %arg1[%c0, %c0_0, %c0_1, %c0_2] : memref<1x16x16x32xf32, #tpu.memory_space<vmem>>, vector<1x16x16x32xf32>
    %1 = vector.shape_cast %0 : vector<1x16x16x32xf32> to vector<16x16x32xf32>
    %cst = arith.constant 0.000000e+00 : f32
    %2 = vector.broadcast %cst : f32 to vector<22x22x32xf32>
    %c0_3 = arith.constant 0 : index
    %c0_4 = arith.constant 0 : index
    %c0_5 = arith.constant 0 : index
    %3 = vector.load %arg12[%c0_3, %c0_4, %c0_5] : memref<22x22x32xf32, #tpu.memory_space<vmem>>, vector<22x22x32xf32>
    tpu.vector_store %arg12[%c0_3, %c0_4, %c0_5], %2 {strides = array<i32>} : memref<22x22x32xf32, #tpu.memory_space<vmem>>, vector<22x22x32xf32>,
    %c3 = arith.constant 3 : index
    %c3_6 = arith.constant 3 : index
    %c0_7 = arith.constant 0 : index
    %4 = vector.load %arg12[%c3, %c3_6, %c0_7] : memref<22x22x32xf32, #tpu.memory_space<vmem>>, vector<16x16x32xf32>
    tpu.vector_store %arg12[%c3, %c3_6, %c0_7], %1 {strides = array<i32>} : memref<22x22x32xf32, #tpu.memory_space<vmem>>, vector<16x16x32xf32>,
    %c0_8 = arith.constant 0 : index
    %c0_9 = arith.constant 0 : index
    %c0_10 = arith.constant 0 : index
    %5 = vector.load %arg12[%c0_8, %c0_9, %c0_10] : memref<22x22x32xf32, #tpu.memory_space<vmem>>, vector<22x22x32xf32>
    %6 = vector.extract_strided_slice %5 {offsets = [0, 0, 0], sizes = [22, 16, 32], strides = [1, 1, 1]} : vector<22x22x32xf32> to vector<22x16x32xf32>
    %7 = vector.extract_strided_slice %5 {offsets = [0, 1, 0], sizes = [22, 16, 32], strides = [1, 1, 1]} : vector<22x22x32xf32> to vector<22x16x32xf32>
    %8 = vector.extract_strided_slice %5 {offsets = [0, 2, 0], sizes = [22, 16, 32], strides = [1, 1, 1]} : vector<22x22x32xf32> to vector<22x16x32xf32>
    %9 = vector.extract_strided_slice %5 {offsets = [0, 3, 0], sizes = [22, 16, 32], strides = [1, 1, 1]} : vector<22x22x32xf32> to vector<22x16x32xf32>
    %10 = vector.extract_strided_slice %5 {offsets = [0, 4, 0], sizes = [22, 16, 32], strides = [1, 1, 1]} : vector<22x22x32xf32> to vector<22x16x32xf32>
    %11 = vector.extract_strided_slice %5 {offsets = [0, 5, 0], sizes = [22, 16, 32], strides = [1, 1, 1]} : vector<22x22x32xf32> to vector<22x16x32xf32>
    %12 = vector.extract_strided_slice %5 {offsets = [0, 6, 0], sizes = [22, 16, 32], strides = [1, 1, 1]} : vector<22x22x32xf32> to vector<22x16x32xf32>
    %c0_11 = arith.constant 0 : index
    %c0_12 = arith.constant 0 : index
    %13 = vector.load %arg2[%c0_11, %c0_12] : memref<49x32xf32, #tpu.memory_space<vmem>>, vector<49x32xf32>
    %cst_13 = arith.constant 0.000000e+00 : f32
    %14 = vector.broadcast %cst_13 : f32 to vector<16x16x32xf32>
    %15 = vector.extract_strided_slice %6 {offsets = [0, 0, 0], sizes = [16, 16, 32], strides = [1, 1, 1]} : vector<22x16x32xf32> to vector<16x16x32xf32>
    %16 = vector.extract_strided_slice %13 {offsets = [0, 0], sizes = [1, 32], strides = [1, 1]} : vector<49x32xf32> to vector<1x32xf32>
    %17 = vector.shape_cast %16 : vector<1x32xf32> to vector<32xf32>
    %18 = vector.shape_cast %17 : vector<32xf32> to vector<1x1x32xf32>
    %19 = vector.broadcast %18 : vector<1x1x32xf32> to vector<16x16x32xf32>
    %20 = arith.mulf %15, %19 : vector<16x16x32xf32>
    %21 = arith.addf %14, %20 : vector<16x16x32xf32>
    %22 = vector.extract_strided_slice %7 {offsets = [0, 0, 0], sizes = [16, 16, 32], strides = [1, 1, 1]} : vector<22x16x32xf32> to vector<16x16x32xf32>
    %23 = vector.extract_strided_slice %13 {offsets = [1, 0], sizes = [1, 32], strides = [1, 1]} : vector<49x32xf32> to vector<1x32xf32>
    %24 = vector.shape_cast %23 : vector<1x32xf32> to vector<32xf32>
    %25 = vector.shape_cast %24 : vector<32xf32> to vector<1x1x32xf32>
    %26 = vector.broadcast %25 : vector<1x1x32xf32> to vector<16x16x32xf32>
    %27 = arith.mulf %22, %26 : vector<16x16x32xf32>
    %28 = arith.addf %21, %27 : vector<16x16x32xf32>
    %29 = vector.extract_strided_slice %8 {offsets = [0, 0, 0], sizes = [16, 16, 32], strides = [1, 1, 1]} : vector<22x16x32xf32> to vector<16x16x32xf32>
    %30 = vector.extract_strided_slice %13 {offsets = [2, 0], sizes = [1, 32], strides = [1, 1]} : vector<49x32xf32> to vector<1x32xf32>
    %31 = vector.shape_cast %30 : vector<1x32xf32> to vector<32xf32>
    %32 = vector.shape_cast %31 : vector<32xf32> to vector<1x1x32xf32>
    %33 = vector.broadcast %32 : vector<1x1x32xf32> to vector<16x16x32xf32>
    %34 = arith.mulf %29, %33 : vector<16x16x32xf32>
    %35 = arith.addf %28, %34 : vector<16x16x32xf32>
    %36 = vector.extract_strided_slice %9 {offsets = [0, 0, 0], sizes = [16, 16, 32], strides = [1, 1, 1]} : vector<22x16x32xf32> to vector<16x16x32xf32>
    %37 = vector.extract_strided_slice %13 {offsets = [3, 0], sizes = [1, 32], strides = [1, 1]} : vector<49x32xf32> to vector<1x32xf32>
    %38 = vector.shape_cast %37 : vector<1x32xf32> to vector<32xf32>
    %39 = vector.shape_cast %38 : vector<32xf32> to vector<1x1x32xf32>
    %40 = vector.broadcast %39 : vector<1x1x32xf32> to vector<16x16x32xf32>
    %41 = arith.mulf %36, %40 : vector<16x16x32xf32>
    %42 = arith.addf %35, %41 : vector<16x16x32xf32>
    %43 = vector.extract_strided_slice %10 {offsets = [0, 0, 0], sizes = [16, 16, 32], strides = [1, 1, 1]} : vector<22x16x32xf32> to vector<16x16x32xf32>
    %44 = vector.extract_strided_slice %13 {offsets = [4, 0], sizes = [1, 32], strides = [1, 1]} : vector<49x32xf32> to vector<1x32xf32>
    %45 = vector.shape_cast %44 : vector<1x32xf32> to vector<32xf32>
    %46 = vector.shape_cast %45 : vector<32xf32> to vector<1x1x32xf32>
    %47 = vector.broadcast %46 : vector<1x1x32xf32> to vector<16x16x32xf32>
    %48 = arith.mulf %43, %47 : vector<16x16x32xf32>
    %49 = arith.addf %42, %48 : vector<16x16x32xf32>
    %50 = vector.extract_strided_slice %11 {offsets = [0, 0, 0], sizes = [16, 16, 32], strides = [1, 1, 1]} : vector<22x16x32xf32> to vector<16x16x32xf32>
    %51 = vector.extract_strided_slice %13 {offsets = [5, 0], sizes = [1, 32], strides = [1, 1]} : vector<49x32xf32> to vector<1x32xf32>
    %52 = vector.shape_cast %51 : vector<1x32xf32> to vector<32xf32>
    %53 = vector.shape_cast %52 : vector<32xf32> to vector<1x1x32xf32>
    %54 = vector.broadcast %53 : vector<1x1x32xf32> to vector<16x16x32xf32>
    %55 = arith.mulf %50, %54 : vector<16x16x32xf32>
    %56 = arith.addf %49, %55 : vector<16x16x32xf32>
    %57 = vector.extract_strided_slice %12 {offsets = [0, 0, 0], sizes = [16, 16, 32], strides = [1, 1, 1]} : vector<22x16x32xf32> to vector<16x16x32xf32>
    %58 = vector.extract_strided_slice %13 {offsets = [6, 0], sizes = [1, 32], strides = [1, 1]} : vector<49x32xf32> to vector<1x32xf32>
    %59 = vector.shape_cast %58 : vector<1x32xf32> to vector<32xf32>
    %60 = vector.shape_cast %59 : vector<32xf32> to vector<1x1x32xf32>
    %61 = vector.broadcast %60 : vector<1x1x32xf32> to vector<16x16x32xf32>
    %62 = arith.mulf %57, %61 : vector<16x16x32xf32>
    %63 = arith.addf %56, %62 : vector<16x16x32xf32>
    %64 = vector.extract_strided_slice %6 {offsets = [1, 0, 0], sizes = [16, 16, 32], strides = [1, 1, 1]} : vector<22x16x32xf32> to vector<16x16x32xf32>
    %65 = vector.extract_strided_slice %13 {offsets = [7, 0], sizes = [1, 32], strides = [1, 1]} : vector<49x32xf32> to vector<1x32xf32>
    %66 = vector.shape_cast %65 : vector<1x32xf32> to vector<32xf32>
    %67 = vector.shape_cast %66 : vector<32xf32> to vector<1x1x32xf32>
    %68 = vector.broadcast %67 : vector<1x1x32xf32> to vector<16x16x32xf32>
    %69 = arith.mulf %64, %68 : vector<16x16x32xf32>
    %70 = arith.addf %63, %69 : vector<16x16x32xf32>
    %71 = vector.extract_strided_slice %7 {offsets = [1, 0, 0], sizes = [16, 16, 32], strides = [1, 1, 1]} : vector<22x16x32xf32> to vector<16x16x32xf32>
    %72 = vector.extract_strided_slice %13 {offsets = [8, 0], sizes = [1, 32], strides = [1, 1]} : vector<49x32xf32> to vector<1x32xf32>
    %73 = vector.shape_cast %72 : vector<1x32xf32> to vector<32xf32>
    %74 = vector.shape_cast %73 : vector<32xf32> to vector<1x1x32xf32>
    %75 = vector.broadcast %74 : vector<1x1x32xf32> to vector<16x16x32xf32>
    %76 = arith.mulf %71, %75 : vector<16x16x32xf32>
    %77 = arith.addf %70, %76 : vector<16x16x32xf32>
    %78 = vector.extract_strided_slice %8 {offsets = [1, 0, 0], sizes = [16, 16, 32], strides = [1, 1, 1]} : vector<22x16x32xf32> to vector<16x16x32xf32>
    %79 = vector.extract_strided_slice %13 {offsets = [9, 0], sizes = [1, 32], strides = [1, 1]} : vector<49x32xf32> to vector<1x32xf32>
    %80 = vector.shape_cast %79 : vector<1x32xf32> to vector<32xf32>
    %81 = vector.shape_cast %80 : vector<32xf32> to vector<1x1x32xf32>
    %82 = vector.broadcast %81 : vector<1x1x32xf32> to vector<16x16x32xf32>
    %83 = arith.mulf %78, %82 : vector<16x16x32xf32>
    %84 = arith.addf %77, %83 : vector<16x16x32xf32>
    %85 = vector.extract_strided_slice %9 {offsets = [1, 0, 0], sizes = [16, 16, 32], strides = [1, 1, 1]} : vector<22x16x32xf32> to vector<16x16x32xf32>
    %86 = vector.extract_strided_slice %13 {offsets = [10, 0], sizes = [1, 32], strides = [1, 1]} : vector<49x32xf32> to vector<1x32xf32>
    %87 = vector.shape_cast %86 : vector<1x32xf32> to vector<32xf32>
    %88 = vector.shape_cast %87 : vector<32xf32> to vector<1x1x32xf32>
    %89 = vector.broadcast %88 : vector<1x1x32xf32> to vector<16x16x32xf32>
    %90 = arith.mulf %85, %89 : vector<16x16x32xf32>
    %91 = arith.addf %84, %90 : vector<16x16x32xf32>
    %92 = vector.extract_strided_slice %10 {offsets = [1, 0, 0], sizes = [16, 16, 32], strides = [1, 1, 1]} : vector<22x16x32xf32> to vector<16x16x32xf32>
    %93 = vector.extract_strided_slice %13 {offsets = [11, 0], sizes = [1, 32], strides = [1, 1]} : vector<49x32xf32> to vector<1x32xf32>
    %94 = vector.shape_cast %93 : vector<1x32xf32> to vector<32xf32>
    %95 = vector.shape_cast %94 : vector<32xf32> to vector<1x1x32xf32>
    %96 = vector.broadcast %95 : vector<1x1x32xf32> to vector<16x16x32xf32>
    %97 = arith.mulf %92, %96 : vector<16x16x32xf32>
    %98 = arith.addf %91, %97 : vector<16x16x32xf32>
    %99 = vector.extract_strided_slice %11 {offsets = [1, 0, 0], sizes = [16, 16, 32], strides = [1, 1, 1]} : vector<22x16x32xf32> to vector<16x16x32xf32>
    %100 = vector.extract_strided_slice %13 {offsets = [12, 0], sizes = [1, 32], strides = [1, 1]} : vector<49x32xf32> to vector<1x32xf32>
    %101 = vector.shape_cast %100 : vector<1x32xf32> to vector<32xf32>
    %102 = vector.shape_cast %101 : vector<32xf32> to vector<1x1x32xf32>
    %103 = vector.broadcast %102 : vector<1x1x32xf32> to vector<16x16x32xf32>
    %104 = arith.mulf %99, %103 : vector<16x16x32xf32>
    %105 = arith.addf %98, %104 : vector<16x16x32xf32>
    %106 = vector.extract_strided_slice %12 {offsets = [1, 0, 0], sizes = [16, 16, 32], strides = [1, 1, 1]} : vector<22x16x32xf32> to vector<16x16x32xf32>
    %107 = vector.extract_strided_slice %13 {offsets = [13, 0], sizes = [1, 32], strides = [1, 1]} : vector<49x32xf32> to vector<1x32xf32>
    %108 = vector.shape_cast %107 : vector<1x32xf32> to vector<32xf32>
    %109 = vector.shape_cast %108 : vector<32xf32> to vector<1x1x32xf32>
    %110 = vector.broadcast %109 : vector<1x1x32xf32> to vector<16x16x32xf32>
    %111 = arith.mulf %106, %110 : vector<16x16x32xf32>
    %112 = arith.addf %105, %111 : vector<16x16x32xf32>
    %113 = vector.extract_strided_slice %6 {offsets = [2, 0, 0], sizes = [16, 16, 32], strides = [1, 1, 1]} : vector<22x16x32xf32> to vector<16x16x32xf32>
    %114 = vector.extract_strided_slice %13 {offsets = [14, 0], sizes = [1, 32], strides = [1, 1]} : vector<49x32xf32> to vector<1x32xf32>
    %115 = vector.shape_cast %114 : vector<1x32xf32> to vector<32xf32>
    %116 = vector.shape_cast %115 : vector<32xf32> to vector<1x1x32xf32>
    %117 = vector.broadcast %116 : vector<1x1x32xf32> to vector<16x16x32xf32>
    %118 = arith.mulf %113, %117 : vector<16x16x32xf32>
    %119 = arith.addf %112, %118 : vector<16x16x32xf32>
    %120 = vector.extract_strided_slice %7 {offsets = [2, 0, 0], sizes = [16, 16, 32], strides = [1, 1, 1]} : vector<22x16x32xf32> to vector<16x16x32xf32>
    %121 = vector.extract_strided_slice %13 {offsets = [15, 0], sizes = [1, 32], strides = [1, 1]} : vector<49x32xf32> to vector<1x32xf32>
    %122 = vector.shape_cast %121 : vector<1x32xf32> to vector<32xf32>
    %123 = vector.shape_cast %122 : vector<32xf32> to vector<1x1x32xf32>
    %124 = vector.broadcast %123 : vector<1x1x32xf32> to vector<16x16x32xf32>
    %125 = arith.mulf %120, %124 : vector<16x16x32xf32>
    %126 = arith.addf %119, %125 : vector<16x16x32xf32>
    %127 = vector.extract_strided_slice %8 {offsets = [2, 0, 0], sizes = [16, 16, 32], strides = [1, 1, 1]} : vector<22x16x32xf32> to vector<16x16x32xf32>
    %128 = vector.extract_strided_slice %13 {offsets = [16, 0], sizes = [1, 32], strides = [1, 1]} : vector<49x32xf32> to vector<1x32xf32>
    %129 = vector.shape_cast %128 : vector<1x32xf32> to vector<32xf32>
    %130 = vector.shape_cast %129 : vector<32xf32> to vector<1x1x32xf32>
    %131 = vector.broadcast %130 : vector<1x1x32xf32> to vector<16x16x32xf32>
    %132 = arith.mulf %127, %131 : vector<16x16x32xf32>
    %133 = arith.addf %126, %132 : vector<16x16x32xf32>
    %134 = vector.extract_strided_slice %9 {offsets = [2, 0, 0], sizes = [16, 16, 32], strides = [1, 1, 1]} : vector<22x16x32xf32> to vector<16x16x32xf32>
    %135 = vector.extract_strided_slice %13 {offsets = [17, 0], sizes = [1, 32], strides = [1, 1]} : vector<49x32xf32> to vector<1x32xf32>
    %136 = vector.shape_cast %135 : vector<1x32xf32> to vector<32xf32>
    %137 = vector.shape_cast %136 : vector<32xf32> to vector<1x1x32xf32>
    %138 = vector.broadcast %137 : vector<1x1x32xf32> to vector<16x16x32xf32>
    %139 = arith.mulf %134, %138 : vector<16x16x32xf32>
    %140 = arith.addf %133, %139 : vector<16x16x32xf32>
    %141 = vector.extract_strided_slice %10 {offsets = [2, 0, 0], sizes = [16, 16, 32], strides = [1, 1, 1]} : vector<22x16x32xf32> to vector<16x16x32xf32>
    %142 = vector.extract_strided_slice %13 {offsets = [18, 0], sizes = [1, 32], strides = [1, 1]} : vector<49x32xf32> to vector<1x32xf32>
    %143 = vector.shape_cast %142 : vector<1x32xf32> to vector<32xf32>
    %144 = vector.shape_cast %143 : vector<32xf32> to vector<1x1x32xf32>
    %145 = vector.broadcast %144 : vector<1x1x32xf32> to vector<16x16x32xf32>
    %146 = arith.mulf %141, %145 : vector<16x16x32xf32>
    %147 = arith.addf %140, %146 : vector<16x16x32xf32>
    %148 = vector.extract_strided_slice %11 {offsets = [2, 0, 0], sizes = [16, 16, 32], strides = [1, 1, 1]} : vector<22x16x32xf32> to vector<16x16x32xf32>
    %149 = vector.extract_strided_slice %13 {offsets = [19, 0], sizes = [1, 32], strides = [1, 1]} : vector<49x32xf32> to vector<1x32xf32>
    %150 = vector.shape_cast %149 : vector<1x32xf32> to vector<32xf32>
    %151 = vector.shape_cast %150 : vector<32xf32> to vector<1x1x32xf32>
    %152 = vector.broadcast %151 : vector<1x1x32xf32> to vector<16x16x32xf32>
    %153 = arith.mulf %148, %152 : vector<16x16x32xf32>
    %154 = arith.addf %147, %153 : vector<16x16x32xf32>
    %155 = vector.extract_strided_slice %12 {offsets = [2, 0, 0], sizes = [16, 16, 32], strides = [1, 1, 1]} : vector<22x16x32xf32> to vector<16x16x32xf32>
    %156 = vector.extract_strided_slice %13 {offsets = [20, 0], sizes = [1, 32], strides = [1, 1]} : vector<49x32xf32> to vector<1x32xf32>
    %157 = vector.shape_cast %156 : vector<1x32xf32> to vector<32xf32>
    %158 = vector.shape_cast %157 : vector<32xf32> to vector<1x1x32xf32>
    %159 = vector.broadcast %158 : vector<1x1x32xf32> to vector<16x16x32xf32>
    %160 = arith.mulf %155, %159 : vector<16x16x32xf32>
    %161 = arith.addf %154, %160 : vector<16x16x32xf32>
    %162 = vector.extract_strided_slice %6 {offsets = [3, 0, 0], sizes = [16, 16, 32], strides = [1, 1, 1]} : vector<22x16x32xf32> to vector<16x16x32xf32>
    %163 = vector.extract_strided_slice %13 {offsets = [21, 0], sizes = [1, 32], strides = [1, 1]} : vector<49x32xf32> to vector<1x32xf32>
    %164 = vector.shape_cast %163 : vector<1x32xf32> to vector<32xf32>
    %165 = vector.shape_cast %164 : vector<32xf32> to vector<1x1x32xf32>
    %166 = vector.broadcast %165 : vector<1x1x32xf32> to vector<16x16x32xf32>
    %167 = arith.mulf %162, %166 : vector<16x16x32xf32>
    %168 = arith.addf %161, %167 : vector<16x16x32xf32>
    %169 = vector.extract_strided_slice %7 {offsets = [3, 0, 0], sizes = [16, 16, 32], strides = [1, 1, 1]} : vector<22x16x32xf32> to vector<16x16x32xf32>
    %170 = vector.extract_strided_slice %13 {offsets = [22, 0], sizes = [1, 32], strides = [1, 1]} : vector<49x32xf32> to vector<1x32xf32>
    %171 = vector.shape_cast %170 : vector<1x32xf32> to vector<32xf32>
    %172 = vector.shape_cast %171 : vector<32xf32> to vector<1x1x32xf32>
    %173 = vector.broadcast %172 : vector<1x1x32xf32> to vector<16x16x32xf32>
    %174 = arith.mulf %169, %173 : vector<16x16x32xf32>
    %175 = arith.addf %168, %174 : vector<16x16x32xf32>
    %176 = vector.extract_strided_slice %8 {offsets = [3, 0, 0], sizes = [16, 16, 32], strides = [1, 1, 1]} : vector<22x16x32xf32> to vector<16x16x32xf32>
    %177 = vector.extract_strided_slice %13 {offsets = [23, 0], sizes = [1, 32], strides = [1, 1]} : vector<49x32xf32> to vector<1x32xf32>
    %178 = vector.shape_cast %177 : vector<1x32xf32> to vector<32xf32>
    %179 = vector.shape_cast %178 : vector<32xf32> to vector<1x1x32xf32>
    %180 = vector.broadcast %179 : vector<1x1x32xf32> to vector<16x16x32xf32>
    %181 = arith.mulf %176, %180 : vector<16x16x32xf32>
    %182 = arith.addf %175, %181 : vector<16x16x32xf32>
    %183 = vector.extract_strided_slice %9 {offsets = [3, 0, 0], sizes = [16, 16, 32], strides = [1, 1, 1]} : vector<22x16x32xf32> to vector<16x16x32xf32>
    %184 = vector.extract_strided_slice %13 {offsets = [24, 0], sizes = [1, 32], strides = [1, 1]} : vector<49x32xf32> to vector<1x32xf32>
    %185 = vector.shape_cast %184 : vector<1x32xf32> to vector<32xf32>
    %186 = vector.shape_cast %185 : vector<32xf32> to vector<1x1x32xf32>
    %187 = vector.broadcast %186 : vector<1x1x32xf32> to vector<16x16x32xf32>
    %188 = arith.mulf %183, %187 : vector<16x16x32xf32>
    %189 = arith.addf %182, %188 : vector<16x16x32xf32>
    %190 = vector.extract_strided_slice %10 {offsets = [3, 0, 0], sizes = [16, 16, 32], strides = [1, 1, 1]} : vector<22x16x32xf32> to vector<16x16x32xf32>
    %191 = vector.extract_strided_slice %13 {offsets = [25, 0], sizes = [1, 32], strides = [1, 1]} : vector<49x32xf32> to vector<1x32xf32>
    %192 = vector.shape_cast %191 : vector<1x32xf32> to vector<32xf32>
    %193 = vector.shape_cast %192 : vector<32xf32> to vector<1x1x32xf32>
    %194 = vector.broadcast %193 : vector<1x1x32xf32> to vector<16x16x32xf32>
    %195 = arith.mulf %190, %194 : vector<16x16x32xf32>
    %196 = arith.addf %189, %195 : vector<16x16x32xf32>
    %197 = vector.extract_strided_slice %11 {offsets = [3, 0, 0], sizes = [16, 16, 32], strides = [1, 1, 1]} : vector<22x16x32xf32> to vector<16x16x32xf32>
    %198 = vector.extract_strided_slice %13 {offsets = [26, 0], sizes = [1, 32], strides = [1, 1]} : vector<49x32xf32> to vector<1x32xf32>
    %199 = vector.shape_cast %198 : vector<1x32xf32> to vector<32xf32>
    %200 = vector.shape_cast %199 : vector<32xf32> to vector<1x1x32xf32>
    %201 = vector.broadcast %200 : vector<1x1x32xf32> to vector<16x16x32xf32>
    %202 = arith.mulf %197, %201 : vector<16x16x32xf32>
    %203 = arith.addf %196, %202 : vector<16x16x32xf32>
    %204 = vector.extract_strided_slice %12 {offsets = [3, 0, 0], sizes = [16, 16, 32], strides = [1, 1, 1]} : vector<22x16x32xf32> to vector<16x16x32xf32>
    %205 = vector.extract_strided_slice %13 {offsets = [27, 0], sizes = [1, 32], strides = [1, 1]} : vector<49x32xf32> to vector<1x32xf32>
    %206 = vector.shape_cast %205 : vector<1x32xf32> to vector<32xf32>
    %207 = vector.shape_cast %206 : vector<32xf32> to vector<1x1x32xf32>
    %208 = vector.broadcast %207 : vector<1x1x32xf32> to vector<16x16x32xf32>
    %209 = arith.mulf %204, %208 : vector<16x16x32xf32>
    %210 = arith.addf %203, %209 : vector<16x16x32xf32>
    %211 = vector.extract_strided_slice %6 {offsets = [4, 0, 0], sizes = [16, 16, 32], strides = [1, 1, 1]} : vector<22x16x32xf32> to vector<16x16x32xf32>
    %212 = vector.extract_strided_slice %13 {offsets = [28, 0], sizes = [1, 32], strides = [1, 1]} : vector<49x32xf32> to vector<1x32xf32>
    %213 = vector.shape_cast %212 : vector<1x32xf32> to vector<32xf32>
    %214 = vector.shape_cast %213 : vector<32xf32> to vector<1x1x32xf32>
    %215 = vector.broadcast %214 : vector<1x1x32xf32> to vector<16x16x32xf32>
    %216 = arith.mulf %211, %215 : vector<16x16x32xf32>
    %217 = arith.addf %210, %216 : vector<16x16x32xf32>
    %218 = vector.extract_strided_slice %7 {offsets = [4, 0, 0], sizes = [16, 16, 32], strides = [1, 1, 1]} : vector<22x16x32xf32> to vector<16x16x32xf32>
    %219 = vector.extract_strided_slice %13 {offsets = [29, 0], sizes = [1, 32], strides = [1, 1]} : vector<49x32xf32> to vector<1x32xf32>
    %220 = vector.shape_cast %219 : vector<1x32xf32> to vector<32xf32>
    %221 = vector.shape_cast %220 : vector<32xf32> to vector<1x1x32xf32>
    %222 = vector.broadcast %221 : vector<1x1x32xf32> to vector<16x16x32xf32>
    %223 = arith.mulf %218, %222 : vector<16x16x32xf32>
    %224 = arith.addf %217, %223 : vector<16x16x32xf32>
    %225 = vector.extract_strided_slice %8 {offsets = [4, 0, 0], sizes = [16, 16, 32], strides = [1, 1, 1]} : vector<22x16x32xf32> to vector<16x16x32xf32>
    %226 = vector.extract_strided_slice %13 {offsets = [30, 0], sizes = [1, 32], strides = [1, 1]} : vector<49x32xf32> to vector<1x32xf32>
    %227 = vector.shape_cast %226 : vector<1x32xf32> to vector<32xf32>
    %228 = vector.shape_cast %227 : vector<32xf32> to vector<1x1x32xf32>
    %229 = vector.broadcast %228 : vector<1x1x32xf32> to vector<16x16x32xf32>
    %230 = arith.mulf %225, %229 : vector<16x16x32xf32>
    %231 = arith.addf %224, %230 : vector<16x16x32xf32>
    %232 = vector.extract_strided_slice %9 {offsets = [4, 0, 0], sizes = [16, 16, 32], strides = [1, 1, 1]} : vector<22x16x32xf32> to vector<16x16x32xf32>
    %233 = vector.extract_strided_slice %13 {offsets = [31, 0], sizes = [1, 32], strides = [1, 1]} : vector<49x32xf32> to vector<1x32xf32>
    %234 = vector.shape_cast %233 : vector<1x32xf32> to vector<32xf32>
    %235 = vector.shape_cast %234 : vector<32xf32> to vector<1x1x32xf32>
    %236 = vector.broadcast %235 : vector<1x1x32xf32> to vector<16x16x32xf32>
    %237 = arith.mulf %232, %236 : vector<16x16x32xf32>
    %238 = arith.addf %231, %237 : vector<16x16x32xf32>
    %239 = vector.extract_strided_slice %10 {offsets = [4, 0, 0], sizes = [16, 16, 32], strides = [1, 1, 1]} : vector<22x16x32xf32> to vector<16x16x32xf32>
    %240 = vector.extract_strided_slice %13 {offsets = [32, 0], sizes = [1, 32], strides = [1, 1]} : vector<49x32xf32> to vector<1x32xf32>
    %241 = vector.shape_cast %240 : vector<1x32xf32> to vector<32xf32>
    %242 = vector.shape_cast %241 : vector<32xf32> to vector<1x1x32xf32>
    %243 = vector.broadcast %242 : vector<1x1x32xf32> to vector<16x16x32xf32>
    %244 = arith.mulf %239, %243 : vector<16x16x32xf32>
    %245 = arith.addf %238, %244 : vector<16x16x32xf32>
    %246 = vector.extract_strided_slice %11 {offsets = [4, 0, 0], sizes = [16, 16, 32], strides = [1, 1, 1]} : vector<22x16x32xf32> to vector<16x16x32xf32>
    %247 = vector.extract_strided_slice %13 {offsets = [33, 0], sizes = [1, 32], strides = [1, 1]} : vector<49x32xf32> to vector<1x32xf32>
    %248 = vector.shape_cast %247 : vector<1x32xf32> to vector<32xf32>
    %249 = vector.shape_cast %248 : vector<32xf32> to vector<1x1x32xf32>
    %250 = vector.broadcast %249 : vector<1x1x32xf32> to vector<16x16x32xf32>
    %251 = arith.mulf %246, %250 : vector<16x16x32xf32>
    %252 = arith.addf %245, %251 : vector<16x16x32xf32>
    %253 = vector.extract_strided_slice %12 {offsets = [4, 0, 0], sizes = [16, 16, 32], strides = [1, 1, 1]} : vector<22x16x32xf32> to vector<16x16x32xf32>
    %254 = vector.extract_strided_slice %13 {offsets = [34, 0], sizes = [1, 32], strides = [1, 1]} : vector<49x32xf32> to vector<1x32xf32>
    %255 = vector.shape_cast %254 : vector<1x32xf32> to vector<32xf32>
    %256 = vector.shape_cast %255 : vector<32xf32> to vector<1x1x32xf32>
    %257 = vector.broadcast %256 : vector<1x1x32xf32> to vector<16x16x32xf32>
    %258 = arith.mulf %253, %257 : vector<16x16x32xf32>
    %259 = arith.addf %252, %258 : vector<16x16x32xf32>
    %260 = vector.extract_strided_slice %6 {offsets = [5, 0, 0], sizes = [16, 16, 32], strides = [1, 1, 1]} : vector<22x16x32xf32> to vector<16x16x32xf32>
    %261 = vector.extract_strided_slice %13 {offsets = [35, 0], sizes = [1, 32], strides = [1, 1]} : vector<49x32xf32> to vector<1x32xf32>
    %262 = vector.shape_cast %261 : vector<1x32xf32> to vector<32xf32>
    %263 = vector.shape_cast %262 : vector<32xf32> to vector<1x1x32xf32>
    %264 = vector.broadcast %263 : vector<1x1x32xf32> to vector<16x16x32xf32>
    %265 = arith.mulf %260, %264 : vector<16x16x32xf32>
    %266 = arith.addf %259, %265 : vector<16x16x32xf32>
    %267 = vector.extract_strided_slice %7 {offsets = [5, 0, 0], sizes = [16, 16, 32], strides = [1, 1, 1]} : vector<22x16x32xf32> to vector<16x16x32xf32>
    %268 = vector.extract_strided_slice %13 {offsets = [36, 0], sizes = [1, 32], strides = [1, 1]} : vector<49x32xf32> to vector<1x32xf32>
    %269 = vector.shape_cast %268 : vector<1x32xf32> to vector<32xf32>
    %270 = vector.shape_cast %269 : vector<32xf32> to vector<1x1x32xf32>
    %271 = vector.broadcast %270 : vector<1x1x32xf32> to vector<16x16x32xf32>
    %272 = arith.mulf %267, %271 : vector<16x16x32xf32>
    %273 = arith.addf %266, %272 : vector<16x16x32xf32>
    %274 = vector.extract_strided_slice %8 {offsets = [5, 0, 0], sizes = [16, 16, 32], strides = [1, 1, 1]} : vector<22x16x32xf32> to vector<16x16x32xf32>
    %275 = vector.extract_strided_slice %13 {offsets = [37, 0], sizes = [1, 32], strides = [1, 1]} : vector<49x32xf32> to vector<1x32xf32>
    %276 = vector.shape_cast %275 : vector<1x32xf32> to vector<32xf32>
    %277 = vector.shape_cast %276 : vector<32xf32> to vector<1x1x32xf32>
    %278 = vector.broadcast %277 : vector<1x1x32xf32> to vector<16x16x32xf32>
    %279 = arith.mulf %274, %278 : vector<16x16x32xf32>
    %280 = arith.addf %273, %279 : vector<16x16x32xf32>
    %281 = vector.extract_strided_slice %9 {offsets = [5, 0, 0], sizes = [16, 16, 32], strides = [1, 1, 1]} : vector<22x16x32xf32> to vector<16x16x32xf32>
    %282 = vector.extract_strided_slice %13 {offsets = [38, 0], sizes = [1, 32], strides = [1, 1]} : vector<49x32xf32> to vector<1x32xf32>
    %283 = vector.shape_cast %282 : vector<1x32xf32> to vector<32xf32>
    %284 = vector.shape_cast %283 : vector<32xf32> to vector<1x1x32xf32>
    %285 = vector.broadcast %284 : vector<1x1x32xf32> to vector<16x16x32xf32>
    %286 = arith.mulf %281, %285 : vector<16x16x32xf32>
    %287 = arith.addf %280, %286 : vector<16x16x32xf32>
    %288 = vector.extract_strided_slice %10 {offsets = [5, 0, 0], sizes = [16, 16, 32], strides = [1, 1, 1]} : vector<22x16x32xf32> to vector<16x16x32xf32>
    %289 = vector.extract_strided_slice %13 {offsets = [39, 0], sizes = [1, 32], strides = [1, 1]} : vector<49x32xf32> to vector<1x32xf32>
    %290 = vector.shape_cast %289 : vector<1x32xf32> to vector<32xf32>
    %291 = vector.shape_cast %290 : vector<32xf32> to vector<1x1x32xf32>
    %292 = vector.broadcast %291 : vector<1x1x32xf32> to vector<16x16x32xf32>
    %293 = arith.mulf %288, %292 : vector<16x16x32xf32>
    %294 = arith.addf %287, %293 : vector<16x16x32xf32>
    %295 = vector.extract_strided_slice %11 {offsets = [5, 0, 0], sizes = [16, 16, 32], strides = [1, 1, 1]} : vector<22x16x32xf32> to vector<16x16x32xf32>
    %296 = vector.extract_strided_slice %13 {offsets = [40, 0], sizes = [1, 32], strides = [1, 1]} : vector<49x32xf32> to vector<1x32xf32>
    %297 = vector.shape_cast %296 : vector<1x32xf32> to vector<32xf32>
    %298 = vector.shape_cast %297 : vector<32xf32> to vector<1x1x32xf32>
    %299 = vector.broadcast %298 : vector<1x1x32xf32> to vector<16x16x32xf32>
    %300 = arith.mulf %295, %299 : vector<16x16x32xf32>
    %301 = arith.addf %294, %300 : vector<16x16x32xf32>
    %302 = vector.extract_strided_slice %12 {offsets = [5, 0, 0], sizes = [16, 16, 32], strides = [1, 1, 1]} : vector<22x16x32xf32> to vector<16x16x32xf32>
    %303 = vector.extract_strided_slice %13 {offsets = [41, 0], sizes = [1, 32], strides = [1, 1]} : vector<49x32xf32> to vector<1x32xf32>
    %304 = vector.shape_cast %303 : vector<1x32xf32> to vector<32xf32>
    %305 = vector.shape_cast %304 : vector<32xf32> to vector<1x1x32xf32>
    %306 = vector.broadcast %305 : vector<1x1x32xf32> to vector<16x16x32xf32>
    %307 = arith.mulf %302, %306 : vector<16x16x32xf32>
    %308 = arith.addf %301, %307 : vector<16x16x32xf32>
    %309 = vector.extract_strided_slice %6 {offsets = [6, 0, 0], sizes = [16, 16, 32], strides = [1, 1, 1]} : vector<22x16x32xf32> to vector<16x16x32xf32>
    %310 = vector.extract_strided_slice %13 {offsets = [42, 0], sizes = [1, 32], strides = [1, 1]} : vector<49x32xf32> to vector<1x32xf32>
    %311 = vector.shape_cast %310 : vector<1x32xf32> to vector<32xf32>
    %312 = vector.shape_cast %311 : vector<32xf32> to vector<1x1x32xf32>
    %313 = vector.broadcast %312 : vector<1x1x32xf32> to vector<16x16x32xf32>
    %314 = arith.mulf %309, %313 : vector<16x16x32xf32>
    %315 = arith.addf %308, %314 : vector<16x16x32xf32>
    %316 = vector.extract_strided_slice %7 {offsets = [6, 0, 0], sizes = [16, 16, 32], strides = [1, 1, 1]} : vector<22x16x32xf32> to vector<16x16x32xf32>
    %317 = vector.extract_strided_slice %13 {offsets = [43, 0], sizes = [1, 32], strides = [1, 1]} : vector<49x32xf32> to vector<1x32xf32>
    %318 = vector.shape_cast %317 : vector<1x32xf32> to vector<32xf32>
    %319 = vector.shape_cast %318 : vector<32xf32> to vector<1x1x32xf32>
    %320 = vector.broadcast %319 : vector<1x1x32xf32> to vector<16x16x32xf32>
    %321 = arith.mulf %316, %320 : vector<16x16x32xf32>
    %322 = arith.addf %315, %321 : vector<16x16x32xf32>
    %323 = vector.extract_strided_slice %8 {offsets = [6, 0, 0], sizes = [16, 16, 32], strides = [1, 1, 1]} : vector<22x16x32xf32> to vector<16x16x32xf32>
    %324 = vector.extract_strided_slice %13 {offsets = [44, 0], sizes = [1, 32], strides = [1, 1]} : vector<49x32xf32> to vector<1x32xf32>
    %325 = vector.shape_cast %324 : vector<1x32xf32> to vector<32xf32>
    %326 = vector.shape_cast %325 : vector<32xf32> to vector<1x1x32xf32>
    %327 = vector.broadcast %326 : vector<1x1x32xf32> to vector<16x16x32xf32>
    %328 = arith.mulf %323, %327 : vector<16x16x32xf32>
    %329 = arith.addf %322, %328 : vector<16x16x32xf32>
    %330 = vector.extract_strided_slice %9 {offsets = [6, 0, 0], sizes = [16, 16, 32], strides = [1, 1, 1]} : vector<22x16x32xf32> to vector<16x16x32xf32>
    %331 = vector.extract_strided_slice %13 {offsets = [45, 0], sizes = [1, 32], strides = [1, 1]} : vector<49x32xf32> to vector<1x32xf32>
    %332 = vector.shape_cast %331 : vector<1x32xf32> to vector<32xf32>
    %333 = vector.shape_cast %332 : vector<32xf32> to vector<1x1x32xf32>
    %334 = vector.broadcast %333 : vector<1x1x32xf32> to vector<16x16x32xf32>
    %335 = arith.mulf %330, %334 : vector<16x16x32xf32>
    %336 = arith.addf %329, %335 : vector<16x16x32xf32>
    %337 = vector.extract_strided_slice %10 {offsets = [6, 0, 0], sizes = [16, 16, 32], strides = [1, 1, 1]} : vector<22x16x32xf32> to vector<16x16x32xf32>
    %338 = vector.extract_strided_slice %13 {offsets = [46, 0], sizes = [1, 32], strides = [1, 1]} : vector<49x32xf32> to vector<1x32xf32>
    %339 = vector.shape_cast %338 : vector<1x32xf32> to vector<32xf32>
    %340 = vector.shape_cast %339 : vector<32xf32> to vector<1x1x32xf32>
    %341 = vector.broadcast %340 : vector<1x1x32xf32> to vector<16x16x32xf32>
    %342 = arith.mulf %337, %341 : vector<16x16x32xf32>
    %343 = arith.addf %336, %342 : vector<16x16x32xf32>
    %344 = vector.extract_strided_slice %11 {offsets = [6, 0, 0], sizes = [16, 16, 32], strides = [1, 1, 1]} : vector<22x16x32xf32> to vector<16x16x32xf32>
    %345 = vector.extract_strided_slice %13 {offsets = [47, 0], sizes = [1, 32], strides = [1, 1]} : vector<49x32xf32> to vector<1x32xf32>
    %346 = vector.shape_cast %345 : vector<1x32xf32> to vector<32xf32>
    %347 = vector.shape_cast %346 : vector<32xf32> to vector<1x1x32xf32>
    %348 = vector.broadcast %347 : vector<1x1x32xf32> to vector<16x16x32xf32>
    %349 = arith.mulf %344, %348 : vector<16x16x32xf32>
    %350 = arith.addf %343, %349 : vector<16x16x32xf32>
    %351 = vector.extract_strided_slice %12 {offsets = [6, 0, 0], sizes = [16, 16, 32], strides = [1, 1, 1]} : vector<22x16x32xf32> to vector<16x16x32xf32>
    %352 = vector.extract_strided_slice %13 {offsets = [48, 0], sizes = [1, 32], strides = [1, 1]} : vector<49x32xf32> to vector<1x32xf32>
    %353 = vector.shape_cast %352 : vector<1x32xf32> to vector<32xf32>
    %354 = vector.shape_cast %353 : vector<32xf32> to vector<1x1x32xf32>
    %355 = vector.broadcast %354 : vector<1x1x32xf32> to vector<16x16x32xf32>
    %356 = arith.mulf %351, %355 : vector<16x16x32xf32>
    %357 = arith.addf %350, %356 : vector<16x16x32xf32>
    %c0_14 = arith.constant 0 : index
    %c0_15 = arith.constant 0 : index
    %358 = vector.load %arg3[%c0_14, %c0_15] : memref<1x32xf32, #tpu.memory_space<vmem>>, vector<1x32xf32>
    %359 = vector.shape_cast %358 : vector<1x32xf32> to vector<1x1x32xf32>
    %360 = vector.broadcast %359 : vector<1x1x32xf32> to vector<16x16x32xf32>
    %361 = arith.addf %357, %360 : vector<16x16x32xf32>
    %cst_16 = arith.constant dense<0.000000e+00> : vector<16x16xf32>
    %362 = vector.multi_reduction <add>, %361, %cst_16 [2] : vector<16x16x32xf32> to vector<16x16xf32>
    %363 = vector.shape_cast %362 : vector<16x16xf32> to vector<16x16x1xf32>
    %cst_17 = arith.constant 3.200000e+01 : f32
    %364 = vector.broadcast %cst_17 : f32 to vector<16x16x1xf32>
    %365 = arith.divf %363, %364 : vector<16x16x1xf32>
    %366 = vector.broadcast %365 : vector<16x16x1xf32> to vector<16x16x32xf32>
    %367 = arith.subf %361, %366 : vector<16x16x32xf32>
    %368 = arith.mulf %367, %367 : vector<16x16x32xf32>
    %cst_18 = arith.constant dense<0.000000e+00> : vector<16x16xf32>
    %369 = vector.multi_reduction <add>, %368, %cst_18 [2] : vector<16x16x32xf32> to vector<16x16xf32>
    %370 = vector.shape_cast %369 : vector<16x16xf32> to vector<16x16x1xf32>
    %cst_19 = arith.constant 3.200000e+01 : f32
    %371 = vector.broadcast %cst_19 : f32 to vector<16x16x1xf32>
    %372 = arith.divf %370, %371 : vector<16x16x1xf32>
    %cst_20 = arith.constant 9.99999997E-7 : f32
    %373 = vector.broadcast %cst_20 : f32 to vector<16x16x1xf32>
    %374 = arith.addf %372, %373 : vector<16x16x1xf32>
    %375 = math.rsqrt %374 : vector<16x16x1xf32>
    %376 = vector.broadcast %375 : vector<16x16x1xf32> to vector<16x16x32xf32>
    %377 = arith.mulf %367, %376 : vector<16x16x32xf32>
    %c0_21 = arith.constant 0 : index
    %c0_22 = arith.constant 0 : index
    %378 = vector.load %arg4[%c0_21, %c0_22] : memref<1x32xf32, #tpu.memory_space<vmem>>, vector<1x32xf32>
    %379 = vector.shape_cast %378 : vector<1x32xf32> to vector<1x1x32xf32>
    %380 = vector.broadcast %379 : vector<1x1x32xf32> to vector<16x16x32xf32>
    %381 = arith.mulf %377, %380 : vector<16x16x32xf32>
    %c0_23 = arith.constant 0 : index
    %c0_24 = arith.constant 0 : index
    %382 = vector.load %arg5[%c0_23, %c0_24] : memref<1x32xf32, #tpu.memory_space<vmem>>, vector<1x32xf32>
    %383 = vector.shape_cast %382 : vector<1x32xf32> to vector<1x1x32xf32>
    %384 = vector.broadcast %383 : vector<1x1x32xf32> to vector<16x16x32xf32>
    %385 = arith.addf %381, %384 : vector<16x16x32xf32>
    %386 = vector.shape_cast %385 : vector<16x16x32xf32> to vector<256x32xf32>
    %387 = arith.truncf %386 : vector<256x32xf32> to vector<256x32xbf16>
    %c0_25 = arith.constant 0 : index
    %c0_26 = arith.constant 0 : index
    %388 = vector.load %arg6[%c0_25, %c0_26] : memref<32x128xbf16, #tpu.memory_space<vmem>>, vector<32x128xbf16>
    %cst_27 = arith.constant dense<0.000000e+00> : vector<256x128xf32>
    %389 = tpu.matmul %387, %388, %cst_27 {dimension_numbers = #tpu.dot_dimension_numbers<[1], [0], [0], [1], [0, 0, 1, 1], [], []>} : vector<256x32xbf16>, vector<32x128xbf16>, vector<256x128xf32> -> vector<256x128xf32>
    %c0_28 = arith.constant 0 : index
    %c0_29 = arith.constant 0 : index
    %390 = vector.load %arg7[%c0_28, %c0_29] : memref<1x128xf32, #tpu.memory_space<vmem>>, vector<1x128xf32>
    %391 = vector.broadcast %390 : vector<1x128xf32> to vector<256x128xf32>
    %392 = arith.addf %389, %391 : vector<256x128xf32>
    %cst_30 = arith.constant 5.000000e-01 : f32
    %393 = vector.broadcast %cst_30 : f32 to vector<256x128xf32>
    %394 = arith.mulf %393, %392 : vector<256x128xf32>
    %cst_31 = arith.constant 4.471500e-02 : f32
    %395 = vector.broadcast %cst_31 : f32 to vector<256x128xf32>
    %396 = arith.mulf %395, %392 : vector<256x128xf32>
    %397 = arith.mulf %396, %392 : vector<256x128xf32>
    %398 = arith.mulf %397, %392 : vector<256x128xf32>
    %399 = arith.addf %392, %398 : vector<256x128xf32>
    %cst_32 = arith.constant 0.797884583 : f32
    %400 = vector.broadcast %cst_32 : f32 to vector<256x128xf32>
    %401 = arith.mulf %400, %399 : vector<256x128xf32>
    %402 = math.tanh %401 : vector<256x128xf32>
    %cst_33 = arith.constant 1.000000e+00 : f32
    %403 = vector.broadcast %cst_33 : f32 to vector<256x128xf32>
    %404 = arith.addf %403, %402 : vector<256x128xf32>
    %405 = arith.mulf %394, %404 : vector<256x128xf32>
    %406 = arith.truncf %405 : vector<256x128xf32> to vector<256x128xbf16>
    %c0_34 = arith.constant 0 : index
    %c0_35 = arith.constant 0 : index
    %407 = vector.load %arg8[%c0_34, %c0_35] : memref<128x32xbf16, #tpu.memory_space<vmem>>, vector<128x32xbf16>
    %cst_36 = arith.constant dense<0.000000e+00> : vector<256x32xf32>
    %408 = tpu.matmul %406, %407, %cst_36 {dimension_numbers = #tpu.dot_dimension_numbers<[1], [0], [0], [1], [0, 0, 1, 1], [], []>} : vector<256x128xbf16>, vector<128x32xbf16>, vector<256x32xf32> -> vector<256x32xf32>
    %c0_37 = arith.constant 0 : index
    %c0_38 = arith.constant 0 : index
    %409 = vector.load %arg9[%c0_37, %c0_38] : memref<1x32xf32, #tpu.memory_space<vmem>>, vector<1x32xf32>
    %410 = vector.broadcast %409 : vector<1x32xf32> to vector<256x32xf32>
    %411 = arith.addf %408, %410 : vector<256x32xf32>
    %c0_39 = arith.constant 0 : index
    %c0_40 = arith.constant 0 : index
    %412 = vector.load %arg10[%c0_39, %c0_40] : memref<1x32xf32, #tpu.memory_space<vmem>>, vector<1x32xf32>
    %413 = vector.broadcast %412 : vector<1x32xf32> to vector<256x32xf32>
    %414 = arith.mulf %411, %413 : vector<256x32xf32>
    %415 = vector.shape_cast %414 : vector<256x32xf32> to vector<16x16x32xf32>
    %416 = arith.addf %1, %415 : vector<16x16x32xf32>
    %c0_41 = arith.constant 0 : index
    %c0_42 = arith.constant 0 : index
    %c0_43 = arith.constant 0 : index
    %c0_44 = arith.constant 0 : index
    %417 = vector.load %arg11[%c0_41, %c0_42, %c0_43, %c0_44] : memref<1x16x16x32xf32, #tpu.memory_space<vmem>>, vector<1x16x16x32xf32>
    %418 = vector.shape_cast %417 : vector<1x16x16x32xf32> to vector<16x16x32xf32>
    %419 = vector.shape_cast %416 : vector<16x16x32xf32> to vector<1x16x16x32xf32>
    tpu.vector_store %arg11[%c0_41, %c0_42, %c0_43, %c0_44], %419 {strides = array<i32>} : memref<1x16x16x32xf32, #tpu.memory_space<vmem>>, vector<1x16x16x32xf32>,
    return
  }
  func.func @transform_0(%arg0: i32) -> (i32, i32, i32, i32) {
    %c0_i32 = arith.constant 0 : i32
    %c0_i32_0 = arith.constant 0 : i32
    %c0_i32_1 = arith.constant 0 : i32
    %c0_i32_2 = arith.constant 0 : i32
    return %arg0, %c0_i32, %c0_i32_0, %c0_i32_1 : i32, i32, i32, i32
  }
  func.func @transform_1(%arg0: i32) -> (i32, i32) {
    %c0_i32 = arith.constant 0 : i32
    %c0_i32_0 = arith.constant 0 : i32
    %c0_i32_1 = arith.constant 0 : i32
    return %c0_i32, %c0_i32_0 : i32, i32
  }
  func.func @transform_2(%arg0: i32) -> (i32, i32) {
    %c0_i32 = arith.constant 0 : i32
    %c0_i32_0 = arith.constant 0 : i32
    %c0_i32_1 = arith.constant 0 : i32
    return %c0_i32, %c0_i32_0 : i32, i32
  }
  func.func @transform_3(%arg0: i32) -> (i32, i32) {
    %c0_i32 = arith.constant 0 : i32
    %c0_i32_0 = arith.constant 0 : i32
    %c0_i32_1 = arith.constant 0 : i32
    return %c0_i32, %c0_i32_0 : i32, i32
  }
  func.func @transform_4(%arg0: i32) -> (i32, i32) {
    %c0_i32 = arith.constant 0 : i32
    %c0_i32_0 = arith.constant 0 : i32
    %c0_i32_1 = arith.constant 0 : i32
    return %c0_i32, %c0_i32_0 : i32, i32
  }
  func.func @transform_5(%arg0: i32) -> (i32, i32) {
    %c0_i32 = arith.constant 0 : i32
    %c0_i32_0 = arith.constant 0 : i32
    %c0_i32_1 = arith.constant 0 : i32
    return %c0_i32, %c0_i32_0 : i32, i32
  }
  func.func @transform_6(%arg0: i32) -> (i32, i32) {
    %c0_i32 = arith.constant 0 : i32
    %c0_i32_0 = arith.constant 0 : i32
    %c0_i32_1 = arith.constant 0 : i32
    return %c0_i32, %c0_i32_0 : i32, i32
  }
  func.func @transform_7(%arg0: i32) -> (i32, i32) {
    %c0_i32 = arith.constant 0 : i32
    %c0_i32_0 = arith.constant 0 : i32
    %c0_i32_1 = arith.constant 0 : i32
    return %c0_i32, %c0_i32_0 : i32, i32
  }
  func.func @transform_8(%arg0: i32) -> (i32, i32) {
    %c0_i32 = arith.constant 0 : i32
    %c0_i32_0 = arith.constant 0 : i32
    %c0_i32_1 = arith.constant 0 : i32
    return %c0_i32, %c0_i32_0 : i32, i32
  }
  func.func @transform_9(%arg0: i32) -> (i32, i32) {
    %c0_i32 = arith.constant 0 : i32
    %c0_i32_0 = arith.constant 0 : i32
    %c0_i32_1 = arith.constant 0 : i32
    return %c0_i32, %c0_i32_0 : i32, i32
  }
  func.func @transform_10(%arg0: i32) -> (i32, i32, i32, i32) {
    %c0_i32 = arith.constant 0 : i32
    %c0_i32_0 = arith.constant 0 : i32
    %c0_i32_1 = arith.constant 0 : i32
    %c0_i32_2 = arith.constant 0 : i32
    return %arg0, %c0_i32, %c0_i32_0, %c0_i32_1 : i32, i32, i32, i32
  }
}

</mosaic_0001>

<llo_original>
// kernel: tpu_custom_call.1
$region0: #{tpu_custom_call.1}
  #allocation0 [shape = 'u32[]', space=smem, size = 0x4, offset = 0x4, fixed_abs, tag = 'smem constant byte address 0x4 - core index']
  #allocation1 [shape = 'u32[144,128]{1,0:T(1,128)}', space=vmem, size = 0x12000, scoped, tag = 'internal scratch']
  #allocation2 [shape = 'f32[22,22,32]{2,1,0:T(8,128)}', space=vmem, size = 0x42000, scoped, tag = 'scratch operand']
  %s0 = inlined_call_operand.hbm [shape: f32[2,16,16,32], index: 0, kind: input, shape index: {}]
  %s1 = inlined_call_operand.vmem [shape: f32[49,32], index: 1, kind: input, shape index: {}]
  %s2 = inlined_call_operand.vmem [shape: f32[1,32], index: 2, kind: input, shape index: {}]
  %s3 = inlined_call_operand.vmem [shape: f32[1,32], index: 3, kind: input, shape index: {}]
  %s4 = inlined_call_operand.vmem [shape: f32[1,32], index: 4, kind: input, shape index: {}]
  %s5 = inlined_call_operand.vmem [shape: bf16[32,128], index: 5, kind: input, shape index: {}]
  %s6 = inlined_call_operand.vmem [shape: f32[1,128], index: 6, kind: input, shape index: {}]
  %s7 = inlined_call_operand.vmem [shape: bf16[128,32], index: 7, kind: input, shape index: {}]
  %s8 = inlined_call_operand.vmem [shape: f32[1,32], index: 8, kind: input, shape index: {}]
  %s9 = inlined_call_operand.vmem [shape: f32[1,32], index: 9, kind: input, shape index: {}]
  %s10 = inlined_call_operand.hbm [shape: f32[2,16,16,32], index: 10, kind: output, shape index: {}]
  %s11 = sld [smem:[#allocation0]]
  $region77: #{tpu_custom_call.1} parent=0
    _
  %s13 = ssub.s32 1, %s11
  %s14 = scalar_select 0, %s13, %s11
  $region1: #{tpu_custom_call.1} parent=0
    #allocation3 [shape = 'u8[262144]{0}', space=vmem, size = 0x40000, scoped, tag = 'input window, operand 0']
    #allocation4 [shape = 's32[2]{0}', space=sflag, size = 0x8, scoped, tag = 'scoped memory for tpu_custom_call.1']
    #allocation5 [shape = 's32[2]{0}', space=sflag, size = 0x8, scoped, tag = 'scoped memory for tpu_custom_call.1']
    #allocation6 [shape = 'u8[262144]{0}', space=vmem, size = 0x40000, scoped, tag = 'output window, operand 0']
    %15 = vsyncpa [#allocation4], 0
    %s16 = scalar_lea.sflag [#allocation4], 1
    %17 = vsyncpa %s16, 0
    %18 = vsyncpa [#allocation5], 0
    %s19 = scalar_lea.sflag [#allocation5], 1
    %20 = vsyncpa %s19, 0
    loop: start=0, step=1, limit=4
    $region2: #{tpu_custom_call.1} parent=1 // loop_pre_header
      _
    $region3: #{tpu_custom_call.1} parent=1 // loop_header
      %s22 = sphi 0, %s26
      %p23 = scmp.ge.s32.totalorder %s22, 4
      %s32 = sphi 0, %s34
      %s35 = sphi 0, %s32
      %s36 = sphi 0, %s35
      %s52 = sphi 0, %s36
      %s56 = sphi 0, %s56
      %s58 = sphi 0, %s56
      %s59 = sphi 0, %s58
      %s73 = sphi 0, %s59
      %s77 = sphi 0, %s77
      %s79 = sphi 0, %s77
      %s80 = sphi 0, %s79
      %s94 = sphi 0, %s80
      %s98 = sphi 0, %s98
      %s100 = sphi 0, %s98
      %s101 = sphi 0, %s100
      %s115 = sphi 0, %s101
      %s119 = sphi 0, %s119
      %s121 = sphi 0, %s119
      %s122 = sphi 0, %s121
      %s136 = sphi 0, %s122
      %s140 = sphi 0, %s140
      %s142 = sphi 0, %s140
      %s143 = sphi 0, %s142
      %s157 = sphi 0, %s143
      %s161 = sphi 0, %s161
      %s163 = sphi 0, %s161
      %s164 = sphi 0, %s163
      %s178 = sphi 0, %s164
      %s182 = sphi 0, %s182
      %s184 = sphi 0, %s182
      %s185 = sphi 0, %s184
      %s199 = sphi 0, %s185
      %s203 = sphi 0, %s203
      %s205 = sphi 0, %s203
      %s206 = sphi 0, %s205
      %s220 = sphi 0, %s206
      %s224 = sphi 0, %s224
      %s226 = sphi 0, %s224
      %s227 = sphi 0, %s226
      %s241 = sphi 0, %s227
      %s247 = sphi 0, %s249
      %s250 = sphi 0, %s247
      %s251 = sphi 0, %s250
      %s267 = sphi 0, %s251
    $region4: #{tpu_custom_call.1} parent=1 // loop_header_branch
      %25 = sbr.rel (%p23) target = $region8
    $region5: #{tpu_custom_call.1} parent=1 // loop_body
      %s27 = ssub.s32 %s22, 1
      %s28 = ssub.s32 %s22, 2
      %s29 = sadd.s32 %s22, 1
      %s30 = ssub.s32 %s22, %s29
      %p31 = scmp.eq.s32.totalorder %s30, 0
      %s33 = sadd.s32 %s32, 1
      %s34 = scalar_select %p31, %s32, %s33
      %p37 = pneg %p31
      %p38 = scmp.eq.s32.totalorder %s22, 1
      %p39 = por %p37, %p38
      %p40 = scmp.ne.s32.totalorder %s32, %s35
      %p41 = scmp.eq.s32.totalorder %s22, 0
      %p42 = por %p40, %p41
      %p43 = scmp.ne.s32.totalorder %s32, %s35
      %p44 = scmp.eq.s32.totalorder %s27, 1
      %p45 = por %p43, %p44
      %p46 = scmp.ne.s32.totalorder %s35, %s36
      %p47 = scmp.eq.s32.totalorder %s27, 0
      %p48 = por %p46, %p47
      %p49 = scmp.ne.s32.totalorder %s35, %s36
      %p50 = scmp.eq.s32.totalorder %s28, 1
      %p51 = por %p49, %p50
      %p53 = scmp.ne.s32.totalorder %s36, %s52
      %p54 = scmp.eq.s32.totalorder %s28, 0
      %p55 = por %p53, %p54
      %s57 = sadd.s32 %s56, 1
      %p60 = scmp.eq.s32.totalorder %s22, 1
      %p61 = scmp.ne.s32.totalorder %s56, %s58
      %p62 = scmp.eq.s32.totalorder %s22, 0
      %p63 = por %p61, %p62
      %p64 = scmp.ne.s32.totalorder %s56, %s58
      %p65 = scmp.eq.s32.totalorder %s27, 1
      %p66 = por %p64, %p65
      %p67 = scmp.ne.s32.totalorder %s58, %s59
      %p68 = scmp.eq.s32.totalorder %s27, 0
      %p69 = por %p67, %p68
      %p70 = scmp.ne.s32.totalorder %s58, %s59
      %p71 = scmp.eq.s32.totalorder %s28, 1
      %p72 = por %p70, %p71
      %p74 = scmp.ne.s32.totalorder %s59, %s73
      %p75 = scmp.eq.s32.totalorder %s28, 0
      %p76 = por %p74, %p75
      %s78 = sadd.s32 %s77, 1
      %p81 = scmp.eq.s32.totalorder %s22, 1
      %p82 = scmp.ne.s32.totalorder %s77, %s79
      %p83 = scmp.eq.s32.totalorder %s22, 0
      %p84 = por %p82, %p83
      %p85 = scmp.ne.s32.totalorder %s77, %s79
      %p86 = scmp.eq.s32.totalorder %s27, 1
      %p87 = por %p85, %p86
      %p88 = scmp.ne.s32.totalorder %s79, %s80
      %p89 = scmp.eq.s32.totalorder %s27, 0
      %p90 = por %p88, %p89
      %p91 = scmp.ne.s32.totalorder %s79, %s80
      %p92 = scmp.eq.s32.totalorder %s28, 1
      %p93 = por %p91, %p92
      %p95 = scmp.ne.s32.totalorder %s80, %s94
      %p96 = scmp.eq.s32.totalorder %s28, 0
      %p97 = por %p95, %p96
      %s99 = sadd.s32 %s98, 1
      %p102 = scmp.eq.s32.totalorder %s22, 1
      %p103 = scmp.ne.s32.totalorder %s98, %s100
      %p104 = scmp.eq.s32.totalorder %s22, 0
      %p105 = por %p103, %p104
      %p106 = scmp.ne.s32.totalorder %s98, %s100
      %p107 = scmp.eq.s32.totalorder %s27, 1
      %p108 = por %p106, %p107
      %p109 = scmp.ne.s32.totalorder %s100, %s101
      %p110 = scmp.eq.s32.totalorder %s27, 0
      %p111 = por %p109, %p110
      %p112 = scmp.ne.s32.totalorder %s100, %s101
      %p113 = scmp.eq.s32.totalorder %s28, 1
      %p114 = por %p112, %p113
      %p116 = scmp.ne.s32.totalorder %s101, %s115
      %p117 = scmp.eq.s32.totalorder %s28, 0
      %p118 = por %p116, %p117
      %s120 = sadd.s32 %s119, 1
      %p123 = scmp.eq.s32.totalorder %s22, 1
      %p124 = scmp.ne.s32.totalorder %s119, %s121
      %p125 = scmp.eq.s32.totalorder %s22, 0
      %p126 = por %p124, %p125
      %p127 = scmp.ne.s32.totalorder %s119, %s121
      %p128 = scmp.eq.s32.totalorder %s27, 1
      %p129 = por %p127, %p128
      %p130 = scmp.ne.s32.totalorder %s121, %s122
      %p131 = scmp.eq.s32.totalorder %s27, 0
      %p132 = por %p130, %p131
      %p133 = scmp.ne.s32.totalorder %s121, %s122
      %p134 = scmp.eq.s32.totalorder %s28, 1
      %p135 = por %p133, %p134
      %p137 = scmp.ne.s32.totalorder %s122, %s136
      %p138 = scmp.eq.s32.totalorder %s28, 0
      %p139 = por %p137, %p138
      %s141 = sadd.s32 %s140, 1
      %p144 = scmp.eq.s32.totalorder %s22, 1
      %p145 = scmp.ne.s32.totalorder %s140, %s142
      %p146 = scmp.eq.s32.totalorder %s22, 0
      %p147 = por %p145, %p146
      %p148 = scmp.ne.s32.totalorder %s140, %s142
      %p149 = scmp.eq.s32.totalorder %s27, 1
      %p150 = por %p148, %p149
      %p151 = scmp.ne.s32.totalorder %s142, %s143
      %p152 = scmp.eq.s32.totalorder %s27, 0
      %p153 = por %p151, %p152
      %p154 = scmp.ne.s32.totalorder %s142, %s143
      %p155 = scmp.eq.s32.totalorder %s28, 1
      %p156 = por %p154, %p155
      %p158 = scmp.ne.s32.totalorder %s143, %s157
      %p159 = scmp.eq.s32.totalorder %s28, 0
      %p160 = por %p158, %p159
      %s162 = sadd.s32 %s161, 1
      %p165 = scmp.eq.s32.totalorder %s22, 1
      %p166 = scmp.ne.s32.totalorder %s161, %s163
      %p167 = scmp.eq.s32.totalorder %s22, 0
      %p168 = por %p166, %p167
      %p169 = scmp.ne.s32.totalorder %s161, %s163
      %p170 = scmp.eq.s32.totalorder %s27, 1
      %p171 = por %p169, %p170
      %p172 = scmp.ne.s32.totalorder %s163, %s164
      %p173 = scmp.eq.s32.totalorder %s27, 0
      %p174 = por %p172, %p173
      %p175 = scmp.ne.s32.totalorder %s163, %s164
      %p176 = scmp.eq.s32.totalorder %s28, 1
      %p177 = por %p175, %p176
      %p179 = scmp.ne.s32.totalorder %s164, %s178
      %p180 = scmp.eq.s32.totalorder %s28, 0
      %p181 = por %p179, %p180
      %s183 = sadd.s32 %s182, 1
      %p186 = scmp.eq.s32.totalorder %s22, 1
      %p187 = scmp.ne.s32.totalorder %s182, %s184
      %p188 = scmp.eq.s32.totalorder %s22, 0
      %p189 = por %p187, %p188
      %p190 = scmp.ne.s32.totalorder %s182, %s184
      %p191 = scmp.eq.s32.totalorder %s27, 1
      %p192 = por %p190, %p191
      %p193 = scmp.ne.s32.totalorder %s184, %s185
      %p194 = scmp.eq.s32.totalorder %s27, 0
      %p195 = por %p193, %p194
      %p196 = scmp.ne.s32.totalorder %s184, %s185
      %p197 = scmp.eq.s32.totalorder %s28, 1
      %p198 = por %p196, %p197
      %p200 = scmp.ne.s32.totalorder %s185, %s199
      %p201 = scmp.eq.s32.totalorder %s28, 0
      %p202 = por %p200, %p201
      %s204 = sadd.s32 %s203, 1
      %p207 = scmp.eq.s32.totalorder %s22, 1
      %p208 = scmp.ne.s32.totalorder %s203, %s205
      %p209 = scmp.eq.s32.totalorder %s22, 0
      %p210 = por %p208, %p209
      %p211 = scmp.ne.s32.totalorder %s203, %s205
      %p212 = scmp.eq.s32.totalorder %s27, 1
      %p213 = por %p211, %p212
      %p214 = scmp.ne.s32.totalorder %s205, %s206
      %p215 = scmp.eq.s32.totalorder %s27, 0
      %p216 = por %p214, %p215
      %p217 = scmp.ne.s32.totalorder %s205, %s206
      %p218 = scmp.eq.s32.totalorder %s28, 1
      %p219 = por %p217, %p218
      %p221 = scmp.ne.s32.totalorder %s206, %s220
      %p222 = scmp.eq.s32.totalorder %s28, 0
      %p223 = por %p221, %p222
      %s225 = sadd.s32 %s224, 1
      %p228 = scmp.eq.s32.totalorder %s22, 1
      %p229 = scmp.ne.s32.totalorder %s224, %s226
      %p230 = scmp.eq.s32.totalorder %s22, 0
      %p231 = por %p229, %p230
      %p232 = scmp.ne.s32.totalorder %s224, %s226
      %p233 = scmp.eq.s32.totalorder %s27, 1
      %p234 = por %p232, %p233
      %p235 = scmp.ne.s32.totalorder %s226, %s227
      %p236 = scmp.eq.s32.totalorder %s27, 0
      %p237 = por %p235, %p236
      %p238 = scmp.ne.s32.totalorder %s226, %s227
      %p239 = scmp.eq.s32.totalorder %s28, 1
      %p240 = por %p238, %p239
      %p242 = scmp.ne.s32.totalorder %s227, %s241
      %p243 = scmp.eq.s32.totalorder %s28, 0
      %p244 = por %p242, %p243
      %s245 = ssub.s32 %s22, %s29
      %p246 = scmp.eq.s32.totalorder %s245, 0
      %s248 = sadd.s32 %s247, 1
      %s249 = scalar_select %p246, %s247, %s248
      %p252 = pneg %p246
      %p253 = scmp.eq.s32.totalorder %s22, 1
      %p254 = por %p252, %p253
      %p255 = scmp.ne.s32.totalorder %s247, %s250
      %p256 = scmp.eq.s32.totalorder %s22, 0
      %p257 = por %p255, %p256
      %p258 = scmp.ne.s32.totalorder %s247, %s250
      %p259 = scmp.eq.s32.totalorder %s27, 1
      %p260 = por %p258, %p259
      %p261 = scmp.ne.s32.totalorder %s250, %s251
      %p262 = scmp.eq.s32.totalorder %s27, 0
      %p263 = por %p261, %p262
      %p264 = scmp.ne.s32.totalorder %s250, %s251
      %p265 = scmp.eq.s32.totalorder %s28, 1
      %p266 = por %p264, %p265
      %p268 = scmp.ne.s32.totalorder %s251, %s267
      %p269 = scmp.eq.s32.totalorder %s28, 0
      %p270 = por %p268, %p269
      %p271 = scmp.le.s32.totalorder 1, %s22
      %p272 = scmp.lt.s32.totalorder %s22, 3
      %p273 = pnand %p271, %p272
      %p274 = pneg %p273
      // Predicated region
      $region9: #{tpu_custom_call.1} parent=5 // pred_check
        _
      $region10: #{tpu_custom_call.1} parent=5 // pred_check_branch
        %276 = sbr.rel (%p273) target = $region12
      $region11: #{tpu_custom_call.1} parent=5 // pred_region
        %s277 = ssub.s32 %s22, 1
        // Predicated region
        $region13: #{tpu_custom_call.1} parent=11 // pred_check
          %p278 = pneg %p69
        $region14: #{tpu_custom_call.1} parent=11 // pred_check_branch
          %280 = sbr.rel (%p278) target = $region16
        $region15: #{tpu_custom_call.1} parent=11 // pred_region
          _
        $region16: #{tpu_custom_call.1} parent=11 // pred_fallthru
          _
        // Predicated region
        $region17: #{tpu_custom_call.1} parent=11 // pred_check
          %p281 = pneg %p90
        $region18: #{tpu_custom_call.1} parent=11 // pred_check_branch
          %283 = sbr.rel (%p281) target = $region20
        $region19: #{tpu_custom_call.1} parent=11 // pred_region
          _
        $region20: #{tpu_custom_call.1} parent=11 // pred_fallthru
          _
        // Predicated region
        $region21: #{tpu_custom_call.1} parent=11 // pred_check
          %p284 = pneg %p111
        $region22: #{tpu_custom_call.1} parent=11 // pred_check_branch
          %286 = sbr.rel (%p284) target = $region24
        $region23: #{tpu_custom_call.1} parent=11 // pred_region
          _
        $region24: #{tpu_custom_call.1} parent=11 // pred_fallthru
          _
        // Predicated region
        $region25: #{tpu_custom_call.1} parent=11 // pred_check
          %p287 = pneg %p132
        $region26: #{tpu_custom_call.1} parent=11 // pred_check_branch
          %289 = sbr.rel (%p287) target = $region28
        $region27: #{tpu_custom_call.1} parent=11 // pred_region
          _
        $region28: #{tpu_custom_call.1} parent=11 // pred_fallthru
          _
        // Predicated region
        $region29: #{tpu_custom_call.1} parent=11 // pred_check
          %p290 = pneg %p153
        $region30: #{tpu_custom_call.1} parent=11 // pred_check_branch
          %292 = sbr.rel (%p290) target = $region32
        $region31: #{tpu_custom_call.1} parent=11 // pred_region
          _
        $region32: #{tpu_custom_call.1} parent=11 // pred_fallthru
          _
        // Predicated region
        $region33: #{tpu_custom_call.1} parent=11 // pred_check
          %p293 = pneg %p174
        $region34: #{tpu_custom_call.1} parent=11 // pred_check_branch
          %295 = sbr.rel (%p293) target = $region36
        $region35: #{tpu_custom_call.1} parent=11 // pred_region
          _
        $region36: #{tpu_custom_call.1} parent=11 // pred_fallthru
          _
        // Predicated region
        $region37: #{tpu_custom_call.1} parent=11 // pred_check
          %p296 = pneg %p195
        $region38: #{tpu_custom_call.1} parent=11 // pred_check_branch
          %298 = sbr.rel (%p296) target = $region40
        $region39: #{tpu_custom_call.1} parent=11 // pred_region
          _
        $region40: #{tpu_custom_call.1} parent=11 // pred_fallthru
          _
        // Predicated region
        $region41: #{tpu_custom_call.1} parent=11 // pred_check
          %p299 = pneg %p216
        $region42: #{tpu_custom_call.1} parent=11 // pred_check_branch
          %301 = sbr.rel (%p299) target = $region44
        $region43: #{tpu_custom_call.1} parent=11 // pred_region
          _
        $region44: #{tpu_custom_call.1} parent=11 // pred_fallthru
          _
        // Predicated region
        $region45: #{tpu_custom_call.1} parent=11 // pred_check
          %p302 = pneg %p237
        $region46: #{tpu_custom_call.1} parent=11 // pred_check_branch
          %304 = sbr.rel (%p302) target = $region48
        $region47: #{tpu_custom_call.1} parent=11 // pred_region
          _
        $region48: #{tpu_custom_call.1} parent=11 // pred_fallthru
          _
      $region12: #{tpu_custom_call.1} parent=5 // pred_fallthru
        _
      %p305 = scmp.lt.s32.totalorder %s22, 2
      // Predicated region
      $region49: #{tpu_custom_call.1} parent=5 // pred_check
        %p306 = pneg %p305
      $region50: #{tpu_custom_call.1} parent=5 // pred_check_branch
        %308 = sbr.rel (%p306) target = $region52
      $region51: #{tpu_custom_call.1} parent=5 // pred_region
        // Predicated region
        $region53: #{tpu_custom_call.1} parent=51 // pred_check
          %p309 = pneg %p42
        $region54: #{tpu_custom_call.1} parent=51 // pred_check_branch
          %311 = sbr.rel (%p309) target = $region56
        $region55: #{tpu_custom_call.1} parent=51 // pred_region
          %s312 = sand.u32 %s32, 1
          %s313 = scalar_lea.sflag [#allocation4], %s312
          %s314 = sand.u32 %s32, 1
          %s315 = smul.addr %s314, 256
          %s316 = scalar_lea.vmem [#allocation3], %s315
          %s318 = ssub.s32 4096, 4096
          %319 = vsyncadd %s313, %s318
          %s320 = smul.addr %s22, 32
          %s321 = smul.addr %s320, 128
          %s322 = scalar_lea.hbm %s0, %s321
          %s323 = sshll.u32 %s316, 4
          %s324 = int_to_ptr.vmem [resolvable:$true] %s323
          %329 = dma.hbm_to_vmem [thread:$0]  %s322, 4096, %s324, %s313, 128, 128, 8
        $region56: #{tpu_custom_call.1} parent=51 // pred_fallthru
          _
      $region52: #{tpu_custom_call.1} parent=5 // pred_fallthru
        _
      %p330 = scmp.le.s32.totalorder 1, %s22
      %p331 = scmp.lt.s32.totalorder %s22, 3
      %p332 = pnand %p330, %p331
      %p333 = pneg %p332
      // Predicated region
      $region57: #{tpu_custom_call.1} parent=5 // pred_check
        _
      $region58: #{tpu_custom_call.1} parent=5 // pred_check_branch
        %335 = sbr.rel (%p332) target = $region60
      $region59: #{tpu_custom_call.1} parent=5 // pred_region
        %s336 = ssub.s32 %s22, 1
        %s337 = sand.u32 %s35, 1
        %s338 = scalar_lea.sflag [#allocation4], %s337
        %s339 = sand.u32 %s35, 1
        %s340 = smul.addr %s339, 256
        %s341 = scalar_lea.vmem [#allocation3], %s340
        // Predicated region
        $region61: #{tpu_custom_call.1} parent=59 // pred_check
          %p342 = pneg %p48
        $region62: #{tpu_custom_call.1} parent=59 // pred_check_branch
          %344 = sbr.rel (%p342) target = $region64
        $region63: #{tpu_custom_call.1} parent=59 // pred_region
          %345 = dma.done %s338, 4096
        $region64: #{tpu_custom_call.1} parent=59 // pred_fallthru
          _
        %s346 = sand.u32 %s35, 1
        %s347 = scalar_lea.sflag [#allocation4], %s346
        %s348 = sand.u32 %s35, 1
        %s349 = smul.addr %s348, 256
        %s350 = scalar_lea.vmem [#allocation3], %s349
        %p351 = pneg %p48
        %p352 = pneg %p45
        %p353 = pneg %p69
        %p354 = pneg %p66
        %p355 = pneg %p90
        %p356 = pneg %p87
        %p357 = pneg %p111
        %p358 = pneg %p108
        %p359 = pneg %p132
        %p360 = pneg %p129
        %p361 = pneg %p153
        %p362 = pneg %p150
        %p363 = pneg %p174
        %p364 = pneg %p171
        %p365 = pneg %p195
        %p366 = pneg %p192
        %p367 = pneg %p216
        %p368 = pneg %p213
        %p369 = pneg %p237
        %p370 = pneg %p234
        %p371 = pneg %p263
        %p372 = pneg %p260
        %s373 = sand.u32 %s250, 1
        %s374 = scalar_lea.sflag [#allocation5], %s373
        %s375 = sand.u32 %s250, 1
        %s376 = smul.addr %s375, 256
        %s377 = scalar_lea.vmem [#allocation6], %s376
        %v379 = vld [vmem:[%s341] sm:$0xff]
        %v380 = vld [vmem:[%s341 + $0x8] sm:$0xff]
        %v381 = vld [vmem:[%s341 + $0x10] sm:$0xff]
        %v382 = vld [vmem:[%s341 + $0x18] sm:$0xff]
        %v383 = vld [vmem:[%s341 + $0x20] sm:$0xff]
        %v384 = vld [vmem:[%s341 + $0x28] sm:$0xff]
        %v385 = vld [vmem:[%s341 + $0x30] sm:$0xff]
        %v386 = vld [vmem:[%s341 + $0x38] sm:$0xff]
        %v387 = vld [vmem:[%s341 + $0x40] sm:$0xff]
        %v388 = vld [vmem:[%s341 + $0x48] sm:$0xff]
        %v389 = vld [vmem:[%s341 + $0x50] sm:$0xff]
        %v390 = vld [vmem:[%s341 + $0x58] sm:$0xff]
        %v391 = vld [vmem:[%s341 + $0x60] sm:$0xff]
        %v392 = vld [vmem:[%s341 + $0x68] sm:$0xff]
        %v393 = vld [vmem:[%s341 + $0x70] sm:$0xff]
        %v394 = vld [vmem:[%s341 + $0x78] sm:$0xff]
        %v395 = vld [vmem:[%s341 + $0x80] sm:$0xff]
        %v396 = vld [vmem:[%s341 + $0x88] sm:$0xff]
        %v397 = vld [vmem:[%s341 + $0x90] sm:$0xff]
        %v398 = vld [vmem:[%s341 + $0x98] sm:$0xff]
        %v399 = vld [vmem:[%s341 + $0xa0] sm:$0xff]
        %v400 = vld [vmem:[%s341 + $0xa8] sm:$0xff]
        %v401 = vld [vmem:[%s341 + $0xb0] sm:$0xff]
        %v402 = vld [vmem:[%s341 + $0xb8] sm:$0xff]
        %v403 = vld [vmem:[%s341 + $0xc0] sm:$0xff]
        %v404 = vld [vmem:[%s341 + $0xc8] sm:$0xff]
        %v405 = vld [vmem:[%s341 + $0xd0] sm:$0xff]
        %v406 = vld [vmem:[%s341 + $0xd8] sm:$0xff]
        %v407 = vld [vmem:[%s341 + $0xe0] sm:$0xff]
        %v408 = vld [vmem:[%s341 + $0xe8] sm:$0xff]
        %v409 = vld [vmem:[%s341 + $0xf0] sm:$0xff]
        %v410 = vld [vmem:[%s341 + $0xf8] sm:$0xff]
        %vm411 = vcmask 261120
        %412 = vst.msk [vmem:[#allocation2] sm:$0xff] %vm411, 0.0
        %413 = vst.msk [vmem:[#allocation2 + $0x8] sm:$0xff] %vm411, 0.0
        %vm414 = vcmask 259072
        %415 = vst.msk [vmem:[#allocation2 + $0x10] sm:$0x3f] %vm414, 0.0
        %416 = vst.msk [vmem:[#allocation2 + $0x18] sm:$0xff] %vm411, 0.0
        %417 = vst.msk [vmem:[#allocation2 + $0x20] sm:$0xff] %vm411, 0.0
        %418 = vst.msk [vmem:[#allocation2 + $0x28] sm:$0x3f] %vm414, 0.0
        %419 = vst.msk [vmem:[#allocation2 + $0x30] sm:$0xff] %vm411, 0.0
        %420 = vst.msk [vmem:[#allocation2 + $0x38] sm:$0xff] %vm411, 0.0
        %421 = vst.msk [vmem:[#allocation2 + $0x40] sm:$0x3f] %vm414, 0.0
        %422 = vst.msk [vmem:[#allocation2 + $0x48] sm:$0xff] %vm411, 0.0
        %423 = vst.msk [vmem:[#allocation2 + $0x50] sm:$0xff] %vm411, 0.0
        %424 = vst.msk [vmem:[#allocation2 + $0x58] sm:$0x3f] %vm414, 0.0
        %425 = vst.msk [vmem:[#allocation2 + $0x60] sm:$0xff] %vm411, 0.0
        %426 = vst.msk [vmem:[#allocation2 + $0x68] sm:$0xff] %vm411, 0.0
        %427 = vst.msk [vmem:[#allocation2 + $0x70] sm:$0x3f] %vm414, 0.0
        %428 = vst.msk [vmem:[#allocation2 + $0x78] sm:$0xff] %vm411, 0.0
        %429 = vst.msk [vmem:[#allocation2 + $0x80] sm:$0xff] %vm411, 0.0
        %430 = vst.msk [vmem:[#allocation2 + $0x88] sm:$0x3f] %vm414, 0.0
        %431 = vst.msk [vmem:[#allocation2 + $0x90] sm:$0xff] %vm411, 0.0
        %432 = vst.msk [vmem:[#allocation2 + $0x98] sm:$0xff] %vm411, 0.0
        %433 = vst.msk [vmem:[#allocation2 + $0xa0] sm:$0x3f] %vm414, 0.0
        %434 = vst.msk [vmem:[#allocation2 + $0xa8] sm:$0xff] %vm411, 0.0
        %435 = vst.msk [vmem:[#allocation2 + $0xb0] sm:$0xff] %vm411, 0.0
        %436 = vst.msk [vmem:[#allocation2 + $0xb8] sm:$0x3f] %vm414, 0.0
        %437 = vst.msk [vmem:[#allocation2 + $0xc0] sm:$0xff] %vm411, 0.0
        %438 = vst.msk [vmem:[#allocation2 + $0xc8] sm:$0xff] %vm411, 0.0
        %439 = vst.msk [vmem:[#allocation2 + $0xd0] sm:$0x3f] %vm414, 0.0
        %440 = vst.msk [vmem:[#allocation2 + $0xd8] sm:$0xff] %vm411, 0.0
        %441 = vst.msk [vmem:[#allocation2 + $0xe0] sm:$0xff] %vm411, 0.0
        %442 = vst.msk [vmem:[#allocation2 + $0xe8] sm:$0x3f] %vm414, 0.0
        %443 = vst.msk [vmem:[#allocation2 + $0xf0] sm:$0xff] %vm411, 0.0
        %444 = vst.msk [vmem:[#allocation2 + $0xf8] sm:$0xff] %vm411, 0.0
        %445 = vst.msk [vmem:[#allocation2 + $0x100] sm:$0x3f] %vm414, 0.0
        %446 = vst.msk [vmem:[#allocation2 + $0x108] sm:$0xff] %vm411, 0.0
        %447 = vst.msk [vmem:[#allocation2 + $0x110] sm:$0xff] %vm411, 0.0
        %448 = vst.msk [vmem:[#allocation2 + $0x118] sm:$0x3f] %vm414, 0.0
        %449 = vst.msk [vmem:[#allocation2 + $0x120] sm:$0xff] %vm411, 0.0
        %450 = vst.msk [vmem:[#allocation2 + $0x128] sm:$0xff] %vm411, 0.0
        %451 = vst.msk [vmem:[#allocation2 + $0x130] sm:$0x3f] %vm414, 0.0
        %452 = vst.msk [vmem:[#allocation2 + $0x138] sm:$0xff] %vm411, 0.0
        %453 = vst.msk [vmem:[#allocation2 + $0x140] sm:$0xff] %vm411, 0.0
        %454 = vst.msk [vmem:[#allocation2 + $0x148] sm:$0x3f] %vm414, 0.0
        %455 = vst.msk [vmem:[#allocation2 + $0x150] sm:$0xff] %vm411, 0.0
        %456 = vst.msk [vmem:[#allocation2 + $0x158] sm:$0xff] %vm411, 0.0
        %457 = vst.msk [vmem:[#allocation2 + $0x160] sm:$0x3f] %vm414, 0.0
        %458 = vst.msk [vmem:[#allocation2 + $0x168] sm:$0xff] %vm411, 0.0
        %459 = vst.msk [vmem:[#allocation2 + $0x170] sm:$0xff] %vm411, 0.0
        %460 = vst.msk [vmem:[#allocation2 + $0x178] sm:$0x3f] %vm414, 0.0
        %461 = vst.msk [vmem:[#allocation2 + $0x180] sm:$0xff] %vm411, 0.0
        %462 = vst.msk [vmem:[#allocation2 + $0x188] sm:$0xff] %vm411, 0.0
        %463 = vst.msk [vmem:[#allocation2 + $0x190] sm:$0x3f] %vm414, 0.0
        %464 = vst.msk [vmem:[#allocation2 + $0x198] sm:$0xff] %vm411, 0.0
        %465 = vst.msk [vmem:[#allocation2 + $0x1a0] sm:$0xff] %vm411, 0.0
        %466 = vst.msk [vmem:[#allocation2 + $0x1a8] sm:$0x3f] %vm414, 0.0
        %467 = vst.msk [vmem:[#allocation2 + $0x1b0] sm:$0xff] %vm411, 0.0
        %468 = vst.msk [vmem:[#allocation2 + $0x1b8] sm:$0xff] %vm411, 0.0
        %469 = vst.msk [vmem:[#allocation2 + $0x1c0] sm:$0x3f] %vm414, 0.0
        %470 = vst.msk [vmem:[#allocation2 + $0x1c8] sm:$0xff] %vm411, 0.0
        %471 = vst.msk [vmem:[#allocation2 + $0x1d0] sm:$0xff] %vm411, 0.0
        %472 = vst.msk [vmem:[#allocation2 + $0x1d8] sm:$0x3f] %vm414, 0.0
        %473 = vst.msk [vmem:[#allocation2 + $0x1e0] sm:$0xff] %vm411, 0.0
        %474 = vst.msk [vmem:[#allocation2 + $0x1e8] sm:$0xff] %vm411, 0.0
        %475 = vst.msk [vmem:[#allocation2 + $0x1f0] sm:$0x3f] %vm414, 0.0
        %476 = vst.msk [vmem:[#allocation2 + $0x1f8] sm:$0xff] %vm411, 0.0
        %477 = vst.msk [vmem:[#allocation2 + $0x200] sm:$0xff] %vm411, 0.0
        %478 = vst.msk [vmem:[#allocation2 + $0x208] sm:$0x3f] %vm414, 0.0
        %s479 = scalar_lea.vmem [#allocation2], 72
        %480 = vst.msk [vmem:[%s479 + $0x3] sm:$0xff] %vm411, %v379
        %481 = vst.msk [vmem:[%s479 + $0xb] sm:$0xff] %vm411, %v380
        %482 = vst.msk [vmem:[%s479 + $0x1b] sm:$0xff] %vm411, %v381
        %483 = vst.msk [vmem:[%s479 + $0x23] sm:$0xff] %vm411, %v382
        %484 = vst.msk [vmem:[%s479 + $0x33] sm:$0xff] %vm411, %v383
        %485 = vst.msk [vmem:[%s479 + $0x3b] sm:$0xff] %vm411, %v384
        %486 = vst.msk [vmem:[%s479 + $0x4b] sm:$0xff] %vm411, %v385
        %487 = vst.msk [vmem:[%s479 + $0x53] sm:$0xff] %vm411, %v386
        %488 = vst.msk [vmem:[%s479 + $0x63] sm:$0xff] %vm411, %v387
        %489 = vst.msk [vmem:[%s479 + $0x6b] sm:$0xff] %vm411, %v388
        %490 = vst.msk [vmem:[%s479 + $0x7b] sm:$0xff] %vm411, %v389
        %491 = vst.msk [vmem:[%s479 + $0x83] sm:$0xff] %vm411, %v390
        %492 = vst.msk [vmem:[%s479 + $0x93] sm:$0xff] %vm411, %v391
        %493 = vst.msk [vmem:[%s479 + $0x9b] sm:$0xff] %vm411, %v392
        %494 = vst.msk [vmem:[%s479 + $0xab] sm:$0xff] %vm411, %v393
        %495 = vst.msk [vmem:[%s479 + $0xb3] sm:$0xff] %vm411, %v394
        %496 = vst.msk [vmem:[%s479 + $0xc3] sm:$0xff] %vm411, %v395
        %497 = vst.msk [vmem:[%s479 + $0xcb] sm:$0xff] %vm411, %v396
        %498 = vst.msk [vmem:[%s479 + $0xdb] sm:$0xff] %vm411, %v397
        %499 = vst.msk [vmem:[%s479 + $0xe3] sm:$0xff] %vm411, %v398
        %500 = vst.msk [vmem:[%s479 + $0xf3] sm:$0xff] %vm411, %v399
        %501 = vst.msk [vmem:[%s479 + $0xfb] sm:$0xff] %vm411, %v400
        %502 = vst.msk [vmem:[%s479 + $0x10b] sm:$0xff] %vm411, %v401
        %503 = vst.msk [vmem:[%s479 + $0x113] sm:$0xff] %vm411, %v402
        %504 = vst.msk [vmem:[%s479 + $0x123] sm:$0xff] %vm411, %v403
        %505 = vst.msk [vmem:[%s479 + $0x12b] sm:$0xff] %vm411, %v404
        %506 = vst.msk [vmem:[%s479 + $0x13b] sm:$0xff] %vm411, %v405
        %507 = vst.msk [vmem:[%s479 + $0x143] sm:$0xff] %vm411, %v406
        %508 = vst.msk [vmem:[%s479 + $0x153] sm:$0xff] %vm411, %v407
        %509 = vst.msk [vmem:[%s479 + $0x15b] sm:$0xff] %vm411, %v408
        %510 = vst.msk [vmem:[%s479 + $0x16b] sm:$0xff] %vm411, %v409
        %511 = vst.msk [vmem:[%s479 + $0x173] sm:$0xff] %vm411, %v410
        %v512 = vld [vmem:[#allocation2] sm:$0xff]
        %v513 = vld [vmem:[#allocation2 + $0x8] sm:$0xff]
        %v514 = vld [vmem:[#allocation2 + $0x10] sm:$0x3f]
        %v515 = vld [vmem:[#allocation2 + $0x18] sm:$0xff]
        %v516 = vld [vmem:[#allocation2 + $0x20] sm:$0xff]
        %v517 = vld [vmem:[#allocation2 + $0x28] sm:$0x3f]
        %v518 = vld [vmem:[#allocation2 + $0x30] sm:$0xff]
        %v519 = vld [vmem:[#allocation2 + $0x38] sm:$0xff]
        %v520 = vld [vmem:[#allocation2 + $0x40] sm:$0x3f]
        %v521 = vld [vmem:[#allocation2 + $0x48] sm:$0xff]
        %v522 = vld [vmem:[#allocation2 + $0x50] sm:$0xff]
        %v523 = vld [vmem:[#allocation2 + $0x58] sm:$0x3f]
        %v524 = vld [vmem:[#allocation2 + $0x60] sm:$0xff]
        %v525 = vld [vmem:[#allocation2 + $0x68] sm:$0xff]
        %v526 = vld [vmem:[#allocation2 + $0x70] sm:$0x3f]
        %v527 = vld [vmem:[#allocation2 + $0x78] sm:$0xff]
        %v528 = vld [vmem:[#allocation2 + $0x80] sm:$0xff]
        %v529 = vld [vmem:[#allocation2 + $0x88] sm:$0x3f]
        %v530 = vld [vmem:[#allocation2 + $0x90] sm:$0xff]
        %v531 = vld [vmem:[#allocation2 + $0x98] sm:$0xff]
        %v532 = vld [vmem:[#allocation2 + $0xa0] sm:$0x3f]
        %v533 = vld [vmem:[#allocation2 + $0xa8] sm:$0xff]
        %v534 = vld [vmem:[#allocation2 + $0xb0] sm:$0xff]
        %v535 = vld [vmem:[#allocation2 + $0xb8] sm:$0x3f]
        %v536 = vld [vmem:[#allocation2 + $0xc0] sm:$0xff]
        %v537 = vld [vmem:[#allocation2 + $0xc8] sm:$0xff]
        %v538 = vld [vmem:[#allocation2 + $0xd0] sm:$0x3f]
        %v539 = vld [vmem:[#allocation2 + $0xd8] sm:$0xff]
        %v540 = vld [vmem:[#allocation2 + $0xe0] sm:$0xff]
        %v541 = vld [vmem:[#allocation2 + $0xe8] sm:$0x3f]
        %v542 = vld [vmem:[#allocation2 + $0xf0] sm:$0xff]
        %v543 = vld [vmem:[#allocation2 + $0xf8] sm:$0xff]
        %v544 = vld [vmem:[#allocation2 + $0x100] sm:$0x3f]
        %v545 = vld [vmem:[#allocation2 + $0x108] sm:$0xff]
        %v546 = vld [vmem:[#allocation2 + $0x110] sm:$0xff]
        %v547 = vld [vmem:[#allocation2 + $0x118] sm:$0x3f]
        %v548 = vld [vmem:[#allocation2 + $0x120] sm:$0xff]
        %v549 = vld [vmem:[#allocation2 + $0x128] sm:$0xff]
        %v550 = vld [vmem:[#allocation2 + $0x130] sm:$0x3f]
        %v551 = vld [vmem:[#allocation2 + $0x138] sm:$0xff]
        %v552 = vld [vmem:[#allocation2 + $0x140] sm:$0xff]
        %v553 = vld [vmem:[#allocation2 + $0x148] sm:$0x3f]
        %v554 = vld [vmem:[#allocation2 + $0x150] sm:$0xff]
        %v555 = vld [vmem:[#allocation2 + $0x158] sm:$0xff]
        %v556 = vld [vmem:[#allocation2 + $0x160] sm:$0x3f]
        %v557 = vld [vmem:[#allocation2 + $0x168] sm:$0xff]
        %v558 = vld [vmem:[#allocation2 + $0x170] sm:$0xff]
        %v559 = vld [vmem:[#allocation2 + $0x178] sm:$0x3f]
        %v560 = vld [vmem:[#allocation2 + $0x180] sm:$0xff]
        %v561 = vld [vmem:[#allocation2 + $0x188] sm:$0xff]
        %v562 = vld [vmem:[#allocation2 + $0x190] sm:$0x3f]
        %v563 = vld [vmem:[#allocation2 + $0x198] sm:$0xff]
        %v564 = vld [vmem:[#allocation2 + $0x1a0] sm:$0xff]
        %v565 = vld [vmem:[#allocation2 + $0x1a8] sm:$0x3f]
        %v566 = vld [vmem:[#allocation2 + $0x1b0] sm:$0xff]
        %v567 = vld [vmem:[#allocation2 + $0x1b8] sm:$0xff]
        %v568 = vld [vmem:[#allocation2 + $0x1c0] sm:$0x3f]
        %v569 = vld [vmem:[#allocation2 + $0x1c8] sm:$0xff]
        %v570 = vld [vmem:[#allocation2 + $0x1d0] sm:$0xff]
        %v571 = vld [vmem:[#allocation2 + $0x1d8] sm:$0x3f]
        %v572 = vld [vmem:[#allocation2 + $0x1e0] sm:$0xff]
        %v573 = vld [vmem:[#allocation2 + $0x1e8] sm:$0xff]
        %v574 = vld [vmem:[#allocation2 + $0x1f0] sm:$0x3f]
        %v575 = vld [vmem:[#allocation2 + $0x1f8] sm:$0xff]
        %v576 = vld [vmem:[#allocation2 + $0x200] sm:$0xff]
        %v577 = vld [vmem:[#allocation2 + $0x208] sm:$0x3f]
        %v578 = vld [vmem:[%s1] sm:$0xff]
        %v579 = vld [vmem:[%s1 + $0x8] sm:$0xff]
        %v580 = vld [vmem:[%s1 + $0x10] sm:$0xff]
        %v581 = vld [vmem:[%s1 + $0x18] sm:$0xff]
        %v582 = vld [vmem:[%s1 + $0x20] sm:$0xff]
        %v583 = vld [vmem:[%s1 + $0x28] sm:$0xff]
        %v584 = vld [vmem:[%s1 + $0x30] sm:$0x1]
        %v585 = vlaneseq
        %v586 = vshrl.u32 %v585, 7
        %v587 = vsub.s32 0, %v586
        %v588 = vrot.slane %v578, %v587
        %v589 = vmul.f32 %v512, %v588
        %v590 = vmul.f32 %v513, %v588
        %v591 = vmul.f32 %v515, %v588
        %v592 = vmul.f32 %v516, %v588
        %v593 = vmul.f32 %v518, %v588
        %v594 = vmul.f32 %v519, %v588
        %v595 = vmul.f32 %v521, %v588
        %v596 = vmul.f32 %v522, %v588
        %v597 = vmul.f32 %v524, %v588
        %v598 = vmul.f32 %v525, %v588
        %v599 = vmul.f32 %v527, %v588
        %v600 = vmul.f32 %v528, %v588
        %v601 = vmul.f32 %v530, %v588
        %v602 = vmul.f32 %v531, %v588
        %v603 = vmul.f32 %v533, %v588
        %v604 = vmul.f32 %v534, %v588
        %v605 = vmul.f32 %v536, %v588
        %v606 = vmul.f32 %v537, %v588
        %v607 = vmul.f32 %v539, %v588
        %v608 = vmul.f32 %v540, %v588
        %v609 = vmul.f32 %v542, %v588
        %v610 = vmul.f32 %v543, %v588
        %v611 = vmul.f32 %v545, %v588
        %v612 = vmul.f32 %v546, %v588
        %v613 = vmul.f32 %v548, %v588
        %v614 = vmul.f32 %v549, %v588
        %v615 = vmul.f32 %v551, %v588
        %v616 = vmul.f32 %v552, %v588
        %v617 = vmul.f32 %v554, %v588
        %v618 = vmul.f32 %v555, %v588
        %v619 = vmul.f32 %v557, %v588
        %v620 = vmul.f32 %v558, %v588
        %v621 = vadd.f32 %v589, 0.0
        %v622 = vadd.f32 %v590, 0.0
        %v623 = vadd.f32 %v591, 0.0
        %v624 = vadd.f32 %v592, 0.0
        %v625 = vadd.f32 %v593, 0.0
        %v626 = vadd.f32 %v594, 0.0
        %v627 = vadd.f32 %v595, 0.0
        %v628 = vadd.f32 %v596, 0.0
        %v629 = vadd.f32 %v597, 0.0
        %v630 = vadd.f32 %v598, 0.0
        %v631 = vadd.f32 %v599, 0.0
        %v632 = vadd.f32 %v600, 0.0
        %v633 = vadd.f32 %v601, 0.0
        %v634 = vadd.f32 %v602, 0.0
        %v635 = vadd.f32 %v603, 0.0
        %v636 = vadd.f32 %v604, 0.0
        %v637 = vadd.f32 %v605, 0.0
        %v638 = vadd.f32 %v606, 0.0
        %v639 = vadd.f32 %v607, 0.0
        %v640 = vadd.f32 %v608, 0.0
        %v641 = vadd.f32 %v609, 0.0
        %v642 = vadd.f32 %v610, 0.0
        %v643 = vadd.f32 %v611, 0.0
        %v644 = vadd.f32 %v612, 0.0
        %v645 = vadd.f32 %v613, 0.0
        %v646 = vadd.f32 %v614, 0.0
        %v647 = vadd.f32 %v615, 0.0
        %v648 = vadd.f32 %v616, 0.0
        %v649 = vadd.f32 %v617, 0.0
        %v650 = vadd.f32 %v618, 0.0
        %v651 = vadd.f32 %v619, 0.0
        %v652 = vadd.f32 %v620, 0.0
        %v653 = vlaneseq
        %v654 = vshrl.u32 %v653, 7
        %v655 = vsub.s32 1, %v654
        %v656 = vrot.slane %v578, %v655
        %v657 = vmul.f32 %v512, %v656
        %v658 = vmul.f32 %v513, %v656
        %v659 = vmul.f32 %v514, %v656
        %v660 = vmul.f32 %v515, %v656
        %v661 = vmul.f32 %v516, %v656
        %v662 = vmul.f32 %v517, %v656
        %v663 = vmul.f32 %v518, %v656
        %v664 = vmul.f32 %v519, %v656
        %v665 = vmul.f32 %v520, %v656
        %v666 = vmul.f32 %v521, %v656
        %v667 = vmul.f32 %v522, %v656
        %v668 = vmul.f32 %v523, %v656
        %v669 = vmul.f32 %v524, %v656
        %v670 = vmul.f32 %v525, %v656
        %v671 = vmul.f32 %v526, %v656
        %v672 = vmul.f32 %v527, %v656
        %v673 = vmul.f32 %v528, %v656
        %v674 = vmul.f32 %v529, %v656
        %v675 = vmul.f32 %v530, %v656
        %v676 = vmul.f32 %v531, %v656
        %v677 = vmul.f32 %v532, %v656
        %v678 = vmul.f32 %v533, %v656
        %v679 = vmul.f32 %v534, %v656
        %v680 = vmul.f32 %v535, %v656
        %v681 = vmul.f32 %v536, %v656
        %v682 = vmul.f32 %v537, %v656
        %v683 = vmul.f32 %v538, %v656
        %v684 = vmul.f32 %v539, %v656
        %v685 = vmul.f32 %v540, %v656
        %v686 = vmul.f32 %v541, %v656
        %v687 = vmul.f32 %v542, %v656
        %v688 = vmul.f32 %v543, %v656
        %v689 = vmul.f32 %v544, %v656
        %v690 = vmul.f32 %v545, %v656
        %v691 = vmul.f32 %v546, %v656
        %v692 = vmul.f32 %v547, %v656
        %v693 = vmul.f32 %v548, %v656
        %v694 = vmul.f32 %v549, %v656
        %v695 = vmul.f32 %v550, %v656
        %v696 = vmul.f32 %v551, %v656
        %v697 = vmul.f32 %v552, %v656
        %v698 = vmul.f32 %v553, %v656
        %v699 = vmul.f32 %v554, %v656
        %v700 = vmul.f32 %v555, %v656
        %v701 = vmul.f32 %v556, %v656
        %v702 = vmul.f32 %v557, %v656
        %v703 = vmul.f32 %v558, %v656
        %v704 = vmul.f32 %v559, %v656
        %vm753 = vcmask 1046528
        %v754 = vrot.slane %v657, 1
        %v755 = vrot.slane %v658, 1
        %v756 = vsel %vm753, %v754, %v755
        %v757 = vrot.slane %v659, 1
        %v758 = vsel %vm753, %v755, %v757
        %v759 = vrot.slane %v660, 1
        %v760 = vrot.slane %v661, 1
        %v761 = vsel %vm753, %v759, %v760
        %v762 = vrot.slane %v662, 1
        %v763 = vsel %vm753, %v760, %v762
        %v764 = vrot.slane %v663, 1
        %v765 = vrot.slane %v664, 1
        %v766 = vsel %vm753, %v764, %v765
        %v767 = vrot.slane %v665, 1
        %v768 = vsel %vm753, %v765, %v767
        %v769 = vrot.slane %v666, 1
        %v770 = vrot.slane %v667, 1
        %v771 = vsel %vm753, %v769, %v770
        %v772 = vrot.slane %v668, 1
        %v773 = vsel %vm753, %v770, %v772
        %v774 = vrot.slane %v669, 1
        %v775 = vrot.slane %v670, 1
        %v776 = vsel %vm753, %v774, %v775
        %v777 = vrot.slane %v671, 1
        %v778 = vsel %vm753, %v775, %v777
        %v779 = vrot.slane %v672, 1
        %v780 = vrot.slane %v673, 1
        %v781 = vsel %vm753, %v779, %v780
        %v782 = vrot.slane %v674, 1
        %v783 = vsel %vm753, %v780, %v782
        %v784 = vrot.slane %v675, 1
        %v785 = vrot.slane %v676, 1
        %v786 = vsel %vm753, %v784, %v785
        %v787 = vrot.slane %v677, 1
        %v788 = vsel %vm753, %v785, %v787
        %v789 = vrot.slane %v678, 1
        %v790 = vrot.slane %v679, 1
        %v791 = vsel %vm753, %v789, %v790
        %v792 = vrot.slane %v680, 1
        %v793 = vsel %vm753, %v790, %v792
        %v794 = vrot.slane %v681, 1
        %v795 = vrot.slane %v682, 1
        %v796 = vsel %vm753, %v794, %v795
        %v797 = vrot.slane %v683, 1
        %v798 = vsel %vm753, %v795, %v797
        %v799 = vrot.slane %v684, 1
        %v800 = vrot.slane %v685, 1
        %v801 = vsel %vm753, %v799, %v800
        %v802 = vrot.slane %v686, 1
        %v803 = vsel %vm753, %v800, %v802
        %v804 = vrot.slane %v687, 1
        %v805 = vrot.slane %v688, 1
        %v806 = vsel %vm753, %v804, %v805
        %v807 = vrot.slane %v689, 1
        %v808 = vsel %vm753, %v805, %v807
        %v809 = vrot.slane %v690, 1
        %v810 = vrot.slane %v691, 1
        %v811 = vsel %vm753, %v809, %v810
        %v812 = vrot.slane %v692, 1
        %v813 = vsel %vm753, %v810, %v812
        %v814 = vrot.slane %v693, 1
        %v815 = vrot.slane %v694, 1
        %v816 = vsel %vm753, %v814, %v815
        %v817 = vrot.slane %v695, 1
        %v818 = vsel %vm753, %v815, %v817
        %v819 = vrot.slane %v696, 1
        %v820 = vrot.slane %v697, 1
        %v821 = vsel %vm753, %v819, %v820
        %v822 = vrot.slane %v698, 1
        %v823 = vsel %vm753, %v820, %v822
        %v824 = vrot.slane %v699, 1
        %v825 = vrot.slane %v700, 1
        %v826 = vsel %vm753, %v824, %v825
        %v827 = vrot.slane %v701, 1
        %v828 = vsel %vm753, %v825, %v827
        %v829 = vrot.slane %v702, 1
        %v830 = vrot.slane %v703, 1
        %v831 = vsel %vm753, %v829, %v830
        %v832 = vrot.slane %v704, 1
        %v833 = vsel %vm753, %v830, %v832
        %v866 = vadd.f32 %v621, %v756
        %v867 = vadd.f32 %v622, %v758
        %v868 = vadd.f32 %v623, %v761
        %v869 = vadd.f32 %v624, %v763
        %v870 = vadd.f32 %v625, %v766
        %v871 = vadd.f32 %v626, %v768
        %v872 = vadd.f32 %v627, %v771
        %v873 = vadd.f32 %v628, %v773
        %v874 = vadd.f32 %v629, %v776
        %v875 = vadd.f32 %v630, %v778
        %v876 = vadd.f32 %v631, %v781
        %v877 = vadd.f32 %v632, %v783
        %v878 = vadd.f32 %v633, %v786
        %v879 = vadd.f32 %v634, %v788
        %v880 = vadd.f32 %v635, %v791
        %v881 = vadd.f32 %v636, %v793
        %v882 = vadd.f32 %v637, %v796
        %v883 = vadd.f32 %v638, %v798
        %v884 = vadd.f32 %v639, %v801
        %v885 = vadd.f32 %v640, %v803
        %v886 = vadd.f32 %v641, %v806
        %v887 = vadd.f32 %v642, %v808
        %v888 = vadd.f32 %v643, %v811
        %v889 = vadd.f32 %v644, %v813
        %v890 = vadd.f32 %v645, %v816
        %v891 = vadd.f32 %v646, %v818
        %v892 = vadd.f32 %v647, %v821
        %v893 = vadd.f32 %v648, %v823
        %v894 = vadd.f32 %v649, %v826
        %v895 = vadd.f32 %v650, %v828
        %v896 = vadd.f32 %v651, %v831
        %v897 = vadd.f32 %v652, %v833
        %v898 = vlaneseq
        %v899 = vshrl.u32 %v898, 7
        %v900 = vsub.s32 2, %v899
        %v901 = vrot.slane %v578, %v900
        %v902 = vmul.f32 %v512, %v901
        %v903 = vmul.f32 %v513, %v901
        %v904 = vmul.f32 %v514, %v901
        %v905 = vmul.f32 %v515, %v901
        %v906 = vmul.f32 %v516, %v901
        %v907 = vmul.f32 %v517, %v901
        %v908 = vmul.f32 %v518, %v901
        %v909 = vmul.f32 %v519, %v901
        %v910 = vmul.f32 %v520, %v901
        %v911 = vmul.f32 %v521, %v901
        %v912 = vmul.f32 %v522, %v901
        %v913 = vmul.f32 %v523, %v901
        %v914 = vmul.f32 %v524, %v901
        %v915 = vmul.f32 %v525, %v901
        %v916 = vmul.f32 %v526, %v901
        %v917 = vmul.f32 %v527, %v901
        %v918 = vmul.f32 %v528, %v901
        %v919 = vmul.f32 %v529, %v901
        %v920 = vmul.f32 %v530, %v901
        %v921 = vmul.f32 %v531, %v901
        %v922 = vmul.f32 %v532, %v901
        %v923 = vmul.f32 %v533, %v901
        %v924 = vmul.f32 %v534, %v901
        %v925 = vmul.f32 %v535, %v901
        %v926 = vmul.f32 %v536, %v901
        %v927 = vmul.f32 %v537, %v901
        %v928 = vmul.f32 %v538, %v901
        %v929 = vmul.f32 %v539, %v901
        %v930 = vmul.f32 %v540, %v901
        %v931 = vmul.f32 %v541, %v901
        %v932 = vmul.f32 %v542, %v901
        %v933 = vmul.f32 %v543, %v901
        %v934 = vmul.f32 %v544, %v901
        %v935 = vmul.f32 %v545, %v901
        %v936 = vmul.f32 %v546, %v901
        %v937 = vmul.f32 %v547, %v901
        %v938 = vmul.f32 %v548, %v901
        %v939 = vmul.f32 %v549, %v901
        %v940 = vmul.f32 %v550, %v901
        %v941 = vmul.f32 %v551, %v901
        %v942 = vmul.f32 %v552, %v901
        %v943 = vmul.f32 %v553, %v901
        %v944 = vmul.f32 %v554, %v901
        %v945 = vmul.f32 %v555, %v901
        %v946 = vmul.f32 %v556, %v901
        %v947 = vmul.f32 %v557, %v901
        %v948 = vmul.f32 %v558, %v901
        %v949 = vmul.f32 %v559, %v901
        %vm998 = vcmask 1045504
        %v999 = vrot.slane %v902, 2
        %v1000 = vrot.slane %v903, 2
        %v1001 = vsel %vm998, %v999, %v1000
        %v1002 = vrot.slane %v904, 2
        %v1003 = vsel %vm998, %v1000, %v1002
        %v1004 = vrot.slane %v905, 2
        %v1005 = vrot.slane %v906, 2
        %v1006 = vsel %vm998, %v1004, %v1005
        %v1007 = vrot.slane %v907, 2
        %v1008 = vsel %vm998, %v1005, %v1007
        %v1009 = vrot.slane %v908, 2
        %v1010 = vrot.slane %v909, 2
        %v1011 = vsel %vm998, %v1009, %v1010
        %v1012 = vrot.slane %v910, 2
        %v1013 = vsel %vm998, %v1010, %v1012
        %v1014 = vrot.slane %v911, 2
        %v1015 = vrot.slane %v912, 2
        %v1016 = vsel %vm998, %v1014, %v1015
        %v1017 = vrot.slane %v913, 2
        %v1018 = vsel %vm998, %v1015, %v1017
        %v1019 = vrot.slane %v914, 2
        %v1020 = vrot.slane %v915, 2
        %v1021 = vsel %vm998, %v1019, %v1020
        %v1022 = vrot.slane %v916, 2
        %v1023 = vsel %vm998, %v1020, %v1022
        %v1024 = vrot.slane %v917, 2
        %v1025 = vrot.slane %v918, 2
        %v1026 = vsel %vm998, %v1024, %v1025
        %v1027 = vrot.slane %v919, 2
        %v1028 = vsel %vm998, %v1025, %v1027
        %v1029 = vrot.slane %v920, 2
        %v1030 = vrot.slane %v921, 2
        %v1031 = vsel %vm998, %v1029, %v1030
        %v1032 = vrot.slane %v922, 2
        %v1033 = vsel %vm998, %v1030, %v1032
        %v1034 = vrot.slane %v923, 2
        %v1035 = vrot.slane %v924, 2
        %v1036 = vsel %vm998, %v1034, %v1035
        %v1037 = vrot.slane %v925, 2
        %v1038 = vsel %vm998, %v1035, %v1037
        %v1039 = vrot.slane %v926, 2
        %v1040 = vrot.slane %v927, 2
        %v1041 = vsel %vm998, %v1039, %v1040
        %v1042 = vrot.slane %v928, 2
        %v1043 = vsel %vm998, %v1040, %v1042
        %v1044 = vrot.slane %v929, 2
        %v1045 = vrot.slane %v930, 2
        %v1046 = vsel %vm998, %v1044, %v1045
        %v1047 = vrot.slane %v931, 2
        %v1048 = vsel %vm998, %v1045, %v1047
        %v1049 = vrot.slane %v932, 2
        %v1050 = vrot.slane %v933, 2
        %v1051 = vsel %vm998, %v1049, %v1050
        %v1052 = vrot.slane %v934, 2
        %v1053 = vsel %vm998, %v1050, %v1052
        %v1054 = vrot.slane %v935, 2
        %v1055 = vrot.slane %v936, 2
        %v1056 = vsel %vm998, %v1054, %v1055
        %v1057 = vrot.slane %v937, 2
        %v1058 = vsel %vm998, %v1055, %v1057
        %v1059 = vrot.slane %v938, 2
        %v1060 = vrot.slane %v939, 2
        %v1061 = vsel %vm998, %v1059, %v1060
        %v1062 = vrot.slane %v940, 2
        %v1063 = vsel %vm998, %v1060, %v1062
        %v1064 = vrot.slane %v941, 2
        %v1065 = vrot.slane %v942, 2
        %v1066 = vsel %vm998, %v1064, %v1065
        %v1067 = vrot.slane %v943, 2
        %v1068 = vsel %vm998, %v1065, %v1067
        %v1069 = vrot.slane %v944, 2
        %v1070 = vrot.slane %v945, 2
        %v1071 = vsel %vm998, %v1069, %v1070
        %v1072 = vrot.slane %v946, 2
        %v1073 = vsel %vm998, %v1070, %v1072
        %v1074 = vrot.slane %v947, 2
        %v1075 = vrot.slane %v948, 2
        %v1076 = vsel %vm998, %v1074, %v1075
        %v1077 = vrot.slane %v949, 2
        %v1078 = vsel %vm998, %v1075, %v1077
        %v1111 = vadd.f32 %v866, %v1001
        %v1112 = vadd.f32 %v867, %v1003
        %v1113 = vadd.f32 %v868, %v1006
        %v1114 = vadd.f32 %v869, %v1008
        %v1115 = vadd.f32 %v870, %v1011
        %v1116 = vadd.f32 %v871, %v1013
        %v1117 = vadd.f32 %v872, %v1016
        %v1118 = vadd.f32 %v873, %v1018
        %v1119 = vadd.f32 %v874, %v1021
        %v1120 = vadd.f32 %v875, %v1023
        %v1121 = vadd.f32 %v876, %v1026
        %v1122 = vadd.f32 %v877, %v1028
        %v1123 = vadd.f32 %v878, %v1031
        %v1124 = vadd.f32 %v879, %v1033
        %v1125 = vadd.f32 %v880, %v1036
        %v1126 = vadd.f32 %v881, %v1038
        %v1127 = vadd.f32 %v882, %v1041
        %v1128 = vadd.f32 %v883, %v1043
        %v1129 = vadd.f32 %v884, %v1046
        %v1130 = vadd.f32 %v885, %v1048
        %v1131 = vadd.f32 %v886, %v1051
        %v1132 = vadd.f32 %v887, %v1053
        %v1133 = vadd.f32 %v888, %v1056
        %v1134 = vadd.f32 %v889, %v1058
        %v1135 = vadd.f32 %v890, %v1061
        %v1136 = vadd.f32 %v891, %v1063
        %v1137 = vadd.f32 %v892, %v1066
        %v1138 = vadd.f32 %v893, %v1068
        %v1139 = vadd.f32 %v894, %v1071
        %v1140 = vadd.f32 %v895, %v1073
        %v1141 = vadd.f32 %v896, %v1076
        %v1142 = vadd.f32 %v897, %v1078
        %v1143 = vlaneseq
        %v1144 = vshrl.u32 %v1143, 7
        %v1145 = vsub.s32 3, %v1144
        %v1146 = vrot.slane %v578, %v1145
        %v1147 = vmul.f32 %v512, %v1146
        %v1148 = vmul.f32 %v513, %v1146
        %v1149 = vmul.f32 %v514, %v1146
        %v1150 = vmul.f32 %v515, %v1146
        %v1151 = vmul.f32 %v516, %v1146
        %v1152 = vmul.f32 %v517, %v1146
        %v1153 = vmul.f32 %v518, %v1146
        %v1154 = vmul.f32 %v519, %v1146
        %v1155 = vmul.f32 %v520, %v1146
        %v1156 = vmul.f32 %v521, %v1146
        %v1157 = vmul.f32 %v522, %v1146
        %v1158 = vmul.f32 %v523, %v1146
        %v1159 = vmul.f32 %v524, %v1146
        %v1160 = vmul.f32 %v525, %v1146
        %v1161 = vmul.f32 %v526, %v1146
        %v1162 = vmul.f32 %v527, %v1146
        %v1163 = vmul.f32 %v528, %v1146
        %v1164 = vmul.f32 %v529, %v1146
        %v1165 = vmul.f32 %v530, %v1146
        %v1166 = vmul.f32 %v531, %v1146
        %v1167 = vmul.f32 %v532, %v1146
        %v1168 = vmul.f32 %v533, %v1146
        %v1169 = vmul.f32 %v534, %v1146
        %v1170 = vmul.f32 %v535, %v1146
        %v1171 = vmul.f32 %v536, %v1146
        %v1172 = vmul.f32 %v537, %v1146
        %v1173 = vmul.f32 %v538, %v1146
        %v1174 = vmul.f32 %v539, %v1146
        %v1175 = vmul.f32 %v540, %v1146
        %v1176 = vmul.f32 %v541, %v1146
        %v1177 = vmul.f32 %v542, %v1146
        %v1178 = vmul.f32 %v543, %v1146
        %v1179 = vmul.f32 %v544, %v1146
        %v1180 = vmul.f32 %v545, %v1146
        %v1181 = vmul.f32 %v546, %v1146
        %v1182 = vmul.f32 %v547, %v1146
        %v1183 = vmul.f32 %v548, %v1146
        %v1184 = vmul.f32 %v549, %v1146
        %v1185 = vmul.f32 %v550, %v1146
        %v1186 = vmul.f32 %v551, %v1146
        %v1187 = vmul.f32 %v552, %v1146
        %v1188 = vmul.f32 %v553, %v1146
        %v1189 = vmul.f32 %v554, %v1146
        %v1190 = vmul.f32 %v555, %v1146
        %v1191 = vmul.f32 %v556, %v1146
        %v1192 = vmul.f32 %v557, %v1146
        %v1193 = vmul.f32 %v558, %v1146
        %v1194 = vmul.f32 %v559, %v1146
        %vm1243 = vcmask 1044480
        %v1244 = vrot.slane %v1147, 3
        %v1245 = vrot.slane %v1148, 3
        %v1246 = vsel %vm1243, %v1244, %v1245
        %v1247 = vrot.slane %v1149, 3
        %v1248 = vsel %vm1243, %v1245, %v1247
        %v1249 = vrot.slane %v1150, 3
        %v1250 = vrot.slane %v1151, 3
        %v1251 = vsel %vm1243, %v1249, %v1250
        %v1252 = vrot.slane %v1152, 3
        %v1253 = vsel %vm1243, %v1250, %v1252
        %v1254 = vrot.slane %v1153, 3
        %v1255 = vrot.slane %v1154, 3
        %v1256 = vsel %vm1243, %v1254, %v1255
        %v1257 = vrot.slane %v1155, 3
        %v1258 = vsel %vm1243, %v1255, %v1257
        %v1259 = vrot.slane %v1156, 3
        %v1260 = vrot.slane %v1157, 3
        %v1261 = vsel %vm1243, %v1259, %v1260
        %v1262 = vrot.slane %v1158, 3
        %v1263 = vsel %vm1243, %v1260, %v1262
        %v1264 = vrot.slane %v1159, 3
        %v1265 = vrot.slane %v1160, 3
        %v1266 = vsel %vm1243, %v1264, %v1265
        %v1267 = vrot.slane %v1161, 3
        %v1268 = vsel %vm1243, %v1265, %v1267
        %v1269 = vrot.slane %v1162, 3
        %v1270 = vrot.slane %v1163, 3
        %v1271 = vsel %vm1243, %v1269, %v1270
        %v1272 = vrot.slane %v1164, 3
        %v1273 = vsel %vm1243, %v1270, %v1272
        %v1274 = vrot.slane %v1165, 3
        %v1275 = vrot.slane %v1166, 3
        %v1276 = vsel %vm1243, %v1274, %v1275
        %v1277 = vrot.slane %v1167, 3
        %v1278 = vsel %vm1243, %v1275, %v1277
        %v1279 = vrot.slane %v1168, 3
        %v1280 = vrot.slane %v1169, 3
        %v1281 = vsel %vm1243, %v1279, %v1280
        %v1282 = vrot.slane %v1170, 3
        %v1283 = vsel %vm1243, %v1280, %v1282
        %v1284 = vrot.slane %v1171, 3
        %v1285 = vrot.slane %v1172, 3
        %v1286 = vsel %vm1243, %v1284, %v1285
        %v1287 = vrot.slane %v1173, 3
        %v1288 = vsel %vm1243, %v1285, %v1287
        %v1289 = vrot.slane %v1174, 3
        %v1290 = vrot.slane %v1175, 3
        %v1291 = vsel %vm1243, %v1289, %v1290
        %v1292 = vrot.slane %v1176, 3
        %v1293 = vsel %vm1243, %v1290, %v1292
        %v1294 = vrot.slane %v1177, 3
        %v1295 = vrot.slane %v1178, 3
        %v1296 = vsel %vm1243, %v1294, %v1295
        %v1297 = vrot.slane %v1179, 3
        %v1298 = vsel %vm1243, %v1295, %v1297
        %v1299 = vrot.slane %v1180, 3
        %v1300 = vrot.slane %v1181, 3
        %v1301 = vsel %vm1243, %v1299, %v1300
        %v1302 = vrot.slane %v1182, 3
        %v1303 = vsel %vm1243, %v1300, %v1302
        %v1304 = vrot.slane %v1183, 3
        %v1305 = vrot.slane %v1184, 3
        %v1306 = vsel %vm1243, %v1304, %v1305
        %v1307 = vrot.slane %v1185, 3
        %v1308 = vsel %vm1243, %v1305, %v1307
        %v1309 = vrot.slane %v1186, 3
        %v1310 = vrot.slane %v1187, 3
        %v1311 = vsel %vm1243, %v1309, %v1310
        %v1312 = vrot.slane %v1188, 3
        %v1313 = vsel %vm1243, %v1310, %v1312
        %v1314 = vrot.slane %v1189, 3
        %v1315 = vrot.slane %v1190, 3
        %v1316 = vsel %vm1243, %v1314, %v1315
        %v1317 = vrot.slane %v1191, 3
        %v1318 = vsel %vm1243, %v1315, %v1317
        %v1319 = vrot.slane %v1192, 3
        %v1320 = vrot.slane %v1193, 3
        %v1321 = vsel %vm1243, %v1319, %v1320
        %v1322 = vrot.slane %v1194, 3
        %v1323 = vsel %vm1243, %v1320, %v1322
        %v1356 = vadd.f32 %v1111, %v1246
        %v1357 = vadd.f32 %v1112, %v1248
        %v1358 = vadd.f32 %v1113, %v1251
        %v1359 = vadd.f32 %v1114, %v1253
        %v1360 = vadd.f32 %v1115, %v1256
        %v1361 = vadd.f32 %v1116, %v1258
        %v1362 = vadd.f32 %v1117, %v1261
        %v1363 = vadd.f32 %v1118, %v1263
        %v1364 = vadd.f32 %v1119, %v1266
        %v1365 = vadd.f32 %v1120, %v1268
        %v1366 = vadd.f32 %v1121, %v1271
        %v1367 = vadd.f32 %v1122, %v1273
        %v1368 = vadd.f32 %v1123, %v1276
        %v1369 = vadd.f32 %v1124, %v1278
        %v1370 = vadd.f32 %v1125, %v1281
        %v1371 = vadd.f32 %v1126, %v1283
        %v1372 = vadd.f32 %v1127, %v1286
        %v1373 = vadd.f32 %v1128, %v1288
        %v1374 = vadd.f32 %v1129, %v1291
        %v1375 = vadd.f32 %v1130, %v1293
        %v1376 = vadd.f32 %v1131, %v1296
        %v1377 = vadd.f32 %v1132, %v1298
        %v1378 = vadd.f32 %v1133, %v1301
        %v1379 = vadd.f32 %v1134, %v1303
        %v1380 = vadd.f32 %v1135, %v1306
        %v1381 = vadd.f32 %v1136, %v1308
        %v1382 = vadd.f32 %v1137, %v1311
        %v1383 = vadd.f32 %v1138, %v1313
        %v1384 = vadd.f32 %v1139, %v1316
        %v1385 = vadd.f32 %v1140, %v1318
        %v1386 = vadd.f32 %v1141, %v1321
        %v1387 = vadd.f32 %v1142, %v1323
        %v1388 = vlaneseq
        %v1389 = vshrl.u32 %v1388, 7
        %v1390 = vsub.s32 4, %v1389
        %v1391 = vrot.slane %v578, %v1390
        %v1392 = vmul.f32 %v512, %v1391
        %v1393 = vmul.f32 %v513, %v1391
        %v1394 = vmul.f32 %v514, %v1391
        %v1395 = vmul.f32 %v515, %v1391
        %v1396 = vmul.f32 %v516, %v1391
        %v1397 = vmul.f32 %v517, %v1391
        %v1398 = vmul.f32 %v518, %v1391
        %v1399 = vmul.f32 %v519, %v1391
        %v1400 = vmul.f32 %v520, %v1391
        %v1401 = vmul.f32 %v521, %v1391
        %v1402 = vmul.f32 %v522, %v1391
        %v1403 = vmul.f32 %v523, %v1391
        %v1404 = vmul.f32 %v524, %v1391
        %v1405 = vmul.f32 %v525, %v1391
        %v1406 = vmul.f32 %v526, %v1391
        %v1407 = vmul.f32 %v527, %v1391
        %v1408 = vmul.f32 %v528, %v1391
        %v1409 = vmul.f32 %v529, %v1391
        %v1410 = vmul.f32 %v530, %v1391
        %v1411 = vmul.f32 %v531, %v1391
        %v1412 = vmul.f32 %v532, %v1391
        %v1413 = vmul.f32 %v533, %v1391
        %v1414 = vmul.f32 %v534, %v1391
        %v1415 = vmul.f32 %v535, %v1391
        %v1416 = vmul.f32 %v536, %v1391
        %v1417 = vmul.f32 %v537, %v1391
        %v1418 = vmul.f32 %v538, %v1391
        %v1419 = vmul.f32 %v539, %v1391
        %v1420 = vmul.f32 %v540, %v1391
        %v1421 = vmul.f32 %v541, %v1391
        %v1422 = vmul.f32 %v542, %v1391
        %v1423 = vmul.f32 %v543, %v1391
        %v1424 = vmul.f32 %v544, %v1391
        %v1425 = vmul.f32 %v545, %v1391
        %v1426 = vmul.f32 %v546, %v1391
        %v1427 = vmul.f32 %v547, %v1391
        %v1428 = vmul.f32 %v548, %v1391
        %v1429 = vmul.f32 %v549, %v1391
        %v1430 = vmul.f32 %v550, %v1391
        %v1431 = vmul.f32 %v551, %v1391
        %v1432 = vmul.f32 %v552, %v1391
        %v1433 = vmul.f32 %v553, %v1391
        %v1434 = vmul.f32 %v554, %v1391
        %v1435 = vmul.f32 %v555, %v1391
        %v1436 = vmul.f32 %v556, %v1391
        %v1437 = vmul.f32 %v557, %v1391
        %v1438 = vmul.f32 %v558, %v1391
        %v1439 = vmul.f32 %v559, %v1391
        %vm1488 = vcmask 1043456
        %v1489 = vrot.slane %v1392, 4
        %v1490 = vrot.slane %v1393, 4
        %v1491 = vsel %vm1488, %v1489, %v1490
        %v1492 = vrot.slane %v1394, 4
        %v1493 = vsel %vm1488, %v1490, %v1492
        %v1494 = vrot.slane %v1395, 4
        %v1495 = vrot.slane %v1396, 4
        %v1496 = vsel %vm1488, %v1494, %v1495
        %v1497 = vrot.slane %v1397, 4
        %v1498 = vsel %vm1488, %v1495, %v1497
        %v1499 = vrot.slane %v1398, 4
        %v1500 = vrot.slane %v1399, 4
        %v1501 = vsel %vm1488, %v1499, %v1500
        %v1502 = vrot.slane %v1400, 4
        %v1503 = vsel %vm1488, %v1500, %v1502
        %v1504 = vrot.slane %v1401, 4
        %v1505 = vrot.slane %v1402, 4
        %v1506 = vsel %vm1488, %v1504, %v1505
        %v1507 = vrot.slane %v1403, 4
        %v1508 = vsel %vm1488, %v1505, %v1507
        %v1509 = vrot.slane %v1404, 4
        %v1510 = vrot.slane %v1405, 4
        %v1511 = vsel %vm1488, %v1509, %v1510
        %v1512 = vrot.slane %v1406, 4
        %v1513 = vsel %vm1488, %v1510, %v1512
        %v1514 = vrot.slane %v1407, 4
        %v1515 = vrot.slane %v1408, 4
        %v1516 = vsel %vm1488, %v1514, %v1515
        %v1517 = vrot.slane %v1409, 4
        %v1518 = vsel %vm1488, %v1515, %v1517
        %v1519 = vrot.slane %v1410, 4
        %v1520 = vrot.slane %v1411, 4
        %v1521 = vsel %vm1488, %v1519, %v1520
        %v1522 = vrot.slane %v1412, 4
        %v1523 = vsel %vm1488, %v1520, %v1522
        %v1524 = vrot.slane %v1413, 4
        %v1525 = vrot.slane %v1414, 4
        %v1526 = vsel %vm1488, %v1524, %v1525
        %v1527 = vrot.slane %v1415, 4
        %v1528 = vsel %vm1488, %v1525, %v1527
        %v1529 = vrot.slane %v1416, 4
        %v1530 = vrot.slane %v1417, 4
        %v1531 = vsel %vm1488, %v1529, %v1530
        %v1532 = vrot.slane %v1418, 4
        %v1533 = vsel %vm1488, %v1530, %v1532
        %v1534 = vrot.slane %v1419, 4
        %v1535 = vrot.slane %v1420, 4
        %v1536 = vsel %vm1488, %v1534, %v1535
        %v1537 = vrot.slane %v1421, 4
        %v1538 = vsel %vm1488, %v1535, %v1537
        %v1539 = vrot.slane %v1422, 4
        %v1540 = vrot.slane %v1423, 4
        %v1541 = vsel %vm1488, %v1539, %v1540
        %v1542 = vrot.slane %v1424, 4
        %v1543 = vsel %vm1488, %v1540, %v1542
        %v1544 = vrot.slane %v1425, 4
        %v1545 = vrot.slane %v1426, 4
        %v1546 = vsel %vm1488, %v1544, %v1545
        %v1547 = vrot.slane %v1427, 4
        %v1548 = vsel %vm1488, %v1545, %v1547
        %v1549 = vrot.slane %v1428, 4
        %v1550 = vrot.slane %v1429, 4
        %v1551 = vsel %vm1488, %v1549, %v1550
        %v1552 = vrot.slane %v1430, 4
        %v1553 = vsel %vm1488, %v1550, %v1552
        %v1554 = vrot.slane %v1431, 4
        %v1555 = vrot.slane %v1432, 4
        %v1556 = vsel %vm1488, %v1554, %v1555
        %v1557 = vrot.slane %v1433, 4
        %v1558 = vsel %vm1488, %v1555, %v1557
        %v1559 = vrot.slane %v1434, 4
        %v1560 = vrot.slane %v1435, 4
        %v1561 = vsel %vm1488, %v1559, %v1560
        %v1562 = vrot.slane %v1436, 4
        %v1563 = vsel %vm1488, %v1560, %v1562
        %v1564 = vrot.slane %v1437, 4
        %v1565 = vrot.slane %v1438, 4
        %v1566 = vsel %vm1488, %v1564, %v1565
        %v1567 = vrot.slane %v1439, 4
        %v1568 = vsel %vm1488, %v1565, %v1567
        %v1601 = vadd.f32 %v1356, %v1491
        %v1602 = vadd.f32 %v1357, %v1493
        %v1603 = vadd.f32 %v1358, %v1496
        %v1604 = vadd.f32 %v1359, %v1498
        %v1605 = vadd.f32 %v1360, %v1501
        %v1606 = vadd.f32 %v1361, %v1503
        %v1607 = vadd.f32 %v1362, %v1506
        %v1608 = vadd.f32 %v1363, %v1508
        %v1609 = vadd.f32 %v1364, %v1511
        %v1610 = vadd.f32 %v1365, %v1513
        %v1611 = vadd.f32 %v1366, %v1516
        %v1612 = vadd.f32 %v1367, %v1518
        %v1613 = vadd.f32 %v1368, %v1521
        %v1614 = vadd.f32 %v1369, %v1523
        %v1615 = vadd.f32 %v1370, %v1526
        %v1616 = vadd.f32 %v1371, %v1528
        %v1617 = vadd.f32 %v1372, %v1531
        %v1618 = vadd.f32 %v1373, %v1533
        %v1619 = vadd.f32 %v1374, %v1536
        %v1620 = vadd.f32 %v1375, %v1538
        %v1621 = vadd.f32 %v1376, %v1541
        %v1622 = vadd.f32 %v1377, %v1543
        %v1623 = vadd.f32 %v1378, %v1546
        %v1624 = vadd.f32 %v1379, %v1548
        %v1625 = vadd.f32 %v1380, %v1551
        %v1626 = vadd.f32 %v1381, %v1553
        %v1627 = vadd.f32 %v1382, %v1556
        %v1628 = vadd.f32 %v1383, %v1558
        %v1629 = vadd.f32 %v1384, %v1561
        %v1630 = vadd.f32 %v1385, %v1563
        %v1631 = vadd.f32 %v1386, %v1566
        %v1632 = vadd.f32 %v1387, %v1568
        %v1633 = vlaneseq
        %v1634 = vshrl.u32 %v1633, 7
        %v1635 = vsub.s32 5, %v1634
        %v1636 = vrot.slane %v578, %v1635
        %v1637 = vmul.f32 %v512, %v1636
        %v1638 = vmul.f32 %v513, %v1636
        %v1639 = vmul.f32 %v514, %v1636
        %v1640 = vmul.f32 %v515, %v1636
        %v1641 = vmul.f32 %v516, %v1636
        %v1642 = vmul.f32 %v517, %v1636
        %v1643 = vmul.f32 %v518, %v1636
        %v1644 = vmul.f32 %v519, %v1636
        %v1645 = vmul.f32 %v520, %v1636
        %v1646 = vmul.f32 %v521, %v1636
        %v1647 = vmul.f32 %v522, %v1636
        %v1648 = vmul.f32 %v523, %v1636
        %v1649 = vmul.f32 %v524, %v1636
        %v1650 = vmul.f32 %v525, %v1636
        %v1651 = vmul.f32 %v526, %v1636
        %v1652 = vmul.f32 %v527, %v1636
        %v1653 = vmul.f32 %v528, %v1636
        %v1654 = vmul.f32 %v529, %v1636
        %v1655 = vmul.f32 %v530, %v1636
        %v1656 = vmul.f32 %v531, %v1636
        %v1657 = vmul.f32 %v532, %v1636
        %v1658 = vmul.f32 %v533, %v1636
        %v1659 = vmul.f32 %v534, %v1636
        %v1660 = vmul.f32 %v535, %v1636
        %v1661 = vmul.f32 %v536, %v1636
        %v1662 = vmul.f32 %v537, %v1636
        %v1663 = vmul.f32 %v538, %v1636
        %v1664 = vmul.f32 %v539, %v1636
        %v1665 = vmul.f32 %v540, %v1636
        %v1666 = vmul.f32 %v541, %v1636
        %v1667 = vmul.f32 %v542, %v1636
        %v1668 = vmul.f32 %v543, %v1636
        %v1669 = vmul.f32 %v544, %v1636
        %v1670 = vmul.f32 %v545, %v1636
        %v1671 = vmul.f32 %v546, %v1636
        %v1672 = vmul.f32 %v547, %v1636
        %v1673 = vmul.f32 %v548, %v1636
        %v1674 = vmul.f32 %v549, %v1636
        %v1675 = vmul.f32 %v550, %v1636
        %v1676 = vmul.f32 %v551, %v1636
        %v1677 = vmul.f32 %v552, %v1636
        %v1678 = vmul.f32 %v553, %v1636
        %v1679 = vmul.f32 %v554, %v1636
        %v1680 = vmul.f32 %v555, %v1636
        %v1681 = vmul.f32 %v556, %v1636
        %v1682 = vmul.f32 %v557, %v1636
        %v1683 = vmul.f32 %v558, %v1636
        %v1684 = vmul.f32 %v559, %v1636
        %vm1733 = vcmask 1042432
        %v1734 = vrot.slane %v1637, 5
        %v1735 = vrot.slane %v1638, 5
        %v1736 = vsel %vm1733, %v1734, %v1735
        %v1737 = vrot.slane %v1639, 5
        %v1738 = vsel %vm1733, %v1735, %v1737
        %v1739 = vrot.slane %v1640, 5
        %v1740 = vrot.slane %v1641, 5
        %v1741 = vsel %vm1733, %v1739, %v1740
        %v1742 = vrot.slane %v1642, 5
        %v1743 = vsel %vm1733, %v1740, %v1742
        %v1744 = vrot.slane %v1643, 5
        %v1745 = vrot.slane %v1644, 5
        %v1746 = vsel %vm1733, %v1744, %v1745
        %v1747 = vrot.slane %v1645, 5
        %v1748 = vsel %vm1733, %v1745, %v1747
        %v1749 = vrot.slane %v1646, 5
        %v1750 = vrot.slane %v1647, 5
        %v1751 = vsel %vm1733, %v1749, %v1750
        %v1752 = vrot.slane %v1648, 5
        %v1753 = vsel %vm1733, %v1750, %v1752
        %v1754 = vrot.slane %v1649, 5
        %v1755 = vrot.slane %v1650, 5
        %v1756 = vsel %vm1733, %v1754, %v1755
        %v1757 = vrot.slane %v1651, 5
        %v1758 = vsel %vm1733, %v1755, %v1757
        %v1759 = vrot.slane %v1652, 5
        %v1760 = vrot.slane %v1653, 5
        %v1761 = vsel %vm1733, %v1759, %v1760
        %v1762 = vrot.slane %v1654, 5
        %v1763 = vsel %vm1733, %v1760, %v1762
        %v1764 = vrot.slane %v1655, 5
        %v1765 = vrot.slane %v1656, 5
        %v1766 = vsel %vm1733, %v1764, %v1765
        %v1767 = vrot.slane %v1657, 5
        %v1768 = vsel %vm1733, %v1765, %v1767
        %v1769 = vrot.slane %v1658, 5
        %v1770 = vrot.slane %v1659, 5
        %v1771 = vsel %vm1733, %v1769, %v1770
        %v1772 = vrot.slane %v1660, 5
        %v1773 = vsel %vm1733, %v1770, %v1772
        %v1774 = vrot.slane %v1661, 5
        %v1775 = vrot.slane %v1662, 5
        %v1776 = vsel %vm1733, %v1774, %v1775
        %v1777 = vrot.slane %v1663, 5
        %v1778 = vsel %vm1733, %v1775, %v1777
        %v1779 = vrot.slane %v1664, 5
        %v1780 = vrot.slane %v1665, 5
        %v1781 = vsel %vm1733, %v1779, %v1780
        %v1782 = vrot.slane %v1666, 5
        %v1783 = vsel %vm1733, %v1780, %v1782
        %v1784 = vrot.slane %v1667, 5
        %v1785 = vrot.slane %v1668, 5
        %v1786 = vsel %vm1733, %v1784, %v1785
        %v1787 = vrot.slane %v1669, 5
        %v1788 = vsel %vm1733, %v1785, %v1787
        %v1789 = vrot.slane %v1670, 5
        %v1790 = vrot.slane %v1671, 5
        %v1791 = vsel %vm1733, %v1789, %v1790
        %v1792 = vrot.slane %v1672, 5
        %v1793 = vsel %vm1733, %v1790, %v1792
        %v1794 = vrot.slane %v1673, 5
        %v1795 = vrot.slane %v1674, 5
        %v1796 = vsel %vm1733, %v1794, %v1795
        %v1797 = vrot.slane %v1675, 5
        %v1798 = vsel %vm1733, %v1795, %v1797
        %v1799 = vrot.slane %v1676, 5
        %v1800 = vrot.slane %v1677, 5
        %v1801 = vsel %vm1733, %v1799, %v1800
        %v1802 = vrot.slane %v1678, 5
        %v1803 = vsel %vm1733, %v1800, %v1802
        %v1804 = vrot.slane %v1679, 5
        %v1805 = vrot.slane %v1680, 5
        %v1806 = vsel %vm1733, %v1804, %v1805
        %v1807 = vrot.slane %v1681, 5
        %v1808 = vsel %vm1733, %v1805, %v1807
        %v1809 = vrot.slane %v1682, 5
        %v1810 = vrot.slane %v1683, 5
        %v1811 = vsel %vm1733, %v1809, %v1810
        %v1812 = vrot.slane %v1684, 5
        %v1813 = vsel %vm1733, %v1810, %v1812
        %v1846 = vadd.f32 %v1601, %v1736
        %v1847 = vadd.f32 %v1602, %v1738
        %v1848 = vadd.f32 %v1603, %v1741
        %v1849 = vadd.f32 %v1604, %v1743
        %v1850 = vadd.f32 %v1605, %v1746
        %v1851 = vadd.f32 %v1606, %v1748
        %v1852 = vadd.f32 %v1607, %v1751
        %v1853 = vadd.f32 %v1608, %v1753
        %v1854 = vadd.f32 %v1609, %v1756
        %v1855 = vadd.f32 %v1610, %v1758
        %v1856 = vadd.f32 %v1611, %v1761
        %v1857 = vadd.f32 %v1612, %v1763
        %v1858 = vadd.f32 %v1613, %v1766
        %v1859 = vadd.f32 %v1614, %v1768
        %v1860 = vadd.f32 %v1615, %v1771
        %v1861 = vadd.f32 %v1616, %v1773
        %v1862 = vadd.f32 %v1617, %v1776
        %v1863 = vadd.f32 %v1618, %v1778
        %v1864 = vadd.f32 %v1619, %v1781
        %v1865 = vadd.f32 %v1620, %v1783
        %v1866 = vadd.f32 %v1621, %v1786
        %v1867 = vadd.f32 %v1622, %v1788
        %v1868 = vadd.f32 %v1623, %v1791
        %v1869 = vadd.f32 %v1624, %v1793
        %v1870 = vadd.f32 %v1625, %v1796
        %v1871 = vadd.f32 %v1626, %v1798
        %v1872 = vadd.f32 %v1627, %v1801
        %v1873 = vadd.f32 %v1628, %v1803
        %v1874 = vadd.f32 %v1629, %v1806
        %v1875 = vadd.f32 %v1630, %v1808
        %v1876 = vadd.f32 %v1631, %v1811
        %v1877 = vadd.f32 %v1632, %v1813
        %v1878 = vlaneseq
        %v1879 = vshrl.u32 %v1878, 7
        %v1880 = vsub.s32 6, %v1879
        %v1881 = vrot.slane %v578, %v1880
        %v1882 = vmul.f32 %v512, %v1881
        %v1883 = vmul.f32 %v513, %v1881
        %v1884 = vmul.f32 %v514, %v1881
        %v1885 = vmul.f32 %v515, %v1881
        %v1886 = vmul.f32 %v516, %v1881
        %v1887 = vmul.f32 %v517, %v1881
        %v1888 = vmul.f32 %v518, %v1881
        %v1889 = vmul.f32 %v519, %v1881
        %v1890 = vmul.f32 %v520, %v1881
        %v1891 = vmul.f32 %v521, %v1881
        %v1892 = vmul.f32 %v522, %v1881
        %v1893 = vmul.f32 %v523, %v1881
        %v1894 = vmul.f32 %v524, %v1881
        %v1895 = vmul.f32 %v525, %v1881
        %v1896 = vmul.f32 %v526, %v1881
        %v1897 = vmul.f32 %v527, %v1881
        %v1898 = vmul.f32 %v528, %v1881
        %v1899 = vmul.f32 %v529, %v1881
        %v1900 = vmul.f32 %v530, %v1881
        %v1901 = vmul.f32 %v531, %v1881
        %v1902 = vmul.f32 %v532, %v1881
        %v1903 = vmul.f32 %v533, %v1881
        %v1904 = vmul.f32 %v534, %v1881
        %v1905 = vmul.f32 %v535, %v1881
        %v1906 = vmul.f32 %v536, %v1881
        %v1907 = vmul.f32 %v537, %v1881
        %v1908 = vmul.f32 %v538, %v1881
        %v1909 = vmul.f32 %v539, %v1881
        %v1910 = vmul.f32 %v540, %v1881
        %v1911 = vmul.f32 %v541, %v1881
        %v1912 = vmul.f32 %v542, %v1881
        %v1913 = vmul.f32 %v543, %v1881
        %v1914 = vmul.f32 %v544, %v1881
        %v1915 = vmul.f32 %v545, %v1881
        %v1916 = vmul.f32 %v546, %v1881
        %v1917 = vmul.f32 %v547, %v1881
        %v1918 = vmul.f32 %v548, %v1881
        %v1919 = vmul.f32 %v549, %v1881
        %v1920 = vmul.f32 %v550, %v1881
        %v1921 = vmul.f32 %v551, %v1881
        %v1922 = vmul.f32 %v552, %v1881
        %v1923 = vmul.f32 %v553, %v1881
        %v1924 = vmul.f32 %v554, %v1881
        %v1925 = vmul.f32 %v555, %v1881
        %v1926 = vmul.f32 %v556, %v1881
        %v1927 = vmul.f32 %v557, %v1881
        %v1928 = vmul.f32 %v558, %v1881
        %v1929 = vmul.f32 %v559, %v1881
        %vm1978 = vcmask 1041408
        %v1979 = vrot.slane %v1882, 6
        %v1980 = vrot.slane %v1883, 6
        %v1981 = vsel %vm1978, %v1979, %v1980
        %v1982 = vrot.slane %v1884, 6
        %v1983 = vsel %vm1978, %v1980, %v1982
        %v1984 = vrot.slane %v1885, 6
        %v1985 = vrot.slane %v1886, 6
        %v1986 = vsel %vm1978, %v1984, %v1985
        %v1987 = vrot.slane %v1887, 6
        %v1988 = vsel %vm1978, %v1985, %v1987
        %v1989 = vrot.slane %v1888, 6
        %v1990 = vrot.slane %v1889, 6
        %v1991 = vsel %vm1978, %v1989, %v1990
        %v1992 = vrot.slane %v1890, 6
        %v1993 = vsel %vm1978, %v1990, %v1992
        %v1994 = vrot.slane %v1891, 6
        %v1995 = vrot.slane %v1892, 6
        %v1996 = vsel %vm1978, %v1994, %v1995
        %v1997 = vrot.slane %v1893, 6
        %v1998 = vsel %vm1978, %v1995, %v1997
        %v1999 = vrot.slane %v1894, 6
        %v2000 = vrot.slane %v1895, 6
        %v2001 = vsel %vm1978, %v1999, %v2000
        %v2002 = vrot.slane %v1896, 6
        %v2003 = vsel %vm1978, %v2000, %v2002
        %v2004 = vrot.slane %v1897, 6
        %v2005 = vrot.slane %v1898, 6
        %v2006 = vsel %vm1978, %v2004, %v2005
        %v2007 = vrot.slane %v1899, 6
        %v2008 = vsel %vm1978, %v2005, %v2007
        %v2009 = vrot.slane %v1900, 6
        %v2010 = vrot.slane %v1901, 6
        %v2011 = vsel %vm1978, %v2009, %v2010
        %v2012 = vrot.slane %v1902, 6
        %v2013 = vsel %vm1978, %v2010, %v2012
        %v2014 = vrot.slane %v1903, 6
        %v2015 = vrot.slane %v1904, 6
        %v2016 = vsel %vm1978, %v2014, %v2015
        %v2017 = vrot.slane %v1905, 6
        %v2018 = vsel %vm1978, %v2015, %v2017
        %v2019 = vrot.slane %v1906, 6
        %v2020 = vrot.slane %v1907, 6
        %v2021 = vsel %vm1978, %v2019, %v2020
        %v2022 = vrot.slane %v1908, 6
        %v2023 = vsel %vm1978, %v2020, %v2022
        %v2024 = vrot.slane %v1909, 6
        %v2025 = vrot.slane %v1910, 6
        %v2026 = vsel %vm1978, %v2024, %v2025
        %v2027 = vrot.slane %v1911, 6
        %v2028 = vsel %vm1978, %v2025, %v2027
        %v2029 = vrot.slane %v1912, 6
        %v2030 = vrot.slane %v1913, 6
        %v2031 = vsel %vm1978, %v2029, %v2030
        %v2032 = vrot.slane %v1914, 6
        %v2033 = vsel %vm1978, %v2030, %v2032
        %v2034 = vrot.slane %v1915, 6
        %v2035 = vrot.slane %v1916, 6
        %v2036 = vsel %vm1978, %v2034, %v2035
        %v2037 = vrot.slane %v1917, 6
        %v2038 = vsel %vm1978, %v2035, %v2037
        %v2039 = vrot.slane %v1918, 6
        %v2040 = vrot.slane %v1919, 6
        %v2041 = vsel %vm1978, %v2039, %v2040
        %v2042 = vrot.slane %v1920, 6
        %v2043 = vsel %vm1978, %v2040, %v2042
        %v2044 = vrot.slane %v1921, 6
        %v2045 = vrot.slane %v1922, 6
        %v2046 = vsel %vm1978, %v2044, %v2045
        %v2047 = vrot.slane %v1923, 6
        %v2048 = vsel %vm1978, %v2045, %v2047
        %v2049 = vrot.slane %v1924, 6
        %v2050 = vrot.slane %v1925, 6
        %v2051 = vsel %vm1978, %v2049, %v2050
        %v2052 = vrot.slane %v1926, 6
        %v2053 = vsel %vm1978, %v2050, %v2052
        %v2054 = vrot.slane %v1927, 6
        %v2055 = vrot.slane %v1928, 6
        %v2056 = vsel %vm1978, %v2054, %v2055
        %v2057 = vrot.slane %v1929, 6
        %v2058 = vsel %vm1978, %v2055, %v2057
        %v2091 = vadd.f32 %v1846, %v1981
        %v2092 = vadd.f32 %v1847, %v1983
        %v2093 = vadd.f32 %v1848, %v1986
        %v2094 = vadd.f32 %v1849, %v1988
        %v2095 = vadd.f32 %v1850, %v1991
        %v2096 = vadd.f32 %v1851, %v1993
        %v2097 = vadd.f32 %v1852, %v1996
        %v2098 = vadd.f32 %v1853, %v1998
        %v2099 = vadd.f32 %v1854, %v2001
        %v2100 = vadd.f32 %v1855, %v2003
        %v2101 = vadd.f32 %v1856, %v2006
        %v2102 = vadd.f32 %v1857, %v2008
        %v2103 = vadd.f32 %v1858, %v2011
        %v2104 = vadd.f32 %v1859, %v2013
        %v2105 = vadd.f32 %v1860, %v2016
        %v2106 = vadd.f32 %v1861, %v2018
        %v2107 = vadd.f32 %v1862, %v2021
        %v2108 = vadd.f32 %v1863, %v2023
        %v2109 = vadd.f32 %v1864, %v2026
        %v2110 = vadd.f32 %v1865, %v2028
        %v2111 = vadd.f32 %v1866, %v2031
        %v2112 = vadd.f32 %v1867, %v2033
        %v2113 = vadd.f32 %v1868, %v2036
        %v2114 = vadd.f32 %v1869, %v2038
        %v2115 = vadd.f32 %v1870, %v2041
        %v2116 = vadd.f32 %v1871, %v2043
        %v2117 = vadd.f32 %v1872, %v2046
        %v2118 = vadd.f32 %v1873, %v2048
        %v2119 = vadd.f32 %v1874, %v2051
        %v2120 = vadd.f32 %v1875, %v2053
        %v2121 = vadd.f32 %v1876, %v2056
        %v2122 = vadd.f32 %v1877, %v2058
        %v2123 = vlaneseq
        %v2124 = vshrl.u32 %v2123, 7
        %v2125 = vsub.s32 7, %v2124
        %v2126 = vrot.slane %v578, %v2125
        %v2127 = vmul.f32 %v515, %v2126
        %v2128 = vmul.f32 %v516, %v2126
        %v2129 = vmul.f32 %v518, %v2126
        %v2130 = vmul.f32 %v519, %v2126
        %v2131 = vmul.f32 %v521, %v2126
        %v2132 = vmul.f32 %v522, %v2126
        %v2133 = vmul.f32 %v524, %v2126
        %v2134 = vmul.f32 %v525, %v2126
        %v2135 = vmul.f32 %v527, %v2126
        %v2136 = vmul.f32 %v528, %v2126
        %v2137 = vmul.f32 %v530, %v2126
        %v2138 = vmul.f32 %v531, %v2126
        %v2139 = vmul.f32 %v533, %v2126
        %v2140 = vmul.f32 %v534, %v2126
        %v2141 = vmul.f32 %v536, %v2126
        %v2142 = vmul.f32 %v537, %v2126
        %v2143 = vmul.f32 %v539, %v2126
        %v2144 = vmul.f32 %v540, %v2126
        %v2145 = vmul.f32 %v542, %v2126
        %v2146 = vmul.f32 %v543, %v2126
        %v2147 = vmul.f32 %v545, %v2126
        %v2148 = vmul.f32 %v546, %v2126
        %v2149 = vmul.f32 %v548, %v2126
        %v2150 = vmul.f32 %v549, %v2126
        %v2151 = vmul.f32 %v551, %v2126
        %v2152 = vmul.f32 %v552, %v2126
        %v2153 = vmul.f32 %v554, %v2126
        %v2154 = vmul.f32 %v555, %v2126
        %v2155 = vmul.f32 %v557, %v2126
        %v2156 = vmul.f32 %v558, %v2126
        %v2157 = vmul.f32 %v560, %v2126
        %v2158 = vmul.f32 %v561, %v2126
        %v2159 = vadd.f32 %v2091, %v2127
        %v2160 = vadd.f32 %v2092, %v2128
        %v2161 = vadd.f32 %v2093, %v2129
        %v2162 = vadd.f32 %v2094, %v2130
        %v2163 = vadd.f32 %v2095, %v2131
        %v2164 = vadd.f32 %v2096, %v2132
        %v2165 = vadd.f32 %v2097, %v2133
        %v2166 = vadd.f32 %v2098, %v2134
        %v2167 = vadd.f32 %v2099, %v2135
        %v2168 = vadd.f32 %v2100, %v2136
        %v2169 = vadd.f32 %v2101, %v2137
        %v2170 = vadd.f32 %v2102, %v2138
        %v2171 = vadd.f32 %v2103, %v2139
        %v2172 = vadd.f32 %v2104, %v2140
        %v2173 = vadd.f32 %v2105, %v2141
        %v2174 = vadd.f32 %v2106, %v2142
        %v2175 = vadd.f32 %v2107, %v2143
        %v2176 = vadd.f32 %v2108, %v2144
        %v2177 = vadd.f32 %v2109, %v2145
        %v2178 = vadd.f32 %v2110, %v2146
        %v2179 = vadd.f32 %v2111, %v2147
        %v2180 = vadd.f32 %v2112, %v2148
        %v2181 = vadd.f32 %v2113, %v2149
        %v2182 = vadd.f32 %v2114, %v2150
        %v2183 = vadd.f32 %v2115, %v2151
        %v2184 = vadd.f32 %v2116, %v2152
        %v2185 = vadd.f32 %v2117, %v2153
        %v2186 = vadd.f32 %v2118, %v2154
        %v2187 = vadd.f32 %v2119, %v2155
        %v2188 = vadd.f32 %v2120, %v2156
        %v2189 = vadd.f32 %v2121, %v2157
        %v2190 = vadd.f32 %v2122, %v2158
        %v2191 = vlaneseq
        %v2192 = vshrl.u32 %v2191, 7
        %v2193 = vsub.s32 0, %v2192
        %v2194 = vrot.slane %v579, %v2193
        %v2195 = vmul.f32 %v515, %v2194
        %v2196 = vmul.f32 %v516, %v2194
        %v2197 = vmul.f32 %v517, %v2194
        %v2198 = vmul.f32 %v518, %v2194
        %v2199 = vmul.f32 %v519, %v2194
        %v2200 = vmul.f32 %v520, %v2194
        %v2201 = vmul.f32 %v521, %v2194
        %v2202 = vmul.f32 %v522, %v2194
        %v2203 = vmul.f32 %v523, %v2194
        %v2204 = vmul.f32 %v524, %v2194
        %v2205 = vmul.f32 %v525, %v2194
        %v2206 = vmul.f32 %v526, %v2194
        %v2207 = vmul.f32 %v527, %v2194
        %v2208 = vmul.f32 %v528, %v2194
        %v2209 = vmul.f32 %v529, %v2194
        %v2210 = vmul.f32 %v530, %v2194
        %v2211 = vmul.f32 %v531, %v2194
        %v2212 = vmul.f32 %v532, %v2194
        %v2213 = vmul.f32 %v533, %v2194
        %v2214 = vmul.f32 %v534, %v2194
        %v2215 = vmul.f32 %v535, %v2194
        %v2216 = vmul.f32 %v536, %v2194
        %v2217 = vmul.f32 %v537, %v2194
        %v2218 = vmul.f32 %v538, %v2194
        %v2219 = vmul.f32 %v539, %v2194
        %v2220 = vmul.f32 %v540, %v2194
        %v2221 = vmul.f32 %v541, %v2194
        %v2222 = vmul.f32 %v542, %v2194
        %v2223 = vmul.f32 %v543, %v2194
        %v2224 = vmul.f32 %v544, %v2194
        %v2225 = vmul.f32 %v545, %v2194
        %v2226 = vmul.f32 %v546, %v2194
        %v2227 = vmul.f32 %v547, %v2194
        %v2228 = vmul.f32 %v548, %v2194
        %v2229 = vmul.f32 %v549, %v2194
        %v2230 = vmul.f32 %v550, %v2194
        %v2231 = vmul.f32 %v551, %v2194
        %v2232 = vmul.f32 %v552, %v2194
        %v2233 = vmul.f32 %v553, %v2194
        %v2234 = vmul.f32 %v554, %v2194
        %v2235 = vmul.f32 %v555, %v2194
        %v2236 = vmul.f32 %v556, %v2194
        %v2237 = vmul.f32 %v557, %v2194
        %v2238 = vmul.f32 %v558, %v2194
        %v2239 = vmul.f32 %v559, %v2194
        %v2240 = vmul.f32 %v560, %v2194
        %v2241 = vmul.f32 %v561, %v2194
        %v2242 = vmul.f32 %v562, %v2194
        %v2291 = vrot.slane %v2195, 1
        %v2292 = vrot.slane %v2196, 1
        %v2293 = vsel %vm753, %v2291, %v2292
        %v2294 = vrot.slane %v2197, 1
        %v2295 = vsel %vm753, %v2292, %v2294
        %v2296 = vrot.slane %v2198, 1
        %v2297 = vrot.slane %v2199, 1
        %v2298 = vsel %vm753, %v2296, %v2297
        %v2299 = vrot.slane %v2200, 1
        %v2300 = vsel %vm753, %v2297, %v2299
        %v2301 = vrot.slane %v2201, 1
        %v2302 = vrot.slane %v2202, 1
        %v2303 = vsel %vm753, %v2301, %v2302
        %v2304 = vrot.slane %v2203, 1
        %v2305 = vsel %vm753, %v2302, %v2304
        %v2306 = vrot.slane %v2204, 1
        %v2307 = vrot.slane %v2205, 1
        %v2308 = vsel %vm753, %v2306, %v2307
        %v2309 = vrot.slane %v2206, 1
        %v2310 = vsel %vm753, %v2307, %v2309
        %v2311 = vrot.slane %v2207, 1
        %v2312 = vrot.slane %v2208, 1
        %v2313 = vsel %vm753, %v2311, %v2312
        %v2314 = vrot.slane %v2209, 1
        %v2315 = vsel %vm753, %v2312, %v2314
        %v2316 = vrot.slane %v2210, 1
        %v2317 = vrot.slane %v2211, 1
        %v2318 = vsel %vm753, %v2316, %v2317
        %v2319 = vrot.slane %v2212, 1
        %v2320 = vsel %vm753, %v2317, %v2319
        %v2321 = vrot.slane %v2213, 1
        %v2322 = vrot.slane %v2214, 1
        %v2323 = vsel %vm753, %v2321, %v2322
        %v2324 = vrot.slane %v2215, 1
        %v2325 = vsel %vm753, %v2322, %v2324
        %v2326 = vrot.slane %v2216, 1
        %v2327 = vrot.slane %v2217, 1
        %v2328 = vsel %vm753, %v2326, %v2327
        %v2329 = vrot.slane %v2218, 1
        %v2330 = vsel %vm753, %v2327, %v2329
        %v2331 = vrot.slane %v2219, 1
        %v2332 = vrot.slane %v2220, 1
        %v2333 = vsel %vm753, %v2331, %v2332
        %v2334 = vrot.slane %v2221, 1
        %v2335 = vsel %vm753, %v2332, %v2334
        %v2336 = vrot.slane %v2222, 1
        %v2337 = vrot.slane %v2223, 1
        %v2338 = vsel %vm753, %v2336, %v2337
        %v2339 = vrot.slane %v2224, 1
        %v2340 = vsel %vm753, %v2337, %v2339
        %v2341 = vrot.slane %v2225, 1
        %v2342 = vrot.slane %v2226, 1
        %v2343 = vsel %vm753, %v2341, %v2342
        %v2344 = vrot.slane %v2227, 1
        %v2345 = vsel %vm753, %v2342, %v2344
        %v2346 = vrot.slane %v2228, 1
        %v2347 = vrot.slane %v2229, 1
        %v2348 = vsel %vm753, %v2346, %v2347
        %v2349 = vrot.slane %v2230, 1
        %v2350 = vsel %vm753, %v2347, %v2349
        %v2351 = vrot.slane %v2231, 1
        %v2352 = vrot.slane %v2232, 1
        %v2353 = vsel %vm753, %v2351, %v2352
        %v2354 = vrot.slane %v2233, 1
        %v2355 = vsel %vm753, %v2352, %v2354
        %v2356 = vrot.slane %v2234, 1
        %v2357 = vrot.slane %v2235, 1
        %v2358 = vsel %vm753, %v2356, %v2357
        %v2359 = vrot.slane %v2236, 1
        %v2360 = vsel %vm753, %v2357, %v2359
        %v2361 = vrot.slane %v2237, 1
        %v2362 = vrot.slane %v2238, 1
        %v2363 = vsel %vm753, %v2361, %v2362
        %v2364 = vrot.slane %v2239, 1
        %v2365 = vsel %vm753, %v2362, %v2364
        %v2366 = vrot.slane %v2240, 1
        %v2367 = vrot.slane %v2241, 1
        %v2368 = vsel %vm753, %v2366, %v2367
        %v2369 = vrot.slane %v2242, 1
        %v2370 = vsel %vm753, %v2367, %v2369
        %v2403 = vadd.f32 %v2159, %v2293
        %v2404 = vadd.f32 %v2160, %v2295
        %v2405 = vadd.f32 %v2161, %v2298
        %v2406 = vadd.f32 %v2162, %v2300
        %v2407 = vadd.f32 %v2163, %v2303
        %v2408 = vadd.f32 %v2164, %v2305
        %v2409 = vadd.f32 %v2165, %v2308
        %v2410 = vadd.f32 %v2166, %v2310
        %v2411 = vadd.f32 %v2167, %v2313
        %v2412 = vadd.f32 %v2168, %v2315
        %v2413 = vadd.f32 %v2169, %v2318
        %v2414 = vadd.f32 %v2170, %v2320
        %v2415 = vadd.f32 %v2171, %v2323
        %v2416 = vadd.f32 %v2172, %v2325
        %v2417 = vadd.f32 %v2173, %v2328
        %v2418 = vadd.f32 %v2174, %v2330
        %v2419 = vadd.f32 %v2175, %v2333
        %v2420 = vadd.f32 %v2176, %v2335
        %v2421 = vadd.f32 %v2177, %v2338
        %v2422 = vadd.f32 %v2178, %v2340
        %v2423 = vadd.f32 %v2179, %v2343
        %v2424 = vadd.f32 %v2180, %v2345
        %v2425 = vadd.f32 %v2181, %v2348
        %v2426 = vadd.f32 %v2182, %v2350
        %v2427 = vadd.f32 %v2183, %v2353
        %v2428 = vadd.f32 %v2184, %v2355
        %v2429 = vadd.f32 %v2185, %v2358
        %v2430 = vadd.f32 %v2186, %v2360
        %v2431 = vadd.f32 %v2187, %v2363
        %v2432 = vadd.f32 %v2188, %v2365
        %v2433 = vadd.f32 %v2189, %v2368
        %v2434 = vadd.f32 %v2190, %v2370
        %v2435 = vlaneseq
        %v2436 = vshrl.u32 %v2435, 7
        %v2437 = vsub.s32 1, %v2436
        %v2438 = vrot.slane %v579, %v2437
        %v2439 = vmul.f32 %v515, %v2438
        %v2440 = vmul.f32 %v516, %v2438
        %v2441 = vmul.f32 %v517, %v2438
        %v2442 = vmul.f32 %v518, %v2438
        %v2443 = vmul.f32 %v519, %v2438
        %v2444 = vmul.f32 %v520, %v2438
        %v2445 = vmul.f32 %v521, %v2438
        %v2446 = vmul.f32 %v522, %v2438
        %v2447 = vmul.f32 %v523, %v2438
        %v2448 = vmul.f32 %v524, %v2438
        %v2449 = vmul.f32 %v525, %v2438
        %v2450 = vmul.f32 %v526, %v2438
        %v2451 = vmul.f32 %v527, %v2438
        %v2452 = vmul.f32 %v528, %v2438
        %v2453 = vmul.f32 %v529, %v2438
        %v2454 = vmul.f32 %v530, %v2438
        %v2455 = vmul.f32 %v531, %v2438
        %v2456 = vmul.f32 %v532, %v2438
        %v2457 = vmul.f32 %v533, %v2438
        %v2458 = vmul.f32 %v534, %v2438
        %v2459 = vmul.f32 %v535, %v2438
        %v2460 = vmul.f32 %v536, %v2438
        %v2461 = vmul.f32 %v537, %v2438
        %v2462 = vmul.f32 %v538, %v2438
        %v2463 = vmul.f32 %v539, %v2438
        %v2464 = vmul.f32 %v540, %v2438
        %v2465 = vmul.f32 %v541, %v2438
        %v2466 = vmul.f32 %v542, %v2438
        %v2467 = vmul.f32 %v543, %v2438
        %v2468 = vmul.f32 %v544, %v2438
        %v2469 = vmul.f32 %v545, %v2438
        %v2470 = vmul.f32 %v546, %v2438
        %v2471 = vmul.f32 %v547, %v2438
        %v2472 = vmul.f32 %v548, %v2438
        %v2473 = vmul.f32 %v549, %v2438
        %v2474 = vmul.f32 %v550, %v2438
        %v2475 = vmul.f32 %v551, %v2438
        %v2476 = vmul.f32 %v552, %v2438
        %v2477 = vmul.f32 %v553, %v2438
        %v2478 = vmul.f32 %v554, %v2438
        %v2479 = vmul.f32 %v555, %v2438
        %v2480 = vmul.f32 %v556, %v2438
        %v2481 = vmul.f32 %v557, %v2438
        %v2482 = vmul.f32 %v558, %v2438
        %v2483 = vmul.f32 %v559, %v2438
        %v2484 = vmul.f32 %v560, %v2438
        %v2485 = vmul.f32 %v561, %v2438
        %v2486 = vmul.f32 %v562, %v2438
        %v2535 = vrot.slane %v2439, 2
        %v2536 = vrot.slane %v2440, 2
        %v2537 = vsel %vm998, %v2535, %v2536
        %v2538 = vrot.slane %v2441, 2
        %v2539 = vsel %vm998, %v2536, %v2538
        %v2540 = vrot.slane %v2442, 2
        %v2541 = vrot.slane %v2443, 2
        %v2542 = vsel %vm998, %v2540, %v2541
        %v2543 = vrot.slane %v2444, 2
        %v2544 = vsel %vm998, %v2541, %v2543
        %v2545 = vrot.slane %v2445, 2
        %v2546 = vrot.slane %v2446, 2
        %v2547 = vsel %vm998, %v2545, %v2546
        %v2548 = vrot.slane %v2447, 2
        %v2549 = vsel %vm998, %v2546, %v2548
        %v2550 = vrot.slane %v2448, 2
        %v2551 = vrot.slane %v2449, 2
        %v2552 = vsel %vm998, %v2550, %v2551
        %v2553 = vrot.slane %v2450, 2
        %v2554 = vsel %vm998, %v2551, %v2553
        %v2555 = vrot.slane %v2451, 2
        %v2556 = vrot.slane %v2452, 2
        %v2557 = vsel %vm998, %v2555, %v2556
        %v2558 = vrot.slane %v2453, 2
        %v2559 = vsel %vm998, %v2556, %v2558
        %v2560 = vrot.slane %v2454, 2
        %v2561 = vrot.slane %v2455, 2
        %v2562 = vsel %vm998, %v2560, %v2561
        %v2563 = vrot.slane %v2456, 2
        %v2564 = vsel %vm998, %v2561, %v2563
        %v2565 = vrot.slane %v2457, 2
        %v2566 = vrot.slane %v2458, 2
        %v2567 = vsel %vm998, %v2565, %v2566
        %v2568 = vrot.slane %v2459, 2
        %v2569 = vsel %vm998, %v2566, %v2568
        %v2570 = vrot.slane %v2460, 2
        %v2571 = vrot.slane %v2461, 2
        %v2572 = vsel %vm998, %v2570, %v2571
        %v2573 = vrot.slane %v2462, 2
        %v2574 = vsel %vm998, %v2571, %v2573
        %v2575 = vrot.slane %v2463, 2
        %v2576 = vrot.slane %v2464, 2
        %v2577 = vsel %vm998, %v2575, %v2576
        %v2578 = vrot.slane %v2465, 2
        %v2579 = vsel %vm998, %v2576, %v2578
        %v2580 = vrot.slane %v2466, 2
        %v2581 = vrot.slane %v2467, 2
        %v2582 = vsel %vm998, %v2580, %v2581
        %v2583 = vrot.slane %v2468, 2
        %v2584 = vsel %vm998, %v2581, %v2583
        %v2585 = vrot.slane %v2469, 2
        %v2586 = vrot.slane %v2470, 2
        %v2587 = vsel %vm998, %v2585, %v2586
        %v2588 = vrot.slane %v2471, 2
        %v2589 = vsel %vm998, %v2586, %v2588
        %v2590 = vrot.slane %v2472, 2
        %v2591 = vrot.slane %v2473, 2
        %v2592 = vsel %vm998, %v2590, %v2591
        %v2593 = vrot.slane %v2474, 2
        %v2594 = vsel %vm998, %v2591, %v2593
        %v2595 = vrot.slane %v2475, 2
        %v2596 = vrot.slane %v2476, 2
        %v2597 = vsel %vm998, %v2595, %v2596
        %v2598 = vrot.slane %v2477, 2
        %v2599 = vsel %vm998, %v2596, %v2598
        %v2600 = vrot.slane %v2478, 2
        %v2601 = vrot.slane %v2479, 2
        %v2602 = vsel %vm998, %v2600, %v2601
        %v2603 = vrot.slane %v2480, 2
        %v2604 = vsel %vm998, %v2601, %v2603
        %v2605 = vrot.slane %v2481, 2
        %v2606 = vrot.slane %v2482, 2
        %v2607 = vsel %vm998, %v2605, %v2606
        %v2608 = vrot.slane %v2483, 2
        %v2609 = vsel %vm998, %v2606, %v2608
        %v2610 = vrot.slane %v2484, 2
        %v2611 = vrot.slane %v2485, 2
        %v2612 = vsel %vm998, %v2610, %v2611
        %v2613 = vrot.slane %v2486, 2
        %v2614 = vsel %vm998, %v2611, %v2613
        %v2647 = vadd.f32 %v2403, %v2537
        %v2648 = vadd.f32 %v2404, %v2539
        %v2649 = vadd.f32 %v2405, %v2542
        %v2650 = vadd.f32 %v2406, %v2544
        %v2651 = vadd.f32 %v2407, %v2547
        %v2652 = vadd.f32 %v2408, %v2549
        %v2653 = vadd.f32 %v2409, %v2552
        %v2654 = vadd.f32 %v2410, %v2554
        %v2655 = vadd.f32 %v2411, %v2557
        %v2656 = vadd.f32 %v2412, %v2559
        %v2657 = vadd.f32 %v2413, %v2562
        %v2658 = vadd.f32 %v2414, %v2564
        %v2659 = vadd.f32 %v2415, %v2567
        %v2660 = vadd.f32 %v2416, %v2569
        %v2661 = vadd.f32 %v2417, %v2572
        %v2662 = vadd.f32 %v2418, %v2574
        %v2663 = vadd.f32 %v2419, %v2577
        %v2664 = vadd.f32 %v2420, %v2579
        %v2665 = vadd.f32 %v2421, %v2582
        %v2666 = vadd.f32 %v2422, %v2584
        %v2667 = vadd.f32 %v2423, %v2587
        %v2668 = vadd.f32 %v2424, %v2589
        %v2669 = vadd.f32 %v2425, %v2592
        %v2670 = vadd.f32 %v2426, %v2594
        %v2671 = vadd.f32 %v2427, %v2597
        %v2672 = vadd.f32 %v2428, %v2599
        %v2673 = vadd.f32 %v2429, %v2602
        %v2674 = vadd.f32 %v2430, %v2604
        %v2675 = vadd.f32 %v2431, %v2607
        %v2676 = vadd.f32 %v2432, %v2609
        %v2677 = vadd.f32 %v2433, %v2612
        %v2678 = vadd.f32 %v2434, %v2614
        %v2679 = vlaneseq
        %v2680 = vshrl.u32 %v2679, 7
        %v2681 = vsub.s32 2, %v2680
        %v2682 = vrot.slane %v579, %v2681
        %v2683 = vmul.f32 %v515, %v2682
        %v2684 = vmul.f32 %v516, %v2682
        %v2685 = vmul.f32 %v517, %v2682
        %v2686 = vmul.f32 %v518, %v2682
        %v2687 = vmul.f32 %v519, %v2682
        %v2688 = vmul.f32 %v520, %v2682
        %v2689 = vmul.f32 %v521, %v2682
        %v2690 = vmul.f32 %v522, %v2682
        %v2691 = vmul.f32 %v523, %v2682
        %v2692 = vmul.f32 %v524, %v2682
        %v2693 = vmul.f32 %v525, %v2682
        %v2694 = vmul.f32 %v526, %v2682
        %v2695 = vmul.f32 %v527, %v2682
        %v2696 = vmul.f32 %v528, %v2682
        %v2697 = vmul.f32 %v529, %v2682
        %v2698 = vmul.f32 %v530, %v2682
        %v2699 = vmul.f32 %v531, %v2682
        %v2700 = vmul.f32 %v532, %v2682
        %v2701 = vmul.f32 %v533, %v2682
        %v2702 = vmul.f32 %v534, %v2682
        %v2703 = vmul.f32 %v535, %v2682
        %v2704 = vmul.f32 %v536, %v2682
        %v2705 = vmul.f32 %v537, %v2682
        %v2706 = vmul.f32 %v538, %v2682
        %v2707 = vmul.f32 %v539, %v2682
        %v2708 = vmul.f32 %v540, %v2682
        %v2709 = vmul.f32 %v541, %v2682
        %v2710 = vmul.f32 %v542, %v2682
        %v2711 = vmul.f32 %v543, %v2682
        %v2712 = vmul.f32 %v544, %v2682
        %v2713 = vmul.f32 %v545, %v2682
        %v2714 = vmul.f32 %v546, %v2682
        %v2715 = vmul.f32 %v547, %v2682
        %v2716 = vmul.f32 %v548, %v2682
        %v2717 = vmul.f32 %v549, %v2682
        %v2718 = vmul.f32 %v550, %v2682
        %v2719 = vmul.f32 %v551, %v2682
        %v2720 = vmul.f32 %v552, %v2682
        %v2721 = vmul.f32 %v553, %v2682
        %v2722 = vmul.f32 %v554, %v2682
        %v2723 = vmul.f32 %v555, %v2682
        %v2724 = vmul.f32 %v556, %v2682
        %v2725 = vmul.f32 %v557, %v2682
        %v2726 = vmul.f32 %v558, %v2682
        %v2727 = vmul.f32 %v559, %v2682
        %v2728 = vmul.f32 %v560, %v2682
        %v2729 = vmul.f32 %v561, %v2682
        %v2730 = vmul.f32 %v562, %v2682
        %v2779 = vrot.slane %v2683, 3
        %v2780 = vrot.slane %v2684, 3
        %v2781 = vsel %vm1243, %v2779, %v2780
        %v2782 = vrot.slane %v2685, 3
        %v2783 = vsel %vm1243, %v2780, %v2782
        %v2784 = vrot.slane %v2686, 3
        %v2785 = vrot.slane %v2687, 3
        %v2786 = vsel %vm1243, %v2784, %v2785
        %v2787 = vrot.slane %v2688, 3
        %v2788 = vsel %vm1243, %v2785, %v2787
        %v2789 = vrot.slane %v2689, 3
        %v2790 = vrot.slane %v2690, 3
        %v2791 = vsel %vm1243, %v2789, %v2790
        %v2792 = vrot.slane %v2691, 3
        %v2793 = vsel %vm1243, %v2790, %v2792
        %v2794 = vrot.slane %v2692, 3
        %v2795 = vrot.slane %v2693, 3
        %v2796 = vsel %vm1243, %v2794, %v2795
        %v2797 = vrot.slane %v2694, 3
        %v2798 = vsel %vm1243, %v2795, %v2797
        %v2799 = vrot.slane %v2695, 3
        %v2800 = vrot.slane %v2696, 3
        %v2801 = vsel %vm1243, %v2799, %v2800
        %v2802 = vrot.slane %v2697, 3
        %v2803 = vsel %vm1243, %v2800, %v2802
        %v2804 = vrot.slane %v2698, 3
        %v2805 = vrot.slane %v2699, 3
        %v2806 = vsel %vm1243, %v2804, %v2805
        %v2807 = vrot.slane %v2700, 3
        %v2808 = vsel %vm1243, %v2805, %v2807
        %v2809 = vrot.slane %v2701, 3
        %v2810 = vrot.slane %v2702, 3
        %v2811 = vsel %vm1243, %v2809, %v2810
        %v2812 = vrot.slane %v2703, 3
        %v2813 = vsel %vm1243, %v2810, %v2812
        %v2814 = vrot.slane %v2704, 3
        %v2815 = vrot.slane %v2705, 3
        %v2816 = vsel %vm1243, %v2814, %v2815
        %v2817 = vrot.slane %v2706, 3
        %v2818 = vsel %vm1243, %v2815, %v2817
        %v2819 = vrot.slane %v2707, 3
        %v2820 = vrot.slane %v2708, 3
        %v2821 = vsel %vm1243, %v2819, %v2820
        %v2822 = vrot.slane %v2709, 3
        %v2823 = vsel %vm1243, %v2820, %v2822
        %v2824 = vrot.slane %v2710, 3
        %v2825 = vrot.slane %v2711, 3
        %v2826 = vsel %vm1243, %v2824, %v2825
        %v2827 = vrot.slane %v2712, 3
        %v2828 = vsel %vm1243, %v2825, %v2827
        %v2829 = vrot.slane %v2713, 3
        %v2830 = vrot.slane %v2714, 3
        %v2831 = vsel %vm1243, %v2829, %v2830
        %v2832 = vrot.slane %v2715, 3
        %v2833 = vsel %vm1243, %v2830, %v2832
        %v2834 = vrot.slane %v2716, 3
        %v2835 = vrot.slane %v2717, 3
        %v2836 = vsel %vm1243, %v2834, %v2835
        %v2837 = vrot.slane %v2718, 3
        %v2838 = vsel %vm1243, %v2835, %v2837
        %v2839 = vrot.slane %v2719, 3
        %v2840 = vrot.slane %v2720, 3
        %v2841 = vsel %vm1243, %v2839, %v2840
        %v2842 = vrot.slane %v2721, 3
        %v2843 = vsel %vm1243, %v2840, %v2842
        %v2844 = vrot.slane %v2722, 3
        %v2845 = vrot.slane %v2723, 3
        %v2846 = vsel %vm1243, %v2844, %v2845
        %v2847 = vrot.slane %v2724, 3
        %v2848 = vsel %vm1243, %v2845, %v2847
        %v2849 = vrot.slane %v2725, 3
        %v2850 = vrot.slane %v2726, 3
        %v2851 = vsel %vm1243, %v2849, %v2850
        %v2852 = vrot.slane %v2727, 3
        %v2853 = vsel %vm1243, %v2850, %v2852
        %v2854 = vrot.slane %v2728, 3
        %v2855 = vrot.slane %v2729, 3
        %v2856 = vsel %vm1243, %v2854, %v2855
        %v2857 = vrot.slane %v2730, 3
        %v2858 = vsel %vm1243, %v2855, %v2857
        %v2891 = vadd.f32 %v2647, %v2781
        %v2892 = vadd.f32 %v2648, %v2783
        %v2893 = vadd.f32 %v2649, %v2786
        %v2894 = vadd.f32 %v2650, %v2788
        %v2895 = vadd.f32 %v2651, %v2791
        %v2896 = vadd.f32 %v2652, %v2793
        %v2897 = vadd.f32 %v2653, %v2796
        %v2898 = vadd.f32 %v2654, %v2798
        %v2899 = vadd.f32 %v2655, %v2801
        %v2900 = vadd.f32 %v2656, %v2803
        %v2901 = vadd.f32 %v2657, %v2806
        %v2902 = vadd.f32 %v2658, %v2808
        %v2903 = vadd.f32 %v2659, %v2811
        %v2904 = vadd.f32 %v2660, %v2813
        %v2905 = vadd.f32 %v2661, %v2816
        %v2906 = vadd.f32 %v2662, %v2818
        %v2907 = vadd.f32 %v2663, %v2821
        %v2908 = vadd.f32 %v2664, %v2823
        %v2909 = vadd.f32 %v2665, %v2826
        %v2910 = vadd.f32 %v2666, %v2828
        %v2911 = vadd.f32 %v2667, %v2831
        %v2912 = vadd.f32 %v2668, %v2833
        %v2913 = vadd.f32 %v2669, %v2836
        %v2914 = vadd.f32 %v2670, %v2838
        %v2915 = vadd.f32 %v2671, %v2841
        %v2916 = vadd.f32 %v2672, %v2843
        %v2917 = vadd.f32 %v2673, %v2846
        %v2918 = vadd.f32 %v2674, %v2848
        %v2919 = vadd.f32 %v2675, %v2851
        %v2920 = vadd.f32 %v2676, %v2853
        %v2921 = vadd.f32 %v2677, %v2856
        %v2922 = vadd.f32 %v2678, %v2858
        %v2923 = vlaneseq
        %v2924 = vshrl.u32 %v2923, 7
        %v2925 = vsub.s32 3, %v2924
        %v2926 = vrot.slane %v579, %v2925
        %v2927 = vmul.f32 %v515, %v2926
        %v2928 = vmul.f32 %v516, %v2926
        %v2929 = vmul.f32 %v517, %v2926
        %v2930 = vmul.f32 %v518, %v2926
        %v2931 = vmul.f32 %v519, %v2926
        %v2932 = vmul.f32 %v520, %v2926
        %v2933 = vmul.f32 %v521, %v2926
        %v2934 = vmul.f32 %v522, %v2926
        %v2935 = vmul.f32 %v523, %v2926
        %v2936 = vmul.f32 %v524, %v2926
        %v2937 = vmul.f32 %v525, %v2926
        %v2938 = vmul.f32 %v526, %v2926
        %v2939 = vmul.f32 %v527, %v2926
        %v2940 = vmul.f32 %v528, %v2926
        %v2941 = vmul.f32 %v529, %v2926
        %v2942 = vmul.f32 %v530, %v2926
        %v2943 = vmul.f32 %v531, %v2926
        %v2944 = vmul.f32 %v532, %v2926
        %v2945 = vmul.f32 %v533, %v2926
        %v2946 = vmul.f32 %v534, %v2926
        %v2947 = vmul.f32 %v535, %v2926
        %v2948 = vmul.f32 %v536, %v2926
        %v2949 = vmul.f32 %v537, %v2926
        %v2950 = vmul.f32 %v538, %v2926
        %v2951 = vmul.f32 %v539, %v2926
        %v2952 = vmul.f32 %v540, %v2926
        %v2953 = vmul.f32 %v541, %v2926
        %v2954 = vmul.f32 %v542, %v2926
        %v2955 = vmul.f32 %v543, %v2926
        %v2956 = vmul.f32 %v544, %v2926
        %v2957 = vmul.f32 %v545, %v2926
        %v2958 = vmul.f32 %v546, %v2926
        %v2959 = vmul.f32 %v547, %v2926
        %v2960 = vmul.f32 %v548, %v2926
        %v2961 = vmul.f32 %v549, %v2926
        %v2962 = vmul.f32 %v550, %v2926
        %v2963 = vmul.f32 %v551, %v2926
        %v2964 = vmul.f32 %v552, %v2926
        %v2965 = vmul.f32 %v553, %v2926
        %v2966 = vmul.f32 %v554, %v2926
        %v2967 = vmul.f32 %v555, %v2926
        %v2968 = vmul.f32 %v556, %v2926
        %v2969 = vmul.f32 %v557, %v2926
        %v2970 = vmul.f32 %v558, %v2926
        %v2971 = vmul.f32 %v559, %v2926
        %v2972 = vmul.f32 %v560, %v2926
        %v2973 = vmul.f32 %v561, %v2926
        %v2974 = vmul.f32 %v562, %v2926
        %v3023 = vrot.slane %v2927, 4
        %v3024 = vrot.slane %v2928, 4
        %v3025 = vsel %vm1488, %v3023, %v3024
        %v3026 = vrot.slane %v2929, 4
        %v3027 = vsel %vm1488, %v3024, %v3026
        %v3028 = vrot.slane %v2930, 4
        %v3029 = vrot.slane %v2931, 4
        %v3030 = vsel %vm1488, %v3028, %v3029
        %v3031 = vrot.slane %v2932, 4
        %v3032 = vsel %vm1488, %v3029, %v3031
        %v3033 = vrot.slane %v2933, 4
        %v3034 = vrot.slane %v2934, 4
        %v3035 = vsel %vm1488, %v3033, %v3034
        %v3036 = vrot.slane %v2935, 4
        %v3037 = vsel %vm1488, %v3034, %v3036
        %v3038 = vrot.slane %v2936, 4
        %v3039 = vrot.slane %v2937, 4
        %v3040 = vsel %vm1488, %v3038, %v3039
        %v3041 = vrot.slane %v2938, 4
        %v3042 = vsel %vm1488, %v3039, %v3041
        %v3043 = vrot.slane %v2939, 4
        %v3044 = vrot.slane %v2940, 4
        %v3045 = vsel %vm1488, %v3043, %v3044
        %v3046 = vrot.slane %v2941, 4
        %v3047 = vsel %vm1488, %v3044, %v3046
        %v3048 = vrot.slane %v2942, 4
        %v3049 = vrot.slane %v2943, 4
        %v3050 = vsel %vm1488, %v3048, %v3049
        %v3051 = vrot.slane %v2944, 4
        %v3052 = vsel %vm1488, %v3049, %v3051
        %v3053 = vrot.slane %v2945, 4
        %v3054 = vrot.slane %v2946, 4
        %v3055 = vsel %vm1488, %v3053, %v3054
        %v3056 = vrot.slane %v2947, 4
        %v3057 = vsel %vm1488, %v3054, %v3056
        %v3058 = vrot.slane %v2948, 4
        %v3059 = vrot.slane %v2949, 4
        %v3060 = vsel %vm1488, %v3058, %v3059
        %v3061 = vrot.slane %v2950, 4
        %v3062 = vsel %vm1488, %v3059, %v3061
        %v3063 = vrot.slane %v2951, 4
        %v3064 = vrot.slane %v2952, 4
        %v3065 = vsel %vm1488, %v3063, %v3064
        %v3066 = vrot.slane %v2953, 4
        %v3067 = vsel %vm1488, %v3064, %v3066
        %v3068 = vrot.slane %v2954, 4
        %v3069 = vrot.slane %v2955, 4
        %v3070 = vsel %vm1488, %v3068, %v3069
        %v3071 = vrot.slane %v2956, 4
        %v3072 = vsel %vm1488, %v3069, %v3071
        %v3073 = vrot.slane %v2957, 4
        %v3074 = vrot.slane %v2958, 4
        %v3075 = vsel %vm1488, %v3073, %v3074
        %v3076 = vrot.slane %v2959, 4
        %v3077 = vsel %vm1488, %v3074, %v3076
        %v3078 = vrot.slane %v2960, 4
        %v3079 = vrot.slane %v2961, 4
        %v3080 = vsel %vm1488, %v3078, %v3079
        %v3081 = vrot.slane %v2962, 4
        %v3082 = vsel %vm1488, %v3079, %v3081
        %v3083 = vrot.slane %v2963, 4
        %v3084 = vrot.slane %v2964, 4
        %v3085 = vsel %vm1488, %v3083, %v3084
        %v3086 = vrot.slane %v2965, 4
        %v3087 = vsel %vm1488, %v3084, %v3086
        %v3088 = vrot.slane %v2966, 4
        %v3089 = vrot.slane %v2967, 4
        %v3090 = vsel %vm1488, %v3088, %v3089
        %v3091 = vrot.slane %v2968, 4
        %v3092 = vsel %vm1488, %v3089, %v3091
        %v3093 = vrot.slane %v2969, 4
        %v3094 = vrot.slane %v2970, 4
        %v3095 = vsel %vm1488, %v3093, %v3094
        %v3096 = vrot.slane %v2971, 4
        %v3097 = vsel %vm1488, %v3094, %v3096
        %v3098 = vrot.slane %v2972, 4
        %v3099 = vrot.slane %v2973, 4
        %v3100 = vsel %vm1488, %v3098, %v3099
        %v3101 = vrot.slane %v2974, 4
        %v3102 = vsel %vm1488, %v3099, %v3101
        %v3135 = vadd.f32 %v2891, %v3025
        %v3136 = vadd.f32 %v2892, %v3027
        %v3137 = vadd.f32 %v2893, %v3030
        %v3138 = vadd.f32 %v2894, %v3032
        %v3139 = vadd.f32 %v2895, %v3035
        %v3140 = vadd.f32 %v2896, %v3037
        %v3141 = vadd.f32 %v2897, %v3040
        %v3142 = vadd.f32 %v2898, %v3042
        %v3143 = vadd.f32 %v2899, %v3045
        %v3144 = vadd.f32 %v2900, %v3047
        %v3145 = vadd.f32 %v2901, %v3050
        %v3146 = vadd.f32 %v2902, %v3052
        %v3147 = vadd.f32 %v2903, %v3055
        %v3148 = vadd.f32 %v2904, %v3057
        %v3149 = vadd.f32 %v2905, %v3060
        %v3150 = vadd.f32 %v2906, %v3062
        %v3151 = vadd.f32 %v2907, %v3065
        %v3152 = vadd.f32 %v2908, %v3067
        %v3153 = vadd.f32 %v2909, %v3070
        %v3154 = vadd.f32 %v2910, %v3072
        %v3155 = vadd.f32 %v2911, %v3075
        %v3156 = vadd.f32 %v2912, %v3077
        %v3157 = vadd.f32 %v2913, %v3080
        %v3158 = vadd.f32 %v2914, %v3082
        %v3159 = vadd.f32 %v2915, %v3085
        %v3160 = vadd.f32 %v2916, %v3087
        %v3161 = vadd.f32 %v2917, %v3090
        %v3162 = vadd.f32 %v2918, %v3092
        %v3163 = vadd.f32 %v2919, %v3095
        %v3164 = vadd.f32 %v2920, %v3097
        %v3165 = vadd.f32 %v2921, %v3100
        %v3166 = vadd.f32 %v2922, %v3102
        %v3167 = vlaneseq
        %v3168 = vshrl.u32 %v3167, 7
        %v3169 = vsub.s32 4, %v3168
        %v3170 = vrot.slane %v579, %v3169
        %v3171 = vmul.f32 %v515, %v3170
        %v3172 = vmul.f32 %v516, %v3170
        %v3173 = vmul.f32 %v517, %v3170
        %v3174 = vmul.f32 %v518, %v3170
        %v3175 = vmul.f32 %v519, %v3170
        %v3176 = vmul.f32 %v520, %v3170
        %v3177 = vmul.f32 %v521, %v3170
        %v3178 = vmul.f32 %v522, %v3170
        %v3179 = vmul.f32 %v523, %v3170
        %v3180 = vmul.f32 %v524, %v3170
        %v3181 = vmul.f32 %v525, %v3170
        %v3182 = vmul.f32 %v526, %v3170
        %v3183 = vmul.f32 %v527, %v3170
        %v3184 = vmul.f32 %v528, %v3170
        %v3185 = vmul.f32 %v529, %v3170
        %v3186 = vmul.f32 %v530, %v3170
        %v3187 = vmul.f32 %v531, %v3170
        %v3188 = vmul.f32 %v532, %v3170
        %v3189 = vmul.f32 %v533, %v3170
        %v3190 = vmul.f32 %v534, %v3170
        %v3191 = vmul.f32 %v535, %v3170
        %v3192 = vmul.f32 %v536, %v3170
        %v3193 = vmul.f32 %v537, %v3170
        %v3194 = vmul.f32 %v538, %v3170
        %v3195 = vmul.f32 %v539, %v3170
        %v3196 = vmul.f32 %v540, %v3170
        %v3197 = vmul.f32 %v541, %v3170
        %v3198 = vmul.f32 %v542, %v3170
        %v3199 = vmul.f32 %v543, %v3170
        %v3200 = vmul.f32 %v544, %v3170
        %v3201 = vmul.f32 %v545, %v3170
        %v3202 = vmul.f32 %v546, %v3170
        %v3203 = vmul.f32 %v547, %v3170
        %v3204 = vmul.f32 %v548, %v3170
        %v3205 = vmul.f32 %v549, %v3170
        %v3206 = vmul.f32 %v550, %v3170
        %v3207 = vmul.f32 %v551, %v3170
        %v3208 = vmul.f32 %v552, %v3170
        %v3209 = vmul.f32 %v553, %v3170
        %v3210 = vmul.f32 %v554, %v3170
        %v3211 = vmul.f32 %v555, %v3170
        %v3212 = vmul.f32 %v556, %v3170
        %v3213 = vmul.f32 %v557, %v3170
        %v3214 = vmul.f32 %v558, %v3170
        %v3215 = vmul.f32 %v559, %v3170
        %v3216 = vmul.f32 %v560, %v3170
        %v3217 = vmul.f32 %v561, %v3170
        %v3218 = vmul.f32 %v562, %v3170
        %v3267 = vrot.slane %v3171, 5
        %v3268 = vrot.slane %v3172, 5
        %v3269 = vsel %vm1733, %v3267, %v3268
        %v3270 = vrot.slane %v3173, 5
        %v3271 = vsel %vm1733, %v3268, %v3270
        %v3272 = vrot.slane %v3174, 5
        %v3273 = vrot.slane %v3175, 5
        %v3274 = vsel %vm1733, %v3272, %v3273
        %v3275 = vrot.slane %v3176, 5
        %v3276 = vsel %vm1733, %v3273, %v3275
        %v3277 = vrot.slane %v3177, 5
        %v3278 = vrot.slane %v3178, 5
        %v3279 = vsel %vm1733, %v3277, %v3278
        %v3280 = vrot.slane %v3179, 5
        %v3281 = vsel %vm1733, %v3278, %v3280
        %v3282 = vrot.slane %v3180, 5
        %v3283 = vrot.slane %v3181, 5
        %v3284 = vsel %vm1733, %v3282, %v3283
        %v3285 = vrot.slane %v3182, 5
        %v3286 = vsel %vm1733, %v3283, %v3285
        %v3287 = vrot.slane %v3183, 5
        %v3288 = vrot.slane %v3184, 5
        %v3289 = vsel %vm1733, %v3287, %v3288
        %v3290 = vrot.slane %v3185, 5
        %v3291 = vsel %vm1733, %v3288, %v3290
        %v3292 = vrot.slane %v3186, 5
        %v3293 = vrot.slane %v3187, 5
        %v3294 = vsel %vm1733, %v3292, %v3293
        %v3295 = vrot.slane %v3188, 5
        %v3296 = vsel %vm1733, %v3293, %v3295
        %v3297 = vrot.slane %v3189, 5
        %v3298 = vrot.slane %v3190, 5
        %v3299 = vsel %vm1733, %v3297, %v3298
        %v3300 = vrot.slane %v3191, 5
        %v3301 = vsel %vm1733, %v3298, %v3300
        %v3302 = vrot.slane %v3192, 5
        %v3303 = vrot.slane %v3193, 5
        %v3304 = vsel %vm1733, %v3302, %v3303
        %v3305 = vrot.slane %v3194, 5
        %v3306 = vsel %vm1733, %v3303, %v3305
        %v3307 = vrot.slane %v3195, 5
        %v3308 = vrot.slane %v3196, 5
        %v3309 = vsel %vm1733, %v3307, %v3308
        %v3310 = vrot.slane %v3197, 5
        %v3311 = vsel %vm1733, %v3308, %v3310
        %v3312 = vrot.slane %v3198, 5
        %v3313 = vrot.slane %v3199, 5
        %v3314 = vsel %vm1733, %v3312, %v3313
        %v3315 = vrot.slane %v3200, 5
        %v3316 = vsel %vm1733, %v3313, %v3315
        %v3317 = vrot.slane %v3201, 5
        %v3318 = vrot.slane %v3202, 5
        %v3319 = vsel %vm1733, %v3317, %v3318
        %v3320 = vrot.slane %v3203, 5
        %v3321 = vsel %vm1733, %v3318, %v3320
        %v3322 = vrot.slane %v3204, 5
        %v3323 = vrot.slane %v3205, 5
        %v3324 = vsel %vm1733, %v3322, %v3323
        %v3325 = vrot.slane %v3206, 5
        %v3326 = vsel %vm1733, %v3323, %v3325
        %v3327 = vrot.slane %v3207, 5
        %v3328 = vrot.slane %v3208, 5
        %v3329 = vsel %vm1733, %v3327, %v3328
        %v3330 = vrot.slane %v3209, 5
        %v3331 = vsel %vm1733, %v3328, %v3330
        %v3332 = vrot.slane %v3210, 5
        %v3333 = vrot.slane %v3211, 5
        %v3334 = vsel %vm1733, %v3332, %v3333
        %v3335 = vrot.slane %v3212, 5
        %v3336 = vsel %vm1733, %v3333, %v3335
        %v3337 = vrot.slane %v3213, 5
        %v3338 = vrot.slane %v3214, 5
        %v3339 = vsel %vm1733, %v3337, %v3338
        %v3340 = vrot.slane %v3215, 5
        %v3341 = vsel %vm1733, %v3338, %v3340
        %v3342 = vrot.slane %v3216, 5
        %v3343 = vrot.slane %v3217, 5
        %v3344 = vsel %vm1733, %v3342, %v3343
        %v3345 = vrot.slane %v3218, 5
        %v3346 = vsel %vm1733, %v3343, %v3345
        %v3379 = vadd.f32 %v3135, %v3269
        %v3380 = vadd.f32 %v3136, %v3271
        %v3381 = vadd.f32 %v3137, %v3274
        %v3382 = vadd.f32 %v3138, %v3276
        %v3383 = vadd.f32 %v3139, %v3279
        %v3384 = vadd.f32 %v3140, %v3281
        %v3385 = vadd.f32 %v3141, %v3284
        %v3386 = vadd.f32 %v3142, %v3286
        %v3387 = vadd.f32 %v3143, %v3289
        %v3388 = vadd.f32 %v3144, %v3291
        %v3389 = vadd.f32 %v3145, %v3294
        %v3390 = vadd.f32 %v3146, %v3296
        %v3391 = vadd.f32 %v3147, %v3299
        %v3392 = vadd.f32 %v3148, %v3301
        %v3393 = vadd.f32 %v3149, %v3304
        %v3394 = vadd.f32 %v3150, %v3306
        %v3395 = vadd.f32 %v3151, %v3309
        %v3396 = vadd.f32 %v3152, %v3311
        %v3397 = vadd.f32 %v3153, %v3314
        %v3398 = vadd.f32 %v3154, %v3316
        %v3399 = vadd.f32 %v3155, %v3319
        %v3400 = vadd.f32 %v3156, %v3321
        %v3401 = vadd.f32 %v3157, %v3324
        %v3402 = vadd.f32 %v3158, %v3326
        %v3403 = vadd.f32 %v3159, %v3329
        %v3404 = vadd.f32 %v3160, %v3331
        %v3405 = vadd.f32 %v3161, %v3334
        %v3406 = vadd.f32 %v3162, %v3336
        %v3407 = vadd.f32 %v3163, %v3339
        %v3408 = vadd.f32 %v3164, %v3341
        %v3409 = vadd.f32 %v3165, %v3344
        %v3410 = vadd.f32 %v3166, %v3346
        %v3411 = vlaneseq
        %v3412 = vshrl.u32 %v3411, 7
        %v3413 = vsub.s32 5, %v3412
        %v3414 = vrot.slane %v579, %v3413
        %v3415 = vmul.f32 %v515, %v3414
        %v3416 = vmul.f32 %v516, %v3414
        %v3417 = vmul.f32 %v517, %v3414
        %v3418 = vmul.f32 %v518, %v3414
        %v3419 = vmul.f32 %v519, %v3414
        %v3420 = vmul.f32 %v520, %v3414
        %v3421 = vmul.f32 %v521, %v3414
        %v3422 = vmul.f32 %v522, %v3414
        %v3423 = vmul.f32 %v523, %v3414
        %v3424 = vmul.f32 %v524, %v3414
        %v3425 = vmul.f32 %v525, %v3414
        %v3426 = vmul.f32 %v526, %v3414
        %v3427 = vmul.f32 %v527, %v3414
        %v3428 = vmul.f32 %v528, %v3414
        %v3429 = vmul.f32 %v529, %v3414
        %v3430 = vmul.f32 %v530, %v3414
        %v3431 = vmul.f32 %v531, %v3414
        %v3432 = vmul.f32 %v532, %v3414
        %v3433 = vmul.f32 %v533, %v3414
        %v3434 = vmul.f32 %v534, %v3414
        %v3435 = vmul.f32 %v535, %v3414
        %v3436 = vmul.f32 %v536, %v3414
        %v3437 = vmul.f32 %v537, %v3414
        %v3438 = vmul.f32 %v538, %v3414
        %v3439 = vmul.f32 %v539, %v3414
        %v3440 = vmul.f32 %v540, %v3414
        %v3441 = vmul.f32 %v541, %v3414
        %v3442 = vmul.f32 %v542, %v3414
        %v3443 = vmul.f32 %v543, %v3414
        %v3444 = vmul.f32 %v544, %v3414
        %v3445 = vmul.f32 %v545, %v3414
        %v3446 = vmul.f32 %v546, %v3414
        %v3447 = vmul.f32 %v547, %v3414
        %v3448 = vmul.f32 %v548, %v3414
        %v3449 = vmul.f32 %v549, %v3414
        %v3450 = vmul.f32 %v550, %v3414
        %v3451 = vmul.f32 %v551, %v3414
        %v3452 = vmul.f32 %v552, %v3414
        %v3453 = vmul.f32 %v553, %v3414
        %v3454 = vmul.f32 %v554, %v3414
        %v3455 = vmul.f32 %v555, %v3414
        %v3456 = vmul.f32 %v556, %v3414
        %v3457 = vmul.f32 %v557, %v3414
        %v3458 = vmul.f32 %v558, %v3414
        %v3459 = vmul.f32 %v559, %v3414
        %v3460 = vmul.f32 %v560, %v3414
        %v3461 = vmul.f32 %v561, %v3414
        %v3462 = vmul.f32 %v562, %v3414
        %v3511 = vrot.slane %v3415, 6
        %v3512 = vrot.slane %v3416, 6
        %v3513 = vsel %vm1978, %v3511, %v3512
        %v3514 = vrot.slane %v3417, 6
        %v3515 = vsel %vm1978, %v3512, %v3514
        %v3516 = vrot.slane %v3418, 6
        %v3517 = vrot.slane %v3419, 6
        %v3518 = vsel %vm1978, %v3516, %v3517
        %v3519 = vrot.slane %v3420, 6
        %v3520 = vsel %vm1978, %v3517, %v3519
        %v3521 = vrot.slane %v3421, 6
        %v3522 = vrot.slane %v3422, 6
        %v3523 = vsel %vm1978, %v3521, %v3522
        %v3524 = vrot.slane %v3423, 6
        %v3525 = vsel %vm1978, %v3522, %v3524
        %v3526 = vrot.slane %v3424, 6
        %v3527 = vrot.slane %v3425, 6
        %v3528 = vsel %vm1978, %v3526, %v3527
        %v3529 = vrot.slane %v3426, 6
        %v3530 = vsel %vm1978, %v3527, %v3529
        %v3531 = vrot.slane %v3427, 6
        %v3532 = vrot.slane %v3428, 6
        %v3533 = vsel %vm1978, %v3531, %v3532
        %v3534 = vrot.slane %v3429, 6
        %v3535 = vsel %vm1978, %v3532, %v3534
        %v3536 = vrot.slane %v3430, 6
        %v3537 = vrot.slane %v3431, 6
        %v3538 = vsel %vm1978, %v3536, %v3537
        %v3539 = vrot.slane %v3432, 6
        %v3540 = vsel %vm1978, %v3537, %v3539
        %v3541 = vrot.slane %v3433, 6
        %v3542 = vrot.slane %v3434, 6
        %v3543 = vsel %vm1978, %v3541, %v3542
        %v3544 = vrot.slane %v3435, 6
        %v3545 = vsel %vm1978, %v3542, %v3544
        %v3546 = vrot.slane %v3436, 6
        %v3547 = vrot.slane %v3437, 6
        %v3548 = vsel %vm1978, %v3546, %v3547
        %v3549 = vrot.slane %v3438, 6
        %v3550 = vsel %vm1978, %v3547, %v3549
        %v3551 = vrot.slane %v3439, 6
        %v3552 = vrot.slane %v3440, 6
        %v3553 = vsel %vm1978, %v3551, %v3552
        %v3554 = vrot.slane %v3441, 6
        %v3555 = vsel %vm1978, %v3552, %v3554
        %v3556 = vrot.slane %v3442, 6
        %v3557 = vrot.slane %v3443, 6
        %v3558 = vsel %vm1978, %v3556, %v3557
        %v3559 = vrot.slane %v3444, 6
        %v3560 = vsel %vm1978, %v3557, %v3559
        %v3561 = vrot.slane %v3445, 6
        %v3562 = vrot.slane %v3446, 6
        %v3563 = vsel %vm1978, %v3561, %v3562
        %v3564 = vrot.slane %v3447, 6
        %v3565 = vsel %vm1978, %v3562, %v3564
        %v3566 = vrot.slane %v3448, 6
        %v3567 = vrot.slane %v3449, 6
        %v3568 = vsel %vm1978, %v3566, %v3567
        %v3569 = vrot.slane %v3450, 6
        %v3570 = vsel %vm1978, %v3567, %v3569
        %v3571 = vrot.slane %v3451, 6
        %v3572 = vrot.slane %v3452, 6
        %v3573 = vsel %vm1978, %v3571, %v3572
        %v3574 = vrot.slane %v3453, 6
        %v3575 = vsel %vm1978, %v3572, %v3574
        %v3576 = vrot.slane %v3454, 6
        %v3577 = vrot.slane %v3455, 6
        %v3578 = vsel %vm1978, %v3576, %v3577
        %v3579 = vrot.slane %v3456, 6
        %v3580 = vsel %vm1978, %v3577, %v3579
        %v3581 = vrot.slane %v3457, 6
        %v3582 = vrot.slane %v3458, 6
        %v3583 = vsel %vm1978, %v3581, %v3582
        %v3584 = vrot.slane %v3459, 6
        %v3585 = vsel %vm1978, %v3582, %v3584
        %v3586 = vrot.slane %v3460, 6
        %v3587 = vrot.slane %v3461, 6
        %v3588 = vsel %vm1978, %v3586, %v3587
        %v3589 = vrot.slane %v3462, 6
        %v3590 = vsel %vm1978, %v3587, %v3589
        %v3623 = vadd.f32 %v3379, %v3513
        %v3624 = vadd.f32 %v3380, %v3515
        %v3625 = vadd.f32 %v3381, %v3518
        %v3626 = vadd.f32 %v3382, %v3520
        %v3627 = vadd.f32 %v3383, %v3523
        %v3628 = vadd.f32 %v3384, %v3525
        %v3629 = vadd.f32 %v3385, %v3528
        %v3630 = vadd.f32 %v3386, %v3530
        %v3631 = vadd.f32 %v3387, %v3533
        %v3632 = vadd.f32 %v3388, %v3535
        %v3633 = vadd.f32 %v3389, %v3538
        %v3634 = vadd.f32 %v3390, %v3540
        %v3635 = vadd.f32 %v3391, %v3543
        %v3636 = vadd.f32 %v3392, %v3545
        %v3637 = vadd.f32 %v3393, %v3548
        %v3638 = vadd.f32 %v3394, %v3550
        %v3639 = vadd.f32 %v3395, %v3553
        %v3640 = vadd.f32 %v3396, %v3555
        %v3641 = vadd.f32 %v3397, %v3558
        %v3642 = vadd.f32 %v3398, %v3560
        %v3643 = vadd.f32 %v3399, %v3563
        %v3644 = vadd.f32 %v3400, %v3565
        %v3645 = vadd.f32 %v3401, %v3568
        %v3646 = vadd.f32 %v3402, %v3570
        %v3647 = vadd.f32 %v3403, %v3573
        %v3648 = vadd.f32 %v3404, %v3575
        %v3649 = vadd.f32 %v3405, %v3578
        %v3650 = vadd.f32 %v3406, %v3580
        %v3651 = vadd.f32 %v3407, %v3583
        %v3652 = vadd.f32 %v3408, %v3585
        %v3653 = vadd.f32 %v3409, %v3588
        %v3654 = vadd.f32 %v3410, %v3590
        %v3655 = vlaneseq
        %v3656 = vshrl.u32 %v3655, 7
        %v3657 = vsub.s32 6, %v3656
        %v3658 = vrot.slane %v579, %v3657
        %v3659 = vmul.f32 %v518, %v3658
        %v3660 = vmul.f32 %v519, %v3658
        %v3661 = vmul.f32 %v521, %v3658
        %v3662 = vmul.f32 %v522, %v3658
        %v3663 = vmul.f32 %v524, %v3658
        %v3664 = vmul.f32 %v525, %v3658
        %v3665 = vmul.f32 %v527, %v3658
        %v3666 = vmul.f32 %v528, %v3658
        %v3667 = vmul.f32 %v530, %v3658
        %v3668 = vmul.f32 %v531, %v3658
        %v3669 = vmul.f32 %v533, %v3658
        %v3670 = vmul.f32 %v534, %v3658
        %v3671 = vmul.f32 %v536, %v3658
        %v3672 = vmul.f32 %v537, %v3658
        %v3673 = vmul.f32 %v539, %v3658
        %v3674 = vmul.f32 %v540, %v3658
        %v3675 = vmul.f32 %v542, %v3658
        %v3676 = vmul.f32 %v543, %v3658
        %v3677 = vmul.f32 %v545, %v3658
        %v3678 = vmul.f32 %v546, %v3658
        %v3679 = vmul.f32 %v548, %v3658
        %v3680 = vmul.f32 %v549, %v3658
        %v3681 = vmul.f32 %v551, %v3658
        %v3682 = vmul.f32 %v552, %v3658
        %v3683 = vmul.f32 %v554, %v3658
        %v3684 = vmul.f32 %v555, %v3658
        %v3685 = vmul.f32 %v557, %v3658
        %v3686 = vmul.f32 %v558, %v3658
        %v3687 = vmul.f32 %v560, %v3658
        %v3688 = vmul.f32 %v561, %v3658
        %v3689 = vmul.f32 %v563, %v3658
        %v3690 = vmul.f32 %v564, %v3658
        %v3691 = vadd.f32 %v3623, %v3659
        %v3692 = vadd.f32 %v3624, %v3660
        %v3693 = vadd.f32 %v3625, %v3661
        %v3694 = vadd.f32 %v3626, %v3662
        %v3695 = vadd.f32 %v3627, %v3663
        %v3696 = vadd.f32 %v3628, %v3664
        %v3697 = vadd.f32 %v3629, %v3665
        %v3698 = vadd.f32 %v3630, %v3666
        %v3699 = vadd.f32 %v3631, %v3667
        %v3700 = vadd.f32 %v3632, %v3668
        %v3701 = vadd.f32 %v3633, %v3669
        %v3702 = vadd.f32 %v3634, %v3670
        %v3703 = vadd.f32 %v3635, %v3671
        %v3704 = vadd.f32 %v3636, %v3672
        %v3705 = vadd.f32 %v3637, %v3673
        %v3706 = vadd.f32 %v3638, %v3674
        %v3707 = vadd.f32 %v3639, %v3675
        %v3708 = vadd.f32 %v3640, %v3676
        %v3709 = vadd.f32 %v3641, %v3677
        %v3710 = vadd.f32 %v3642, %v3678
        %v3711 = vadd.f32 %v3643, %v3679
        %v3712 = vadd.f32 %v3644, %v3680
        %v3713 = vadd.f32 %v3645, %v3681
        %v3714 = vadd.f32 %v3646, %v3682
        %v3715 = vadd.f32 %v3647, %v3683
        %v3716 = vadd.f32 %v3648, %v3684
        %v3717 = vadd.f32 %v3649, %v3685
        %v3718 = vadd.f32 %v3650, %v3686
        %v3719 = vadd.f32 %v3651, %v3687
        %v3720 = vadd.f32 %v3652, %v3688
        %v3721 = vadd.f32 %v3653, %v3689
        %v3722 = vadd.f32 %v3654, %v3690
        %v3723 = vlaneseq
        %v3724 = vshrl.u32 %v3723, 7
        %v3725 = vsub.s32 7, %v3724
        %v3726 = vrot.slane %v579, %v3725
        %v3727 = vmul.f32 %v518, %v3726
        %v3728 = vmul.f32 %v519, %v3726
        %v3729 = vmul.f32 %v520, %v3726
        %v3730 = vmul.f32 %v521, %v3726
        %v3731 = vmul.f32 %v522, %v3726
        %v3732 = vmul.f32 %v523, %v3726
        %v3733 = vmul.f32 %v524, %v3726
        %v3734 = vmul.f32 %v525, %v3726
        %v3735 = vmul.f32 %v526, %v3726
        %v3736 = vmul.f32 %v527, %v3726
        %v3737 = vmul.f32 %v528, %v3726
        %v3738 = vmul.f32 %v529, %v3726
        %v3739 = vmul.f32 %v530, %v3726
        %v3740 = vmul.f32 %v531, %v3726
        %v3741 = vmul.f32 %v532, %v3726
        %v3742 = vmul.f32 %v533, %v3726
        %v3743 = vmul.f32 %v534, %v3726
        %v3744 = vmul.f32 %v535, %v3726
        %v3745 = vmul.f32 %v536, %v3726
        %v3746 = vmul.f32 %v537, %v3726
        %v3747 = vmul.f32 %v538, %v3726
        %v3748 = vmul.f32 %v539, %v3726
        %v3749 = vmul.f32 %v540, %v3726
        %v3750 = vmul.f32 %v541, %v3726
        %v3751 = vmul.f32 %v542, %v3726
        %v3752 = vmul.f32 %v543, %v3726
        %v3753 = vmul.f32 %v544, %v3726
        %v3754 = vmul.f32 %v545, %v3726
        %v3755 = vmul.f32 %v546, %v3726
        %v3756 = vmul.f32 %v547, %v3726
        %v3757 = vmul.f32 %v548, %v3726
        %v3758 = vmul.f32 %v549, %v3726
        %v3759 = vmul.f32 %v550, %v3726
        %v3760 = vmul.f32 %v551, %v3726
        %v3761 = vmul.f32 %v552, %v3726
        %v3762 = vmul.f32 %v553, %v3726
        %v3763 = vmul.f32 %v554, %v3726
        %v3764 = vmul.f32 %v555, %v3726
        %v3765 = vmul.f32 %v556, %v3726
        %v3766 = vmul.f32 %v557, %v3726
        %v3767 = vmul.f32 %v558, %v3726
        %v3768 = vmul.f32 %v559, %v3726
        %v3769 = vmul.f32 %v560, %v3726
        %v3770 = vmul.f32 %v561, %v3726
        %v3771 = vmul.f32 %v562, %v3726
        %v3772 = vmul.f32 %v563, %v3726
        %v3773 = vmul.f32 %v564, %v3726
        %v3774 = vmul.f32 %v565, %v3726
        %v3823 = vrot.slane %v3727, 1
        %v3824 = vrot.slane %v3728, 1
        %v3825 = vsel %vm753, %v3823, %v3824
        %v3826 = vrot.slane %v3729, 1
        %v3827 = vsel %vm753, %v3824, %v3826
        %v3828 = vrot.slane %v3730, 1
        %v3829 = vrot.slane %v3731, 1
        %v3830 = vsel %vm753, %v3828, %v3829
        %v3831 = vrot.slane %v3732, 1
        %v3832 = vsel %vm753, %v3829, %v3831
        %v3833 = vrot.slane %v3733, 1
        %v3834 = vrot.slane %v3734, 1
        %v3835 = vsel %vm753, %v3833, %v3834
        %v3836 = vrot.slane %v3735, 1
        %v3837 = vsel %vm753, %v3834, %v3836
        %v3838 = vrot.slane %v3736, 1
        %v3839 = vrot.slane %v3737, 1
        %v3840 = vsel %vm753, %v3838, %v3839
        %v3841 = vrot.slane %v3738, 1
        %v3842 = vsel %vm753, %v3839, %v3841
        %v3843 = vrot.slane %v3739, 1
        %v3844 = vrot.slane %v3740, 1
        %v3845 = vsel %vm753, %v3843, %v3844
        %v3846 = vrot.slane %v3741, 1
        %v3847 = vsel %vm753, %v3844, %v3846
        %v3848 = vrot.slane %v3742, 1
        %v3849 = vrot.slane %v3743, 1
        %v3850 = vsel %vm753, %v3848, %v3849
        %v3851 = vrot.slane %v3744, 1
        %v3852 = vsel %vm753, %v3849, %v3851
        %v3853 = vrot.slane %v3745, 1
        %v3854 = vrot.slane %v3746, 1
        %v3855 = vsel %vm753, %v3853, %v3854
        %v3856 = vrot.slane %v3747, 1
        %v3857 = vsel %vm753, %v3854, %v3856
        %v3858 = vrot.slane %v3748, 1
        %v3859 = vrot.slane %v3749, 1
        %v3860 = vsel %vm753, %v3858, %v3859
        %v3861 = vrot.slane %v3750, 1
        %v3862 = vsel %vm753, %v3859, %v3861
        %v3863 = vrot.slane %v3751, 1
        %v3864 = vrot.slane %v3752, 1
        %v3865 = vsel %vm753, %v3863, %v3864
        %v3866 = vrot.slane %v3753, 1
        %v3867 = vsel %vm753, %v3864, %v3866
        %v3868 = vrot.slane %v3754, 1
        %v3869 = vrot.slane %v3755, 1
        %v3870 = vsel %vm753, %v3868, %v3869
        %v3871 = vrot.slane %v3756, 1
        %v3872 = vsel %vm753, %v3869, %v3871
        %v3873 = vrot.slane %v3757, 1
        %v3874 = vrot.slane %v3758, 1
        %v3875 = vsel %vm753, %v3873, %v3874
        %v3876 = vrot.slane %v3759, 1
        %v3877 = vsel %vm753, %v3874, %v3876
        %v3878 = vrot.slane %v3760, 1
        %v3879 = vrot.slane %v3761, 1
        %v3880 = vsel %vm753, %v3878, %v3879
        %v3881 = vrot.slane %v3762, 1
        %v3882 = vsel %vm753, %v3879, %v3881
        %v3883 = vrot.slane %v3763, 1
        %v3884 = vrot.slane %v3764, 1
        %v3885 = vsel %vm753, %v3883, %v3884
        %v3886 = vrot.slane %v3765, 1
        %v3887 = vsel %vm753, %v3884, %v3886
        %v3888 = vrot.slane %v3766, 1
        %v3889 = vrot.slane %v3767, 1
        %v3890 = vsel %vm753, %v3888, %v3889
        %v3891 = vrot.slane %v3768, 1
        %v3892 = vsel %vm753, %v3889, %v3891
        %v3893 = vrot.slane %v3769, 1
        %v3894 = vrot.slane %v3770, 1
        %v3895 = vsel %vm753, %v3893, %v3894
        %v3896 = vrot.slane %v3771, 1
        %v3897 = vsel %vm753, %v3894, %v3896
        %v3898 = vrot.slane %v3772, 1
        %v3899 = vrot.slane %v3773, 1
        %v3900 = vsel %vm753, %v3898, %v3899
        %v3901 = vrot.slane %v3774, 1
        %v3902 = vsel %vm753, %v3899, %v3901
        %v3935 = vadd.f32 %v3691, %v3825
        %v3936 = vadd.f32 %v3692, %v3827
        %v3937 = vadd.f32 %v3693, %v3830
        %v3938 = vadd.f32 %v3694, %v3832
        %v3939 = vadd.f32 %v3695, %v3835
        %v3940 = vadd.f32 %v3696, %v3837
        %v3941 = vadd.f32 %v3697, %v3840
        %v3942 = vadd.f32 %v3698, %v3842
        %v3943 = vadd.f32 %v3699, %v3845
        %v3944 = vadd.f32 %v3700, %v3847
        %v3945 = vadd.f32 %v3701, %v3850
        %v3946 = vadd.f32 %v3702, %v3852
        %v3947 = vadd.f32 %v3703, %v3855
        %v3948 = vadd.f32 %v3704, %v3857
        %v3949 = vadd.f32 %v3705, %v3860
        %v3950 = vadd.f32 %v3706, %v3862
        %v3951 = vadd.f32 %v3707, %v3865
        %v3952 = vadd.f32 %v3708, %v3867
        %v3953 = vadd.f32 %v3709, %v3870
        %v3954 = vadd.f32 %v3710, %v3872
        %v3955 = vadd.f32 %v3711, %v3875
        %v3956 = vadd.f32 %v3712, %v3877
        %v3957 = vadd.f32 %v3713, %v3880
        %v3958 = vadd.f32 %v3714, %v3882
        %v3959 = vadd.f32 %v3715, %v3885
        %v3960 = vadd.f32 %v3716, %v3887
        %v3961 = vadd.f32 %v3717, %v3890
        %v3962 = vadd.f32 %v3718, %v3892
        %v3963 = vadd.f32 %v3719, %v3895
        %v3964 = vadd.f32 %v3720, %v3897
        %v3965 = vadd.f32 %v3721, %v3900
        %v3966 = vadd.f32 %v3722, %v3902
        %v3967 = vlaneseq
        %v3968 = vshrl.u32 %v3967, 7
        %v3969 = vsub.s32 0, %v3968
        %v3970 = vrot.slane %v580, %v3969
        %v3971 = vmul.f32 %v518, %v3970
        %v3972 = vmul.f32 %v519, %v3970
        %v3973 = vmul.f32 %v520, %v3970
        %v3974 = vmul.f32 %v521, %v3970
        %v3975 = vmul.f32 %v522, %v3970
        %v3976 = vmul.f32 %v523, %v3970
        %v3977 = vmul.f32 %v524, %v3970
        %v3978 = vmul.f32 %v525, %v3970
        %v3979 = vmul.f32 %v526, %v3970
        %v3980 = vmul.f32 %v527, %v3970
        %v3981 = vmul.f32 %v528, %v3970
        %v3982 = vmul.f32 %v529, %v3970
        %v3983 = vmul.f32 %v530, %v3970
        %v3984 = vmul.f32 %v531, %v3970
        %v3985 = vmul.f32 %v532, %v3970
        %v3986 = vmul.f32 %v533, %v3970
        %v3987 = vmul.f32 %v534, %v3970
        %v3988 = vmul.f32 %v535, %v3970
        %v3989 = vmul.f32 %v536, %v3970
        %v3990 = vmul.f32 %v537, %v3970
        %v3991 = vmul.f32 %v538, %v3970
        %v3992 = vmul.f32 %v539, %v3970
        %v3993 = vmul.f32 %v540, %v3970
        %v3994 = vmul.f32 %v541, %v3970
        %v3995 = vmul.f32 %v542, %v3970
        %v3996 = vmul.f32 %v543, %v3970
        %v3997 = vmul.f32 %v544, %v3970
        %v3998 = vmul.f32 %v545, %v3970
        %v3999 = vmul.f32 %v546, %v3970
        %v4000 = vmul.f32 %v547, %v3970
        %v4001 = vmul.f32 %v548, %v3970
        %v4002 = vmul.f32 %v549, %v3970
        %v4003 = vmul.f32 %v550, %v3970
        %v4004 = vmul.f32 %v551, %v3970
        %v4005 = vmul.f32 %v552, %v3970
        %v4006 = vmul.f32 %v553, %v3970
        %v4007 = vmul.f32 %v554, %v3970
        %v4008 = vmul.f32 %v555, %v3970
        %v4009 = vmul.f32 %v556, %v3970
        %v4010 = vmul.f32 %v557, %v3970
        %v4011 = vmul.f32 %v558, %v3970
        %v4012 = vmul.f32 %v559, %v3970
        %v4013 = vmul.f32 %v560, %v3970
        %v4014 = vmul.f32 %v561, %v3970
        %v4015 = vmul.f32 %v562, %v3970
        %v4016 = vmul.f32 %v563, %v3970
        %v4017 = vmul.f32 %v564, %v3970
        %v4018 = vmul.f32 %v565, %v3970
        %v4067 = vrot.slane %v3971, 2
        %v4068 = vrot.slane %v3972, 2
        %v4069 = vsel %vm998, %v4067, %v4068
        %v4070 = vrot.slane %v3973, 2
        %v4071 = vsel %vm998, %v4068, %v4070
        %v4072 = vrot.slane %v3974, 2
        %v4073 = vrot.slane %v3975, 2
        %v4074 = vsel %vm998, %v4072, %v4073
        %v4075 = vrot.slane %v3976, 2
        %v4076 = vsel %vm998, %v4073, %v4075
        %v4077 = vrot.slane %v3977, 2
        %v4078 = vrot.slane %v3978, 2
        %v4079 = vsel %vm998, %v4077, %v4078
        %v4080 = vrot.slane %v3979, 2
        %v4081 = vsel %vm998, %v4078, %v4080
        %v4082 = vrot.slane %v3980, 2
        %v4083 = vrot.slane %v3981, 2
        %v4084 = vsel %vm998, %v4082, %v4083
        %v4085 = vrot.slane %v3982, 2
        %v4086 = vsel %vm998, %v4083, %v4085
        %v4087 = vrot.slane %v3983, 2
        %v4088 = vrot.slane %v3984, 2
        %v4089 = vsel %vm998, %v4087, %v4088
        %v4090 = vrot.slane %v3985, 2
        %v4091 = vsel %vm998, %v4088, %v4090
        %v4092 = vrot.slane %v3986, 2
        %v4093 = vrot.slane %v3987, 2
        %v4094 = vsel %vm998, %v4092, %v4093
        %v4095 = vrot.slane %v3988, 2
        %v4096 = vsel %vm998, %v4093, %v4095
        %v4097 = vrot.slane %v3989, 2
        %v4098 = vrot.slane %v3990, 2
        %v4099 = vsel %vm998, %v4097, %v4098
        %v4100 = vrot.slane %v3991, 2
        %v4101 = vsel %vm998, %v4098, %v4100
        %v4102 = vrot.slane %v3992, 2
        %v4103 = vrot.slane %v3993, 2
        %v4104 = vsel %vm998, %v4102, %v4103
        %v4105 = vrot.slane %v3994, 2
        %v4106 = vsel %vm998, %v4103, %v4105
        %v4107 = vrot.slane %v3995, 2
        %v4108 = vrot.slane %v3996, 2
        %v4109 = vsel %vm998, %v4107, %v4108
        %v4110 = vrot.slane %v3997, 2
        %v4111 = vsel %vm998, %v4108, %v4110
        %v4112 = vrot.slane %v3998, 2
        %v4113 = vrot.slane %v3999, 2
        %v4114 = vsel %vm998, %v4112, %v4113
        %v4115 = vrot.slane %v4000, 2
        %v4116 = vsel %vm998, %v4113, %v4115
        %v4117 = vrot.slane %v4001, 2
        %v4118 = vrot.slane %v4002, 2
        %v4119 = vsel %vm998, %v4117, %v4118
        %v4120 = vrot.slane %v4003, 2
        %v4121 = vsel %vm998, %v4118, %v4120
        %v4122 = vrot.slane %v4004, 2
        %v4123 = vrot.slane %v4005, 2
        %v4124 = vsel %vm998, %v4122, %v4123
        %v4125 = vrot.slane %v4006, 2
        %v4126 = vsel %vm998, %v4123, %v4125
        %v4127 = vrot.slane %v4007, 2
        %v4128 = vrot.slane %v4008, 2
        %v4129 = vsel %vm998, %v4127, %v4128
        %v4130 = vrot.slane %v4009, 2
        %v4131 = vsel %vm998, %v4128, %v4130
        %v4132 = vrot.slane %v4010, 2
        %v4133 = vrot.slane %v4011, 2
        %v4134 = vsel %vm998, %v4132, %v4133
        %v4135 = vrot.slane %v4012, 2
        %v4136 = vsel %vm998, %v4133, %v4135
        %v4137 = vrot.slane %v4013, 2
        %v4138 = vrot.slane %v4014, 2
        %v4139 = vsel %vm998, %v4137, %v4138
        %v4140 = vrot.slane %v4015, 2
        %v4141 = vsel %vm998, %v4138, %v4140
        %v4142 = vrot.slane %v4016, 2
        %v4143 = vrot.slane %v4017, 2
        %v4144 = vsel %vm998, %v4142, %v4143
        %v4145 = vrot.slane %v4018, 2
        %v4146 = vsel %vm998, %v4143, %v4145
        %v4179 = vadd.f32 %v3935, %v4069
        %v4180 = vadd.f32 %v3936, %v4071
        %v4181 = vadd.f32 %v3937, %v4074
        %v4182 = vadd.f32 %v3938, %v4076
        %v4183 = vadd.f32 %v3939, %v4079
        %v4184 = vadd.f32 %v3940, %v4081
        %v4185 = vadd.f32 %v3941, %v4084
        %v4186 = vadd.f32 %v3942, %v4086
        %v4187 = vadd.f32 %v3943, %v4089
        %v4188 = vadd.f32 %v3944, %v4091
        %v4189 = vadd.f32 %v3945, %v4094
        %v4190 = vadd.f32 %v3946, %v4096
        %v4191 = vadd.f32 %v3947, %v4099
        %v4192 = vadd.f32 %v3948, %v4101
        %v4193 = vadd.f32 %v3949, %v4104
        %v4194 = vadd.f32 %v3950, %v4106
        %v4195 = vadd.f32 %v3951, %v4109
        %v4196 = vadd.f32 %v3952, %v4111
        %v4197 = vadd.f32 %v3953, %v4114
        %v4198 = vadd.f32 %v3954, %v4116
        %v4199 = vadd.f32 %v3955, %v4119
        %v4200 = vadd.f32 %v3956, %v4121
        %v4201 = vadd.f32 %v3957, %v4124
        %v4202 = vadd.f32 %v3958, %v4126
        %v4203 = vadd.f32 %v3959, %v4129
        %v4204 = vadd.f32 %v3960, %v4131
        %v4205 = vadd.f32 %v3961, %v4134
        %v4206 = vadd.f32 %v3962, %v4136
        %v4207 = vadd.f32 %v3963, %v4139
        %v4208 = vadd.f32 %v3964, %v4141
        %v4209 = vadd.f32 %v3965, %v4144
        %v4210 = vadd.f32 %v3966, %v4146
        %v4211 = vlaneseq
        %v4212 = vshrl.u32 %v4211, 7
        %v4213 = vsub.s32 1, %v4212
        %v4214 = vrot.slane %v580, %v4213
        %v4215 = vmul.f32 %v518, %v4214
        %v4216 = vmul.f32 %v519, %v4214
        %v4217 = vmul.f32 %v520, %v4214
        %v4218 = vmul.f32 %v521, %v4214
        %v4219 = vmul.f32 %v522, %v4214
        %v4220 = vmul.f32 %v523, %v4214
        %v4221 = vmul.f32 %v524, %v4214
        %v4222 = vmul.f32 %v525, %v4214
        %v4223 = vmul.f32 %v526, %v4214
        %v4224 = vmul.f32 %v527, %v4214
        %v4225 = vmul.f32 %v528, %v4214
        %v4226 = vmul.f32 %v529, %v4214
        %v4227 = vmul.f32 %v530, %v4214
        %v4228 = vmul.f32 %v531, %v4214
        %v4229 = vmul.f32 %v532, %v4214
        %v4230 = vmul.f32 %v533, %v4214
        %v4231 = vmul.f32 %v534, %v4214
        %v4232 = vmul.f32 %v535, %v4214
        %v4233 = vmul.f32 %v536, %v4214
        %v4234 = vmul.f32 %v537, %v4214
        %v4235 = vmul.f32 %v538, %v4214
        %v4236 = vmul.f32 %v539, %v4214
        %v4237 = vmul.f32 %v540, %v4214
        %v4238 = vmul.f32 %v541, %v4214
        %v4239 = vmul.f32 %v542, %v4214
        %v4240 = vmul.f32 %v543, %v4214
        %v4241 = vmul.f32 %v544, %v4214
        %v4242 = vmul.f32 %v545, %v4214
        %v4243 = vmul.f32 %v546, %v4214
        %v4244 = vmul.f32 %v547, %v4214
        %v4245 = vmul.f32 %v548, %v4214
        %v4246 = vmul.f32 %v549, %v4214
        %v4247 = vmul.f32 %v550, %v4214
        %v4248 = vmul.f32 %v551, %v4214
        %v4249 = vmul.f32 %v552, %v4214
        %v4250 = vmul.f32 %v553, %v4214
        %v4251 = vmul.f32 %v554, %v4214
        %v4252 = vmul.f32 %v555, %v4214
        %v4253 = vmul.f32 %v556, %v4214
        %v4254 = vmul.f32 %v557, %v4214
        %v4255 = vmul.f32 %v558, %v4214
        %v4256 = vmul.f32 %v559, %v4214
        %v4257 = vmul.f32 %v560, %v4214
        %v4258 = vmul.f32 %v561, %v4214
        %v4259 = vmul.f32 %v562, %v4214
        %v4260 = vmul.f32 %v563, %v4214
        %v4261 = vmul.f32 %v564, %v4214
        %v4262 = vmul.f32 %v565, %v4214
        %v4311 = vrot.slane %v4215, 3
        %v4312 = vrot.slane %v4216, 3
        %v4313 = vsel %vm1243, %v4311, %v4312
        %v4314 = vrot.slane %v4217, 3
        %v4315 = vsel %vm1243, %v4312, %v4314
        %v4316 = vrot.slane %v4218, 3
        %v4317 = vrot.slane %v4219, 3
        %v4318 = vsel %vm1243, %v4316, %v4317
        %v4319 = vrot.slane %v4220, 3
        %v4320 = vsel %vm1243, %v4317, %v4319
        %v4321 = vrot.slane %v4221, 3
        %v4322 = vrot.slane %v4222, 3
        %v4323 = vsel %vm1243, %v4321, %v4322
        %v4324 = vrot.slane %v4223, 3
        %v4325 = vsel %vm1243, %v4322, %v4324
        %v4326 = vrot.slane %v4224, 3
        %v4327 = vrot.slane %v4225, 3
        %v4328 = vsel %vm1243, %v4326, %v4327
        %v4329 = vrot.slane %v4226, 3
        %v4330 = vsel %vm1243, %v4327, %v4329
        %v4331 = vrot.slane %v4227, 3
        %v4332 = vrot.slane %v4228, 3
        %v4333 = vsel %vm1243, %v4331, %v4332
        %v4334 = vrot.slane %v4229, 3
        %v4335 = vsel %vm1243, %v4332, %v4334
        %v4336 = vrot.slane %v4230, 3
        %v4337 = vrot.slane %v4231, 3
        %v4338 = vsel %vm1243, %v4336, %v4337
        %v4339 = vrot.slane %v4232, 3
        %v4340 = vsel %vm1243, %v4337, %v4339
        %v4341 = vrot.slane %v4233, 3
        %v4342 = vrot.slane %v4234, 3
        %v4343 = vsel %vm1243, %v4341, %v4342
        %v4344 = vrot.slane %v4235, 3
        %v4345 = vsel %vm1243, %v4342, %v4344
        %v4346 = vrot.slane %v4236, 3
        %v4347 = vrot.slane %v4237, 3
        %v4348 = vsel %vm1243, %v4346, %v4347
        %v4349 = vrot.slane %v4238, 3
        %v4350 = vsel %vm1243, %v4347, %v4349
        %v4351 = vrot.slane %v4239, 3
        %v4352 = vrot.slane %v4240, 3
        %v4353 = vsel %vm1243, %v4351, %v4352
        %v4354 = vrot.slane %v4241, 3
        %v4355 = vsel %vm1243, %v4352, %v4354
        %v4356 = vrot.slane %v4242, 3
        %v4357 = vrot.slane %v4243, 3
        %v4358 = vsel %vm1243, %v4356, %v4357
        %v4359 = vrot.slane %v4244, 3
        %v4360 = vsel %vm1243, %v4357, %v4359
        %v4361 = vrot.slane %v4245, 3
        %v4362 = vrot.slane %v4246, 3
        %v4363 = vsel %vm1243, %v4361, %v4362
        %v4364 = vrot.slane %v4247, 3
        %v4365 = vsel %vm1243, %v4362, %v4364
        %v4366 = vrot.slane %v4248, 3
        %v4367 = vrot.slane %v4249, 3
        %v4368 = vsel %vm1243, %v4366, %v4367
        %v4369 = vrot.slane %v4250, 3
        %v4370 = vsel %vm1243, %v4367, %v4369
        %v4371 = vrot.slane %v4251, 3
        %v4372 = vrot.slane %v4252, 3
        %v4373 = vsel %vm1243, %v4371, %v4372
        %v4374 = vrot.slane %v4253, 3
        %v4375 = vsel %vm1243, %v4372, %v4374
        %v4376 = vrot.slane %v4254, 3
        %v4377 = vrot.slane %v4255, 3
        %v4378 = vsel %vm1243, %v4376, %v4377
        %v4379 = vrot.slane %v4256, 3
        %v4380 = vsel %vm1243, %v4377, %v4379
        %v4381 = vrot.slane %v4257, 3
        %v4382 = vrot.slane %v4258, 3
        %v4383 = vsel %vm1243, %v4381, %v4382
        %v4384 = vrot.slane %v4259, 3
        %v4385 = vsel %vm1243, %v4382, %v4384
        %v4386 = vrot.slane %v4260, 3
        %v4387 = vrot.slane %v4261, 3
        %v4388 = vsel %vm1243, %v4386, %v4387
        %v4389 = vrot.slane %v4262, 3
        %v4390 = vsel %vm1243, %v4387, %v4389
        %v4423 = vadd.f32 %v4179, %v4313
        %v4424 = vadd.f32 %v4180, %v4315
        %v4425 = vadd.f32 %v4181, %v4318
        %v4426 = vadd.f32 %v4182, %v4320
        %v4427 = vadd.f32 %v4183, %v4323
        %v4428 = vadd.f32 %v4184, %v4325
        %v4429 = vadd.f32 %v4185, %v4328
        %v4430 = vadd.f32 %v4186, %v4330
        %v4431 = vadd.f32 %v4187, %v4333
        %v4432 = vadd.f32 %v4188, %v4335
        %v4433 = vadd.f32 %v4189, %v4338
        %v4434 = vadd.f32 %v4190, %v4340
        %v4435 = vadd.f32 %v4191, %v4343
        %v4436 = vadd.f32 %v4192, %v4345
        %v4437 = vadd.f32 %v4193, %v4348
        %v4438 = vadd.f32 %v4194, %v4350
        %v4439 = vadd.f32 %v4195, %v4353
        %v4440 = vadd.f32 %v4196, %v4355
        %v4441 = vadd.f32 %v4197, %v4358
        %v4442 = vadd.f32 %v4198, %v4360
        %v4443 = vadd.f32 %v4199, %v4363
        %v4444 = vadd.f32 %v4200, %v4365
        %v4445 = vadd.f32 %v4201, %v4368
        %v4446 = vadd.f32 %v4202, %v4370
        %v4447 = vadd.f32 %v4203, %v4373
        %v4448 = vadd.f32 %v4204, %v4375
        %v4449 = vadd.f32 %v4205, %v4378
        %v4450 = vadd.f32 %v4206, %v4380
        %v4451 = vadd.f32 %v4207, %v4383
        %v4452 = vadd.f32 %v4208, %v4385
        %v4453 = vadd.f32 %v4209, %v4388
        %v4454 = vadd.f32 %v4210, %v4390
        %v4455 = vlaneseq
        %v4456 = vshrl.u32 %v4455, 7
        %v4457 = vsub.s32 2, %v4456
        %v4458 = vrot.slane %v580, %v4457
        %v4459 = vmul.f32 %v518, %v4458
        %v4460 = vmul.f32 %v519, %v4458
        %v4461 = vmul.f32 %v520, %v4458
        %v4462 = vmul.f32 %v521, %v4458
        %v4463 = vmul.f32 %v522, %v4458
        %v4464 = vmul.f32 %v523, %v4458
        %v4465 = vmul.f32 %v524, %v4458
        %v4466 = vmul.f32 %v525, %v4458
        %v4467 = vmul.f32 %v526, %v4458
        %v4468 = vmul.f32 %v527, %v4458
        %v4469 = vmul.f32 %v528, %v4458
        %v4470 = vmul.f32 %v529, %v4458
        %v4471 = vmul.f32 %v530, %v4458
        %v4472 = vmul.f32 %v531, %v4458
        %v4473 = vmul.f32 %v532, %v4458
        %v4474 = vmul.f32 %v533, %v4458
        %v4475 = vmul.f32 %v534, %v4458
        %v4476 = vmul.f32 %v535, %v4458
        %v4477 = vmul.f32 %v536, %v4458
        %v4478 = vmul.f32 %v537, %v4458
        %v4479 = vmul.f32 %v538, %v4458
        %v4480 = vmul.f32 %v539, %v4458
        %v4481 = vmul.f32 %v540, %v4458
        %v4482 = vmul.f32 %v541, %v4458
        %v4483 = vmul.f32 %v542, %v4458
        %v4484 = vmul.f32 %v543, %v4458
        %v4485 = vmul.f32 %v544, %v4458
        %v4486 = vmul.f32 %v545, %v4458
        %v4487 = vmul.f32 %v546, %v4458
        %v4488 = vmul.f32 %v547, %v4458
        %v4489 = vmul.f32 %v548, %v4458
        %v4490 = vmul.f32 %v549, %v4458
        %v4491 = vmul.f32 %v550, %v4458
        %v4492 = vmul.f32 %v551, %v4458
        %v4493 = vmul.f32 %v552, %v4458
        %v4494 = vmul.f32 %v553, %v4458
        %v4495 = vmul.f32 %v554, %v4458
        %v4496 = vmul.f32 %v555, %v4458
        %v4497 = vmul.f32 %v556, %v4458
        %v4498 = vmul.f32 %v557, %v4458
        %v4499 = vmul.f32 %v558, %v4458
        %v4500 = vmul.f32 %v559, %v4458
        %v4501 = vmul.f32 %v560, %v4458
        %v4502 = vmul.f32 %v561, %v4458
        %v4503 = vmul.f32 %v562, %v4458
        %v4504 = vmul.f32 %v563, %v4458
        %v4505 = vmul.f32 %v564, %v4458
        %v4506 = vmul.f32 %v565, %v4458
        %v4555 = vrot.slane %v4459, 4
        %v4556 = vrot.slane %v4460, 4
        %v4557 = vsel %vm1488, %v4555, %v4556
        %v4558 = vrot.slane %v4461, 4
        %v4559 = vsel %vm1488, %v4556, %v4558
        %v4560 = vrot.slane %v4462, 4
        %v4561 = vrot.slane %v4463, 4
        %v4562 = vsel %vm1488, %v4560, %v4561
        %v4563 = vrot.slane %v4464, 4
        %v4564 = vsel %vm1488, %v4561, %v4563
        %v4565 = vrot.slane %v4465, 4
        %v4566 = vrot.slane %v4466, 4
        %v4567 = vsel %vm1488, %v4565, %v4566
        %v4568 = vrot.slane %v4467, 4
        %v4569 = vsel %vm1488, %v4566, %v4568
        %v4570 = vrot.slane %v4468, 4
        %v4571 = vrot.slane %v4469, 4
        %v4572 = vsel %vm1488, %v4570, %v4571
        %v4573 = vrot.slane %v4470, 4
        %v4574 = vsel %vm1488, %v4571, %v4573
        %v4575 = vrot.slane %v4471, 4
        %v4576 = vrot.slane %v4472, 4
        %v4577 = vsel %vm1488, %v4575, %v4576
        %v4578 = vrot.slane %v4473, 4
        %v4579 = vsel %vm1488, %v4576, %v4578
        %v4580 = vrot.slane %v4474, 4
        %v4581 = vrot.slane %v4475, 4
        %v4582 = vsel %vm1488, %v4580, %v4581
        %v4583 = vrot.slane %v4476, 4
        %v4584 = vsel %vm1488, %v4581, %v4583
        %v4585 = vrot.slane %v4477, 4
        %v4586 = vrot.slane %v4478, 4
        %v4587 = vsel %vm1488, %v4585, %v4586
        %v4588 = vrot.slane %v4479, 4
        %v4589 = vsel %vm1488, %v4586, %v4588
        %v4590 = vrot.slane %v4480, 4
        %v4591 = vrot.slane %v4481, 4
        %v4592 = vsel %vm1488, %v4590, %v4591
        %v4593 = vrot.slane %v4482, 4
        %v4594 = vsel %vm1488, %v4591, %v4593
        %v4595 = vrot.slane %v4483, 4
        %v4596 = vrot.slane %v4484, 4
        %v4597 = vsel %vm1488, %v4595, %v4596
        %v4598 = vrot.slane %v4485, 4
        %v4599 = vsel %vm1488, %v4596, %v4598
        %v4600 = vrot.slane %v4486, 4
        %v4601 = vrot.slane %v4487, 4
        %v4602 = vsel %vm1488, %v4600, %v4601
        %v4603 = vrot.slane %v4488, 4
        %v4604 = vsel %vm1488, %v4601, %v4603
        %v4605 = vrot.slane %v4489, 4
        %v4606 = vrot.slane %v4490, 4
        %v4607 = vsel %vm1488, %v4605, %v4606
        %v4608 = vrot.slane %v4491, 4
        %v4609 = vsel %vm1488, %v4606, %v4608
        %v4610 = vrot.slane %v4492, 4
        %v4611 = vrot.slane %v4493, 4
        %v4612 = vsel %vm1488, %v4610, %v4611
        %v4613 = vrot.slane %v4494, 4
        %v4614 = vsel %vm1488, %v4611, %v4613
        %v4615 = vrot.slane %v4495, 4
        %v4616 = vrot.slane %v4496, 4
        %v4617 = vsel %vm1488, %v4615, %v4616
        %v4618 = vrot.slane %v4497, 4
        %v4619 = vsel %vm1488, %v4616, %v4618
        %v4620 = vrot.slane %v4498, 4
        %v4621 = vrot.slane %v4499, 4
        %v4622 = vsel %vm1488, %v4620, %v4621
        %v4623 = vrot.slane %v4500, 4
        %v4624 = vsel %vm1488, %v4621, %v4623
        %v4625 = vrot.slane %v4501, 4
        %v4626 = vrot.slane %v4502, 4
        %v4627 = vsel %vm1488, %v4625, %v4626
        %v4628 = vrot.slane %v4503, 4
        %v4629 = vsel %vm1488, %v4626, %v4628
        %v4630 = vrot.slane %v4504, 4
        %v4631 = vrot.slane %v4505, 4
        %v4632 = vsel %vm1488, %v4630, %v4631
        %v4633 = vrot.slane %v4506, 4
        %v4634 = vsel %vm1488, %v4631, %v4633
        %v4667 = vadd.f32 %v4423, %v4557
        %v4668 = vadd.f32 %v4424, %v4559
        %v4669 = vadd.f32 %v4425, %v4562
        %v4670 = vadd.f32 %v4426, %v4564
        %v4671 = vadd.f32 %v4427, %v4567
        %v4672 = vadd.f32 %v4428, %v4569
        %v4673 = vadd.f32 %v4429, %v4572
        %v4674 = vadd.f32 %v4430, %v4574
        %v4675 = vadd.f32 %v4431, %v4577
        %v4676 = vadd.f32 %v4432, %v4579
        %v4677 = vadd.f32 %v4433, %v4582
        %v4678 = vadd.f32 %v4434, %v4584
        %v4679 = vadd.f32 %v4435, %v4587
        %v4680 = vadd.f32 %v4436, %v4589
        %v4681 = vadd.f32 %v4437, %v4592
        %v4682 = vadd.f32 %v4438, %v4594
        %v4683 = vadd.f32 %v4439, %v4597
        %v4684 = vadd.f32 %v4440, %v4599
        %v4685 = vadd.f32 %v4441, %v4602
        %v4686 = vadd.f32 %v4442, %v4604
        %v4687 = vadd.f32 %v4443, %v4607
        %v4688 = vadd.f32 %v4444, %v4609
        %v4689 = vadd.f32 %v4445, %v4612
        %v4690 = vadd.f32 %v4446, %v4614
        %v4691 = vadd.f32 %v4447, %v4617
        %v4692 = vadd.f32 %v4448, %v4619
        %v4693 = vadd.f32 %v4449, %v4622
        %v4694 = vadd.f32 %v4450, %v4624
        %v4695 = vadd.f32 %v4451, %v4627
        %v4696 = vadd.f32 %v4452, %v4629
        %v4697 = vadd.f32 %v4453, %v4632
        %v4698 = vadd.f32 %v4454, %v4634
        %v4699 = vlaneseq
        %v4700 = vshrl.u32 %v4699, 7
        %v4701 = vsub.s32 3, %v4700
        %v4702 = vrot.slane %v580, %v4701
        %v4703 = vmul.f32 %v518, %v4702
        %v4704 = vmul.f32 %v519, %v4702
        %v4705 = vmul.f32 %v520, %v4702
        %v4706 = vmul.f32 %v521, %v4702
        %v4707 = vmul.f32 %v522, %v4702
        %v4708 = vmul.f32 %v523, %v4702
        %v4709 = vmul.f32 %v524, %v4702
        %v4710 = vmul.f32 %v525, %v4702
        %v4711 = vmul.f32 %v526, %v4702
        %v4712 = vmul.f32 %v527, %v4702
        %v4713 = vmul.f32 %v528, %v4702
        %v4714 = vmul.f32 %v529, %v4702
        %v4715 = vmul.f32 %v530, %v4702
        %v4716 = vmul.f32 %v531, %v4702
        %v4717 = vmul.f32 %v532, %v4702
        %v4718 = vmul.f32 %v533, %v4702
        %v4719 = vmul.f32 %v534, %v4702
        %v4720 = vmul.f32 %v535, %v4702
        %v4721 = vmul.f32 %v536, %v4702
        %v4722 = vmul.f32 %v537, %v4702
        %v4723 = vmul.f32 %v538, %v4702
        %v4724 = vmul.f32 %v539, %v4702
        %v4725 = vmul.f32 %v540, %v4702
        %v4726 = vmul.f32 %v541, %v4702
        %v4727 = vmul.f32 %v542, %v4702
        %v4728 = vmul.f32 %v543, %v4702
        %v4729 = vmul.f32 %v544, %v4702
        %v4730 = vmul.f32 %v545, %v4702
        %v4731 = vmul.f32 %v546, %v4702
        %v4732 = vmul.f32 %v547, %v4702
        %v4733 = vmul.f32 %v548, %v4702
        %v4734 = vmul.f32 %v549, %v4702
        %v4735 = vmul.f32 %v550, %v4702
        %v4736 = vmul.f32 %v551, %v4702
        %v4737 = vmul.f32 %v552, %v4702
        %v4738 = vmul.f32 %v553, %v4702
        %v4739 = vmul.f32 %v554, %v4702
        %v4740 = vmul.f32 %v555, %v4702
        %v4741 = vmul.f32 %v556, %v4702
        %v4742 = vmul.f32 %v557, %v4702
        %v4743 = vmul.f32 %v558, %v4702
        %v4744 = vmul.f32 %v559, %v4702
        %v4745 = vmul.f32 %v560, %v4702
        %v4746 = vmul.f32 %v561, %v4702
        %v4747 = vmul.f32 %v562, %v4702
        %v4748 = vmul.f32 %v563, %v4702
        %v4749 = vmul.f32 %v564, %v4702
        %v4750 = vmul.f32 %v565, %v4702
        %v4799 = vrot.slane %v4703, 5
        %v4800 = vrot.slane %v4704, 5
        %v4801 = vsel %vm1733, %v4799, %v4800
        %v4802 = vrot.slane %v4705, 5
        %v4803 = vsel %vm1733, %v4800, %v4802
        %v4804 = vrot.slane %v4706, 5
        %v4805 = vrot.slane %v4707, 5
        %v4806 = vsel %vm1733, %v4804, %v4805
        %v4807 = vrot.slane %v4708, 5
        %v4808 = vsel %vm1733, %v4805, %v4807
        %v4809 = vrot.slane %v4709, 5
        %v4810 = vrot.slane %v4710, 5
        %v4811 = vsel %vm1733, %v4809, %v4810
        %v4812 = vrot.slane %v4711, 5
        %v4813 = vsel %vm1733, %v4810, %v4812
        %v4814 = vrot.slane %v4712, 5
        %v4815 = vrot.slane %v4713, 5
        %v4816 = vsel %vm1733, %v4814, %v4815
        %v4817 = vrot.slane %v4714, 5
        %v4818 = vsel %vm1733, %v4815, %v4817
        %v4819 = vrot.slane %v4715, 5
        %v4820 = vrot.slane %v4716, 5
        %v4821 = vsel %vm1733, %v4819, %v4820
        %v4822 = vrot.slane %v4717, 5
        %v4823 = vsel %vm1733, %v4820, %v4822
        %v4824 = vrot.slane %v4718, 5
        %v4825 = vrot.slane %v4719, 5
        %v4826 = vsel %vm1733, %v4824, %v4825
        %v4827 = vrot.slane %v4720, 5
        %v4828 = vsel %vm1733, %v4825, %v4827
        %v4829 = vrot.slane %v4721, 5
        %v4830 = vrot.slane %v4722, 5
        %v4831 = vsel %vm1733, %v4829, %v4830
        %v4832 = vrot.slane %v4723, 5
        %v4833 = vsel %vm1733, %v4830, %v4832
        %v4834 = vrot.slane %v4724, 5
        %v4835 = vrot.slane %v4725, 5
        %v4836 = vsel %vm1733, %v4834, %v4835
        %v4837 = vrot.slane %v4726, 5
        %v4838 = vsel %vm1733, %v4835, %v4837
        %v4839 = vrot.slane %v4727, 5
        %v4840 = vrot.slane %v4728, 5
        %v4841 = vsel %vm1733, %v4839, %v4840
        %v4842 = vrot.slane %v4729, 5
        %v4843 = vsel %vm1733, %v4840, %v4842
        %v4844 = vrot.slane %v4730, 5
        %v4845 = vrot.slane %v4731, 5
        %v4846 = vsel %vm1733, %v4844, %v4845
        %v4847 = vrot.slane %v4732, 5
        %v4848 = vsel %vm1733, %v4845, %v4847
        %v4849 = vrot.slane %v4733, 5
        %v4850 = vrot.slane %v4734, 5
        %v4851 = vsel %vm1733, %v4849, %v4850
        %v4852 = vrot.slane %v4735, 5
        %v4853 = vsel %vm1733, %v4850, %v4852
        %v4854 = vrot.slane %v4736, 5
        %v4855 = vrot.slane %v4737, 5
        %v4856 = vsel %vm1733, %v4854, %v4855
        %v4857 = vrot.slane %v4738, 5
        %v4858 = vsel %vm1733, %v4855, %v4857
        %v4859 = vrot.slane %v4739, 5
        %v4860 = vrot.slane %v4740, 5
        %v4861 = vsel %vm1733, %v4859, %v4860
        %v4862 = vrot.slane %v4741, 5
        %v4863 = vsel %vm1733, %v4860, %v4862
        %v4864 = vrot.slane %v4742, 5
        %v4865 = vrot.slane %v4743, 5
        %v4866 = vsel %vm1733, %v4864, %v4865
        %v4867 = vrot.slane %v4744, 5
        %v4868 = vsel %vm1733, %v4865, %v4867
        %v4869 = vrot.slane %v4745, 5
        %v4870 = vrot.slane %v4746, 5
        %v4871 = vsel %vm1733, %v4869, %v4870
        %v4872 = vrot.slane %v4747, 5
        %v4873 = vsel %vm1733, %v4870, %v4872
        %v4874 = vrot.slane %v4748, 5
        %v4875 = vrot.slane %v4749, 5
        %v4876 = vsel %vm1733, %v4874, %v4875
        %v4877 = vrot.slane %v4750, 5
        %v4878 = vsel %vm1733, %v4875, %v4877
        %v4911 = vadd.f32 %v4667, %v4801
        %v4912 = vadd.f32 %v4668, %v4803
        %v4913 = vadd.f32 %v4669, %v4806
        %v4914 = vadd.f32 %v4670, %v4808
        %v4915 = vadd.f32 %v4671, %v4811
        %v4916 = vadd.f32 %v4672, %v4813
        %v4917 = vadd.f32 %v4673, %v4816
        %v4918 = vadd.f32 %v4674, %v4818
        %v4919 = vadd.f32 %v4675, %v4821
        %v4920 = vadd.f32 %v4676, %v4823
        %v4921 = vadd.f32 %v4677, %v4826
        %v4922 = vadd.f32 %v4678, %v4828
        %v4923 = vadd.f32 %v4679, %v4831
        %v4924 = vadd.f32 %v4680, %v4833
        %v4925 = vadd.f32 %v4681, %v4836
        %v4926 = vadd.f32 %v4682, %v4838
        %v4927 = vadd.f32 %v4683, %v4841
        %v4928 = vadd.f32 %v4684, %v4843
        %v4929 = vadd.f32 %v4685, %v4846
        %v4930 = vadd.f32 %v4686, %v4848
        %v4931 = vadd.f32 %v4687, %v4851
        %v4932 = vadd.f32 %v4688, %v4853
        %v4933 = vadd.f32 %v4689, %v4856
        %v4934 = vadd.f32 %v4690, %v4858
        %v4935 = vadd.f32 %v4691, %v4861
        %v4936 = vadd.f32 %v4692, %v4863
        %v4937 = vadd.f32 %v4693, %v4866
        %v4938 = vadd.f32 %v4694, %v4868
        %v4939 = vadd.f32 %v4695, %v4871
        %v4940 = vadd.f32 %v4696, %v4873
        %v4941 = vadd.f32 %v4697, %v4876
        %v4942 = vadd.f32 %v4698, %v4878
        %v4943 = vlaneseq
        %v4944 = vshrl.u32 %v4943, 7
        %v4945 = vsub.s32 4, %v4944
        %v4946 = vrot.slane %v580, %v4945
        %v4947 = vmul.f32 %v518, %v4946
        %v4948 = vmul.f32 %v519, %v4946
        %v4949 = vmul.f32 %v520, %v4946
        %v4950 = vmul.f32 %v521, %v4946
        %v4951 = vmul.f32 %v522, %v4946
        %v4952 = vmul.f32 %v523, %v4946
        %v4953 = vmul.f32 %v524, %v4946
        %v4954 = vmul.f32 %v525, %v4946
        %v4955 = vmul.f32 %v526, %v4946
        %v4956 = vmul.f32 %v527, %v4946
        %v4957 = vmul.f32 %v528, %v4946
        %v4958 = vmul.f32 %v529, %v4946
        %v4959 = vmul.f32 %v530, %v4946
        %v4960 = vmul.f32 %v531, %v4946
        %v4961 = vmul.f32 %v532, %v4946
        %v4962 = vmul.f32 %v533, %v4946
        %v4963 = vmul.f32 %v534, %v4946
        %v4964 = vmul.f32 %v535, %v4946
        %v4965 = vmul.f32 %v536, %v4946
        %v4966 = vmul.f32 %v537, %v4946
        %v4967 = vmul.f32 %v538, %v4946
        %v4968 = vmul.f32 %v539, %v4946
        %v4969 = vmul.f32 %v540, %v4946
        %v4970 = vmul.f32 %v541, %v4946
        %v4971 = vmul.f32 %v542, %v4946
        %v4972 = vmul.f32 %v543, %v4946
        %v4973 = vmul.f32 %v544, %v4946
        %v4974 = vmul.f32 %v545, %v4946
        %v4975 = vmul.f32 %v546, %v4946
        %v4976 = vmul.f32 %v547, %v4946
        %v4977 = vmul.f32 %v548, %v4946
        %v4978 = vmul.f32 %v549, %v4946
        %v4979 = vmul.f32 %v550, %v4946
        %v4980 = vmul.f32 %v551, %v4946
        %v4981 = vmul.f32 %v552, %v4946
        %v4982 = vmul.f32 %v553, %v4946
        %v4983 = vmul.f32 %v554, %v4946
        %v4984 = vmul.f32 %v555, %v4946
        %v4985 = vmul.f32 %v556, %v4946
        %v4986 = vmul.f32 %v557, %v4946
        %v4987 = vmul.f32 %v558, %v4946
        %v4988 = vmul.f32 %v559, %v4946
        %v4989 = vmul.f32 %v560, %v4946
        %v4990 = vmul.f32 %v561, %v4946
        %v4991 = vmul.f32 %v562, %v4946
        %v4992 = vmul.f32 %v563, %v4946
        %v4993 = vmul.f32 %v564, %v4946
        %v4994 = vmul.f32 %v565, %v4946
        %v5043 = vrot.slane %v4947, 6
        %v5044 = vrot.slane %v4948, 6
        %v5045 = vsel %vm1978, %v5043, %v5044
        %v5046 = vrot.slane %v4949, 6
        %v5047 = vsel %vm1978, %v5044, %v5046
        %v5048 = vrot.slane %v4950, 6
        %v5049 = vrot.slane %v4951, 6
        %v5050 = vsel %vm1978, %v5048, %v5049
        %v5051 = vrot.slane %v4952, 6
        %v5052 = vsel %vm1978, %v5049, %v5051
        %v5053 = vrot.slane %v4953, 6
        %v5054 = vrot.slane %v4954, 6
        %v5055 = vsel %vm1978, %v5053, %v5054
        %v5056 = vrot.slane %v4955, 6
        %v5057 = vsel %vm1978, %v5054, %v5056
        %v5058 = vrot.slane %v4956, 6
        %v5059 = vrot.slane %v4957, 6
        %v5060 = vsel %vm1978, %v5058, %v5059
        %v5061 = vrot.slane %v4958, 6
        %v5062 = vsel %vm1978, %v5059, %v5061
        %v5063 = vrot.slane %v4959, 6
        %v5064 = vrot.slane %v4960, 6
        %v5065 = vsel %vm1978, %v5063, %v5064
        %v5066 = vrot.slane %v4961, 6
        %v5067 = vsel %vm1978, %v5064, %v5066
        %v5068 = vrot.slane %v4962, 6
        %v5069 = vrot.slane %v4963, 6
        %v5070 = vsel %vm1978, %v5068, %v5069
        %v5071 = vrot.slane %v4964, 6
        %v5072 = vsel %vm1978, %v5069, %v5071
        %v5073 = vrot.slane %v4965, 6
        %v5074 = vrot.slane %v4966, 6
        %v5075 = vsel %vm1978, %v5073, %v5074
        %v5076 = vrot.slane %v4967, 6
        %v5077 = vsel %vm1978, %v5074, %v5076
        %v5078 = vrot.slane %v4968, 6
        %v5079 = vrot.slane %v4969, 6
        %v5080 = vsel %vm1978, %v5078, %v5079
        %v5081 = vrot.slane %v4970, 6
        %v5082 = vsel %vm1978, %v5079, %v5081
        %v5083 = vrot.slane %v4971, 6
        %v5084 = vrot.slane %v4972, 6
        %v5085 = vsel %vm1978, %v5083, %v5084
        %v5086 = vrot.slane %v4973, 6
        %v5087 = vsel %vm1978, %v5084, %v5086
        %v5088 = vrot.slane %v4974, 6
        %v5089 = vrot.slane %v4975, 6
        %v5090 = vsel %vm1978, %v5088, %v5089
        %v5091 = vrot.slane %v4976, 6
        %v5092 = vsel %vm1978, %v5089, %v5091
        %v5093 = vrot.slane %v4977, 6
        %v5094 = vrot.slane %v4978, 6
        %v5095 = vsel %vm1978, %v5093, %v5094
        %v5096 = vrot.slane %v4979, 6
        %v5097 = vsel %vm1978, %v5094, %v5096
        %v5098 = vrot.slane %v4980, 6
        %v5099 = vrot.slane %v4981, 6
        %v5100 = vsel %vm1978, %v5098, %v5099
        %v5101 = vrot.slane %v4982, 6
        %v5102 = vsel %vm1978, %v5099, %v5101
        %v5103 = vrot.slane %v4983, 6
        %v5104 = vrot.slane %v4984, 6
        %v5105 = vsel %vm1978, %v5103, %v5104
        %v5106 = vrot.slane %v4985, 6
        %v5107 = vsel %vm1978, %v5104, %v5106
        %v5108 = vrot.slane %v4986, 6
        %v5109 = vrot.slane %v4987, 6
        %v5110 = vsel %vm1978, %v5108, %v5109
        %v5111 = vrot.slane %v4988, 6
        %v5112 = vsel %vm1978, %v5109, %v5111
        %v5113 = vrot.slane %v4989, 6
        %v5114 = vrot.slane %v4990, 6
        %v5115 = vsel %vm1978, %v5113, %v5114
        %v5116 = vrot.slane %v4991, 6
        %v5117 = vsel %vm1978, %v5114, %v5116
        %v5118 = vrot.slane %v4992, 6
        %v5119 = vrot.slane %v4993, 6
        %v5120 = vsel %vm1978, %v5118, %v5119
        %v5121 = vrot.slane %v4994, 6
        %v5122 = vsel %vm1978, %v5119, %v5121
        %v5155 = vadd.f32 %v4911, %v5045
        %v5156 = vadd.f32 %v4912, %v5047
        %v5157 = vadd.f32 %v4913, %v5050
        %v5158 = vadd.f32 %v4914, %v5052
        %v5159 = vadd.f32 %v4915, %v5055
        %v5160 = vadd.f32 %v4916, %v5057
        %v5161 = vadd.f32 %v4917, %v5060
        %v5162 = vadd.f32 %v4918, %v5062
        %v5163 = vadd.f32 %v4919, %v5065
        %v5164 = vadd.f32 %v4920, %v5067
        %v5165 = vadd.f32 %v4921, %v5070
        %v5166 = vadd.f32 %v4922, %v5072
        %v5167 = vadd.f32 %v4923, %v5075
        %v5168 = vadd.f32 %v4924, %v5077
        %v5169 = vadd.f32 %v4925, %v5080
        %v5170 = vadd.f32 %v4926, %v5082
        %v5171 = vadd.f32 %v4927, %v5085
        %v5172 = vadd.f32 %v4928, %v5087
        %v5173 = vadd.f32 %v4929, %v5090
        %v5174 = vadd.f32 %v4930, %v5092
        %v5175 = vadd.f32 %v4931, %v5095
        %v5176 = vadd.f32 %v4932, %v5097
        %v5177 = vadd.f32 %v4933, %v5100
        %v5178 = vadd.f32 %v4934, %v5102
        %v5179 = vadd.f32 %v4935, %v5105
        %v5180 = vadd.f32 %v4936, %v5107
        %v5181 = vadd.f32 %v4937, %v5110
        %v5182 = vadd.f32 %v4938, %v5112
        %v5183 = vadd.f32 %v4939, %v5115
        %v5184 = vadd.f32 %v4940, %v5117
        %v5185 = vadd.f32 %v4941, %v5120
        %v5186 = vadd.f32 %v4942, %v5122
        %v5187 = vlaneseq
        %v5188 = vshrl.u32 %v5187, 7
        %v5189 = vsub.s32 5, %v5188
        %v5190 = vrot.slane %v580, %v5189
        %v5191 = vmul.f32 %v521, %v5190
        %v5192 = vmul.f32 %v522, %v5190
        %v5193 = vmul.f32 %v524, %v5190
        %v5194 = vmul.f32 %v525, %v5190
        %v5195 = vmul.f32 %v527, %v5190
        %v5196 = vmul.f32 %v528, %v5190
        %v5197 = vmul.f32 %v530, %v5190
        %v5198 = vmul.f32 %v531, %v5190
        %v5199 = vmul.f32 %v533, %v5190
        %v5200 = vmul.f32 %v534, %v5190
        %v5201 = vmul.f32 %v536, %v5190
        %v5202 = vmul.f32 %v537, %v5190
        %v5203 = vmul.f32 %v539, %v5190
        %v5204 = vmul.f32 %v540, %v5190
        %v5205 = vmul.f32 %v542, %v5190
        %v5206 = vmul.f32 %v543, %v5190
        %v5207 = vmul.f32 %v545, %v5190
        %v5208 = vmul.f32 %v546, %v5190
        %v5209 = vmul.f32 %v548, %v5190
        %v5210 = vmul.f32 %v549, %v5190
        %v5211 = vmul.f32 %v551, %v5190
        %v5212 = vmul.f32 %v552, %v5190
        %v5213 = vmul.f32 %v554, %v5190
        %v5214 = vmul.f32 %v555, %v5190
        %v5215 = vmul.f32 %v557, %v5190
        %v5216 = vmul.f32 %v558, %v5190
        %v5217 = vmul.f32 %v560, %v5190
        %v5218 = vmul.f32 %v561, %v5190
        %v5219 = vmul.f32 %v563, %v5190
        %v5220 = vmul.f32 %v564, %v5190
        %v5221 = vmul.f32 %v566, %v5190
        %v5222 = vmul.f32 %v567, %v5190
        %v5223 = vadd.f32 %v5155, %v5191
        %v5224 = vadd.f32 %v5156, %v5192
        %v5225 = vadd.f32 %v5157, %v5193
        %v5226 = vadd.f32 %v5158, %v5194
        %v5227 = vadd.f32 %v5159, %v5195
        %v5228 = vadd.f32 %v5160, %v5196
        %v5229 = vadd.f32 %v5161, %v5197
        %v5230 = vadd.f32 %v5162, %v5198
        %v5231 = vadd.f32 %v5163, %v5199
        %v5232 = vadd.f32 %v5164, %v5200
        %v5233 = vadd.f32 %v5165, %v5201
        %v5234 = vadd.f32 %v5166, %v5202
        %v5235 = vadd.f32 %v5167, %v5203
        %v5236 = vadd.f32 %v5168, %v5204
        %v5237 = vadd.f32 %v5169, %v5205
        %v5238 = vadd.f32 %v5170, %v5206
        %v5239 = vadd.f32 %v5171, %v5207
        %v5240 = vadd.f32 %v5172, %v5208
        %v5241 = vadd.f32 %v5173, %v5209
        %v5242 = vadd.f32 %v5174, %v5210
        %v5243 = vadd.f32 %v5175, %v5211
        %v5244 = vadd.f32 %v5176, %v5212
        %v5245 = vadd.f32 %v5177, %v5213
        %v5246 = vadd.f32 %v5178, %v5214
        %v5247 = vadd.f32 %v5179, %v5215
        %v5248 = vadd.f32 %v5180, %v5216
        %v5249 = vadd.f32 %v5181, %v5217
        %v5250 = vadd.f32 %v5182, %v5218
        %v5251 = vadd.f32 %v5183, %v5219
        %v5252 = vadd.f32 %v5184, %v5220
        %v5253 = vadd.f32 %v5185, %v5221
        %v5254 = vadd.f32 %v5186, %v5222
        %v5255 = vlaneseq
        %v5256 = vshrl.u32 %v5255, 7
        %v5257 = vsub.s32 6, %v5256
        %v5258 = vrot.slane %v580, %v5257
        %v5259 = vmul.f32 %v521, %v5258
        %v5260 = vmul.f32 %v522, %v5258
        %v5261 = vmul.f32 %v523, %v5258
        %v5262 = vmul.f32 %v524, %v5258
        %v5263 = vmul.f32 %v525, %v5258
        %v5264 = vmul.f32 %v526, %v5258
        %v5265 = vmul.f32 %v527, %v5258
        %v5266 = vmul.f32 %v528, %v5258
        %v5267 = vmul.f32 %v529, %v5258
        %v5268 = vmul.f32 %v530, %v5258
        %v5269 = vmul.f32 %v531, %v5258
        %v5270 = vmul.f32 %v532, %v5258
        %v5271 = vmul.f32 %v533, %v5258
        %v5272 = vmul.f32 %v534, %v5258
        %v5273 = vmul.f32 %v535, %v5258
        %v5274 = vmul.f32 %v536, %v5258
        %v5275 = vmul.f32 %v537, %v5258
        %v5276 = vmul.f32 %v538, %v5258
        %v5277 = vmul.f32 %v539, %v5258
        %v5278 = vmul.f32 %v540, %v5258
        %v5279 = vmul.f32 %v541, %v5258
        %v5280 = vmul.f32 %v542, %v5258
        %v5281 = vmul.f32 %v543, %v5258
        %v5282 = vmul.f32 %v544, %v5258
        %v5283 = vmul.f32 %v545, %v5258
        %v5284 = vmul.f32 %v546, %v5258
        %v5285 = vmul.f32 %v547, %v5258
        %v5286 = vmul.f32 %v548, %v5258
        %v5287 = vmul.f32 %v549, %v5258
        %v5288 = vmul.f32 %v550, %v5258
        %v5289 = vmul.f32 %v551, %v5258
        %v5290 = vmul.f32 %v552, %v5258
        %v5291 = vmul.f32 %v553, %v5258
        %v5292 = vmul.f32 %v554, %v5258
        %v5293 = vmul.f32 %v555, %v5258
        %v5294 = vmul.f32 %v556, %v5258
        %v5295 = vmul.f32 %v557, %v5258
        %v5296 = vmul.f32 %v558, %v5258
        %v5297 = vmul.f32 %v559, %v5258
        %v5298 = vmul.f32 %v560, %v5258
        %v5299 = vmul.f32 %v561, %v5258
        %v5300 = vmul.f32 %v562, %v5258
        %v5301 = vmul.f32 %v563, %v5258
        %v5302 = vmul.f32 %v564, %v5258
        %v5303 = vmul.f32 %v565, %v5258
        %v5304 = vmul.f32 %v566, %v5258
        %v5305 = vmul.f32 %v567, %v5258
        %v5306 = vmul.f32 %v568, %v5258
        %v5355 = vrot.slane %v5259, 1
        %v5356 = vrot.slane %v5260, 1
        %v5357 = vsel %vm753, %v5355, %v5356
        %v5358 = vrot.slane %v5261, 1
        %v5359 = vsel %vm753, %v5356, %v5358
        %v5360 = vrot.slane %v5262, 1
        %v5361 = vrot.slane %v5263, 1
        %v5362 = vsel %vm753, %v5360, %v5361
        %v5363 = vrot.slane %v5264, 1
        %v5364 = vsel %vm753, %v5361, %v5363
        %v5365 = vrot.slane %v5265, 1
        %v5366 = vrot.slane %v5266, 1
        %v5367 = vsel %vm753, %v5365, %v5366
        %v5368 = vrot.slane %v5267, 1
        %v5369 = vsel %vm753, %v5366, %v5368
        %v5370 = vrot.slane %v5268, 1
        %v5371 = vrot.slane %v5269, 1
        %v5372 = vsel %vm753, %v5370, %v5371
        %v5373 = vrot.slane %v5270, 1
        %v5374 = vsel %vm753, %v5371, %v5373
        %v5375 = vrot.slane %v5271, 1
        %v5376 = vrot.slane %v5272, 1
        %v5377 = vsel %vm753, %v5375, %v5376
        %v5378 = vrot.slane %v5273, 1
        %v5379 = vsel %vm753, %v5376, %v5378
        %v5380 = vrot.slane %v5274, 1
        %v5381 = vrot.slane %v5275, 1
        %v5382 = vsel %vm753, %v5380, %v5381
        %v5383 = vrot.slane %v5276, 1
        %v5384 = vsel %vm753, %v5381, %v5383
        %v5385 = vrot.slane %v5277, 1
        %v5386 = vrot.slane %v5278, 1
        %v5387 = vsel %vm753, %v5385, %v5386
        %v5388 = vrot.slane %v5279, 1
        %v5389 = vsel %vm753, %v5386, %v5388
        %v5390 = vrot.slane %v5280, 1
        %v5391 = vrot.slane %v5281, 1
        %v5392 = vsel %vm753, %v5390, %v5391
        %v5393 = vrot.slane %v5282, 1
        %v5394 = vsel %vm753, %v5391, %v5393
        %v5395 = vrot.slane %v5283, 1
        %v5396 = vrot.slane %v5284, 1
        %v5397 = vsel %vm753, %v5395, %v5396
        %v5398 = vrot.slane %v5285, 1
        %v5399 = vsel %vm753, %v5396, %v5398
        %v5400 = vrot.slane %v5286, 1
        %v5401 = vrot.slane %v5287, 1
        %v5402 = vsel %vm753, %v5400, %v5401
        %v5403 = vrot.slane %v5288, 1
        %v5404 = vsel %vm753, %v5401, %v5403
        %v5405 = vrot.slane %v5289, 1
        %v5406 = vrot.slane %v5290, 1
        %v5407 = vsel %vm753, %v5405, %v5406
        %v5408 = vrot.slane %v5291, 1
        %v5409 = vsel %vm753, %v5406, %v5408
        %v5410 = vrot.slane %v5292, 1
        %v5411 = vrot.slane %v5293, 1
        %v5412 = vsel %vm753, %v5410, %v5411
        %v5413 = vrot.slane %v5294, 1
        %v5414 = vsel %vm753, %v5411, %v5413
        %v5415 = vrot.slane %v5295, 1
        %v5416 = vrot.slane %v5296, 1
        %v5417 = vsel %vm753, %v5415, %v5416
        %v5418 = vrot.slane %v5297, 1
        %v5419 = vsel %vm753, %v5416, %v5418
        %v5420 = vrot.slane %v5298, 1
        %v5421 = vrot.slane %v5299, 1
        %v5422 = vsel %vm753, %v5420, %v5421
        %v5423 = vrot.slane %v5300, 1
        %v5424 = vsel %vm753, %v5421, %v5423
        %v5425 = vrot.slane %v5301, 1
        %v5426 = vrot.slane %v5302, 1
        %v5427 = vsel %vm753, %v5425, %v5426
        %v5428 = vrot.slane %v5303, 1
        %v5429 = vsel %vm753, %v5426, %v5428
        %v5430 = vrot.slane %v5304, 1
        %v5431 = vrot.slane %v5305, 1
        %v5432 = vsel %vm753, %v5430, %v5431
        %v5433 = vrot.slane %v5306, 1
        %v5434 = vsel %vm753, %v5431, %v5433
        %v5467 = vadd.f32 %v5223, %v5357
        %v5468 = vadd.f32 %v5224, %v5359
        %v5469 = vadd.f32 %v5225, %v5362
        %v5470 = vadd.f32 %v5226, %v5364
        %v5471 = vadd.f32 %v5227, %v5367
        %v5472 = vadd.f32 %v5228, %v5369
        %v5473 = vadd.f32 %v5229, %v5372
        %v5474 = vadd.f32 %v5230, %v5374
        %v5475 = vadd.f32 %v5231, %v5377
        %v5476 = vadd.f32 %v5232, %v5379
        %v5477 = vadd.f32 %v5233, %v5382
        %v5478 = vadd.f32 %v5234, %v5384
        %v5479 = vadd.f32 %v5235, %v5387
        %v5480 = vadd.f32 %v5236, %v5389
        %v5481 = vadd.f32 %v5237, %v5392
        %v5482 = vadd.f32 %v5238, %v5394
        %v5483 = vadd.f32 %v5239, %v5397
        %v5484 = vadd.f32 %v5240, %v5399
        %v5485 = vadd.f32 %v5241, %v5402
        %v5486 = vadd.f32 %v5242, %v5404
        %v5487 = vadd.f32 %v5243, %v5407
        %v5488 = vadd.f32 %v5244, %v5409
        %v5489 = vadd.f32 %v5245, %v5412
        %v5490 = vadd.f32 %v5246, %v5414
        %v5491 = vadd.f32 %v5247, %v5417
        %v5492 = vadd.f32 %v5248, %v5419
        %v5493 = vadd.f32 %v5249, %v5422
        %v5494 = vadd.f32 %v5250, %v5424
        %v5495 = vadd.f32 %v5251, %v5427
        %v5496 = vadd.f32 %v5252, %v5429
        %v5497 = vadd.f32 %v5253, %v5432
        %v5498 = vadd.f32 %v5254, %v5434
        %v5499 = vlaneseq
        %v5500 = vshrl.u32 %v5499, 7
        %v5501 = vsub.s32 7, %v5500
        %v5502 = vrot.slane %v580, %v5501
        %v5503 = vmul.f32 %v521, %v5502
        %v5504 = vmul.f32 %v522, %v5502
        %v5505 = vmul.f32 %v523, %v5502
        %v5506 = vmul.f32 %v524, %v5502
        %v5507 = vmul.f32 %v525, %v5502
        %v5508 = vmul.f32 %v526, %v5502
        %v5509 = vmul.f32 %v527, %v5502
        %v5510 = vmul.f32 %v528, %v5502
        %v5511 = vmul.f32 %v529, %v5502
        %v5512 = vmul.f32 %v530, %v5502
        %v5513 = vmul.f32 %v531, %v5502
        %v5514 = vmul.f32 %v532, %v5502
        %v5515 = vmul.f32 %v533, %v5502
        %v5516 = vmul.f32 %v534, %v5502
        %v5517 = vmul.f32 %v535, %v5502
        %v5518 = vmul.f32 %v536, %v5502
        %v5519 = vmul.f32 %v537, %v5502
        %v5520 = vmul.f32 %v538, %v5502
        %v5521 = vmul.f32 %v539, %v5502
        %v5522 = vmul.f32 %v540, %v5502
        %v5523 = vmul.f32 %v541, %v5502
        %v5524 = vmul.f32 %v542, %v5502
        %v5525 = vmul.f32 %v543, %v5502
        %v5526 = vmul.f32 %v544, %v5502
        %v5527 = vmul.f32 %v545, %v5502
        %v5528 = vmul.f32 %v546, %v5502
        %v5529 = vmul.f32 %v547, %v5502
        %v5530 = vmul.f32 %v548, %v5502
        %v5531 = vmul.f32 %v549, %v5502
        %v5532 = vmul.f32 %v550, %v5502
        %v5533 = vmul.f32 %v551, %v5502
        %v5534 = vmul.f32 %v552, %v5502
        %v5535 = vmul.f32 %v553, %v5502
        %v5536 = vmul.f32 %v554, %v5502
        %v5537 = vmul.f32 %v555, %v5502
        %v5538 = vmul.f32 %v556, %v5502
        %v5539 = vmul.f32 %v557, %v5502
        %v5540 = vmul.f32 %v558, %v5502
        %v5541 = vmul.f32 %v559, %v5502
        %v5542 = vmul.f32 %v560, %v5502
        %v5543 = vmul.f32 %v561, %v5502
        %v5544 = vmul.f32 %v562, %v5502
        %v5545 = vmul.f32 %v563, %v5502
        %v5546 = vmul.f32 %v564, %v5502
        %v5547 = vmul.f32 %v565, %v5502
        %v5548 = vmul.f32 %v566, %v5502
        %v5549 = vmul.f32 %v567, %v5502
        %v5550 = vmul.f32 %v568, %v5502
        %v5599 = vrot.slane %v5503, 2
        %v5600 = vrot.slane %v5504, 2
        %v5601 = vsel %vm998, %v5599, %v5600
        %v5602 = vrot.slane %v5505, 2
        %v5603 = vsel %vm998, %v5600, %v5602
        %v5604 = vrot.slane %v5506, 2
        %v5605 = vrot.slane %v5507, 2
        %v5606 = vsel %vm998, %v5604, %v5605
        %v5607 = vrot.slane %v5508, 2
        %v5608 = vsel %vm998, %v5605, %v5607
        %v5609 = vrot.slane %v5509, 2
        %v5610 = vrot.slane %v5510, 2
        %v5611 = vsel %vm998, %v5609, %v5610
        %v5612 = vrot.slane %v5511, 2
        %v5613 = vsel %vm998, %v5610, %v5612
        %v5614 = vrot.slane %v5512, 2
        %v5615 = vrot.slane %v5513, 2
        %v5616 = vsel %vm998, %v5614, %v5615
        %v5617 = vrot.slane %v5514, 2
        %v5618 = vsel %vm998, %v5615, %v5617
        %v5619 = vrot.slane %v5515, 2
        %v5620 = vrot.slane %v5516, 2
        %v5621 = vsel %vm998, %v5619, %v5620
        %v5622 = vrot.slane %v5517, 2
        %v5623 = vsel %vm998, %v5620, %v5622
        %v5624 = vrot.slane %v5518, 2
        %v5625 = vrot.slane %v5519, 2
        %v5626 = vsel %vm998, %v5624, %v5625
        %v5627 = vrot.slane %v5520, 2
        %v5628 = vsel %vm998, %v5625, %v5627
        %v5629 = vrot.slane %v5521, 2
        %v5630 = vrot.slane %v5522, 2
        %v5631 = vsel %vm998, %v5629, %v5630
        %v5632 = vrot.slane %v5523, 2
        %v5633 = vsel %vm998, %v5630, %v5632
        %v5634 = vrot.slane %v5524, 2
        %v5635 = vrot.slane %v5525, 2
        %v5636 = vsel %vm998, %v5634, %v5635
        %v5637 = vrot.slane %v5526, 2
        %v5638 = vsel %vm998, %v5635, %v5637
        %v5639 = vrot.slane %v5527, 2
        %v5640 = vrot.slane %v5528, 2
        %v5641 = vsel %vm998, %v5639, %v5640
        %v5642 = vrot.slane %v5529, 2
        %v5643 = vsel %vm998, %v5640, %v5642
        %v5644 = vrot.slane %v5530, 2
        %v5645 = vrot.slane %v5531, 2
        %v5646 = vsel %vm998, %v5644, %v5645
        %v5647 = vrot.slane %v5532, 2
        %v5648 = vsel %vm998, %v5645, %v5647
        %v5649 = vrot.slane %v5533, 2
        %v5650 = vrot.slane %v5534, 2
        %v5651 = vsel %vm998, %v5649, %v5650
        %v5652 = vrot.slane %v5535, 2
        %v5653 = vsel %vm998, %v5650, %v5652
        %v5654 = vrot.slane %v5536, 2
        %v5655 = vrot.slane %v5537, 2
        %v5656 = vsel %vm998, %v5654, %v5655
        %v5657 = vrot.slane %v5538, 2
        %v5658 = vsel %vm998, %v5655, %v5657
        %v5659 = vrot.slane %v5539, 2
        %v5660 = vrot.slane %v5540, 2
        %v5661 = vsel %vm998, %v5659, %v5660
        %v5662 = vrot.slane %v5541, 2
        %v5663 = vsel %vm998, %v5660, %v5662
        %v5664 = vrot.slane %v5542, 2
        %v5665 = vrot.slane %v5543, 2
        %v5666 = vsel %vm998, %v5664, %v5665
        %v5667 = vrot.slane %v5544, 2
        %v5668 = vsel %vm998, %v5665, %v5667
        %v5669 = vrot.slane %v5545, 2
        %v5670 = vrot.slane %v5546, 2
        %v5671 = vsel %vm998, %v5669, %v5670
        %v5672 = vrot.slane %v5547, 2
        %v5673 = vsel %vm998, %v5670, %v5672
        %v5674 = vrot.slane %v5548, 2
        %v5675 = vrot.slane %v5549, 2
        %v5676 = vsel %vm998, %v5674, %v5675
        %v5677 = vrot.slane %v5550, 2
        %v5678 = vsel %vm998, %v5675, %v5677
        %v5711 = vadd.f32 %v5467, %v5601
        %v5712 = vadd.f32 %v5468, %v5603
        %v5713 = vadd.f32 %v5469, %v5606
        %v5714 = vadd.f32 %v5470, %v5608
        %v5715 = vadd.f32 %v5471, %v5611
        %v5716 = vadd.f32 %v5472, %v5613
        %v5717 = vadd.f32 %v5473, %v5616
        %v5718 = vadd.f32 %v5474, %v5618
        %v5719 = vadd.f32 %v5475, %v5621
        %v5720 = vadd.f32 %v5476, %v5623
        %v5721 = vadd.f32 %v5477, %v5626
        %v5722 = vadd.f32 %v5478, %v5628
        %v5723 = vadd.f32 %v5479, %v5631
        %v5724 = vadd.f32 %v5480, %v5633
        %v5725 = vadd.f32 %v5481, %v5636
        %v5726 = vadd.f32 %v5482, %v5638
        %v5727 = vadd.f32 %v5483, %v5641
        %v5728 = vadd.f32 %v5484, %v5643
        %v5729 = vadd.f32 %v5485, %v5646
        %v5730 = vadd.f32 %v5486, %v5648
        %v5731 = vadd.f32 %v5487, %v5651
        %v5732 = vadd.f32 %v5488, %v5653
        %v5733 = vadd.f32 %v5489, %v5656
        %v5734 = vadd.f32 %v5490, %v5658
        %v5735 = vadd.f32 %v5491, %v5661
        %v5736 = vadd.f32 %v5492, %v5663
        %v5737 = vadd.f32 %v5493, %v5666
        %v5738 = vadd.f32 %v5494, %v5668
        %v5739 = vadd.f32 %v5495, %v5671
        %v5740 = vadd.f32 %v5496, %v5673
        %v5741 = vadd.f32 %v5497, %v5676
        %v5742 = vadd.f32 %v5498, %v5678
        %v5743 = vlaneseq
        %v5744 = vshrl.u32 %v5743, 7
        %v5745 = vsub.s32 0, %v5744
        %v5746 = vrot.slane %v581, %v5745
        %v5747 = vmul.f32 %v521, %v5746
        %v5748 = vmul.f32 %v522, %v5746
        %v5749 = vmul.f32 %v523, %v5746
        %v5750 = vmul.f32 %v524, %v5746
        %v5751 = vmul.f32 %v525, %v5746
        %v5752 = vmul.f32 %v526, %v5746
        %v5753 = vmul.f32 %v527, %v5746
        %v5754 = vmul.f32 %v528, %v5746
        %v5755 = vmul.f32 %v529, %v5746
        %v5756 = vmul.f32 %v530, %v5746
        %v5757 = vmul.f32 %v531, %v5746
        %v5758 = vmul.f32 %v532, %v5746
        %v5759 = vmul.f32 %v533, %v5746
        %v5760 = vmul.f32 %v534, %v5746
        %v5761 = vmul.f32 %v535, %v5746
        %v5762 = vmul.f32 %v536, %v5746
        %v5763 = vmul.f32 %v537, %v5746
        %v5764 = vmul.f32 %v538, %v5746
        %v5765 = vmul.f32 %v539, %v5746
        %v5766 = vmul.f32 %v540, %v5746
        %v5767 = vmul.f32 %v541, %v5746
        %v5768 = vmul.f32 %v542, %v5746
        %v5769 = vmul.f32 %v543, %v5746
        %v5770 = vmul.f32 %v544, %v5746
        %v5771 = vmul.f32 %v545, %v5746
        %v5772 = vmul.f32 %v546, %v5746
        %v5773 = vmul.f32 %v547, %v5746
        %v5774 = vmul.f32 %v548, %v5746
        %v5775 = vmul.f32 %v549, %v5746
        %v5776 = vmul.f32 %v550, %v5746
        %v5777 = vmul.f32 %v551, %v5746
        %v5778 = vmul.f32 %v552, %v5746
        %v5779 = vmul.f32 %v553, %v5746
        %v5780 = vmul.f32 %v554, %v5746
        %v5781 = vmul.f32 %v555, %v5746
        %v5782 = vmul.f32 %v556, %v5746
        %v5783 = vmul.f32 %v557, %v5746
        %v5784 = vmul.f32 %v558, %v5746
        %v5785 = vmul.f32 %v559, %v5746
        %v5786 = vmul.f32 %v560, %v5746
        %v5787 = vmul.f32 %v561, %v5746
        %v5788 = vmul.f32 %v562, %v5746
        %v5789 = vmul.f32 %v563, %v5746
        %v5790 = vmul.f32 %v564, %v5746
        %v5791 = vmul.f32 %v565, %v5746
        %v5792 = vmul.f32 %v566, %v5746
        %v5793 = vmul.f32 %v567, %v5746
        %v5794 = vmul.f32 %v568, %v5746
        %v5843 = vrot.slane %v5747, 3
        %v5844 = vrot.slane %v5748, 3
        %v5845 = vsel %vm1243, %v5843, %v5844
        %v5846 = vrot.slane %v5749, 3
        %v5847 = vsel %vm1243, %v5844, %v5846
        %v5848 = vrot.slane %v5750, 3
        %v5849 = vrot.slane %v5751, 3
        %v5850 = vsel %vm1243, %v5848, %v5849
        %v5851 = vrot.slane %v5752, 3
        %v5852 = vsel %vm1243, %v5849, %v5851
        %v5853 = vrot.slane %v5753, 3
        %v5854 = vrot.slane %v5754, 3
        %v5855 = vsel %vm1243, %v5853, %v5854
        %v5856 = vrot.slane %v5755, 3
        %v5857 = vsel %vm1243, %v5854, %v5856
        %v5858 = vrot.slane %v5756, 3
        %v5859 = vrot.slane %v5757, 3
        %v5860 = vsel %vm1243, %v5858, %v5859
        %v5861 = vrot.slane %v5758, 3
        %v5862 = vsel %vm1243, %v5859, %v5861
        %v5863 = vrot.slane %v5759, 3
        %v5864 = vrot.slane %v5760, 3
        %v5865 = vsel %vm1243, %v5863, %v5864
        %v5866 = vrot.slane %v5761, 3
        %v5867 = vsel %vm1243, %v5864, %v5866
        %v5868 = vrot.slane %v5762, 3
        %v5869 = vrot.slane %v5763, 3
        %v5870 = vsel %vm1243, %v5868, %v5869
        %v5871 = vrot.slane %v5764, 3
        %v5872 = vsel %vm1243, %v5869, %v5871
        %v5873 = vrot.slane %v5765, 3
        %v5874 = vrot.slane %v5766, 3
        %v5875 = vsel %vm1243, %v5873, %v5874
        %v5876 = vrot.slane %v5767, 3
        %v5877 = vsel %vm1243, %v5874, %v5876
        %v5878 = vrot.slane %v5768, 3
        %v5879 = vrot.slane %v5769, 3
        %v5880 = vsel %vm1243, %v5878, %v5879
        %v5881 = vrot.slane %v5770, 3
        %v5882 = vsel %vm1243, %v5879, %v5881
        %v5883 = vrot.slane %v5771, 3
        %v5884 = vrot.slane %v5772, 3
        %v5885 = vsel %vm1243, %v5883, %v5884
        %v5886 = vrot.slane %v5773, 3
        %v5887 = vsel %vm1243, %v5884, %v5886
        %v5888 = vrot.slane %v5774, 3
        %v5889 = vrot.slane %v5775, 3
        %v5890 = vsel %vm1243, %v5888, %v5889
        %v5891 = vrot.slane %v5776, 3
        %v5892 = vsel %vm1243, %v5889, %v5891
        %v5893 = vrot.slane %v5777, 3
        %v5894 = vrot.slane %v5778, 3
        %v5895 = vsel %vm1243, %v5893, %v5894
        %v5896 = vrot.slane %v5779, 3
        %v5897 = vsel %vm1243, %v5894, %v5896
        %v5898 = vrot.slane %v5780, 3
        %v5899 = vrot.slane %v5781, 3
        %v5900 = vsel %vm1243, %v5898, %v5899
        %v5901 = vrot.slane %v5782, 3
        %v5902 = vsel %vm1243, %v5899, %v5901
        %v5903 = vrot.slane %v5783, 3
        %v5904 = vrot.slane %v5784, 3
        %v5905 = vsel %vm1243, %v5903, %v5904
        %v5906 = vrot.slane %v5785, 3
        %v5907 = vsel %vm1243, %v5904, %v5906
        %v5908 = vrot.slane %v5786, 3
        %v5909 = vrot.slane %v5787, 3
        %v5910 = vsel %vm1243, %v5908, %v5909
        %v5911 = vrot.slane %v5788, 3
        %v5912 = vsel %vm1243, %v5909, %v5911
        %v5913 = vrot.slane %v5789, 3
        %v5914 = vrot.slane %v5790, 3
        %v5915 = vsel %vm1243, %v5913, %v5914
        %v5916 = vrot.slane %v5791, 3
        %v5917 = vsel %vm1243, %v5914, %v5916
        %v5918 = vrot.slane %v5792, 3
        %v5919 = vrot.slane %v5793, 3
        %v5920 = vsel %vm1243, %v5918, %v5919
        %v5921 = vrot.slane %v5794, 3
        %v5922 = vsel %vm1243, %v5919, %v5921
        %v5955 = vadd.f32 %v5711, %v5845
        %v5956 = vadd.f32 %v5712, %v5847
        %v5957 = vadd.f32 %v5713, %v5850
        %v5958 = vadd.f32 %v5714, %v5852
        %v5959 = vadd.f32 %v5715, %v5855
        %v5960 = vadd.f32 %v5716, %v5857
        %v5961 = vadd.f32 %v5717, %v5860
        %v5962 = vadd.f32 %v5718, %v5862
        %v5963 = vadd.f32 %v5719, %v5865
        %v5964 = vadd.f32 %v5720, %v5867
        %v5965 = vadd.f32 %v5721, %v5870
        %v5966 = vadd.f32 %v5722, %v5872
        %v5967 = vadd.f32 %v5723, %v5875
        %v5968 = vadd.f32 %v5724, %v5877
        %v5969 = vadd.f32 %v5725, %v5880
        %v5970 = vadd.f32 %v5726, %v5882
        %v5971 = vadd.f32 %v5727, %v5885
        %v5972 = vadd.f32 %v5728, %v5887
        %v5973 = vadd.f32 %v5729, %v5890
        %v5974 = vadd.f32 %v5730, %v5892
        %v5975 = vadd.f32 %v5731, %v5895
        %v5976 = vadd.f32 %v5732, %v5897
        %v5977 = vadd.f32 %v5733, %v5900
        %v5978 = vadd.f32 %v5734, %v5902
        %v5979 = vadd.f32 %v5735, %v5905
        %v5980 = vadd.f32 %v5736, %v5907
        %v5981 = vadd.f32 %v5737, %v5910
        %v5982 = vadd.f32 %v5738, %v5912
        %v5983 = vadd.f32 %v5739, %v5915
        %v5984 = vadd.f32 %v5740, %v5917
        %v5985 = vadd.f32 %v5741, %v5920
        %v5986 = vadd.f32 %v5742, %v5922
        %v5987 = vlaneseq
        %v5988 = vshrl.u32 %v5987, 7
        %v5989 = vsub.s32 1, %v5988
        %v5990 = vrot.slane %v581, %v5989
        %v5991 = vmul.f32 %v521, %v5990
        %v5992 = vmul.f32 %v522, %v5990
        %v5993 = vmul.f32 %v523, %v5990
        %v5994 = vmul.f32 %v524, %v5990
        %v5995 = vmul.f32 %v525, %v5990
        %v5996 = vmul.f32 %v526, %v5990
        %v5997 = vmul.f32 %v527, %v5990
        %v5998 = vmul.f32 %v528, %v5990
        %v5999 = vmul.f32 %v529, %v5990
        %v6000 = vmul.f32 %v530, %v5990
        %v6001 = vmul.f32 %v531, %v5990
        %v6002 = vmul.f32 %v532, %v5990
        %v6003 = vmul.f32 %v533, %v5990
        %v6004 = vmul.f32 %v534, %v5990
        %v6005 = vmul.f32 %v535, %v5990
        %v6006 = vmul.f32 %v536, %v5990
        %v6007 = vmul.f32 %v537, %v5990
        %v6008 = vmul.f32 %v538, %v5990
        %v6009 = vmul.f32 %v539, %v5990
        %v6010 = vmul.f32 %v540, %v5990
        %v6011 = vmul.f32 %v541, %v5990
        %v6012 = vmul.f32 %v542, %v5990
        %v6013 = vmul.f32 %v543, %v5990
        %v6014 = vmul.f32 %v544, %v5990
        %v6015 = vmul.f32 %v545, %v5990
        %v6016 = vmul.f32 %v546, %v5990
        %v6017 = vmul.f32 %v547, %v5990
        %v6018 = vmul.f32 %v548, %v5990
        %v6019 = vmul.f32 %v549, %v5990
        %v6020 = vmul.f32 %v550, %v5990
        %v6021 = vmul.f32 %v551, %v5990
        %v6022 = vmul.f32 %v552, %v5990
        %v6023 = vmul.f32 %v553, %v5990
        %v6024 = vmul.f32 %v554, %v5990
        %v6025 = vmul.f32 %v555, %v5990
        %v6026 = vmul.f32 %v556, %v5990
        %v6027 = vmul.f32 %v557, %v5990
        %v6028 = vmul.f32 %v558, %v5990
        %v6029 = vmul.f32 %v559, %v5990
        %v6030 = vmul.f32 %v560, %v5990
        %v6031 = vmul.f32 %v561, %v5990
        %v6032 = vmul.f32 %v562, %v5990
        %v6033 = vmul.f32 %v563, %v5990
        %v6034 = vmul.f32 %v564, %v5990
        %v6035 = vmul.f32 %v565, %v5990
        %v6036 = vmul.f32 %v566, %v5990
        %v6037 = vmul.f32 %v567, %v5990
        %v6038 = vmul.f32 %v568, %v5990
        %v6087 = vrot.slane %v5991, 4
        %v6088 = vrot.slane %v5992, 4
        %v6089 = vsel %vm1488, %v6087, %v6088
        %v6090 = vrot.slane %v5993, 4
        %v6091 = vsel %vm1488, %v6088, %v6090
        %v6092 = vrot.slane %v5994, 4
        %v6093 = vrot.slane %v5995, 4
        %v6094 = vsel %vm1488, %v6092, %v6093
        %v6095 = vrot.slane %v5996, 4
        %v6096 = vsel %vm1488, %v6093, %v6095
        %v6097 = vrot.slane %v5997, 4
        %v6098 = vrot.slane %v5998, 4
        %v6099 = vsel %vm1488, %v6097, %v6098
        %v6100 = vrot.slane %v5999, 4
        %v6101 = vsel %vm1488, %v6098, %v6100
        %v6102 = vrot.slane %v6000, 4
        %v6103 = vrot.slane %v6001, 4
        %v6104 = vsel %vm1488, %v6102, %v6103
        %v6105 = vrot.slane %v6002, 4
        %v6106 = vsel %vm1488, %v6103, %v6105
        %v6107 = vrot.slane %v6003, 4
        %v6108 = vrot.slane %v6004, 4
        %v6109 = vsel %vm1488, %v6107, %v6108
        %v6110 = vrot.slane %v6005, 4
        %v6111 = vsel %vm1488, %v6108, %v6110
        %v6112 = vrot.slane %v6006, 4
        %v6113 = vrot.slane %v6007, 4
        %v6114 = vsel %vm1488, %v6112, %v6113
        %v6115 = vrot.slane %v6008, 4
        %v6116 = vsel %vm1488, %v6113, %v6115
        %v6117 = vrot.slane %v6009, 4
        %v6118 = vrot.slane %v6010, 4
        %v6119 = vsel %vm1488, %v6117, %v6118
        %v6120 = vrot.slane %v6011, 4
        %v6121 = vsel %vm1488, %v6118, %v6120
        %v6122 = vrot.slane %v6012, 4
        %v6123 = vrot.slane %v6013, 4
        %v6124 = vsel %vm1488, %v6122, %v6123
        %v6125 = vrot.slane %v6014, 4
        %v6126 = vsel %vm1488, %v6123, %v6125
        %v6127 = vrot.slane %v6015, 4
        %v6128 = vrot.slane %v6016, 4
        %v6129 = vsel %vm1488, %v6127, %v6128
        %v6130 = vrot.slane %v6017, 4
        %v6131 = vsel %vm1488, %v6128, %v6130
        %v6132 = vrot.slane %v6018, 4
        %v6133 = vrot.slane %v6019, 4
        %v6134 = vsel %vm1488, %v6132, %v6133
        %v6135 = vrot.slane %v6020, 4
        %v6136 = vsel %vm1488, %v6133, %v6135
        %v6137 = vrot.slane %v6021, 4
        %v6138 = vrot.slane %v6022, 4
        %v6139 = vsel %vm1488, %v6137, %v6138
        %v6140 = vrot.slane %v6023, 4
        %v6141 = vsel %vm1488, %v6138, %v6140
        %v6142 = vrot.slane %v6024, 4
        %v6143 = vrot.slane %v6025, 4
        %v6144 = vsel %vm1488, %v6142, %v6143
        %v6145 = vrot.slane %v6026, 4
        %v6146 = vsel %vm1488, %v6143, %v6145
        %v6147 = vrot.slane %v6027, 4
        %v6148 = vrot.slane %v6028, 4
        %v6149 = vsel %vm1488, %v6147, %v6148
        %v6150 = vrot.slane %v6029, 4
        %v6151 = vsel %vm1488, %v6148, %v6150
        %v6152 = vrot.slane %v6030, 4
        %v6153 = vrot.slane %v6031, 4
        %v6154 = vsel %vm1488, %v6152, %v6153
        %v6155 = vrot.slane %v6032, 4
        %v6156 = vsel %vm1488, %v6153, %v6155
        %v6157 = vrot.slane %v6033, 4
        %v6158 = vrot.slane %v6034, 4
        %v6159 = vsel %vm1488, %v6157, %v6158
        %v6160 = vrot.slane %v6035, 4
        %v6161 = vsel %vm1488, %v6158, %v6160
        %v6162 = vrot.slane %v6036, 4
        %v6163 = vrot.slane %v6037, 4
        %v6164 = vsel %vm1488, %v6162, %v6163
        %v6165 = vrot.slane %v6038, 4
        %v6166 = vsel %vm1488, %v6163, %v6165
        %v6199 = vadd.f32 %v5955, %v6089
        %v6200 = vadd.f32 %v5956, %v6091
        %v6201 = vadd.f32 %v5957, %v6094
        %v6202 = vadd.f32 %v5958, %v6096
        %v6203 = vadd.f32 %v5959, %v6099
        %v6204 = vadd.f32 %v5960, %v6101
        %v6205 = vadd.f32 %v5961, %v6104
        %v6206 = vadd.f32 %v5962, %v6106
        %v6207 = vadd.f32 %v5963, %v6109
        %v6208 = vadd.f32 %v5964, %v6111
        %v6209 = vadd.f32 %v5965, %v6114
        %v6210 = vadd.f32 %v5966, %v6116
        %v6211 = vadd.f32 %v5967, %v6119
        %v6212 = vadd.f32 %v5968, %v6121
        %v6213 = vadd.f32 %v5969, %v6124
        %v6214 = vadd.f32 %v5970, %v6126
        %v6215 = vadd.f32 %v5971, %v6129
        %v6216 = vadd.f32 %v5972, %v6131
        %v6217 = vadd.f32 %v5973, %v6134
        %v6218 = vadd.f32 %v5974, %v6136
        %v6219 = vadd.f32 %v5975, %v6139
        %v6220 = vadd.f32 %v5976, %v6141
        %v6221 = vadd.f32 %v5977, %v6144
        %v6222 = vadd.f32 %v5978, %v6146
        %v6223 = vadd.f32 %v5979, %v6149
        %v6224 = vadd.f32 %v5980, %v6151
        %v6225 = vadd.f32 %v5981, %v6154
        %v6226 = vadd.f32 %v5982, %v6156
        %v6227 = vadd.f32 %v5983, %v6159
        %v6228 = vadd.f32 %v5984, %v6161
        %v6229 = vadd.f32 %v5985, %v6164
        %v6230 = vadd.f32 %v5986, %v6166
        %v6231 = vlaneseq
        %v6232 = vshrl.u32 %v6231, 7
        %v6233 = vsub.s32 2, %v6232
        %v6234 = vrot.slane %v581, %v6233
        %v6235 = vmul.f32 %v521, %v6234
        %v6236 = vmul.f32 %v522, %v6234
        %v6237 = vmul.f32 %v523, %v6234
        %v6238 = vmul.f32 %v524, %v6234
        %v6239 = vmul.f32 %v525, %v6234
        %v6240 = vmul.f32 %v526, %v6234
        %v6241 = vmul.f32 %v527, %v6234
        %v6242 = vmul.f32 %v528, %v6234
        %v6243 = vmul.f32 %v529, %v6234
        %v6244 = vmul.f32 %v530, %v6234
        %v6245 = vmul.f32 %v531, %v6234
        %v6246 = vmul.f32 %v532, %v6234
        %v6247 = vmul.f32 %v533, %v6234
        %v6248 = vmul.f32 %v534, %v6234
        %v6249 = vmul.f32 %v535, %v6234
        %v6250 = vmul.f32 %v536, %v6234
        %v6251 = vmul.f32 %v537, %v6234
        %v6252 = vmul.f32 %v538, %v6234
        %v6253 = vmul.f32 %v539, %v6234
        %v6254 = vmul.f32 %v540, %v6234
        %v6255 = vmul.f32 %v541, %v6234
        %v6256 = vmul.f32 %v542, %v6234
        %v6257 = vmul.f32 %v543, %v6234
        %v6258 = vmul.f32 %v544, %v6234
        %v6259 = vmul.f32 %v545, %v6234
        %v6260 = vmul.f32 %v546, %v6234
        %v6261 = vmul.f32 %v547, %v6234
        %v6262 = vmul.f32 %v548, %v6234
        %v6263 = vmul.f32 %v549, %v6234
        %v6264 = vmul.f32 %v550, %v6234
        %v6265 = vmul.f32 %v551, %v6234
        %v6266 = vmul.f32 %v552, %v6234
        %v6267 = vmul.f32 %v553, %v6234
        %v6268 = vmul.f32 %v554, %v6234
        %v6269 = vmul.f32 %v555, %v6234
        %v6270 = vmul.f32 %v556, %v6234
        %v6271 = vmul.f32 %v557, %v6234
        %v6272 = vmul.f32 %v558, %v6234
        %v6273 = vmul.f32 %v559, %v6234
        %v6274 = vmul.f32 %v560, %v6234
        %v6275 = vmul.f32 %v561, %v6234
        %v6276 = vmul.f32 %v562, %v6234
        %v6277 = vmul.f32 %v563, %v6234
        %v6278 = vmul.f32 %v564, %v6234
        %v6279 = vmul.f32 %v565, %v6234
        %v6280 = vmul.f32 %v566, %v6234
        %v6281 = vmul.f32 %v567, %v6234
        %v6282 = vmul.f32 %v568, %v6234
        %v6331 = vrot.slane %v6235, 5
        %v6332 = vrot.slane %v6236, 5
        %v6333 = vsel %vm1733, %v6331, %v6332
        %v6334 = vrot.slane %v6237, 5
        %v6335 = vsel %vm1733, %v6332, %v6334
        %v6336 = vrot.slane %v6238, 5
        %v6337 = vrot.slane %v6239, 5
        %v6338 = vsel %vm1733, %v6336, %v6337
        %v6339 = vrot.slane %v6240, 5
        %v6340 = vsel %vm1733, %v6337, %v6339
        %v6341 = vrot.slane %v6241, 5
        %v6342 = vrot.slane %v6242, 5
        %v6343 = vsel %vm1733, %v6341, %v6342
        %v6344 = vrot.slane %v6243, 5
        %v6345 = vsel %vm1733, %v6342, %v6344
        %v6346 = vrot.slane %v6244, 5
        %v6347 = vrot.slane %v6245, 5
        %v6348 = vsel %vm1733, %v6346, %v6347
        %v6349 = vrot.slane %v6246, 5
        %v6350 = vsel %vm1733, %v6347, %v6349
        %v6351 = vrot.slane %v6247, 5
        %v6352 = vrot.slane %v6248, 5
        %v6353 = vsel %vm1733, %v6351, %v6352
        %v6354 = vrot.slane %v6249, 5
        %v6355 = vsel %vm1733, %v6352, %v6354
        %v6356 = vrot.slane %v6250, 5
        %v6357 = vrot.slane %v6251, 5
        %v6358 = vsel %vm1733, %v6356, %v6357
        %v6359 = vrot.slane %v6252, 5
        %v6360 = vsel %vm1733, %v6357, %v6359
        %v6361 = vrot.slane %v6253, 5
        %v6362 = vrot.slane %v6254, 5
        %v6363 = vsel %vm1733, %v6361, %v6362
        %v6364 = vrot.slane %v6255, 5
        %v6365 = vsel %vm1733, %v6362, %v6364
        %v6366 = vrot.slane %v6256, 5
        %v6367 = vrot.slane %v6257, 5
        %v6368 = vsel %vm1733, %v6366, %v6367
        %v6369 = vrot.slane %v6258, 5
        %v6370 = vsel %vm1733, %v6367, %v6369
        %v6371 = vrot.slane %v6259, 5
        %v6372 = vrot.slane %v6260, 5
        %v6373 = vsel %vm1733, %v6371, %v6372
        %v6374 = vrot.slane %v6261, 5
        %v6375 = vsel %vm1733, %v6372, %v6374
        %v6376 = vrot.slane %v6262, 5
        %v6377 = vrot.slane %v6263, 5
        %v6378 = vsel %vm1733, %v6376, %v6377
        %v6379 = vrot.slane %v6264, 5
        %v6380 = vsel %vm1733, %v6377, %v6379
        %v6381 = vrot.slane %v6265, 5
        %v6382 = vrot.slane %v6266, 5
        %v6383 = vsel %vm1733, %v6381, %v6382
        %v6384 = vrot.slane %v6267, 5
        %v6385 = vsel %vm1733, %v6382, %v6384
        %v6386 = vrot.slane %v6268, 5
        %v6387 = vrot.slane %v6269, 5
        %v6388 = vsel %vm1733, %v6386, %v6387
        %v6389 = vrot.slane %v6270, 5
        %v6390 = vsel %vm1733, %v6387, %v6389
        %v6391 = vrot.slane %v6271, 5
        %v6392 = vrot.slane %v6272, 5
        %v6393 = vsel %vm1733, %v6391, %v6392
        %v6394 = vrot.slane %v6273, 5
        %v6395 = vsel %vm1733, %v6392, %v6394
        %v6396 = vrot.slane %v6274, 5
        %v6397 = vrot.slane %v6275, 5
        %v6398 = vsel %vm1733, %v6396, %v6397
        %v6399 = vrot.slane %v6276, 5
        %v6400 = vsel %vm1733, %v6397, %v6399
        %v6401 = vrot.slane %v6277, 5
        %v6402 = vrot.slane %v6278, 5
        %v6403 = vsel %vm1733, %v6401, %v6402
        %v6404 = vrot.slane %v6279, 5
        %v6405 = vsel %vm1733, %v6402, %v6404
        %v6406 = vrot.slane %v6280, 5
        %v6407 = vrot.slane %v6281, 5
        %v6408 = vsel %vm1733, %v6406, %v6407
        %v6409 = vrot.slane %v6282, 5
        %v6410 = vsel %vm1733, %v6407, %v6409
        %v6443 = vadd.f32 %v6199, %v6333
        %v6444 = vadd.f32 %v6200, %v6335
        %v6445 = vadd.f32 %v6201, %v6338
        %v6446 = vadd.f32 %v6202, %v6340
        %v6447 = vadd.f32 %v6203, %v6343
        %v6448 = vadd.f32 %v6204, %v6345
        %v6449 = vadd.f32 %v6205, %v6348
        %v6450 = vadd.f32 %v6206, %v6350
        %v6451 = vadd.f32 %v6207, %v6353
        %v6452 = vadd.f32 %v6208, %v6355
        %v6453 = vadd.f32 %v6209, %v6358
        %v6454 = vadd.f32 %v6210, %v6360
        %v6455 = vadd.f32 %v6211, %v6363
        %v6456 = vadd.f32 %v6212, %v6365
        %v6457 = vadd.f32 %v6213, %v6368
        %v6458 = vadd.f32 %v6214, %v6370
        %v6459 = vadd.f32 %v6215, %v6373
        %v6460 = vadd.f32 %v6216, %v6375
        %v6461 = vadd.f32 %v6217, %v6378
        %v6462 = vadd.f32 %v6218, %v6380
        %v6463 = vadd.f32 %v6219, %v6383
        %v6464 = vadd.f32 %v6220, %v6385
        %v6465 = vadd.f32 %v6221, %v6388
        %v6466 = vadd.f32 %v6222, %v6390
        %v6467 = vadd.f32 %v6223, %v6393
        %v6468 = vadd.f32 %v6224, %v6395
        %v6469 = vadd.f32 %v6225, %v6398
        %v6470 = vadd.f32 %v6226, %v6400
        %v6471 = vadd.f32 %v6227, %v6403
        %v6472 = vadd.f32 %v6228, %v6405
        %v6473 = vadd.f32 %v6229, %v6408
        %v6474 = vadd.f32 %v6230, %v6410
        %v6475 = vlaneseq
        %v6476 = vshrl.u32 %v6475, 7
        %v6477 = vsub.s32 3, %v6476
        %v6478 = vrot.slane %v581, %v6477
        %v6479 = vmul.f32 %v521, %v6478
        %v6480 = vmul.f32 %v522, %v6478
        %v6481 = vmul.f32 %v523, %v6478
        %v6482 = vmul.f32 %v524, %v6478
        %v6483 = vmul.f32 %v525, %v6478
        %v6484 = vmul.f32 %v526, %v6478
        %v6485 = vmul.f32 %v527, %v6478
        %v6486 = vmul.f32 %v528, %v6478
        %v6487 = vmul.f32 %v529, %v6478
        %v6488 = vmul.f32 %v530, %v6478
        %v6489 = vmul.f32 %v531, %v6478
        %v6490 = vmul.f32 %v532, %v6478
        %v6491 = vmul.f32 %v533, %v6478
        %v6492 = vmul.f32 %v534, %v6478
        %v6493 = vmul.f32 %v535, %v6478
        %v6494 = vmul.f32 %v536, %v6478
        %v6495 = vmul.f32 %v537, %v6478
        %v6496 = vmul.f32 %v538, %v6478
        %v6497 = vmul.f32 %v539, %v6478
        %v6498 = vmul.f32 %v540, %v6478
        %v6499 = vmul.f32 %v541, %v6478
        %v6500 = vmul.f32 %v542, %v6478
        %v6501 = vmul.f32 %v543, %v6478
        %v6502 = vmul.f32 %v544, %v6478
        %v6503 = vmul.f32 %v545, %v6478
        %v6504 = vmul.f32 %v546, %v6478
        %v6505 = vmul.f32 %v547, %v6478
        %v6506 = vmul.f32 %v548, %v6478
        %v6507 = vmul.f32 %v549, %v6478
        %v6508 = vmul.f32 %v550, %v6478
        %v6509 = vmul.f32 %v551, %v6478
        %v6510 = vmul.f32 %v552, %v6478
        %v6511 = vmul.f32 %v553, %v6478
        %v6512 = vmul.f32 %v554, %v6478
        %v6513 = vmul.f32 %v555, %v6478
        %v6514 = vmul.f32 %v556, %v6478
        %v6515 = vmul.f32 %v557, %v6478
        %v6516 = vmul.f32 %v558, %v6478
        %v6517 = vmul.f32 %v559, %v6478
        %v6518 = vmul.f32 %v560, %v6478
        %v6519 = vmul.f32 %v561, %v6478
        %v6520 = vmul.f32 %v562, %v6478
        %v6521 = vmul.f32 %v563, %v6478
        %v6522 = vmul.f32 %v564, %v6478
        %v6523 = vmul.f32 %v565, %v6478
        %v6524 = vmul.f32 %v566, %v6478
        %v6525 = vmul.f32 %v567, %v6478
        %v6526 = vmul.f32 %v568, %v6478
        %v6575 = vrot.slane %v6479, 6
        %v6576 = vrot.slane %v6480, 6
        %v6577 = vsel %vm1978, %v6575, %v6576
        %v6578 = vrot.slane %v6481, 6
        %v6579 = vsel %vm1978, %v6576, %v6578
        %v6580 = vrot.slane %v6482, 6
        %v6581 = vrot.slane %v6483, 6
        %v6582 = vsel %vm1978, %v6580, %v6581
        %v6583 = vrot.slane %v6484, 6
        %v6584 = vsel %vm1978, %v6581, %v6583
        %v6585 = vrot.slane %v6485, 6
        %v6586 = vrot.slane %v6486, 6
        %v6587 = vsel %vm1978, %v6585, %v6586
        %v6588 = vrot.slane %v6487, 6
        %v6589 = vsel %vm1978, %v6586, %v6588
        %v6590 = vrot.slane %v6488, 6
        %v6591 = vrot.slane %v6489, 6
        %v6592 = vsel %vm1978, %v6590, %v6591
        %v6593 = vrot.slane %v6490, 6
        %v6594 = vsel %vm1978, %v6591, %v6593
        %v6595 = vrot.slane %v6491, 6
        %v6596 = vrot.slane %v6492, 6
        %v6597 = vsel %vm1978, %v6595, %v6596
        %v6598 = vrot.slane %v6493, 6
        %v6599 = vsel %vm1978, %v6596, %v6598
        %v6600 = vrot.slane %v6494, 6
        %v6601 = vrot.slane %v6495, 6
        %v6602 = vsel %vm1978, %v6600, %v6601
        %v6603 = vrot.slane %v6496, 6
        %v6604 = vsel %vm1978, %v6601, %v6603
        %v6605 = vrot.slane %v6497, 6
        %v6606 = vrot.slane %v6498, 6
        %v6607 = vsel %vm1978, %v6605, %v6606
        %v6608 = vrot.slane %v6499, 6
        %v6609 = vsel %vm1978, %v6606, %v6608
        %v6610 = vrot.slane %v6500, 6
        %v6611 = vrot.slane %v6501, 6
        %v6612 = vsel %vm1978, %v6610, %v6611
        %v6613 = vrot.slane %v6502, 6
        %v6614 = vsel %vm1978, %v6611, %v6613
        %v6615 = vrot.slane %v6503, 6
        %v6616 = vrot.slane %v6504, 6
        %v6617 = vsel %vm1978, %v6615, %v6616
        %v6618 = vrot.slane %v6505, 6
        %v6619 = vsel %vm1978, %v6616, %v6618
        %v6620 = vrot.slane %v6506, 6
        %v6621 = vrot.slane %v6507, 6
        %v6622 = vsel %vm1978, %v6620, %v6621
        %v6623 = vrot.slane %v6508, 6
        %v6624 = vsel %vm1978, %v6621, %v6623
        %v6625 = vrot.slane %v6509, 6
        %v6626 = vrot.slane %v6510, 6
        %v6627 = vsel %vm1978, %v6625, %v6626
        %v6628 = vrot.slane %v6511, 6
        %v6629 = vsel %vm1978, %v6626, %v6628
        %v6630 = vrot.slane %v6512, 6
        %v6631 = vrot.slane %v6513, 6
        %v6632 = vsel %vm1978, %v6630, %v6631
        %v6633 = vrot.slane %v6514, 6
        %v6634 = vsel %vm1978, %v6631, %v6633
        %v6635 = vrot.slane %v6515, 6
        %v6636 = vrot.slane %v6516, 6
        %v6637 = vsel %vm1978, %v6635, %v6636
        %v6638 = vrot.slane %v6517, 6
        %v6639 = vsel %vm1978, %v6636, %v6638
        %v6640 = vrot.slane %v6518, 6
        %v6641 = vrot.slane %v6519, 6
        %v6642 = vsel %vm1978, %v6640, %v6641
        %v6643 = vrot.slane %v6520, 6
        %v6644 = vsel %vm1978, %v6641, %v6643
        %v6645 = vrot.slane %v6521, 6
        %v6646 = vrot.slane %v6522, 6
        %v6647 = vsel %vm1978, %v6645, %v6646
        %v6648 = vrot.slane %v6523, 6
        %v6649 = vsel %vm1978, %v6646, %v6648
        %v6650 = vrot.slane %v6524, 6
        %v6651 = vrot.slane %v6525, 6
        %v6652 = vsel %vm1978, %v6650, %v6651
        %v6653 = vrot.slane %v6526, 6
        %v6654 = vsel %vm1978, %v6651, %v6653
        %v6687 = vadd.f32 %v6443, %v6577
        %v6688 = vadd.f32 %v6444, %v6579
        %v6689 = vadd.f32 %v6445, %v6582
        %v6690 = vadd.f32 %v6446, %v6584
        %v6691 = vadd.f32 %v6447, %v6587
        %v6692 = vadd.f32 %v6448, %v6589
        %v6693 = vadd.f32 %v6449, %v6592
        %v6694 = vadd.f32 %v6450, %v6594
        %v6695 = vadd.f32 %v6451, %v6597
        %v6696 = vadd.f32 %v6452, %v6599
        %v6697 = vadd.f32 %v6453, %v6602
        %v6698 = vadd.f32 %v6454, %v6604
        %v6699 = vadd.f32 %v6455, %v6607
        %v6700 = vadd.f32 %v6456, %v6609
        %v6701 = vadd.f32 %v6457, %v6612
        %v6702 = vadd.f32 %v6458, %v6614
        %v6703 = vadd.f32 %v6459, %v6617
        %v6704 = vadd.f32 %v6460, %v6619
        %v6705 = vadd.f32 %v6461, %v6622
        %v6706 = vadd.f32 %v6462, %v6624
        %v6707 = vadd.f32 %v6463, %v6627
        %v6708 = vadd.f32 %v6464, %v6629
        %v6709 = vadd.f32 %v6465, %v6632
        %v6710 = vadd.f32 %v6466, %v6634
        %v6711 = vadd.f32 %v6467, %v6637
        %v6712 = vadd.f32 %v6468, %v6639
        %v6713 = vadd.f32 %v6469, %v6642
        %v6714 = vadd.f32 %v6470, %v6644
        %v6715 = vadd.f32 %v6471, %v6647
        %v6716 = vadd.f32 %v6472, %v6649
        %v6717 = vadd.f32 %v6473, %v6652
        %v6718 = vadd.f32 %v6474, %v6654
        %v6719 = vlaneseq
        %v6720 = vshrl.u32 %v6719, 7
        %v6721 = vsub.s32 4, %v6720
        %v6722 = vrot.slane %v581, %v6721
        %v6723 = vmul.f32 %v524, %v6722
        %v6724 = vmul.f32 %v525, %v6722
        %v6725 = vmul.f32 %v527, %v6722
        %v6726 = vmul.f32 %v528, %v6722
        %v6727 = vmul.f32 %v530, %v6722
        %v6728 = vmul.f32 %v531, %v6722
        %v6729 = vmul.f32 %v533, %v6722
        %v6730 = vmul.f32 %v534, %v6722
        %v6731 = vmul.f32 %v536, %v6722
        %v6732 = vmul.f32 %v537, %v6722
        %v6733 = vmul.f32 %v539, %v6722
        %v6734 = vmul.f32 %v540, %v6722
        %v6735 = vmul.f32 %v542, %v6722
        %v6736 = vmul.f32 %v543, %v6722
        %v6737 = vmul.f32 %v545, %v6722
        %v6738 = vmul.f32 %v546, %v6722
        %v6739 = vmul.f32 %v548, %v6722
        %v6740 = vmul.f32 %v549, %v6722
        %v6741 = vmul.f32 %v551, %v6722
        %v6742 = vmul.f32 %v552, %v6722
        %v6743 = vmul.f32 %v554, %v6722
        %v6744 = vmul.f32 %v555, %v6722
        %v6745 = vmul.f32 %v557, %v6722
        %v6746 = vmul.f32 %v558, %v6722
        %v6747 = vmul.f32 %v560, %v6722
        %v6748 = vmul.f32 %v561, %v6722
        %v6749 = vmul.f32 %v563, %v6722
        %v6750 = vmul.f32 %v564, %v6722
        %v6751 = vmul.f32 %v566, %v6722
        %v6752 = vmul.f32 %v567, %v6722
        %v6753 = vmul.f32 %v569, %v6722
        %v6754 = vmul.f32 %v570, %v6722
        %v6755 = vadd.f32 %v6687, %v6723
        %v6756 = vadd.f32 %v6688, %v6724
        %v6757 = vadd.f32 %v6689, %v6725
        %v6758 = vadd.f32 %v6690, %v6726
        %v6759 = vadd.f32 %v6691, %v6727
        %v6760 = vadd.f32 %v6692, %v6728
        %v6761 = vadd.f32 %v6693, %v6729
        %v6762 = vadd.f32 %v6694, %v6730
        %v6763 = vadd.f32 %v6695, %v6731
        %v6764 = vadd.f32 %v6696, %v6732
        %v6765 = vadd.f32 %v6697, %v6733
        %v6766 = vadd.f32 %v6698, %v6734
        %v6767 = vadd.f32 %v6699, %v6735
        %v6768 = vadd.f32 %v6700, %v6736
        %v6769 = vadd.f32 %v6701, %v6737
        %v6770 = vadd.f32 %v6702, %v6738
        %v6771 = vadd.f32 %v6703, %v6739
        %v6772 = vadd.f32 %v6704, %v6740
        %v6773 = vadd.f32 %v6705, %v6741
        %v6774 = vadd.f32 %v6706, %v6742
        %v6775 = vadd.f32 %v6707, %v6743
        %v6776 = vadd.f32 %v6708, %v6744
        %v6777 = vadd.f32 %v6709, %v6745
        %v6778 = vadd.f32 %v6710, %v6746
        %v6779 = vadd.f32 %v6711, %v6747
        %v6780 = vadd.f32 %v6712, %v6748
        %v6781 = vadd.f32 %v6713, %v6749
        %v6782 = vadd.f32 %v6714, %v6750
        %v6783 = vadd.f32 %v6715, %v6751
        %v6784 = vadd.f32 %v6716, %v6752
        %v6785 = vadd.f32 %v6717, %v6753
        %v6786 = vadd.f32 %v6718, %v6754
        %v6787 = vlaneseq
        %v6788 = vshrl.u32 %v6787, 7
        %v6789 = vsub.s32 5, %v6788
        %v6790 = vrot.slane %v581, %v6789
        %v6791 = vmul.f32 %v524, %v6790
        %v6792 = vmul.f32 %v525, %v6790
        %v6793 = vmul.f32 %v526, %v6790
        %v6794 = vmul.f32 %v527, %v6790
        %v6795 = vmul.f32 %v528, %v6790
        %v6796 = vmul.f32 %v529, %v6790
        %v6797 = vmul.f32 %v530, %v6790
        %v6798 = vmul.f32 %v531, %v6790
        %v6799 = vmul.f32 %v532, %v6790
        %v6800 = vmul.f32 %v533, %v6790
        %v6801 = vmul.f32 %v534, %v6790
        %v6802 = vmul.f32 %v535, %v6790
        %v6803 = vmul.f32 %v536, %v6790
        %v6804 = vmul.f32 %v537, %v6790
        %v6805 = vmul.f32 %v538, %v6790
        %v6806 = vmul.f32 %v539, %v6790
        %v6807 = vmul.f32 %v540, %v6790
        %v6808 = vmul.f32 %v541, %v6790
        %v6809 = vmul.f32 %v542, %v6790
        %v6810 = vmul.f32 %v543, %v6790
        %v6811 = vmul.f32 %v544, %v6790
        %v6812 = vmul.f32 %v545, %v6790
        %v6813 = vmul.f32 %v546, %v6790
        %v6814 = vmul.f32 %v547, %v6790
        %v6815 = vmul.f32 %v548, %v6790
        %v6816 = vmul.f32 %v549, %v6790
        %v6817 = vmul.f32 %v550, %v6790
        %v6818 = vmul.f32 %v551, %v6790
        %v6819 = vmul.f32 %v552, %v6790
        %v6820 = vmul.f32 %v553, %v6790
        %v6821 = vmul.f32 %v554, %v6790
        %v6822 = vmul.f32 %v555, %v6790
        %v6823 = vmul.f32 %v556, %v6790
        %v6824 = vmul.f32 %v557, %v6790
        %v6825 = vmul.f32 %v558, %v6790
        %v6826 = vmul.f32 %v559, %v6790
        %v6827 = vmul.f32 %v560, %v6790
        %v6828 = vmul.f32 %v561, %v6790
        %v6829 = vmul.f32 %v562, %v6790
        %v6830 = vmul.f32 %v563, %v6790
        %v6831 = vmul.f32 %v564, %v6790
        %v6832 = vmul.f32 %v565, %v6790
        %v6833 = vmul.f32 %v566, %v6790
        %v6834 = vmul.f32 %v567, %v6790
        %v6835 = vmul.f32 %v568, %v6790
        %v6836 = vmul.f32 %v569, %v6790
        %v6837 = vmul.f32 %v570, %v6790
        %v6838 = vmul.f32 %v571, %v6790
        %v6887 = vrot.slane %v6791, 1
        %v6888 = vrot.slane %v6792, 1
        %v6889 = vsel %vm753, %v6887, %v6888
        %v6890 = vrot.slane %v6793, 1
        %v6891 = vsel %vm753, %v6888, %v6890
        %v6892 = vrot.slane %v6794, 1
        %v6893 = vrot.slane %v6795, 1
        %v6894 = vsel %vm753, %v6892, %v6893
        %v6895 = vrot.slane %v6796, 1
        %v6896 = vsel %vm753, %v6893, %v6895
        %v6897 = vrot.slane %v6797, 1
        %v6898 = vrot.slane %v6798, 1
        %v6899 = vsel %vm753, %v6897, %v6898
        %v6900 = vrot.slane %v6799, 1
        %v6901 = vsel %vm753, %v6898, %v6900
        %v6902 = vrot.slane %v6800, 1
        %v6903 = vrot.slane %v6801, 1
        %v6904 = vsel %vm753, %v6902, %v6903
        %v6905 = vrot.slane %v6802, 1
        %v6906 = vsel %vm753, %v6903, %v6905
        %v6907 = vrot.slane %v6803, 1
        %v6908 = vrot.slane %v6804, 1
        %v6909 = vsel %vm753, %v6907, %v6908
        %v6910 = vrot.slane %v6805, 1
        %v6911 = vsel %vm753, %v6908, %v6910
        %v6912 = vrot.slane %v6806, 1
        %v6913 = vrot.slane %v6807, 1
        %v6914 = vsel %vm753, %v6912, %v6913
        %v6915 = vrot.slane %v6808, 1
        %v6916 = vsel %vm753, %v6913, %v6915
        %v6917 = vrot.slane %v6809, 1
        %v6918 = vrot.slane %v6810, 1
        %v6919 = vsel %vm753, %v6917, %v6918
        %v6920 = vrot.slane %v6811, 1
        %v6921 = vsel %vm753, %v6918, %v6920
        %v6922 = vrot.slane %v6812, 1
        %v6923 = vrot.slane %v6813, 1
        %v6924 = vsel %vm753, %v6922, %v6923
        %v6925 = vrot.slane %v6814, 1
        %v6926 = vsel %vm753, %v6923, %v6925
        %v6927 = vrot.slane %v6815, 1
        %v6928 = vrot.slane %v6816, 1
        %v6929 = vsel %vm753, %v6927, %v6928
        %v6930 = vrot.slane %v6817, 1
        %v6931 = vsel %vm753, %v6928, %v6930
        %v6932 = vrot.slane %v6818, 1
        %v6933 = vrot.slane %v6819, 1
        %v6934 = vsel %vm753, %v6932, %v6933
        %v6935 = vrot.slane %v6820, 1
        %v6936 = vsel %vm753, %v6933, %v6935
        %v6937 = vrot.slane %v6821, 1
        %v6938 = vrot.slane %v6822, 1
        %v6939 = vsel %vm753, %v6937, %v6938
        %v6940 = vrot.slane %v6823, 1
        %v6941 = vsel %vm753, %v6938, %v6940
        %v6942 = vrot.slane %v6824, 1
        %v6943 = vrot.slane %v6825, 1
        %v6944 = vsel %vm753, %v6942, %v6943
        %v6945 = vrot.slane %v6826, 1
        %v6946 = vsel %vm753, %v6943, %v6945
        %v6947 = vrot.slane %v6827, 1
        %v6948 = vrot.slane %v6828, 1
        %v6949 = vsel %vm753, %v6947, %v6948
        %v6950 = vrot.slane %v6829, 1
        %v6951 = vsel %vm753, %v6948, %v6950
        %v6952 = vrot.slane %v6830, 1
        %v6953 = vrot.slane %v6831, 1
        %v6954 = vsel %vm753, %v6952, %v6953
        %v6955 = vrot.slane %v6832, 1
        %v6956 = vsel %vm753, %v6953, %v6955
        %v6957 = vrot.slane %v6833, 1
        %v6958 = vrot.slane %v6834, 1
        %v6959 = vsel %vm753, %v6957, %v6958
        %v6960 = vrot.slane %v6835, 1
        %v6961 = vsel %vm753, %v6958, %v6960
        %v6962 = vrot.slane %v6836, 1
        %v6963 = vrot.slane %v6837, 1
        %v6964 = vsel %vm753, %v6962, %v6963
        %v6965 = vrot.slane %v6838, 1
        %v6966 = vsel %vm753, %v6963, %v6965
        %v6999 = vadd.f32 %v6755, %v6889
        %v7000 = vadd.f32 %v6756, %v6891
        %v7001 = vadd.f32 %v6757, %v6894
        %v7002 = vadd.f32 %v6758, %v6896
        %v7003 = vadd.f32 %v6759, %v6899
        %v7004 = vadd.f32 %v6760, %v6901
        %v7005 = vadd.f32 %v6761, %v6904
        %v7006 = vadd.f32 %v6762, %v6906
        %v7007 = vadd.f32 %v6763, %v6909
        %v7008 = vadd.f32 %v6764, %v6911
        %v7009 = vadd.f32 %v6765, %v6914
        %v7010 = vadd.f32 %v6766, %v6916
        %v7011 = vadd.f32 %v6767, %v6919
        %v7012 = vadd.f32 %v6768, %v6921
        %v7013 = vadd.f32 %v6769, %v6924
        %v7014 = vadd.f32 %v6770, %v6926
        %v7015 = vadd.f32 %v6771, %v6929
        %v7016 = vadd.f32 %v6772, %v6931
        %v7017 = vadd.f32 %v6773, %v6934
        %v7018 = vadd.f32 %v6774, %v6936
        %v7019 = vadd.f32 %v6775, %v6939
        %v7020 = vadd.f32 %v6776, %v6941
        %v7021 = vadd.f32 %v6777, %v6944
        %v7022 = vadd.f32 %v6778, %v6946
        %v7023 = vadd.f32 %v6779, %v6949
        %v7024 = vadd.f32 %v6780, %v6951
        %v7025 = vadd.f32 %v6781, %v6954
        %v7026 = vadd.f32 %v6782, %v6956
        %v7027 = vadd.f32 %v6783, %v6959
        %v7028 = vadd.f32 %v6784, %v6961
        %v7029 = vadd.f32 %v6785, %v6964
        %v7030 = vadd.f32 %v6786, %v6966
        %v7031 = vlaneseq
        %v7032 = vshrl.u32 %v7031, 7
        %v7033 = vsub.s32 6, %v7032
        %v7034 = vrot.slane %v581, %v7033
        %v7035 = vmul.f32 %v524, %v7034
        %v7036 = vmul.f32 %v525, %v7034
        %v7037 = vmul.f32 %v526, %v7034
        %v7038 = vmul.f32 %v527, %v7034
        %v7039 = vmul.f32 %v528, %v7034
        %v7040 = vmul.f32 %v529, %v7034
        %v7041 = vmul.f32 %v530, %v7034
        %v7042 = vmul.f32 %v531, %v7034
        %v7043 = vmul.f32 %v532, %v7034
        %v7044 = vmul.f32 %v533, %v7034
        %v7045 = vmul.f32 %v534, %v7034
        %v7046 = vmul.f32 %v535, %v7034
        %v7047 = vmul.f32 %v536, %v7034
        %v7048 = vmul.f32 %v537, %v7034
        %v7049 = vmul.f32 %v538, %v7034
        %v7050 = vmul.f32 %v539, %v7034
        %v7051 = vmul.f32 %v540, %v7034
        %v7052 = vmul.f32 %v541, %v7034
        %v7053 = vmul.f32 %v542, %v7034
        %v7054 = vmul.f32 %v543, %v7034
        %v7055 = vmul.f32 %v544, %v7034
        %v7056 = vmul.f32 %v545, %v7034
        %v7057 = vmul.f32 %v546, %v7034
        %v7058 = vmul.f32 %v547, %v7034
        %v7059 = vmul.f32 %v548, %v7034
        %v7060 = vmul.f32 %v549, %v7034
        %v7061 = vmul.f32 %v550, %v7034
        %v7062 = vmul.f32 %v551, %v7034
        %v7063 = vmul.f32 %v552, %v7034
        %v7064 = vmul.f32 %v553, %v7034
        %v7065 = vmul.f32 %v554, %v7034
        %v7066 = vmul.f32 %v555, %v7034
        %v7067 = vmul.f32 %v556, %v7034
        %v7068 = vmul.f32 %v557, %v7034
        %v7069 = vmul.f32 %v558, %v7034
        %v7070 = vmul.f32 %v559, %v7034
        %v7071 = vmul.f32 %v560, %v7034
        %v7072 = vmul.f32 %v561, %v7034
        %v7073 = vmul.f32 %v562, %v7034
        %v7074 = vmul.f32 %v563, %v7034
        %v7075 = vmul.f32 %v564, %v7034
        %v7076 = vmul.f32 %v565, %v7034
        %v7077 = vmul.f32 %v566, %v7034
        %v7078 = vmul.f32 %v567, %v7034
        %v7079 = vmul.f32 %v568, %v7034
        %v7080 = vmul.f32 %v569, %v7034
        %v7081 = vmul.f32 %v570, %v7034
        %v7082 = vmul.f32 %v571, %v7034
        %v7131 = vrot.slane %v7035, 2
        %v7132 = vrot.slane %v7036, 2
        %v7133 = vsel %vm998, %v7131, %v7132
        %v7134 = vrot.slane %v7037, 2
        %v7135 = vsel %vm998, %v7132, %v7134
        %v7136 = vrot.slane %v7038, 2
        %v7137 = vrot.slane %v7039, 2
        %v7138 = vsel %vm998, %v7136, %v7137
        %v7139 = vrot.slane %v7040, 2
        %v7140 = vsel %vm998, %v7137, %v7139
        %v7141 = vrot.slane %v7041, 2
        %v7142 = vrot.slane %v7042, 2
        %v7143 = vsel %vm998, %v7141, %v7142
        %v7144 = vrot.slane %v7043, 2
        %v7145 = vsel %vm998, %v7142, %v7144
        %v7146 = vrot.slane %v7044, 2
        %v7147 = vrot.slane %v7045, 2
        %v7148 = vsel %vm998, %v7146, %v7147
        %v7149 = vrot.slane %v7046, 2
        %v7150 = vsel %vm998, %v7147, %v7149
        %v7151 = vrot.slane %v7047, 2
        %v7152 = vrot.slane %v7048, 2
        %v7153 = vsel %vm998, %v7151, %v7152
        %v7154 = vrot.slane %v7049, 2
        %v7155 = vsel %vm998, %v7152, %v7154
        %v7156 = vrot.slane %v7050, 2
        %v7157 = vrot.slane %v7051, 2
        %v7158 = vsel %vm998, %v7156, %v7157
        %v7159 = vrot.slane %v7052, 2
        %v7160 = vsel %vm998, %v7157, %v7159
        %v7161 = vrot.slane %v7053, 2
        %v7162 = vrot.slane %v7054, 2
        %v7163 = vsel %vm998, %v7161, %v7162
        %v7164 = vrot.slane %v7055, 2
        %v7165 = vsel %vm998, %v7162, %v7164
        %v7166 = vrot.slane %v7056, 2
        %v7167 = vrot.slane %v7057, 2
        %v7168 = vsel %vm998, %v7166, %v7167
        %v7169 = vrot.slane %v7058, 2
        %v7170 = vsel %vm998, %v7167, %v7169
        %v7171 = vrot.slane %v7059, 2
        %v7172 = vrot.slane %v7060, 2
        %v7173 = vsel %vm998, %v7171, %v7172
        %v7174 = vrot.slane %v7061, 2
        %v7175 = vsel %vm998, %v7172, %v7174
        %v7176 = vrot.slane %v7062, 2
        %v7177 = vrot.slane %v7063, 2
        %v7178 = vsel %vm998, %v7176, %v7177
        %v7179 = vrot.slane %v7064, 2
        %v7180 = vsel %vm998, %v7177, %v7179
        %v7181 = vrot.slane %v7065, 2
        %v7182 = vrot.slane %v7066, 2
        %v7183 = vsel %vm998, %v7181, %v7182
        %v7184 = vrot.slane %v7067, 2
        %v7185 = vsel %vm998, %v7182, %v7184
        %v7186 = vrot.slane %v7068, 2
        %v7187 = vrot.slane %v7069, 2
        %v7188 = vsel %vm998, %v7186, %v7187
        %v7189 = vrot.slane %v7070, 2
        %v7190 = vsel %vm998, %v7187, %v7189
        %v7191 = vrot.slane %v7071, 2
        %v7192 = vrot.slane %v7072, 2
        %v7193 = vsel %vm998, %v7191, %v7192
        %v7194 = vrot.slane %v7073, 2
        %v7195 = vsel %vm998, %v7192, %v7194
        %v7196 = vrot.slane %v7074, 2
        %v7197 = vrot.slane %v7075, 2
        %v7198 = vsel %vm998, %v7196, %v7197
        %v7199 = vrot.slane %v7076, 2
        %v7200 = vsel %vm998, %v7197, %v7199
        %v7201 = vrot.slane %v7077, 2
        %v7202 = vrot.slane %v7078, 2
        %v7203 = vsel %vm998, %v7201, %v7202
        %v7204 = vrot.slane %v7079, 2
        %v7205 = vsel %vm998, %v7202, %v7204
        %v7206 = vrot.slane %v7080, 2
        %v7207 = vrot.slane %v7081, 2
        %v7208 = vsel %vm998, %v7206, %v7207
        %v7209 = vrot.slane %v7082, 2
        %v7210 = vsel %vm998, %v7207, %v7209
        %v7243 = vadd.f32 %v6999, %v7133
        %v7244 = vadd.f32 %v7000, %v7135
        %v7245 = vadd.f32 %v7001, %v7138
        %v7246 = vadd.f32 %v7002, %v7140
        %v7247 = vadd.f32 %v7003, %v7143
        %v7248 = vadd.f32 %v7004, %v7145
        %v7249 = vadd.f32 %v7005, %v7148
        %v7250 = vadd.f32 %v7006, %v7150
        %v7251 = vadd.f32 %v7007, %v7153
        %v7252 = vadd.f32 %v7008, %v7155
        %v7253 = vadd.f32 %v7009, %v7158
        %v7254 = vadd.f32 %v7010, %v7160
        %v7255 = vadd.f32 %v7011, %v7163
        %v7256 = vadd.f32 %v7012, %v7165
        %v7257 = vadd.f32 %v7013, %v7168
        %v7258 = vadd.f32 %v7014, %v7170
        %v7259 = vadd.f32 %v7015, %v7173
        %v7260 = vadd.f32 %v7016, %v7175
        %v7261 = vadd.f32 %v7017, %v7178
        %v7262 = vadd.f32 %v7018, %v7180
        %v7263 = vadd.f32 %v7019, %v7183
        %v7264 = vadd.f32 %v7020, %v7185
        %v7265 = vadd.f32 %v7021, %v7188
        %v7266 = vadd.f32 %v7022, %v7190
        %v7267 = vadd.f32 %v7023, %v7193
        %v7268 = vadd.f32 %v7024, %v7195
        %v7269 = vadd.f32 %v7025, %v7198
        %v7270 = vadd.f32 %v7026, %v7200
        %v7271 = vadd.f32 %v7027, %v7203
        %v7272 = vadd.f32 %v7028, %v7205
        %v7273 = vadd.f32 %v7029, %v7208
        %v7274 = vadd.f32 %v7030, %v7210
        %v7275 = vlaneseq
        %v7276 = vshrl.u32 %v7275, 7
        %v7277 = vsub.s32 7, %v7276
        %v7278 = vrot.slane %v581, %v7277
        %v7279 = vmul.f32 %v524, %v7278
        %v7280 = vmul.f32 %v525, %v7278
        %v7281 = vmul.f32 %v526, %v7278
        %v7282 = vmul.f32 %v527, %v7278
        %v7283 = vmul.f32 %v528, %v7278
        %v7284 = vmul.f32 %v529, %v7278
        %v7285 = vmul.f32 %v530, %v7278
        %v7286 = vmul.f32 %v531, %v7278
        %v7287 = vmul.f32 %v532, %v7278
        %v7288 = vmul.f32 %v533, %v7278
        %v7289 = vmul.f32 %v534, %v7278
        %v7290 = vmul.f32 %v535, %v7278
        %v7291 = vmul.f32 %v536, %v7278
        %v7292 = vmul.f32 %v537, %v7278
        %v7293 = vmul.f32 %v538, %v7278
        %v7294 = vmul.f32 %v539, %v7278
        %v7295 = vmul.f32 %v540, %v7278
        %v7296 = vmul.f32 %v541, %v7278
        %v7297 = vmul.f32 %v542, %v7278
        %v7298 = vmul.f32 %v543, %v7278
        %v7299 = vmul.f32 %v544, %v7278
        %v7300 = vmul.f32 %v545, %v7278
        %v7301 = vmul.f32 %v546, %v7278
        %v7302 = vmul.f32 %v547, %v7278
        %v7303 = vmul.f32 %v548, %v7278
        %v7304 = vmul.f32 %v549, %v7278
        %v7305 = vmul.f32 %v550, %v7278
        %v7306 = vmul.f32 %v551, %v7278
        %v7307 = vmul.f32 %v552, %v7278
        %v7308 = vmul.f32 %v553, %v7278
        %v7309 = vmul.f32 %v554, %v7278
        %v7310 = vmul.f32 %v555, %v7278
        %v7311 = vmul.f32 %v556, %v7278
        %v7312 = vmul.f32 %v557, %v7278
        %v7313 = vmul.f32 %v558, %v7278
        %v7314 = vmul.f32 %v559, %v7278
        %v7315 = vmul.f32 %v560, %v7278
        %v7316 = vmul.f32 %v561, %v7278
        %v7317 = vmul.f32 %v562, %v7278
        %v7318 = vmul.f32 %v563, %v7278
        %v7319 = vmul.f32 %v564, %v7278
        %v7320 = vmul.f32 %v565, %v7278
        %v7321 = vmul.f32 %v566, %v7278
        %v7322 = vmul.f32 %v567, %v7278
        %v7323 = vmul.f32 %v568, %v7278
        %v7324 = vmul.f32 %v569, %v7278
        %v7325 = vmul.f32 %v570, %v7278
        %v7326 = vmul.f32 %v571, %v7278
        %v7375 = vrot.slane %v7279, 3
        %v7376 = vrot.slane %v7280, 3
        %v7377 = vsel %vm1243, %v7375, %v7376
        %v7378 = vrot.slane %v7281, 3
        %v7379 = vsel %vm1243, %v7376, %v7378
        %v7380 = vrot.slane %v7282, 3
        %v7381 = vrot.slane %v7283, 3
        %v7382 = vsel %vm1243, %v7380, %v7381
        %v7383 = vrot.slane %v7284, 3
        %v7384 = vsel %vm1243, %v7381, %v7383
        %v7385 = vrot.slane %v7285, 3
        %v7386 = vrot.slane %v7286, 3
        %v7387 = vsel %vm1243, %v7385, %v7386
        %v7388 = vrot.slane %v7287, 3
        %v7389 = vsel %vm1243, %v7386, %v7388
        %v7390 = vrot.slane %v7288, 3
        %v7391 = vrot.slane %v7289, 3
        %v7392 = vsel %vm1243, %v7390, %v7391
        %v7393 = vrot.slane %v7290, 3
        %v7394 = vsel %vm1243, %v7391, %v7393
        %v7395 = vrot.slane %v7291, 3
        %v7396 = vrot.slane %v7292, 3
        %v7397 = vsel %vm1243, %v7395, %v7396
        %v7398 = vrot.slane %v7293, 3
        %v7399 = vsel %vm1243, %v7396, %v7398
        %v7400 = vrot.slane %v7294, 3
        %v7401 = vrot.slane %v7295, 3
        %v7402 = vsel %vm1243, %v7400, %v7401
        %v7403 = vrot.slane %v7296, 3
        %v7404 = vsel %vm1243, %v7401, %v7403
        %v7405 = vrot.slane %v7297, 3
        %v7406 = vrot.slane %v7298, 3
        %v7407 = vsel %vm1243, %v7405, %v7406
        %v7408 = vrot.slane %v7299, 3
        %v7409 = vsel %vm1243, %v7406, %v7408
        %v7410 = vrot.slane %v7300, 3
        %v7411 = vrot.slane %v7301, 3
        %v7412 = vsel %vm1243, %v7410, %v7411
        %v7413 = vrot.slane %v7302, 3
        %v7414 = vsel %vm1243, %v7411, %v7413
        %v7415 = vrot.slane %v7303, 3
        %v7416 = vrot.slane %v7304, 3
        %v7417 = vsel %vm1243, %v7415, %v7416
        %v7418 = vrot.slane %v7305, 3
        %v7419 = vsel %vm1243, %v7416, %v7418
        %v7420 = vrot.slane %v7306, 3
        %v7421 = vrot.slane %v7307, 3
        %v7422 = vsel %vm1243, %v7420, %v7421
        %v7423 = vrot.slane %v7308, 3
        %v7424 = vsel %vm1243, %v7421, %v7423
        %v7425 = vrot.slane %v7309, 3
        %v7426 = vrot.slane %v7310, 3
        %v7427 = vsel %vm1243, %v7425, %v7426
        %v7428 = vrot.slane %v7311, 3
        %v7429 = vsel %vm1243, %v7426, %v7428
        %v7430 = vrot.slane %v7312, 3
        %v7431 = vrot.slane %v7313, 3
        %v7432 = vsel %vm1243, %v7430, %v7431
        %v7433 = vrot.slane %v7314, 3
        %v7434 = vsel %vm1243, %v7431, %v7433
        %v7435 = vrot.slane %v7315, 3
        %v7436 = vrot.slane %v7316, 3
        %v7437 = vsel %vm1243, %v7435, %v7436
        %v7438 = vrot.slane %v7317, 3
        %v7439 = vsel %vm1243, %v7436, %v7438
        %v7440 = vrot.slane %v7318, 3
        %v7441 = vrot.slane %v7319, 3
        %v7442 = vsel %vm1243, %v7440, %v7441
        %v7443 = vrot.slane %v7320, 3
        %v7444 = vsel %vm1243, %v7441, %v7443
        %v7445 = vrot.slane %v7321, 3
        %v7446 = vrot.slane %v7322, 3
        %v7447 = vsel %vm1243, %v7445, %v7446
        %v7448 = vrot.slane %v7323, 3
        %v7449 = vsel %vm1243, %v7446, %v7448
        %v7450 = vrot.slane %v7324, 3
        %v7451 = vrot.slane %v7325, 3
        %v7452 = vsel %vm1243, %v7450, %v7451
        %v7453 = vrot.slane %v7326, 3
        %v7454 = vsel %vm1243, %v7451, %v7453
        %v7487 = vadd.f32 %v7243, %v7377
        %v7488 = vadd.f32 %v7244, %v7379
        %v7489 = vadd.f32 %v7245, %v7382
        %v7490 = vadd.f32 %v7246, %v7384
        %v7491 = vadd.f32 %v7247, %v7387
        %v7492 = vadd.f32 %v7248, %v7389
        %v7493 = vadd.f32 %v7249, %v7392
        %v7494 = vadd.f32 %v7250, %v7394
        %v7495 = vadd.f32 %v7251, %v7397
        %v7496 = vadd.f32 %v7252, %v7399
        %v7497 = vadd.f32 %v7253, %v7402
        %v7498 = vadd.f32 %v7254, %v7404
        %v7499 = vadd.f32 %v7255, %v7407
        %v7500 = vadd.f32 %v7256, %v7409
        %v7501 = vadd.f32 %v7257, %v7412
        %v7502 = vadd.f32 %v7258, %v7414
        %v7503 = vadd.f32 %v7259, %v7417
        %v7504 = vadd.f32 %v7260, %v7419
        %v7505 = vadd.f32 %v7261, %v7422
        %v7506 = vadd.f32 %v7262, %v7424
        %v7507 = vadd.f32 %v7263, %v7427
        %v7508 = vadd.f32 %v7264, %v7429
        %v7509 = vadd.f32 %v7265, %v7432
        %v7510 = vadd.f32 %v7266, %v7434
        %v7511 = vadd.f32 %v7267, %v7437
        %v7512 = vadd.f32 %v7268, %v7439
        %v7513 = vadd.f32 %v7269, %v7442
        %v7514 = vadd.f32 %v7270, %v7444
        %v7515 = vadd.f32 %v7271, %v7447
        %v7516 = vadd.f32 %v7272, %v7449
        %v7517 = vadd.f32 %v7273, %v7452
        %v7518 = vadd.f32 %v7274, %v7454
        %v7519 = vlaneseq
        %v7520 = vshrl.u32 %v7519, 7
        %v7521 = vsub.s32 0, %v7520
        %v7522 = vrot.slane %v582, %v7521
        %v7523 = vmul.f32 %v524, %v7522
        %v7524 = vmul.f32 %v525, %v7522
        %v7525 = vmul.f32 %v526, %v7522
        %v7526 = vmul.f32 %v527, %v7522
        %v7527 = vmul.f32 %v528, %v7522
        %v7528 = vmul.f32 %v529, %v7522
        %v7529 = vmul.f32 %v530, %v7522
        %v7530 = vmul.f32 %v531, %v7522
        %v7531 = vmul.f32 %v532, %v7522
        %v7532 = vmul.f32 %v533, %v7522
        %v7533 = vmul.f32 %v534, %v7522
        %v7534 = vmul.f32 %v535, %v7522
        %v7535 = vmul.f32 %v536, %v7522
        %v7536 = vmul.f32 %v537, %v7522
        %v7537 = vmul.f32 %v538, %v7522
        %v7538 = vmul.f32 %v539, %v7522
        %v7539 = vmul.f32 %v540, %v7522
        %v7540 = vmul.f32 %v541, %v7522
        %v7541 = vmul.f32 %v542, %v7522
        %v7542 = vmul.f32 %v543, %v7522
        %v7543 = vmul.f32 %v544, %v7522
        %v7544 = vmul.f32 %v545, %v7522
        %v7545 = vmul.f32 %v546, %v7522
        %v7546 = vmul.f32 %v547, %v7522
        %v7547 = vmul.f32 %v548, %v7522
        %v7548 = vmul.f32 %v549, %v7522
        %v7549 = vmul.f32 %v550, %v7522
        %v7550 = vmul.f32 %v551, %v7522
        %v7551 = vmul.f32 %v552, %v7522
        %v7552 = vmul.f32 %v553, %v7522
        %v7553 = vmul.f32 %v554, %v7522
        %v7554 = vmul.f32 %v555, %v7522
        %v7555 = vmul.f32 %v556, %v7522
        %v7556 = vmul.f32 %v557, %v7522
        %v7557 = vmul.f32 %v558, %v7522
        %v7558 = vmul.f32 %v559, %v7522
        %v7559 = vmul.f32 %v560, %v7522
        %v7560 = vmul.f32 %v561, %v7522
        %v7561 = vmul.f32 %v562, %v7522
        %v7562 = vmul.f32 %v563, %v7522
        %v7563 = vmul.f32 %v564, %v7522
        %v7564 = vmul.f32 %v565, %v7522
        %v7565 = vmul.f32 %v566, %v7522
        %v7566 = vmul.f32 %v567, %v7522
        %v7567 = vmul.f32 %v568, %v7522
        %v7568 = vmul.f32 %v569, %v7522
        %v7569 = vmul.f32 %v570, %v7522
        %v7570 = vmul.f32 %v571, %v7522
        %v7619 = vrot.slane %v7523, 4
        %v7620 = vrot.slane %v7524, 4
        %v7621 = vsel %vm1488, %v7619, %v7620
        %v7622 = vrot.slane %v7525, 4
        %v7623 = vsel %vm1488, %v7620, %v7622
        %v7624 = vrot.slane %v7526, 4
        %v7625 = vrot.slane %v7527, 4
        %v7626 = vsel %vm1488, %v7624, %v7625
        %v7627 = vrot.slane %v7528, 4
        %v7628 = vsel %vm1488, %v7625, %v7627
        %v7629 = vrot.slane %v7529, 4
        %v7630 = vrot.slane %v7530, 4
        %v7631 = vsel %vm1488, %v7629, %v7630
        %v7632 = vrot.slane %v7531, 4
        %v7633 = vsel %vm1488, %v7630, %v7632
        %v7634 = vrot.slane %v7532, 4
        %v7635 = vrot.slane %v7533, 4
        %v7636 = vsel %vm1488, %v7634, %v7635
        %v7637 = vrot.slane %v7534, 4
        %v7638 = vsel %vm1488, %v7635, %v7637
        %v7639 = vrot.slane %v7535, 4
        %v7640 = vrot.slane %v7536, 4
        %v7641 = vsel %vm1488, %v7639, %v7640
        %v7642 = vrot.slane %v7537, 4
        %v7643 = vsel %vm1488, %v7640, %v7642
        %v7644 = vrot.slane %v7538, 4
        %v7645 = vrot.slane %v7539, 4
        %v7646 = vsel %vm1488, %v7644, %v7645
        %v7647 = vrot.slane %v7540, 4
        %v7648 = vsel %vm1488, %v7645, %v7647
        %v7649 = vrot.slane %v7541, 4
        %v7650 = vrot.slane %v7542, 4
        %v7651 = vsel %vm1488, %v7649, %v7650
        %v7652 = vrot.slane %v7543, 4
        %v7653 = vsel %vm1488, %v7650, %v7652
        %v7654 = vrot.slane %v7544, 4
        %v7655 = vrot.slane %v7545, 4
        %v7656 = vsel %vm1488, %v7654, %v7655
        %v7657 = vrot.slane %v7546, 4
        %v7658 = vsel %vm1488, %v7655, %v7657
        %v7659 = vrot.slane %v7547, 4
        %v7660 = vrot.slane %v7548, 4
        %v7661 = vsel %vm1488, %v7659, %v7660
        %v7662 = vrot.slane %v7549, 4
        %v7663 = vsel %vm1488, %v7660, %v7662
        %v7664 = vrot.slane %v7550, 4
        %v7665 = vrot.slane %v7551, 4
        %v7666 = vsel %vm1488, %v7664, %v7665
        %v7667 = vrot.slane %v7552, 4
        %v7668 = vsel %vm1488, %v7665, %v7667
        %v7669 = vrot.slane %v7553, 4
        %v7670 = vrot.slane %v7554, 4
        %v7671 = vsel %vm1488, %v7669, %v7670
        %v7672 = vrot.slane %v7555, 4
        %v7673 = vsel %vm1488, %v7670, %v7672
        %v7674 = vrot.slane %v7556, 4
        %v7675 = vrot.slane %v7557, 4
        %v7676 = vsel %vm1488, %v7674, %v7675
        %v7677 = vrot.slane %v7558, 4
        %v7678 = vsel %vm1488, %v7675, %v7677
        %v7679 = vrot.slane %v7559, 4
        %v7680 = vrot.slane %v7560, 4
        %v7681 = vsel %vm1488, %v7679, %v7680
        %v7682 = vrot.slane %v7561, 4
        %v7683 = vsel %vm1488, %v7680, %v7682
        %v7684 = vrot.slane %v7562, 4
        %v7685 = vrot.slane %v7563, 4
        %v7686 = vsel %vm1488, %v7684, %v7685
        %v7687 = vrot.slane %v7564, 4
        %v7688 = vsel %vm1488, %v7685, %v7687
        %v7689 = vrot.slane %v7565, 4
        %v7690 = vrot.slane %v7566, 4
        %v7691 = vsel %vm1488, %v7689, %v7690
        %v7692 = vrot.slane %v7567, 4
        %v7693 = vsel %vm1488, %v7690, %v7692
        %v7694 = vrot.slane %v7568, 4
        %v7695 = vrot.slane %v7569, 4
        %v7696 = vsel %vm1488, %v7694, %v7695
        %v7697 = vrot.slane %v7570, 4
        %v7698 = vsel %vm1488, %v7695, %v7697
        %v7731 = vadd.f32 %v7487, %v7621
        %v7732 = vadd.f32 %v7488, %v7623
        %v7733 = vadd.f32 %v7489, %v7626
        %v7734 = vadd.f32 %v7490, %v7628
        %v7735 = vadd.f32 %v7491, %v7631
        %v7736 = vadd.f32 %v7492, %v7633
        %v7737 = vadd.f32 %v7493, %v7636
        %v7738 = vadd.f32 %v7494, %v7638
        %v7739 = vadd.f32 %v7495, %v7641
        %v7740 = vadd.f32 %v7496, %v7643
        %v7741 = vadd.f32 %v7497, %v7646
        %v7742 = vadd.f32 %v7498, %v7648
        %v7743 = vadd.f32 %v7499, %v7651
        %v7744 = vadd.f32 %v7500, %v7653
        %v7745 = vadd.f32 %v7501, %v7656
        %v7746 = vadd.f32 %v7502, %v7658
        %v7747 = vadd.f32 %v7503, %v7661
        %v7748 = vadd.f32 %v7504, %v7663
        %v7749 = vadd.f32 %v7505, %v7666
        %v7750 = vadd.f32 %v7506, %v7668
        %v7751 = vadd.f32 %v7507, %v7671
        %v7752 = vadd.f32 %v7508, %v7673
        %v7753 = vadd.f32 %v7509, %v7676
        %v7754 = vadd.f32 %v7510, %v7678
        %v7755 = vadd.f32 %v7511, %v7681
        %v7756 = vadd.f32 %v7512, %v7683
        %v7757 = vadd.f32 %v7513, %v7686
        %v7758 = vadd.f32 %v7514, %v7688
        %v7759 = vadd.f32 %v7515, %v7691
        %v7760 = vadd.f32 %v7516, %v7693
        %v7761 = vadd.f32 %v7517, %v7696
        %v7762 = vadd.f32 %v7518, %v7698
        %v7763 = vlaneseq
        %v7764 = vshrl.u32 %v7763, 7
        %v7765 = vsub.s32 1, %v7764
        %v7766 = vrot.slane %v582, %v7765
        %v7767 = vmul.f32 %v524, %v7766
        %v7768 = vmul.f32 %v525, %v7766
        %v7769 = vmul.f32 %v526, %v7766
        %v7770 = vmul.f32 %v527, %v7766
        %v7771 = vmul.f32 %v528, %v7766
        %v7772 = vmul.f32 %v529, %v7766
        %v7773 = vmul.f32 %v530, %v7766
        %v7774 = vmul.f32 %v531, %v7766
        %v7775 = vmul.f32 %v532, %v7766
        %v7776 = vmul.f32 %v533, %v7766
        %v7777 = vmul.f32 %v534, %v7766
        %v7778 = vmul.f32 %v535, %v7766
        %v7779 = vmul.f32 %v536, %v7766
        %v7780 = vmul.f32 %v537, %v7766
        %v7781 = vmul.f32 %v538, %v7766
        %v7782 = vmul.f32 %v539, %v7766
        %v7783 = vmul.f32 %v540, %v7766
        %v7784 = vmul.f32 %v541, %v7766
        %v7785 = vmul.f32 %v542, %v7766
        %v7786 = vmul.f32 %v543, %v7766
        %v7787 = vmul.f32 %v544, %v7766
        %v7788 = vmul.f32 %v545, %v7766
        %v7789 = vmul.f32 %v546, %v7766
        %v7790 = vmul.f32 %v547, %v7766
        %v7791 = vmul.f32 %v548, %v7766
        %v7792 = vmul.f32 %v549, %v7766
        %v7793 = vmul.f32 %v550, %v7766
        %v7794 = vmul.f32 %v551, %v7766
        %v7795 = vmul.f32 %v552, %v7766
        %v7796 = vmul.f32 %v553, %v7766
        %v7797 = vmul.f32 %v554, %v7766
        %v7798 = vmul.f32 %v555, %v7766
        %v7799 = vmul.f32 %v556, %v7766
        %v7800 = vmul.f32 %v557, %v7766
        %v7801 = vmul.f32 %v558, %v7766
        %v7802 = vmul.f32 %v559, %v7766
        %v7803 = vmul.f32 %v560, %v7766
        %v7804 = vmul.f32 %v561, %v7766
        %v7805 = vmul.f32 %v562, %v7766
        %v7806 = vmul.f32 %v563, %v7766
        %v7807 = vmul.f32 %v564, %v7766
        %v7808 = vmul.f32 %v565, %v7766
        %v7809 = vmul.f32 %v566, %v7766
        %v7810 = vmul.f32 %v567, %v7766
        %v7811 = vmul.f32 %v568, %v7766
        %v7812 = vmul.f32 %v569, %v7766
        %v7813 = vmul.f32 %v570, %v7766
        %v7814 = vmul.f32 %v571, %v7766
        %v7863 = vrot.slane %v7767, 5
        %v7864 = vrot.slane %v7768, 5
        %v7865 = vsel %vm1733, %v7863, %v7864
        %v7866 = vrot.slane %v7769, 5
        %v7867 = vsel %vm1733, %v7864, %v7866
        %v7868 = vrot.slane %v7770, 5
        %v7869 = vrot.slane %v7771, 5
        %v7870 = vsel %vm1733, %v7868, %v7869
        %v7871 = vrot.slane %v7772, 5
        %v7872 = vsel %vm1733, %v7869, %v7871
        %v7873 = vrot.slane %v7773, 5
        %v7874 = vrot.slane %v7774, 5
        %v7875 = vsel %vm1733, %v7873, %v7874
        %v7876 = vrot.slane %v7775, 5
        %v7877 = vsel %vm1733, %v7874, %v7876
        %v7878 = vrot.slane %v7776, 5
        %v7879 = vrot.slane %v7777, 5
        %v7880 = vsel %vm1733, %v7878, %v7879
        %v7881 = vrot.slane %v7778, 5
        %v7882 = vsel %vm1733, %v7879, %v7881
        %v7883 = vrot.slane %v7779, 5
        %v7884 = vrot.slane %v7780, 5
        %v7885 = vsel %vm1733, %v7883, %v7884
        %v7886 = vrot.slane %v7781, 5
        %v7887 = vsel %vm1733, %v7884, %v7886
        %v7888 = vrot.slane %v7782, 5
        %v7889 = vrot.slane %v7783, 5
        %v7890 = vsel %vm1733, %v7888, %v7889
        %v7891 = vrot.slane %v7784, 5
        %v7892 = vsel %vm1733, %v7889, %v7891
        %v7893 = vrot.slane %v7785, 5
        %v7894 = vrot.slane %v7786, 5
        %v7895 = vsel %vm1733, %v7893, %v7894
        %v7896 = vrot.slane %v7787, 5
        %v7897 = vsel %vm1733, %v7894, %v7896
        %v7898 = vrot.slane %v7788, 5
        %v7899 = vrot.slane %v7789, 5
        %v7900 = vsel %vm1733, %v7898, %v7899
        %v7901 = vrot.slane %v7790, 5
        %v7902 = vsel %vm1733, %v7899, %v7901
        %v7903 = vrot.slane %v7791, 5
        %v7904 = vrot.slane %v7792, 5
        %v7905 = vsel %vm1733, %v7903, %v7904
        %v7906 = vrot.slane %v7793, 5
        %v7907 = vsel %vm1733, %v7904, %v7906
        %v7908 = vrot.slane %v7794, 5
        %v7909 = vrot.slane %v7795, 5
        %v7910 = vsel %vm1733, %v7908, %v7909
        %v7911 = vrot.slane %v7796, 5
        %v7912 = vsel %vm1733, %v7909, %v7911
        %v7913 = vrot.slane %v7797, 5
        %v7914 = vrot.slane %v7798, 5
        %v7915 = vsel %vm1733, %v7913, %v7914
        %v7916 = vrot.slane %v7799, 5
        %v7917 = vsel %vm1733, %v7914, %v7916
        %v7918 = vrot.slane %v7800, 5
        %v7919 = vrot.slane %v7801, 5
        %v7920 = vsel %vm1733, %v7918, %v7919
        %v7921 = vrot.slane %v7802, 5
        %v7922 = vsel %vm1733, %v7919, %v7921
        %v7923 = vrot.slane %v7803, 5
        %v7924 = vrot.slane %v7804, 5
        %v7925 = vsel %vm1733, %v7923, %v7924
        %v7926 = vrot.slane %v7805, 5
        %v7927 = vsel %vm1733, %v7924, %v7926
        %v7928 = vrot.slane %v7806, 5
        %v7929 = vrot.slane %v7807, 5
        %v7930 = vsel %vm1733, %v7928, %v7929
        %v7931 = vrot.slane %v7808, 5
        %v7932 = vsel %vm1733, %v7929, %v7931
        %v7933 = vrot.slane %v7809, 5
        %v7934 = vrot.slane %v7810, 5
        %v7935 = vsel %vm1733, %v7933, %v7934
        %v7936 = vrot.slane %v7811, 5
        %v7937 = vsel %vm1733, %v7934, %v7936
        %v7938 = vrot.slane %v7812, 5
        %v7939 = vrot.slane %v7813, 5
        %v7940 = vsel %vm1733, %v7938, %v7939
        %v7941 = vrot.slane %v7814, 5
        %v7942 = vsel %vm1733, %v7939, %v7941
        %v7975 = vadd.f32 %v7731, %v7865
        %v7976 = vadd.f32 %v7732, %v7867
        %v7977 = vadd.f32 %v7733, %v7870
        %v7978 = vadd.f32 %v7734, %v7872
        %v7979 = vadd.f32 %v7735, %v7875
        %v7980 = vadd.f32 %v7736, %v7877
        %v7981 = vadd.f32 %v7737, %v7880
        %v7982 = vadd.f32 %v7738, %v7882
        %v7983 = vadd.f32 %v7739, %v7885
        %v7984 = vadd.f32 %v7740, %v7887
        %v7985 = vadd.f32 %v7741, %v7890
        %v7986 = vadd.f32 %v7742, %v7892
        %v7987 = vadd.f32 %v7743, %v7895
        %v7988 = vadd.f32 %v7744, %v7897
        %v7989 = vadd.f32 %v7745, %v7900
        %v7990 = vadd.f32 %v7746, %v7902
        %v7991 = vadd.f32 %v7747, %v7905
        %v7992 = vadd.f32 %v7748, %v7907
        %v7993 = vadd.f32 %v7749, %v7910
        %v7994 = vadd.f32 %v7750, %v7912
        %v7995 = vadd.f32 %v7751, %v7915
        %v7996 = vadd.f32 %v7752, %v7917
        %v7997 = vadd.f32 %v7753, %v7920
        %v7998 = vadd.f32 %v7754, %v7922
        %v7999 = vadd.f32 %v7755, %v7925
        %v8000 = vadd.f32 %v7756, %v7927
        %v8001 = vadd.f32 %v7757, %v7930
        %v8002 = vadd.f32 %v7758, %v7932
        %v8003 = vadd.f32 %v7759, %v7935
        %v8004 = vadd.f32 %v7760, %v7937
        %v8005 = vadd.f32 %v7761, %v7940
        %v8006 = vadd.f32 %v7762, %v7942
        %v8007 = vlaneseq
        %v8008 = vshrl.u32 %v8007, 7
        %v8009 = vsub.s32 2, %v8008
        %v8010 = vrot.slane %v582, %v8009
        %v8011 = vmul.f32 %v524, %v8010
        %v8012 = vmul.f32 %v525, %v8010
        %v8013 = vmul.f32 %v526, %v8010
        %v8014 = vmul.f32 %v527, %v8010
        %v8015 = vmul.f32 %v528, %v8010
        %v8016 = vmul.f32 %v529, %v8010
        %v8017 = vmul.f32 %v530, %v8010
        %v8018 = vmul.f32 %v531, %v8010
        %v8019 = vmul.f32 %v532, %v8010
        %v8020 = vmul.f32 %v533, %v8010
        %v8021 = vmul.f32 %v534, %v8010
        %v8022 = vmul.f32 %v535, %v8010
        %v8023 = vmul.f32 %v536, %v8010
        %v8024 = vmul.f32 %v537, %v8010
        %v8025 = vmul.f32 %v538, %v8010
        %v8026 = vmul.f32 %v539, %v8010
        %v8027 = vmul.f32 %v540, %v8010
        %v8028 = vmul.f32 %v541, %v8010
        %v8029 = vmul.f32 %v542, %v8010
        %v8030 = vmul.f32 %v543, %v8010
        %v8031 = vmul.f32 %v544, %v8010
        %v8032 = vmul.f32 %v545, %v8010
        %v8033 = vmul.f32 %v546, %v8010
        %v8034 = vmul.f32 %v547, %v8010
        %v8035 = vmul.f32 %v548, %v8010
        %v8036 = vmul.f32 %v549, %v8010
        %v8037 = vmul.f32 %v550, %v8010
        %v8038 = vmul.f32 %v551, %v8010
        %v8039 = vmul.f32 %v552, %v8010
        %v8040 = vmul.f32 %v553, %v8010
        %v8041 = vmul.f32 %v554, %v8010
        %v8042 = vmul.f32 %v555, %v8010
        %v8043 = vmul.f32 %v556, %v8010
        %v8044 = vmul.f32 %v557, %v8010
        %v8045 = vmul.f32 %v558, %v8010
        %v8046 = vmul.f32 %v559, %v8010
        %v8047 = vmul.f32 %v560, %v8010
        %v8048 = vmul.f32 %v561, %v8010
        %v8049 = vmul.f32 %v562, %v8010
        %v8050 = vmul.f32 %v563, %v8010
        %v8051 = vmul.f32 %v564, %v8010
        %v8052 = vmul.f32 %v565, %v8010
        %v8053 = vmul.f32 %v566, %v8010
        %v8054 = vmul.f32 %v567, %v8010
        %v8055 = vmul.f32 %v568, %v8010
        %v8056 = vmul.f32 %v569, %v8010
        %v8057 = vmul.f32 %v570, %v8010
        %v8058 = vmul.f32 %v571, %v8010
        %v8107 = vrot.slane %v8011, 6
        %v8108 = vrot.slane %v8012, 6
        %v8109 = vsel %vm1978, %v8107, %v8108
        %v8110 = vrot.slane %v8013, 6
        %v8111 = vsel %vm1978, %v8108, %v8110
        %v8112 = vrot.slane %v8014, 6
        %v8113 = vrot.slane %v8015, 6
        %v8114 = vsel %vm1978, %v8112, %v8113
        %v8115 = vrot.slane %v8016, 6
        %v8116 = vsel %vm1978, %v8113, %v8115
        %v8117 = vrot.slane %v8017, 6
        %v8118 = vrot.slane %v8018, 6
        %v8119 = vsel %vm1978, %v8117, %v8118
        %v8120 = vrot.slane %v8019, 6
        %v8121 = vsel %vm1978, %v8118, %v8120
        %v8122 = vrot.slane %v8020, 6
        %v8123 = vrot.slane %v8021, 6
        %v8124 = vsel %vm1978, %v8122, %v8123
        %v8125 = vrot.slane %v8022, 6
        %v8126 = vsel %vm1978, %v8123, %v8125
        %v8127 = vrot.slane %v8023, 6
        %v8128 = vrot.slane %v8024, 6
        %v8129 = vsel %vm1978, %v8127, %v8128
        %v8130 = vrot.slane %v8025, 6
        %v8131 = vsel %vm1978, %v8128, %v8130
        %v8132 = vrot.slane %v8026, 6
        %v8133 = vrot.slane %v8027, 6
        %v8134 = vsel %vm1978, %v8132, %v8133
        %v8135 = vrot.slane %v8028, 6
        %v8136 = vsel %vm1978, %v8133, %v8135
        %v8137 = vrot.slane %v8029, 6
        %v8138 = vrot.slane %v8030, 6
        %v8139 = vsel %vm1978, %v8137, %v8138
        %v8140 = vrot.slane %v8031, 6
        %v8141 = vsel %vm1978, %v8138, %v8140
        %v8142 = vrot.slane %v8032, 6
        %v8143 = vrot.slane %v8033, 6
        %v8144 = vsel %vm1978, %v8142, %v8143
        %v8145 = vrot.slane %v8034, 6
        %v8146 = vsel %vm1978, %v8143, %v8145
        %v8147 = vrot.slane %v8035, 6
        %v8148 = vrot.slane %v8036, 6
        %v8149 = vsel %vm1978, %v8147, %v8148
        %v8150 = vrot.slane %v8037, 6
        %v8151 = vsel %vm1978, %v8148, %v8150
        %v8152 = vrot.slane %v8038, 6
        %v8153 = vrot.slane %v8039, 6
        %v8154 = vsel %vm1978, %v8152, %v8153
        %v8155 = vrot.slane %v8040, 6
        %v8156 = vsel %vm1978, %v8153, %v8155
        %v8157 = vrot.slane %v8041, 6
        %v8158 = vrot.slane %v8042, 6
        %v8159 = vsel %vm1978, %v8157, %v8158
        %v8160 = vrot.slane %v8043, 6
        %v8161 = vsel %vm1978, %v8158, %v8160
        %v8162 = vrot.slane %v8044, 6
        %v8163 = vrot.slane %v8045, 6
        %v8164 = vsel %vm1978, %v8162, %v8163
        %v8165 = vrot.slane %v8046, 6
        %v8166 = vsel %vm1978, %v8163, %v8165
        %v8167 = vrot.slane %v8047, 6
        %v8168 = vrot.slane %v8048, 6
        %v8169 = vsel %vm1978, %v8167, %v8168
        %v8170 = vrot.slane %v8049, 6
        %v8171 = vsel %vm1978, %v8168, %v8170
        %v8172 = vrot.slane %v8050, 6
        %v8173 = vrot.slane %v8051, 6
        %v8174 = vsel %vm1978, %v8172, %v8173
        %v8175 = vrot.slane %v8052, 6
        %v8176 = vsel %vm1978, %v8173, %v8175
        %v8177 = vrot.slane %v8053, 6
        %v8178 = vrot.slane %v8054, 6
        %v8179 = vsel %vm1978, %v8177, %v8178
        %v8180 = vrot.slane %v8055, 6
        %v8181 = vsel %vm1978, %v8178, %v8180
        %v8182 = vrot.slane %v8056, 6
        %v8183 = vrot.slane %v8057, 6
        %v8184 = vsel %vm1978, %v8182, %v8183
        %v8185 = vrot.slane %v8058, 6
        %v8186 = vsel %vm1978, %v8183, %v8185
        %v8219 = vadd.f32 %v7975, %v8109
        %v8220 = vadd.f32 %v7976, %v8111
        %v8221 = vadd.f32 %v7977, %v8114
        %v8222 = vadd.f32 %v7978, %v8116
        %v8223 = vadd.f32 %v7979, %v8119
        %v8224 = vadd.f32 %v7980, %v8121
        %v8225 = vadd.f32 %v7981, %v8124
        %v8226 = vadd.f32 %v7982, %v8126
        %v8227 = vadd.f32 %v7983, %v8129
        %v8228 = vadd.f32 %v7984, %v8131
        %v8229 = vadd.f32 %v7985, %v8134
        %v8230 = vadd.f32 %v7986, %v8136
        %v8231 = vadd.f32 %v7987, %v8139
        %v8232 = vadd.f32 %v7988, %v8141
        %v8233 = vadd.f32 %v7989, %v8144
        %v8234 = vadd.f32 %v7990, %v8146
        %v8235 = vadd.f32 %v7991, %v8149
        %v8236 = vadd.f32 %v7992, %v8151
        %v8237 = vadd.f32 %v7993, %v8154
        %v8238 = vadd.f32 %v7994, %v8156
        %v8239 = vadd.f32 %v7995, %v8159
        %v8240 = vadd.f32 %v7996, %v8161
        %v8241 = vadd.f32 %v7997, %v8164
        %v8242 = vadd.f32 %v7998, %v8166
        %v8243 = vadd.f32 %v7999, %v8169
        %v8244 = vadd.f32 %v8000, %v8171
        %v8245 = vadd.f32 %v8001, %v8174
        %v8246 = vadd.f32 %v8002, %v8176
        %v8247 = vadd.f32 %v8003, %v8179
        %v8248 = vadd.f32 %v8004, %v8181
        %v8249 = vadd.f32 %v8005, %v8184
        %v8250 = vadd.f32 %v8006, %v8186
        %v8251 = vlaneseq
        %v8252 = vshrl.u32 %v8251, 7
        %v8253 = vsub.s32 3, %v8252
        %v8254 = vrot.slane %v582, %v8253
        %v8255 = vmul.f32 %v527, %v8254
        %v8256 = vmul.f32 %v528, %v8254
        %v8257 = vmul.f32 %v530, %v8254
        %v8258 = vmul.f32 %v531, %v8254
        %v8259 = vmul.f32 %v533, %v8254
        %v8260 = vmul.f32 %v534, %v8254
        %v8261 = vmul.f32 %v536, %v8254
        %v8262 = vmul.f32 %v537, %v8254
        %v8263 = vmul.f32 %v539, %v8254
        %v8264 = vmul.f32 %v540, %v8254
        %v8265 = vmul.f32 %v542, %v8254
        %v8266 = vmul.f32 %v543, %v8254
        %v8267 = vmul.f32 %v545, %v8254
        %v8268 = vmul.f32 %v546, %v8254
        %v8269 = vmul.f32 %v548, %v8254
        %v8270 = vmul.f32 %v549, %v8254
        %v8271 = vmul.f32 %v551, %v8254
        %v8272 = vmul.f32 %v552, %v8254
        %v8273 = vmul.f32 %v554, %v8254
        %v8274 = vmul.f32 %v555, %v8254
        %v8275 = vmul.f32 %v557, %v8254
        %v8276 = vmul.f32 %v558, %v8254
        %v8277 = vmul.f32 %v560, %v8254
        %v8278 = vmul.f32 %v561, %v8254
        %v8279 = vmul.f32 %v563, %v8254
        %v8280 = vmul.f32 %v564, %v8254
        %v8281 = vmul.f32 %v566, %v8254
        %v8282 = vmul.f32 %v567, %v8254
        %v8283 = vmul.f32 %v569, %v8254
        %v8284 = vmul.f32 %v570, %v8254
        %v8285 = vmul.f32 %v572, %v8254
        %v8286 = vmul.f32 %v573, %v8254
        %v8287 = vadd.f32 %v8219, %v8255
        %v8288 = vadd.f32 %v8220, %v8256
        %v8289 = vadd.f32 %v8221, %v8257
        %v8290 = vadd.f32 %v8222, %v8258
        %v8291 = vadd.f32 %v8223, %v8259
        %v8292 = vadd.f32 %v8224, %v8260
        %v8293 = vadd.f32 %v8225, %v8261
        %v8294 = vadd.f32 %v8226, %v8262
        %v8295 = vadd.f32 %v8227, %v8263
        %v8296 = vadd.f32 %v8228, %v8264
        %v8297 = vadd.f32 %v8229, %v8265
        %v8298 = vadd.f32 %v8230, %v8266
        %v8299 = vadd.f32 %v8231, %v8267
        %v8300 = vadd.f32 %v8232, %v8268
        %v8301 = vadd.f32 %v8233, %v8269
        %v8302 = vadd.f32 %v8234, %v8270
        %v8303 = vadd.f32 %v8235, %v8271
        %v8304 = vadd.f32 %v8236, %v8272
        %v8305 = vadd.f32 %v8237, %v8273
        %v8306 = vadd.f32 %v8238, %v8274
        %v8307 = vadd.f32 %v8239, %v8275
        %v8308 = vadd.f32 %v8240, %v8276
        %v8309 = vadd.f32 %v8241, %v8277
        %v8310 = vadd.f32 %v8242, %v8278
        %v8311 = vadd.f32 %v8243, %v8279
        %v8312 = vadd.f32 %v8244, %v8280
        %v8313 = vadd.f32 %v8245, %v8281
        %v8314 = vadd.f32 %v8246, %v8282
        %v8315 = vadd.f32 %v8247, %v8283
        %v8316 = vadd.f32 %v8248, %v8284
        %v8317 = vadd.f32 %v8249, %v8285
        %v8318 = vadd.f32 %v8250, %v8286
        %v8319 = vlaneseq
        %v8320 = vshrl.u32 %v8319, 7
        %v8321 = vsub.s32 4, %v8320
        %v8322 = vrot.slane %v582, %v8321
        %v8323 = vmul.f32 %v527, %v8322
        %v8324 = vmul.f32 %v528, %v8322
        %v8325 = vmul.f32 %v529, %v8322
        %v8326 = vmul.f32 %v530, %v8322
        %v8327 = vmul.f32 %v531, %v8322
        %v8328 = vmul.f32 %v532, %v8322
        %v8329 = vmul.f32 %v533, %v8322
        %v8330 = vmul.f32 %v534, %v8322
        %v8331 = vmul.f32 %v535, %v8322
        %v8332 = vmul.f32 %v536, %v8322
        %v8333 = vmul.f32 %v537, %v8322
        %v8334 = vmul.f32 %v538, %v8322
        %v8335 = vmul.f32 %v539, %v8322
        %v8336 = vmul.f32 %v540, %v8322
        %v8337 = vmul.f32 %v541, %v8322
        %v8338 = vmul.f32 %v542, %v8322
        %v8339 = vmul.f32 %v543, %v8322
        %v8340 = vmul.f32 %v544, %v8322
        %v8341 = vmul.f32 %v545, %v8322
        %v8342 = vmul.f32 %v546, %v8322
        %v8343 = vmul.f32 %v547, %v8322
        %v8344 = vmul.f32 %v548, %v8322
        %v8345 = vmul.f32 %v549, %v8322
        %v8346 = vmul.f32 %v550, %v8322
        %v8347 = vmul.f32 %v551, %v8322
        %v8348 = vmul.f32 %v552, %v8322
        %v8349 = vmul.f32 %v553, %v8322
        %v8350 = vmul.f32 %v554, %v8322
        %v8351 = vmul.f32 %v555, %v8322
        %v8352 = vmul.f32 %v556, %v8322
        %v8353 = vmul.f32 %v557, %v8322
        %v8354 = vmul.f32 %v558, %v8322
        %v8355 = vmul.f32 %v559, %v8322
        %v8356 = vmul.f32 %v560, %v8322
        %v8357 = vmul.f32 %v561, %v8322
        %v8358 = vmul.f32 %v562, %v8322
        %v8359 = vmul.f32 %v563, %v8322
        %v8360 = vmul.f32 %v564, %v8322
        %v8361 = vmul.f32 %v565, %v8322
        %v8362 = vmul.f32 %v566, %v8322
        %v8363 = vmul.f32 %v567, %v8322
        %v8364 = vmul.f32 %v568, %v8322
        %v8365 = vmul.f32 %v569, %v8322
        %v8366 = vmul.f32 %v570, %v8322
        %v8367 = vmul.f32 %v571, %v8322
        %v8368 = vmul.f32 %v572, %v8322
        %v8369 = vmul.f32 %v573, %v8322
        %v8370 = vmul.f32 %v574, %v8322
        %v8419 = vrot.slane %v8323, 1
        %v8420 = vrot.slane %v8324, 1
        %v8421 = vsel %vm753, %v8419, %v8420
        %v8422 = vrot.slane %v8325, 1
        %v8423 = vsel %vm753, %v8420, %v8422
        %v8424 = vrot.slane %v8326, 1
        %v8425 = vrot.slane %v8327, 1
        %v8426 = vsel %vm753, %v8424, %v8425
        %v8427 = vrot.slane %v8328, 1
        %v8428 = vsel %vm753, %v8425, %v8427
        %v8429 = vrot.slane %v8329, 1
        %v8430 = vrot.slane %v8330, 1
        %v8431 = vsel %vm753, %v8429, %v8430
        %v8432 = vrot.slane %v8331, 1
        %v8433 = vsel %vm753, %v8430, %v8432
        %v8434 = vrot.slane %v8332, 1
        %v8435 = vrot.slane %v8333, 1
        %v8436 = vsel %vm753, %v8434, %v8435
        %v8437 = vrot.slane %v8334, 1
        %v8438 = vsel %vm753, %v8435, %v8437
        %v8439 = vrot.slane %v8335, 1
        %v8440 = vrot.slane %v8336, 1
        %v8441 = vsel %vm753, %v8439, %v8440
        %v8442 = vrot.slane %v8337, 1
        %v8443 = vsel %vm753, %v8440, %v8442
        %v8444 = vrot.slane %v8338, 1
        %v8445 = vrot.slane %v8339, 1
        %v8446 = vsel %vm753, %v8444, %v8445
        %v8447 = vrot.slane %v8340, 1
        %v8448 = vsel %vm753, %v8445, %v8447
        %v8449 = vrot.slane %v8341, 1
        %v8450 = vrot.slane %v8342, 1
        %v8451 = vsel %vm753, %v8449, %v8450
        %v8452 = vrot.slane %v8343, 1
        %v8453 = vsel %vm753, %v8450, %v8452
        %v8454 = vrot.slane %v8344, 1
        %v8455 = vrot.slane %v8345, 1
        %v8456 = vsel %vm753, %v8454, %v8455
        %v8457 = vrot.slane %v8346, 1
        %v8458 = vsel %vm753, %v8455, %v8457
        %v8459 = vrot.slane %v8347, 1
        %v8460 = vrot.slane %v8348, 1
        %v8461 = vsel %vm753, %v8459, %v8460
        %v8462 = vrot.slane %v8349, 1
        %v8463 = vsel %vm753, %v8460, %v8462
        %v8464 = vrot.slane %v8350, 1
        %v8465 = vrot.slane %v8351, 1
        %v8466 = vsel %vm753, %v8464, %v8465
        %v8467 = vrot.slane %v8352, 1
        %v8468 = vsel %vm753, %v8465, %v8467
        %v8469 = vrot.slane %v8353, 1
        %v8470 = vrot.slane %v8354, 1
        %v8471 = vsel %vm753, %v8469, %v8470
        %v8472 = vrot.slane %v8355, 1
        %v8473 = vsel %vm753, %v8470, %v8472
        %v8474 = vrot.slane %v8356, 1
        %v8475 = vrot.slane %v8357, 1
        %v8476 = vsel %vm753, %v8474, %v8475
        %v8477 = vrot.slane %v8358, 1
        %v8478 = vsel %vm753, %v8475, %v8477
        %v8479 = vrot.slane %v8359, 1
        %v8480 = vrot.slane %v8360, 1
        %v8481 = vsel %vm753, %v8479, %v8480
        %v8482 = vrot.slane %v8361, 1
        %v8483 = vsel %vm753, %v8480, %v8482
        %v8484 = vrot.slane %v8362, 1
        %v8485 = vrot.slane %v8363, 1
        %v8486 = vsel %vm753, %v8484, %v8485
        %v8487 = vrot.slane %v8364, 1
        %v8488 = vsel %vm753, %v8485, %v8487
        %v8489 = vrot.slane %v8365, 1
        %v8490 = vrot.slane %v8366, 1
        %v8491 = vsel %vm753, %v8489, %v8490
        %v8492 = vrot.slane %v8367, 1
        %v8493 = vsel %vm753, %v8490, %v8492
        %v8494 = vrot.slane %v8368, 1
        %v8495 = vrot.slane %v8369, 1
        %v8496 = vsel %vm753, %v8494, %v8495
        %v8497 = vrot.slane %v8370, 1
        %v8498 = vsel %vm753, %v8495, %v8497
        %v8531 = vadd.f32 %v8287, %v8421
        %v8532 = vadd.f32 %v8288, %v8423
        %v8533 = vadd.f32 %v8289, %v8426
        %v8534 = vadd.f32 %v8290, %v8428
        %v8535 = vadd.f32 %v8291, %v8431
        %v8536 = vadd.f32 %v8292, %v8433
        %v8537 = vadd.f32 %v8293, %v8436
        %v8538 = vadd.f32 %v8294, %v8438
        %v8539 = vadd.f32 %v8295, %v8441
        %v8540 = vadd.f32 %v8296, %v8443
        %v8541 = vadd.f32 %v8297, %v8446
        %v8542 = vadd.f32 %v8298, %v8448
        %v8543 = vadd.f32 %v8299, %v8451
        %v8544 = vadd.f32 %v8300, %v8453
        %v8545 = vadd.f32 %v8301, %v8456
        %v8546 = vadd.f32 %v8302, %v8458
        %v8547 = vadd.f32 %v8303, %v8461
        %v8548 = vadd.f32 %v8304, %v8463
        %v8549 = vadd.f32 %v8305, %v8466
        %v8550 = vadd.f32 %v8306, %v8468
        %v8551 = vadd.f32 %v8307, %v8471
        %v8552 = vadd.f32 %v8308, %v8473
        %v8553 = vadd.f32 %v8309, %v8476
        %v8554 = vadd.f32 %v8310, %v8478
        %v8555 = vadd.f32 %v8311, %v8481
        %v8556 = vadd.f32 %v8312, %v8483
        %v8557 = vadd.f32 %v8313, %v8486
        %v8558 = vadd.f32 %v8314, %v8488
        %v8559 = vadd.f32 %v8315, %v8491
        %v8560 = vadd.f32 %v8316, %v8493
        %v8561 = vadd.f32 %v8317, %v8496
        %v8562 = vadd.f32 %v8318, %v8498
        %v8563 = vlaneseq
        %v8564 = vshrl.u32 %v8563, 7
        %v8565 = vsub.s32 5, %v8564
        %v8566 = vrot.slane %v582, %v8565
        %v8567 = vmul.f32 %v527, %v8566
        %v8568 = vmul.f32 %v528, %v8566
        %v8569 = vmul.f32 %v529, %v8566
        %v8570 = vmul.f32 %v530, %v8566
        %v8571 = vmul.f32 %v531, %v8566
        %v8572 = vmul.f32 %v532, %v8566
        %v8573 = vmul.f32 %v533, %v8566
        %v8574 = vmul.f32 %v534, %v8566
        %v8575 = vmul.f32 %v535, %v8566
        %v8576 = vmul.f32 %v536, %v8566
        %v8577 = vmul.f32 %v537, %v8566
        %v8578 = vmul.f32 %v538, %v8566
        %v8579 = vmul.f32 %v539, %v8566
        %v8580 = vmul.f32 %v540, %v8566
        %v8581 = vmul.f32 %v541, %v8566
        %v8582 = vmul.f32 %v542, %v8566
        %v8583 = vmul.f32 %v543, %v8566
        %v8584 = vmul.f32 %v544, %v8566
        %v8585 = vmul.f32 %v545, %v8566
        %v8586 = vmul.f32 %v546, %v8566
        %v8587 = vmul.f32 %v547, %v8566
        %v8588 = vmul.f32 %v548, %v8566
        %v8589 = vmul.f32 %v549, %v8566
        %v8590 = vmul.f32 %v550, %v8566
        %v8591 = vmul.f32 %v551, %v8566
        %v8592 = vmul.f32 %v552, %v8566
        %v8593 = vmul.f32 %v553, %v8566
        %v8594 = vmul.f32 %v554, %v8566
        %v8595 = vmul.f32 %v555, %v8566
        %v8596 = vmul.f32 %v556, %v8566
        %v8597 = vmul.f32 %v557, %v8566
        %v8598 = vmul.f32 %v558, %v8566
        %v8599 = vmul.f32 %v559, %v8566
        %v8600 = vmul.f32 %v560, %v8566
        %v8601 = vmul.f32 %v561, %v8566
        %v8602 = vmul.f32 %v562, %v8566
        %v8603 = vmul.f32 %v563, %v8566
        %v8604 = vmul.f32 %v564, %v8566
        %v8605 = vmul.f32 %v565, %v8566
        %v8606 = vmul.f32 %v566, %v8566
        %v8607 = vmul.f32 %v567, %v8566
        %v8608 = vmul.f32 %v568, %v8566
        %v8609 = vmul.f32 %v569, %v8566
        %v8610 = vmul.f32 %v570, %v8566
        %v8611 = vmul.f32 %v571, %v8566
        %v8612 = vmul.f32 %v572, %v8566
        %v8613 = vmul.f32 %v573, %v8566
        %v8614 = vmul.f32 %v574, %v8566
        %v8663 = vrot.slane %v8567, 2
        %v8664 = vrot.slane %v8568, 2
        %v8665 = vsel %vm998, %v8663, %v8664
        %v8666 = vrot.slane %v8569, 2
        %v8667 = vsel %vm998, %v8664, %v8666
        %v8668 = vrot.slane %v8570, 2
        %v8669 = vrot.slane %v8571, 2
        %v8670 = vsel %vm998, %v8668, %v8669
        %v8671 = vrot.slane %v8572, 2
        %v8672 = vsel %vm998, %v8669, %v8671
        %v8673 = vrot.slane %v8573, 2
        %v8674 = vrot.slane %v8574, 2
        %v8675 = vsel %vm998, %v8673, %v8674
        %v8676 = vrot.slane %v8575, 2
        %v8677 = vsel %vm998, %v8674, %v8676
        %v8678 = vrot.slane %v8576, 2
        %v8679 = vrot.slane %v8577, 2
        %v8680 = vsel %vm998, %v8678, %v8679
        %v8681 = vrot.slane %v8578, 2
        %v8682 = vsel %vm998, %v8679, %v8681
        %v8683 = vrot.slane %v8579, 2
        %v8684 = vrot.slane %v8580, 2
        %v8685 = vsel %vm998, %v8683, %v8684
        %v8686 = vrot.slane %v8581, 2
        %v8687 = vsel %vm998, %v8684, %v8686
        %v8688 = vrot.slane %v8582, 2
        %v8689 = vrot.slane %v8583, 2
        %v8690 = vsel %vm998, %v8688, %v8689
        %v8691 = vrot.slane %v8584, 2
        %v8692 = vsel %vm998, %v8689, %v8691
        %v8693 = vrot.slane %v8585, 2
        %v8694 = vrot.slane %v8586, 2
        %v8695 = vsel %vm998, %v8693, %v8694
        %v8696 = vrot.slane %v8587, 2
        %v8697 = vsel %vm998, %v8694, %v8696
        %v8698 = vrot.slane %v8588, 2
        %v8699 = vrot.slane %v8589, 2
        %v8700 = vsel %vm998, %v8698, %v8699
        %v8701 = vrot.slane %v8590, 2
        %v8702 = vsel %vm998, %v8699, %v8701
        %v8703 = vrot.slane %v8591, 2
        %v8704 = vrot.slane %v8592, 2
        %v8705 = vsel %vm998, %v8703, %v8704
        %v8706 = vrot.slane %v8593, 2
        %v8707 = vsel %vm998, %v8704, %v8706
        %v8708 = vrot.slane %v8594, 2
        %v8709 = vrot.slane %v8595, 2
        %v8710 = vsel %vm998, %v8708, %v8709
        %v8711 = vrot.slane %v8596, 2
        %v8712 = vsel %vm998, %v8709, %v8711
        %v8713 = vrot.slane %v8597, 2
        %v8714 = vrot.slane %v8598, 2
        %v8715 = vsel %vm998, %v8713, %v8714
        %v8716 = vrot.slane %v8599, 2
        %v8717 = vsel %vm998, %v8714, %v8716
        %v8718 = vrot.slane %v8600, 2
        %v8719 = vrot.slane %v8601, 2
        %v8720 = vsel %vm998, %v8718, %v8719
        %v8721 = vrot.slane %v8602, 2
        %v8722 = vsel %vm998, %v8719, %v8721
        %v8723 = vrot.slane %v8603, 2
        %v8724 = vrot.slane %v8604, 2
        %v8725 = vsel %vm998, %v8723, %v8724
        %v8726 = vrot.slane %v8605, 2
        %v8727 = vsel %vm998, %v8724, %v8726
        %v8728 = vrot.slane %v8606, 2
        %v8729 = vrot.slane %v8607, 2
        %v8730 = vsel %vm998, %v8728, %v8729
        %v8731 = vrot.slane %v8608, 2
        %v8732 = vsel %vm998, %v8729, %v8731
        %v8733 = vrot.slane %v8609, 2
        %v8734 = vrot.slane %v8610, 2
        %v8735 = vsel %vm998, %v8733, %v8734
        %v8736 = vrot.slane %v8611, 2
        %v8737 = vsel %vm998, %v8734, %v8736
        %v8738 = vrot.slane %v8612, 2
        %v8739 = vrot.slane %v8613, 2
        %v8740 = vsel %vm998, %v8738, %v8739
        %v8741 = vrot.slane %v8614, 2
        %v8742 = vsel %vm998, %v8739, %v8741
        %v8775 = vadd.f32 %v8531, %v8665
        %v8776 = vadd.f32 %v8532, %v8667
        %v8777 = vadd.f32 %v8533, %v8670
        %v8778 = vadd.f32 %v8534, %v8672
        %v8779 = vadd.f32 %v8535, %v8675
        %v8780 = vadd.f32 %v8536, %v8677
        %v8781 = vadd.f32 %v8537, %v8680
        %v8782 = vadd.f32 %v8538, %v8682
        %v8783 = vadd.f32 %v8539, %v8685
        %v8784 = vadd.f32 %v8540, %v8687
        %v8785 = vadd.f32 %v8541, %v8690
        %v8786 = vadd.f32 %v8542, %v8692
        %v8787 = vadd.f32 %v8543, %v8695
        %v8788 = vadd.f32 %v8544, %v8697
        %v8789 = vadd.f32 %v8545, %v8700
        %v8790 = vadd.f32 %v8546, %v8702
        %v8791 = vadd.f32 %v8547, %v8705
        %v8792 = vadd.f32 %v8548, %v8707
        %v8793 = vadd.f32 %v8549, %v8710
        %v8794 = vadd.f32 %v8550, %v8712
        %v8795 = vadd.f32 %v8551, %v8715
        %v8796 = vadd.f32 %v8552, %v8717
        %v8797 = vadd.f32 %v8553, %v8720
        %v8798 = vadd.f32 %v8554, %v8722
        %v8799 = vadd.f32 %v8555, %v8725
        %v8800 = vadd.f32 %v8556, %v8727
        %v8801 = vadd.f32 %v8557, %v8730
        %v8802 = vadd.f32 %v8558, %v8732
        %v8803 = vadd.f32 %v8559, %v8735
        %v8804 = vadd.f32 %v8560, %v8737
        %v8805 = vadd.f32 %v8561, %v8740
        %v8806 = vadd.f32 %v8562, %v8742
        %v8807 = vlaneseq
        %v8808 = vshrl.u32 %v8807, 7
        %v8809 = vsub.s32 6, %v8808
        %v8810 = vrot.slane %v582, %v8809
        %v8811 = vmul.f32 %v527, %v8810
        %v8812 = vmul.f32 %v528, %v8810
        %v8813 = vmul.f32 %v529, %v8810
        %v8814 = vmul.f32 %v530, %v8810
        %v8815 = vmul.f32 %v531, %v8810
        %v8816 = vmul.f32 %v532, %v8810
        %v8817 = vmul.f32 %v533, %v8810
        %v8818 = vmul.f32 %v534, %v8810
        %v8819 = vmul.f32 %v535, %v8810
        %v8820 = vmul.f32 %v536, %v8810
        %v8821 = vmul.f32 %v537, %v8810
        %v8822 = vmul.f32 %v538, %v8810
        %v8823 = vmul.f32 %v539, %v8810
        %v8824 = vmul.f32 %v540, %v8810
        %v8825 = vmul.f32 %v541, %v8810
        %v8826 = vmul.f32 %v542, %v8810
        %v8827 = vmul.f32 %v543, %v8810
        %v8828 = vmul.f32 %v544, %v8810
        %v8829 = vmul.f32 %v545, %v8810
        %v8830 = vmul.f32 %v546, %v8810
        %v8831 = vmul.f32 %v547, %v8810
        %v8832 = vmul.f32 %v548, %v8810
        %v8833 = vmul.f32 %v549, %v8810
        %v8834 = vmul.f32 %v550, %v8810
        %v8835 = vmul.f32 %v551, %v8810
        %v8836 = vmul.f32 %v552, %v8810
        %v8837 = vmul.f32 %v553, %v8810
        %v8838 = vmul.f32 %v554, %v8810
        %v8839 = vmul.f32 %v555, %v8810
        %v8840 = vmul.f32 %v556, %v8810
        %v8841 = vmul.f32 %v557, %v8810
        %v8842 = vmul.f32 %v558, %v8810
        %v8843 = vmul.f32 %v559, %v8810
        %v8844 = vmul.f32 %v560, %v8810
        %v8845 = vmul.f32 %v561, %v8810
        %v8846 = vmul.f32 %v562, %v8810
        %v8847 = vmul.f32 %v563, %v8810
        %v8848 = vmul.f32 %v564, %v8810
        %v8849 = vmul.f32 %v565, %v8810
        %v8850 = vmul.f32 %v566, %v8810
        %v8851 = vmul.f32 %v567, %v8810
        %v8852 = vmul.f32 %v568, %v8810
        %v8853 = vmul.f32 %v569, %v8810
        %v8854 = vmul.f32 %v570, %v8810
        %v8855 = vmul.f32 %v571, %v8810
        %v8856 = vmul.f32 %v572, %v8810
        %v8857 = vmul.f32 %v573, %v8810
        %v8858 = vmul.f32 %v574, %v8810
        %v8907 = vrot.slane %v8811, 3
        %v8908 = vrot.slane %v8812, 3
        %v8909 = vsel %vm1243, %v8907, %v8908
        %v8910 = vrot.slane %v8813, 3
        %v8911 = vsel %vm1243, %v8908, %v8910
        %v8912 = vrot.slane %v8814, 3
        %v8913 = vrot.slane %v8815, 3
        %v8914 = vsel %vm1243, %v8912, %v8913
        %v8915 = vrot.slane %v8816, 3
        %v8916 = vsel %vm1243, %v8913, %v8915
        %v8917 = vrot.slane %v8817, 3
        %v8918 = vrot.slane %v8818, 3
        %v8919 = vsel %vm1243, %v8917, %v8918
        %v8920 = vrot.slane %v8819, 3
        %v8921 = vsel %vm1243, %v8918, %v8920
        %v8922 = vrot.slane %v8820, 3
        %v8923 = vrot.slane %v8821, 3
        %v8924 = vsel %vm1243, %v8922, %v8923
        %v8925 = vrot.slane %v8822, 3
        %v8926 = vsel %vm1243, %v8923, %v8925
        %v8927 = vrot.slane %v8823, 3
        %v8928 = vrot.slane %v8824, 3
        %v8929 = vsel %vm1243, %v8927, %v8928
        %v8930 = vrot.slane %v8825, 3
        %v8931 = vsel %vm1243, %v8928, %v8930
        %v8932 = vrot.slane %v8826, 3
        %v8933 = vrot.slane %v8827, 3
        %v8934 = vsel %vm1243, %v8932, %v8933
        %v8935 = vrot.slane %v8828, 3
        %v8936 = vsel %vm1243, %v8933, %v8935
        %v8937 = vrot.slane %v8829, 3
        %v8938 = vrot.slane %v8830, 3
        %v8939 = vsel %vm1243, %v8937, %v8938
        %v8940 = vrot.slane %v8831, 3
        %v8941 = vsel %vm1243, %v8938, %v8940
        %v8942 = vrot.slane %v8832, 3
        %v8943 = vrot.slane %v8833, 3
        %v8944 = vsel %vm1243, %v8942, %v8943
        %v8945 = vrot.slane %v8834, 3
        %v8946 = vsel %vm1243, %v8943, %v8945
        %v8947 = vrot.slane %v8835, 3
        %v8948 = vrot.slane %v8836, 3
        %v8949 = vsel %vm1243, %v8947, %v8948
        %v8950 = vrot.slane %v8837, 3
        %v8951 = vsel %vm1243, %v8948, %v8950
        %v8952 = vrot.slane %v8838, 3
        %v8953 = vrot.slane %v8839, 3
        %v8954 = vsel %vm1243, %v8952, %v8953
        %v8955 = vrot.slane %v8840, 3
        %v8956 = vsel %vm1243, %v8953, %v8955
        %v8957 = vrot.slane %v8841, 3
        %v8958 = vrot.slane %v8842, 3
        %v8959 = vsel %vm1243, %v8957, %v8958
        %v8960 = vrot.slane %v8843, 3
        %v8961 = vsel %vm1243, %v8958, %v8960
        %v8962 = vrot.slane %v8844, 3
        %v8963 = vrot.slane %v8845, 3
        %v8964 = vsel %vm1243, %v8962, %v8963
        %v8965 = vrot.slane %v8846, 3
        %v8966 = vsel %vm1243, %v8963, %v8965
        %v8967 = vrot.slane %v8847, 3
        %v8968 = vrot.slane %v8848, 3
        %v8969 = vsel %vm1243, %v8967, %v8968
        %v8970 = vrot.slane %v8849, 3
        %v8971 = vsel %vm1243, %v8968, %v8970
        %v8972 = vrot.slane %v8850, 3
        %v8973 = vrot.slane %v8851, 3
        %v8974 = vsel %vm1243, %v8972, %v8973
        %v8975 = vrot.slane %v8852, 3
        %v8976 = vsel %vm1243, %v8973, %v8975
        %v8977 = vrot.slane %v8853, 3
        %v8978 = vrot.slane %v8854, 3
        %v8979 = vsel %vm1243, %v8977, %v8978
        %v8980 = vrot.slane %v8855, 3
        %v8981 = vsel %vm1243, %v8978, %v8980
        %v8982 = vrot.slane %v8856, 3
        %v8983 = vrot.slane %v8857, 3
        %v8984 = vsel %vm1243, %v8982, %v8983
        %v8985 = vrot.slane %v8858, 3
        %v8986 = vsel %vm1243, %v8983, %v8985
        %v9019 = vadd.f32 %v8775, %v8909
        %v9020 = vadd.f32 %v8776, %v8911
        %v9021 = vadd.f32 %v8777, %v8914
        %v9022 = vadd.f32 %v8778, %v8916
        %v9023 = vadd.f32 %v8779, %v8919
        %v9024 = vadd.f32 %v8780, %v8921
        %v9025 = vadd.f32 %v8781, %v8924
        %v9026 = vadd.f32 %v8782, %v8926
        %v9027 = vadd.f32 %v8783, %v8929
        %v9028 = vadd.f32 %v8784, %v8931
        %v9029 = vadd.f32 %v8785, %v8934
        %v9030 = vadd.f32 %v8786, %v8936
        %v9031 = vadd.f32 %v8787, %v8939
        %v9032 = vadd.f32 %v8788, %v8941
        %v9033 = vadd.f32 %v8789, %v8944
        %v9034 = vadd.f32 %v8790, %v8946
        %v9035 = vadd.f32 %v8791, %v8949
        %v9036 = vadd.f32 %v8792, %v8951
        %v9037 = vadd.f32 %v8793, %v8954
        %v9038 = vadd.f32 %v8794, %v8956
        %v9039 = vadd.f32 %v8795, %v8959
        %v9040 = vadd.f32 %v8796, %v8961
        %v9041 = vadd.f32 %v8797, %v8964
        %v9042 = vadd.f32 %v8798, %v8966
        %v9043 = vadd.f32 %v8799, %v8969
        %v9044 = vadd.f32 %v8800, %v8971
        %v9045 = vadd.f32 %v8801, %v8974
        %v9046 = vadd.f32 %v8802, %v8976
        %v9047 = vadd.f32 %v8803, %v8979
        %v9048 = vadd.f32 %v8804, %v8981
        %v9049 = vadd.f32 %v8805, %v8984
        %v9050 = vadd.f32 %v8806, %v8986
        %v9051 = vlaneseq
        %v9052 = vshrl.u32 %v9051, 7
        %v9053 = vsub.s32 7, %v9052
        %v9054 = vrot.slane %v582, %v9053
        %v9055 = vmul.f32 %v527, %v9054
        %v9056 = vmul.f32 %v528, %v9054
        %v9057 = vmul.f32 %v529, %v9054
        %v9058 = vmul.f32 %v530, %v9054
        %v9059 = vmul.f32 %v531, %v9054
        %v9060 = vmul.f32 %v532, %v9054
        %v9061 = vmul.f32 %v533, %v9054
        %v9062 = vmul.f32 %v534, %v9054
        %v9063 = vmul.f32 %v535, %v9054
        %v9064 = vmul.f32 %v536, %v9054
        %v9065 = vmul.f32 %v537, %v9054
        %v9066 = vmul.f32 %v538, %v9054
        %v9067 = vmul.f32 %v539, %v9054
        %v9068 = vmul.f32 %v540, %v9054
        %v9069 = vmul.f32 %v541, %v9054
        %v9070 = vmul.f32 %v542, %v9054
        %v9071 = vmul.f32 %v543, %v9054
        %v9072 = vmul.f32 %v544, %v9054
        %v9073 = vmul.f32 %v545, %v9054
        %v9074 = vmul.f32 %v546, %v9054
        %v9075 = vmul.f32 %v547, %v9054
        %v9076 = vmul.f32 %v548, %v9054
        %v9077 = vmul.f32 %v549, %v9054
        %v9078 = vmul.f32 %v550, %v9054
        %v9079 = vmul.f32 %v551, %v9054
        %v9080 = vmul.f32 %v552, %v9054
        %v9081 = vmul.f32 %v553, %v9054
        %v9082 = vmul.f32 %v554, %v9054
        %v9083 = vmul.f32 %v555, %v9054
        %v9084 = vmul.f32 %v556, %v9054
        %v9085 = vmul.f32 %v557, %v9054
        %v9086 = vmul.f32 %v558, %v9054
        %v9087 = vmul.f32 %v559, %v9054
        %v9088 = vmul.f32 %v560, %v9054
        %v9089 = vmul.f32 %v561, %v9054
        %v9090 = vmul.f32 %v562, %v9054
        %v9091 = vmul.f32 %v563, %v9054
        %v9092 = vmul.f32 %v564, %v9054
        %v9093 = vmul.f32 %v565, %v9054
        %v9094 = vmul.f32 %v566, %v9054
        %v9095 = vmul.f32 %v567, %v9054
        %v9096 = vmul.f32 %v568, %v9054
        %v9097 = vmul.f32 %v569, %v9054
        %v9098 = vmul.f32 %v570, %v9054
        %v9099 = vmul.f32 %v571, %v9054
        %v9100 = vmul.f32 %v572, %v9054
        %v9101 = vmul.f32 %v573, %v9054
        %v9102 = vmul.f32 %v574, %v9054
        %v9151 = vrot.slane %v9055, 4
        %v9152 = vrot.slane %v9056, 4
        %v9153 = vsel %vm1488, %v9151, %v9152
        %v9154 = vrot.slane %v9057, 4
        %v9155 = vsel %vm1488, %v9152, %v9154
        %v9156 = vrot.slane %v9058, 4
        %v9157 = vrot.slane %v9059, 4
        %v9158 = vsel %vm1488, %v9156, %v9157
        %v9159 = vrot.slane %v9060, 4
        %v9160 = vsel %vm1488, %v9157, %v9159
        %v9161 = vrot.slane %v9061, 4
        %v9162 = vrot.slane %v9062, 4
        %v9163 = vsel %vm1488, %v9161, %v9162
        %v9164 = vrot.slane %v9063, 4
        %v9165 = vsel %vm1488, %v9162, %v9164
        %v9166 = vrot.slane %v9064, 4
        %v9167 = vrot.slane %v9065, 4
        %v9168 = vsel %vm1488, %v9166, %v9167
        %v9169 = vrot.slane %v9066, 4
        %v9170 = vsel %vm1488, %v9167, %v9169
        %v9171 = vrot.slane %v9067, 4
        %v9172 = vrot.slane %v9068, 4
        %v9173 = vsel %vm1488, %v9171, %v9172
        %v9174 = vrot.slane %v9069, 4
        %v9175 = vsel %vm1488, %v9172, %v9174
        %v9176 = vrot.slane %v9070, 4
        %v9177 = vrot.slane %v9071, 4
        %v9178 = vsel %vm1488, %v9176, %v9177
        %v9179 = vrot.slane %v9072, 4
        %v9180 = vsel %vm1488, %v9177, %v9179
        %v9181 = vrot.slane %v9073, 4
        %v9182 = vrot.slane %v9074, 4
        %v9183 = vsel %vm1488, %v9181, %v9182
        %v9184 = vrot.slane %v9075, 4
        %v9185 = vsel %vm1488, %v9182, %v9184
        %v9186 = vrot.slane %v9076, 4
        %v9187 = vrot.slane %v9077, 4
        %v9188 = vsel %vm1488, %v9186, %v9187
        %v9189 = vrot.slane %v9078, 4
        %v9190 = vsel %vm1488, %v9187, %v9189
        %v9191 = vrot.slane %v9079, 4
        %v9192 = vrot.slane %v9080, 4
        %v9193 = vsel %vm1488, %v9191, %v9192
        %v9194 = vrot.slane %v9081, 4
        %v9195 = vsel %vm1488, %v9192, %v9194
        %v9196 = vrot.slane %v9082, 4
        %v9197 = vrot.slane %v9083, 4
        %v9198 = vsel %vm1488, %v9196, %v9197
        %v9199 = vrot.slane %v9084, 4
        %v9200 = vsel %vm1488, %v9197, %v9199
        %v9201 = vrot.slane %v9085, 4
        %v9202 = vrot.slane %v9086, 4
        %v9203 = vsel %vm1488, %v9201, %v9202
        %v9204 = vrot.slane %v9087, 4
        %v9205 = vsel %vm1488, %v9202, %v9204
        %v9206 = vrot.slane %v9088, 4
        %v9207 = vrot.slane %v9089, 4
        %v9208 = vsel %vm1488, %v9206, %v9207
        %v9209 = vrot.slane %v9090, 4
        %v9210 = vsel %vm1488, %v9207, %v9209
        %v9211 = vrot.slane %v9091, 4
        %v9212 = vrot.slane %v9092, 4
        %v9213 = vsel %vm1488, %v9211, %v9212
        %v9214 = vrot.slane %v9093, 4
        %v9215 = vsel %vm1488, %v9212, %v9214
        %v9216 = vrot.slane %v9094, 4
        %v9217 = vrot.slane %v9095, 4
        %v9218 = vsel %vm1488, %v9216, %v9217
        %v9219 = vrot.slane %v9096, 4
        %v9220 = vsel %vm1488, %v9217, %v9219
        %v9221 = vrot.slane %v9097, 4
        %v9222 = vrot.slane %v9098, 4
        %v9223 = vsel %vm1488, %v9221, %v9222
        %v9224 = vrot.slane %v9099, 4
        %v9225 = vsel %vm1488, %v9222, %v9224
        %v9226 = vrot.slane %v9100, 4
        %v9227 = vrot.slane %v9101, 4
        %v9228 = vsel %vm1488, %v9226, %v9227
        %v9229 = vrot.slane %v9102, 4
        %v9230 = vsel %vm1488, %v9227, %v9229
        %v9263 = vadd.f32 %v9019, %v9153
        %v9264 = vadd.f32 %v9020, %v9155
        %v9265 = vadd.f32 %v9021, %v9158
        %v9266 = vadd.f32 %v9022, %v9160
        %v9267 = vadd.f32 %v9023, %v9163
        %v9268 = vadd.f32 %v9024, %v9165
        %v9269 = vadd.f32 %v9025, %v9168
        %v9270 = vadd.f32 %v9026, %v9170
        %v9271 = vadd.f32 %v9027, %v9173
        %v9272 = vadd.f32 %v9028, %v9175
        %v9273 = vadd.f32 %v9029, %v9178
        %v9274 = vadd.f32 %v9030, %v9180
        %v9275 = vadd.f32 %v9031, %v9183
        %v9276 = vadd.f32 %v9032, %v9185
        %v9277 = vadd.f32 %v9033, %v9188
        %v9278 = vadd.f32 %v9034, %v9190
        %v9279 = vadd.f32 %v9035, %v9193
        %v9280 = vadd.f32 %v9036, %v9195
        %v9281 = vadd.f32 %v9037, %v9198
        %v9282 = vadd.f32 %v9038, %v9200
        %v9283 = vadd.f32 %v9039, %v9203
        %v9284 = vadd.f32 %v9040, %v9205
        %v9285 = vadd.f32 %v9041, %v9208
        %v9286 = vadd.f32 %v9042, %v9210
        %v9287 = vadd.f32 %v9043, %v9213
        %v9288 = vadd.f32 %v9044, %v9215
        %v9289 = vadd.f32 %v9045, %v9218
        %v9290 = vadd.f32 %v9046, %v9220
        %v9291 = vadd.f32 %v9047, %v9223
        %v9292 = vadd.f32 %v9048, %v9225
        %v9293 = vadd.f32 %v9049, %v9228
        %v9294 = vadd.f32 %v9050, %v9230
        %v9295 = vlaneseq
        %v9296 = vshrl.u32 %v9295, 7
        %v9297 = vsub.s32 0, %v9296
        %v9298 = vrot.slane %v583, %v9297
        %v9299 = vmul.f32 %v527, %v9298
        %v9300 = vmul.f32 %v528, %v9298
        %v9301 = vmul.f32 %v529, %v9298
        %v9302 = vmul.f32 %v530, %v9298
        %v9303 = vmul.f32 %v531, %v9298
        %v9304 = vmul.f32 %v532, %v9298
        %v9305 = vmul.f32 %v533, %v9298
        %v9306 = vmul.f32 %v534, %v9298
        %v9307 = vmul.f32 %v535, %v9298
        %v9308 = vmul.f32 %v536, %v9298
        %v9309 = vmul.f32 %v537, %v9298
        %v9310 = vmul.f32 %v538, %v9298
        %v9311 = vmul.f32 %v539, %v9298
        %v9312 = vmul.f32 %v540, %v9298
        %v9313 = vmul.f32 %v541, %v9298
        %v9314 = vmul.f32 %v542, %v9298
        %v9315 = vmul.f32 %v543, %v9298
        %v9316 = vmul.f32 %v544, %v9298
        %v9317 = vmul.f32 %v545, %v9298
        %v9318 = vmul.f32 %v546, %v9298
        %v9319 = vmul.f32 %v547, %v9298
        %v9320 = vmul.f32 %v548, %v9298
        %v9321 = vmul.f32 %v549, %v9298
        %v9322 = vmul.f32 %v550, %v9298
        %v9323 = vmul.f32 %v551, %v9298
        %v9324 = vmul.f32 %v552, %v9298
        %v9325 = vmul.f32 %v553, %v9298
        %v9326 = vmul.f32 %v554, %v9298
        %v9327 = vmul.f32 %v555, %v9298
        %v9328 = vmul.f32 %v556, %v9298
        %v9329 = vmul.f32 %v557, %v9298
        %v9330 = vmul.f32 %v558, %v9298
        %v9331 = vmul.f32 %v559, %v9298
        %v9332 = vmul.f32 %v560, %v9298
        %v9333 = vmul.f32 %v561, %v9298
        %v9334 = vmul.f32 %v562, %v9298
        %v9335 = vmul.f32 %v563, %v9298
        %v9336 = vmul.f32 %v564, %v9298
        %v9337 = vmul.f32 %v565, %v9298
        %v9338 = vmul.f32 %v566, %v9298
        %v9339 = vmul.f32 %v567, %v9298
        %v9340 = vmul.f32 %v568, %v9298
        %v9341 = vmul.f32 %v569, %v9298
        %v9342 = vmul.f32 %v570, %v9298
        %v9343 = vmul.f32 %v571, %v9298
        %v9344 = vmul.f32 %v572, %v9298
        %v9345 = vmul.f32 %v573, %v9298
        %v9346 = vmul.f32 %v574, %v9298
        %v9395 = vrot.slane %v9299, 5
        %v9396 = vrot.slane %v9300, 5
        %v9397 = vsel %vm1733, %v9395, %v9396
        %v9398 = vrot.slane %v9301, 5
        %v9399 = vsel %vm1733, %v9396, %v9398
        %v9400 = vrot.slane %v9302, 5
        %v9401 = vrot.slane %v9303, 5
        %v9402 = vsel %vm1733, %v9400, %v9401
        %v9403 = vrot.slane %v9304, 5
        %v9404 = vsel %vm1733, %v9401, %v9403
        %v9405 = vrot.slane %v9305, 5
        %v9406 = vrot.slane %v9306, 5
        %v9407 = vsel %vm1733, %v9405, %v9406
        %v9408 = vrot.slane %v9307, 5
        %v9409 = vsel %vm1733, %v9406, %v9408
        %v9410 = vrot.slane %v9308, 5
        %v9411 = vrot.slane %v9309, 5
        %v9412 = vsel %vm1733, %v9410, %v9411
        %v9413 = vrot.slane %v9310, 5
        %v9414 = vsel %vm1733, %v9411, %v9413
        %v9415 = vrot.slane %v9311, 5
        %v9416 = vrot.slane %v9312, 5
        %v9417 = vsel %vm1733, %v9415, %v9416
        %v9418 = vrot.slane %v9313, 5
        %v9419 = vsel %vm1733, %v9416, %v9418
        %v9420 = vrot.slane %v9314, 5
        %v9421 = vrot.slane %v9315, 5
        %v9422 = vsel %vm1733, %v9420, %v9421
        %v9423 = vrot.slane %v9316, 5
        %v9424 = vsel %vm1733, %v9421, %v9423
        %v9425 = vrot.slane %v9317, 5
        %v9426 = vrot.slane %v9318, 5
        %v9427 = vsel %vm1733, %v9425, %v9426
        %v9428 = vrot.slane %v9319, 5
        %v9429 = vsel %vm1733, %v9426, %v9428
        %v9430 = vrot.slane %v9320, 5
        %v9431 = vrot.slane %v9321, 5
        %v9432 = vsel %vm1733, %v9430, %v9431
        %v9433 = vrot.slane %v9322, 5
        %v9434 = vsel %vm1733, %v9431, %v9433
        %v9435 = vrot.slane %v9323, 5
        %v9436 = vrot.slane %v9324, 5
        %v9437 = vsel %vm1733, %v9435, %v9436
        %v9438 = vrot.slane %v9325, 5
        %v9439 = vsel %vm1733, %v9436, %v9438
        %v9440 = vrot.slane %v9326, 5
        %v9441 = vrot.slane %v9327, 5
        %v9442 = vsel %vm1733, %v9440, %v9441
        %v9443 = vrot.slane %v9328, 5
        %v9444 = vsel %vm1733, %v9441, %v9443
        %v9445 = vrot.slane %v9329, 5
        %v9446 = vrot.slane %v9330, 5
        %v9447 = vsel %vm1733, %v9445, %v9446
        %v9448 = vrot.slane %v9331, 5
        %v9449 = vsel %vm1733, %v9446, %v9448
        %v9450 = vrot.slane %v9332, 5
        %v9451 = vrot.slane %v9333, 5
        %v9452 = vsel %vm1733, %v9450, %v9451
        %v9453 = vrot.slane %v9334, 5
        %v9454 = vsel %vm1733, %v9451, %v9453
        %v9455 = vrot.slane %v9335, 5
        %v9456 = vrot.slane %v9336, 5
        %v9457 = vsel %vm1733, %v9455, %v9456
        %v9458 = vrot.slane %v9337, 5
        %v9459 = vsel %vm1733, %v9456, %v9458
        %v9460 = vrot.slane %v9338, 5
        %v9461 = vrot.slane %v9339, 5
        %v9462 = vsel %vm1733, %v9460, %v9461
        %v9463 = vrot.slane %v9340, 5
        %v9464 = vsel %vm1733, %v9461, %v9463
        %v9465 = vrot.slane %v9341, 5
        %v9466 = vrot.slane %v9342, 5
        %v9467 = vsel %vm1733, %v9465, %v9466
        %v9468 = vrot.slane %v9343, 5
        %v9469 = vsel %vm1733, %v9466, %v9468
        %v9470 = vrot.slane %v9344, 5
        %v9471 = vrot.slane %v9345, 5
        %v9472 = vsel %vm1733, %v9470, %v9471
        %v9473 = vrot.slane %v9346, 5
        %v9474 = vsel %vm1733, %v9471, %v9473
        %v9507 = vadd.f32 %v9263, %v9397
        %v9508 = vadd.f32 %v9264, %v9399
        %v9509 = vadd.f32 %v9265, %v9402
        %v9510 = vadd.f32 %v9266, %v9404
        %v9511 = vadd.f32 %v9267, %v9407
        %v9512 = vadd.f32 %v9268, %v9409
        %v9513 = vadd.f32 %v9269, %v9412
        %v9514 = vadd.f32 %v9270, %v9414
        %v9515 = vadd.f32 %v9271, %v9417
        %v9516 = vadd.f32 %v9272, %v9419
        %v9517 = vadd.f32 %v9273, %v9422
        %v9518 = vadd.f32 %v9274, %v9424
        %v9519 = vadd.f32 %v9275, %v9427
        %v9520 = vadd.f32 %v9276, %v9429
        %v9521 = vadd.f32 %v9277, %v9432
        %v9522 = vadd.f32 %v9278, %v9434
        %v9523 = vadd.f32 %v9279, %v9437
        %v9524 = vadd.f32 %v9280, %v9439
        %v9525 = vadd.f32 %v9281, %v9442
        %v9526 = vadd.f32 %v9282, %v9444
        %v9527 = vadd.f32 %v9283, %v9447
        %v9528 = vadd.f32 %v9284, %v9449
        %v9529 = vadd.f32 %v9285, %v9452
        %v9530 = vadd.f32 %v9286, %v9454
        %v9531 = vadd.f32 %v9287, %v9457
        %v9532 = vadd.f32 %v9288, %v9459
        %v9533 = vadd.f32 %v9289, %v9462
        %v9534 = vadd.f32 %v9290, %v9464
        %v9535 = vadd.f32 %v9291, %v9467
        %v9536 = vadd.f32 %v9292, %v9469
        %v9537 = vadd.f32 %v9293, %v9472
        %v9538 = vadd.f32 %v9294, %v9474
        %v9539 = vlaneseq
        %v9540 = vshrl.u32 %v9539, 7
        %v9541 = vsub.s32 1, %v9540
        %v9542 = vrot.slane %v583, %v9541
        %v9543 = vmul.f32 %v527, %v9542
        %v9544 = vmul.f32 %v528, %v9542
        %v9545 = vmul.f32 %v529, %v9542
        %v9546 = vmul.f32 %v530, %v9542
        %v9547 = vmul.f32 %v531, %v9542
        %v9548 = vmul.f32 %v532, %v9542
        %v9549 = vmul.f32 %v533, %v9542
        %v9550 = vmul.f32 %v534, %v9542
        %v9551 = vmul.f32 %v535, %v9542
        %v9552 = vmul.f32 %v536, %v9542
        %v9553 = vmul.f32 %v537, %v9542
        %v9554 = vmul.f32 %v538, %v9542
        %v9555 = vmul.f32 %v539, %v9542
        %v9556 = vmul.f32 %v540, %v9542
        %v9557 = vmul.f32 %v541, %v9542
        %v9558 = vmul.f32 %v542, %v9542
        %v9559 = vmul.f32 %v543, %v9542
        %v9560 = vmul.f32 %v544, %v9542
        %v9561 = vmul.f32 %v545, %v9542
        %v9562 = vmul.f32 %v546, %v9542
        %v9563 = vmul.f32 %v547, %v9542
        %v9564 = vmul.f32 %v548, %v9542
        %v9565 = vmul.f32 %v549, %v9542
        %v9566 = vmul.f32 %v550, %v9542
        %v9567 = vmul.f32 %v551, %v9542
        %v9568 = vmul.f32 %v552, %v9542
        %v9569 = vmul.f32 %v553, %v9542
        %v9570 = vmul.f32 %v554, %v9542
        %v9571 = vmul.f32 %v555, %v9542
        %v9572 = vmul.f32 %v556, %v9542
        %v9573 = vmul.f32 %v557, %v9542
        %v9574 = vmul.f32 %v558, %v9542
        %v9575 = vmul.f32 %v559, %v9542
        %v9576 = vmul.f32 %v560, %v9542
        %v9577 = vmul.f32 %v561, %v9542
        %v9578 = vmul.f32 %v562, %v9542
        %v9579 = vmul.f32 %v563, %v9542
        %v9580 = vmul.f32 %v564, %v9542
        %v9581 = vmul.f32 %v565, %v9542
        %v9582 = vmul.f32 %v566, %v9542
        %v9583 = vmul.f32 %v567, %v9542
        %v9584 = vmul.f32 %v568, %v9542
        %v9585 = vmul.f32 %v569, %v9542
        %v9586 = vmul.f32 %v570, %v9542
        %v9587 = vmul.f32 %v571, %v9542
        %v9588 = vmul.f32 %v572, %v9542
        %v9589 = vmul.f32 %v573, %v9542
        %v9590 = vmul.f32 %v574, %v9542
        %v9639 = vrot.slane %v9543, 6
        %v9640 = vrot.slane %v9544, 6
        %v9641 = vsel %vm1978, %v9639, %v9640
        %v9642 = vrot.slane %v9545, 6
        %v9643 = vsel %vm1978, %v9640, %v9642
        %v9644 = vrot.slane %v9546, 6
        %v9645 = vrot.slane %v9547, 6
        %v9646 = vsel %vm1978, %v9644, %v9645
        %v9647 = vrot.slane %v9548, 6
        %v9648 = vsel %vm1978, %v9645, %v9647
        %v9649 = vrot.slane %v9549, 6
        %v9650 = vrot.slane %v9550, 6
        %v9651 = vsel %vm1978, %v9649, %v9650
        %v9652 = vrot.slane %v9551, 6
        %v9653 = vsel %vm1978, %v9650, %v9652
        %v9654 = vrot.slane %v9552, 6
        %v9655 = vrot.slane %v9553, 6
        %v9656 = vsel %vm1978, %v9654, %v9655
        %v9657 = vrot.slane %v9554, 6
        %v9658 = vsel %vm1978, %v9655, %v9657
        %v9659 = vrot.slane %v9555, 6
        %v9660 = vrot.slane %v9556, 6
        %v9661 = vsel %vm1978, %v9659, %v9660
        %v9662 = vrot.slane %v9557, 6
        %v9663 = vsel %vm1978, %v9660, %v9662
        %v9664 = vrot.slane %v9558, 6
        %v9665 = vrot.slane %v9559, 6
        %v9666 = vsel %vm1978, %v9664, %v9665
        %v9667 = vrot.slane %v9560, 6
        %v9668 = vsel %vm1978, %v9665, %v9667
        %v9669 = vrot.slane %v9561, 6
        %v9670 = vrot.slane %v9562, 6
        %v9671 = vsel %vm1978, %v9669, %v9670
        %v9672 = vrot.slane %v9563, 6
        %v9673 = vsel %vm1978, %v9670, %v9672
        %v9674 = vrot.slane %v9564, 6
        %v9675 = vrot.slane %v9565, 6
        %v9676 = vsel %vm1978, %v9674, %v9675
        %v9677 = vrot.slane %v9566, 6
        %v9678 = vsel %vm1978, %v9675, %v9677
        %v9679 = vrot.slane %v9567, 6
        %v9680 = vrot.slane %v9568, 6
        %v9681 = vsel %vm1978, %v9679, %v9680
        %v9682 = vrot.slane %v9569, 6
        %v9683 = vsel %vm1978, %v9680, %v9682
        %v9684 = vrot.slane %v9570, 6
        %v9685 = vrot.slane %v9571, 6
        %v9686 = vsel %vm1978, %v9684, %v9685
        %v9687 = vrot.slane %v9572, 6
        %v9688 = vsel %vm1978, %v9685, %v9687
        %v9689 = vrot.slane %v9573, 6
        %v9690 = vrot.slane %v9574, 6
        %v9691 = vsel %vm1978, %v9689, %v9690
        %v9692 = vrot.slane %v9575, 6
        %v9693 = vsel %vm1978, %v9690, %v9692
        %v9694 = vrot.slane %v9576, 6
        %v9695 = vrot.slane %v9577, 6
        %v9696 = vsel %vm1978, %v9694, %v9695
        %v9697 = vrot.slane %v9578, 6
        %v9698 = vsel %vm1978, %v9695, %v9697
        %v9699 = vrot.slane %v9579, 6
        %v9700 = vrot.slane %v9580, 6
        %v9701 = vsel %vm1978, %v9699, %v9700
        %v9702 = vrot.slane %v9581, 6
        %v9703 = vsel %vm1978, %v9700, %v9702
        %v9704 = vrot.slane %v9582, 6
        %v9705 = vrot.slane %v9583, 6
        %v9706 = vsel %vm1978, %v9704, %v9705
        %v9707 = vrot.slane %v9584, 6
        %v9708 = vsel %vm1978, %v9705, %v9707
        %v9709 = vrot.slane %v9585, 6
        %v9710 = vrot.slane %v9586, 6
        %v9711 = vsel %vm1978, %v9709, %v9710
        %v9712 = vrot.slane %v9587, 6
        %v9713 = vsel %vm1978, %v9710, %v9712
        %v9714 = vrot.slane %v9588, 6
        %v9715 = vrot.slane %v9589, 6
        %v9716 = vsel %vm1978, %v9714, %v9715
        %v9717 = vrot.slane %v9590, 6
        %v9718 = vsel %vm1978, %v9715, %v9717
        %v9751 = vadd.f32 %v9507, %v9641
        %v9752 = vadd.f32 %v9508, %v9643
        %v9753 = vadd.f32 %v9509, %v9646
        %v9754 = vadd.f32 %v9510, %v9648
        %v9755 = vadd.f32 %v9511, %v9651
        %v9756 = vadd.f32 %v9512, %v9653
        %v9757 = vadd.f32 %v9513, %v9656
        %v9758 = vadd.f32 %v9514, %v9658
        %v9759 = vadd.f32 %v9515, %v9661
        %v9760 = vadd.f32 %v9516, %v9663
        %v9761 = vadd.f32 %v9517, %v9666
        %v9762 = vadd.f32 %v9518, %v9668
        %v9763 = vadd.f32 %v9519, %v9671
        %v9764 = vadd.f32 %v9520, %v9673
        %v9765 = vadd.f32 %v9521, %v9676
        %v9766 = vadd.f32 %v9522, %v9678
        %v9767 = vadd.f32 %v9523, %v9681
        %v9768 = vadd.f32 %v9524, %v9683
        %v9769 = vadd.f32 %v9525, %v9686
        %v9770 = vadd.f32 %v9526, %v9688
        %v9771 = vadd.f32 %v9527, %v9691
        %v9772 = vadd.f32 %v9528, %v9693
        %v9773 = vadd.f32 %v9529, %v9696
        %v9774 = vadd.f32 %v9530, %v9698
        %v9775 = vadd.f32 %v9531, %v9701
        %v9776 = vadd.f32 %v9532, %v9703
        %v9777 = vadd.f32 %v9533, %v9706
        %v9778 = vadd.f32 %v9534, %v9708
        %v9779 = vadd.f32 %v9535, %v9711
        %v9780 = vadd.f32 %v9536, %v9713
        %v9781 = vadd.f32 %v9537, %v9716
        %v9782 = vadd.f32 %v9538, %v9718
        %v9783 = vlaneseq
        %v9784 = vshrl.u32 %v9783, 7
        %v9785 = vsub.s32 2, %v9784
        %v9786 = vrot.slane %v583, %v9785
        %v9787 = vmul.f32 %v530, %v9786
        %v9788 = vmul.f32 %v531, %v9786
        %v9789 = vmul.f32 %v533, %v9786
        %v9790 = vmul.f32 %v534, %v9786
        %v9791 = vmul.f32 %v536, %v9786
        %v9792 = vmul.f32 %v537, %v9786
        %v9793 = vmul.f32 %v539, %v9786
        %v9794 = vmul.f32 %v540, %v9786
        %v9795 = vmul.f32 %v542, %v9786
        %v9796 = vmul.f32 %v543, %v9786
        %v9797 = vmul.f32 %v545, %v9786
        %v9798 = vmul.f32 %v546, %v9786
        %v9799 = vmul.f32 %v548, %v9786
        %v9800 = vmul.f32 %v549, %v9786
        %v9801 = vmul.f32 %v551, %v9786
        %v9802 = vmul.f32 %v552, %v9786
        %v9803 = vmul.f32 %v554, %v9786
        %v9804 = vmul.f32 %v555, %v9786
        %v9805 = vmul.f32 %v557, %v9786
        %v9806 = vmul.f32 %v558, %v9786
        %v9807 = vmul.f32 %v560, %v9786
        %v9808 = vmul.f32 %v561, %v9786
        %v9809 = vmul.f32 %v563, %v9786
        %v9810 = vmul.f32 %v564, %v9786
        %v9811 = vmul.f32 %v566, %v9786
        %v9812 = vmul.f32 %v567, %v9786
        %v9813 = vmul.f32 %v569, %v9786
        %v9814 = vmul.f32 %v570, %v9786
        %v9815 = vmul.f32 %v572, %v9786
        %v9816 = vmul.f32 %v573, %v9786
        %v9817 = vmul.f32 %v575, %v9786
        %v9818 = vmul.f32 %v576, %v9786
        %v9819 = vadd.f32 %v9751, %v9787
        %v9820 = vadd.f32 %v9752, %v9788
        %v9821 = vadd.f32 %v9753, %v9789
        %v9822 = vadd.f32 %v9754, %v9790
        %v9823 = vadd.f32 %v9755, %v9791
        %v9824 = vadd.f32 %v9756, %v9792
        %v9825 = vadd.f32 %v9757, %v9793
        %v9826 = vadd.f32 %v9758, %v9794
        %v9827 = vadd.f32 %v9759, %v9795
        %v9828 = vadd.f32 %v9760, %v9796
        %v9829 = vadd.f32 %v9761, %v9797
        %v9830 = vadd.f32 %v9762, %v9798
        %v9831 = vadd.f32 %v9763, %v9799
        %v9832 = vadd.f32 %v9764, %v9800
        %v9833 = vadd.f32 %v9765, %v9801
        %v9834 = vadd.f32 %v9766, %v9802
        %v9835 = vadd.f32 %v9767, %v9803
        %v9836 = vadd.f32 %v9768, %v9804
        %v9837 = vadd.f32 %v9769, %v9805
        %v9838 = vadd.f32 %v9770, %v9806
        %v9839 = vadd.f32 %v9771, %v9807
        %v9840 = vadd.f32 %v9772, %v9808
        %v9841 = vadd.f32 %v9773, %v9809
        %v9842 = vadd.f32 %v9774, %v9810
        %v9843 = vadd.f32 %v9775, %v9811
        %v9844 = vadd.f32 %v9776, %v9812
        %v9845 = vadd.f32 %v9777, %v9813
        %v9846 = vadd.f32 %v9778, %v9814
        %v9847 = vadd.f32 %v9779, %v9815
        %v9848 = vadd.f32 %v9780, %v9816
        %v9849 = vadd.f32 %v9781, %v9817
        %v9850 = vadd.f32 %v9782, %v9818
        %v9851 = vlaneseq
        %v9852 = vshrl.u32 %v9851, 7
        %v9853 = vsub.s32 3, %v9852
        %v9854 = vrot.slane %v583, %v9853
        %v9855 = vmul.f32 %v530, %v9854
        %v9856 = vmul.f32 %v531, %v9854
        %v9857 = vmul.f32 %v532, %v9854
        %v9858 = vmul.f32 %v533, %v9854
        %v9859 = vmul.f32 %v534, %v9854
        %v9860 = vmul.f32 %v535, %v9854
        %v9861 = vmul.f32 %v536, %v9854
        %v9862 = vmul.f32 %v537, %v9854
        %v9863 = vmul.f32 %v538, %v9854
        %v9864 = vmul.f32 %v539, %v9854
        %v9865 = vmul.f32 %v540, %v9854
        %v9866 = vmul.f32 %v541, %v9854
        %v9867 = vmul.f32 %v542, %v9854
        %v9868 = vmul.f32 %v543, %v9854
        %v9869 = vmul.f32 %v544, %v9854
        %v9870 = vmul.f32 %v545, %v9854
        %v9871 = vmul.f32 %v546, %v9854
        %v9872 = vmul.f32 %v547, %v9854
        %v9873 = vmul.f32 %v548, %v9854
        %v9874 = vmul.f32 %v549, %v9854
        %v9875 = vmul.f32 %v550, %v9854
        %v9876 = vmul.f32 %v551, %v9854
        %v9877 = vmul.f32 %v552, %v9854
        %v9878 = vmul.f32 %v553, %v9854
        %v9879 = vmul.f32 %v554, %v9854
        %v9880 = vmul.f32 %v555, %v9854
        %v9881 = vmul.f32 %v556, %v9854
        %v9882 = vmul.f32 %v557, %v9854
        %v9883 = vmul.f32 %v558, %v9854
        %v9884 = vmul.f32 %v559, %v9854
        %v9885 = vmul.f32 %v560, %v9854
        %v9886 = vmul.f32 %v561, %v9854
        %v9887 = vmul.f32 %v562, %v9854
        %v9888 = vmul.f32 %v563, %v9854
        %v9889 = vmul.f32 %v564, %v9854
        %v9890 = vmul.f32 %v565, %v9854
        %v9891 = vmul.f32 %v566, %v9854
        %v9892 = vmul.f32 %v567, %v9854
        %v9893 = vmul.f32 %v568, %v9854
        %v9894 = vmul.f32 %v569, %v9854
        %v9895 = vmul.f32 %v570, %v9854
        %v9896 = vmul.f32 %v571, %v9854
        %v9897 = vmul.f32 %v572, %v9854
        %v9898 = vmul.f32 %v573, %v9854
        %v9899 = vmul.f32 %v574, %v9854
        %v9900 = vmul.f32 %v575, %v9854
        %v9901 = vmul.f32 %v576, %v9854
        %v9902 = vmul.f32 %v577, %v9854
        %v9951 = vrot.slane %v9855, 1
        %v9952 = vrot.slane %v9856, 1
        %v9953 = vsel %vm753, %v9951, %v9952
        %v9954 = vrot.slane %v9857, 1
        %v9955 = vsel %vm753, %v9952, %v9954
        %v9956 = vrot.slane %v9858, 1
        %v9957 = vrot.slane %v9859, 1
        %v9958 = vsel %vm753, %v9956, %v9957
        %v9959 = vrot.slane %v9860, 1
        %v9960 = vsel %vm753, %v9957, %v9959
        %v9961 = vrot.slane %v9861, 1
        %v9962 = vrot.slane %v9862, 1
        %v9963 = vsel %vm753, %v9961, %v9962
        %v9964 = vrot.slane %v9863, 1
        %v9965 = vsel %vm753, %v9962, %v9964
        %v9966 = vrot.slane %v9864, 1
        %v9967 = vrot.slane %v9865, 1
        %v9968 = vsel %vm753, %v9966, %v9967
        %v9969 = vrot.slane %v9866, 1
        %v9970 = vsel %vm753, %v9967, %v9969
        %v9971 = vrot.slane %v9867, 1
        %v9972 = vrot.slane %v9868, 1
        %v9973 = vsel %vm753, %v9971, %v9972
        %v9974 = vrot.slane %v9869, 1
        %v9975 = vsel %vm753, %v9972, %v9974
        %v9976 = vrot.slane %v9870, 1
        %v9977 = vrot.slane %v9871, 1
        %v9978 = vsel %vm753, %v9976, %v9977
        %v9979 = vrot.slane %v9872, 1
        %v9980 = vsel %vm753, %v9977, %v9979
        %v9981 = vrot.slane %v9873, 1
        %v9982 = vrot.slane %v9874, 1
        %v9983 = vsel %vm753, %v9981, %v9982
        %v9984 = vrot.slane %v9875, 1
        %v9985 = vsel %vm753, %v9982, %v9984
        %v9986 = vrot.slane %v9876, 1
        %v9987 = vrot.slane %v9877, 1
        %v9988 = vsel %vm753, %v9986, %v9987
        %v9989 = vrot.slane %v9878, 1
        %v9990 = vsel %vm753, %v9987, %v9989
        %v9991 = vrot.slane %v9879, 1
        %v9992 = vrot.slane %v9880, 1
        %v9993 = vsel %vm753, %v9991, %v9992
        %v9994 = vrot.slane %v9881, 1
        %v9995 = vsel %vm753, %v9992, %v9994
        %v9996 = vrot.slane %v9882, 1
        %v9997 = vrot.slane %v9883, 1
        %v9998 = vsel %vm753, %v9996, %v9997
        %v9999 = vrot.slane %v9884, 1
        %v10000 = vsel %vm753, %v9997, %v9999
        %v10001 = vrot.slane %v9885, 1
        %v10002 = vrot.slane %v9886, 1
        %v10003 = vsel %vm753, %v10001, %v10002
        %v10004 = vrot.slane %v9887, 1
        %v10005 = vsel %vm753, %v10002, %v10004
        %v10006 = vrot.slane %v9888, 1
        %v10007 = vrot.slane %v9889, 1
        %v10008 = vsel %vm753, %v10006, %v10007
        %v10009 = vrot.slane %v9890, 1
        %v10010 = vsel %vm753, %v10007, %v10009
        %v10011 = vrot.slane %v9891, 1
        %v10012 = vrot.slane %v9892, 1
        %v10013 = vsel %vm753, %v10011, %v10012
        %v10014 = vrot.slane %v9893, 1
        %v10015 = vsel %vm753, %v10012, %v10014
        %v10016 = vrot.slane %v9894, 1
        %v10017 = vrot.slane %v9895, 1
        %v10018 = vsel %vm753, %v10016, %v10017
        %v10019 = vrot.slane %v9896, 1
        %v10020 = vsel %vm753, %v10017, %v10019
        %v10021 = vrot.slane %v9897, 1
        %v10022 = vrot.slane %v9898, 1
        %v10023 = vsel %vm753, %v10021, %v10022
        %v10024 = vrot.slane %v9899, 1
        %v10025 = vsel %vm753, %v10022, %v10024
        %v10026 = vrot.slane %v9900, 1
        %v10027 = vrot.slane %v9901, 1
        %v10028 = vsel %vm753, %v10026, %v10027
        %v10029 = vrot.slane %v9902, 1
        %v10030 = vsel %vm753, %v10027, %v10029
        %v10063 = vadd.f32 %v9819, %v9953
        %v10064 = vadd.f32 %v9820, %v9955
        %v10065 = vadd.f32 %v9821, %v9958
        %v10066 = vadd.f32 %v9822, %v9960
        %v10067 = vadd.f32 %v9823, %v9963
        %v10068 = vadd.f32 %v9824, %v9965
        %v10069 = vadd.f32 %v9825, %v9968
        %v10070 = vadd.f32 %v9826, %v9970
        %v10071 = vadd.f32 %v9827, %v9973
        %v10072 = vadd.f32 %v9828, %v9975
        %v10073 = vadd.f32 %v9829, %v9978
        %v10074 = vadd.f32 %v9830, %v9980
        %v10075 = vadd.f32 %v9831, %v9983
        %v10076 = vadd.f32 %v9832, %v9985
        %v10077 = vadd.f32 %v9833, %v9988
        %v10078 = vadd.f32 %v9834, %v9990
        %v10079 = vadd.f32 %v9835, %v9993
        %v10080 = vadd.f32 %v9836, %v9995
        %v10081 = vadd.f32 %v9837, %v9998
        %v10082 = vadd.f32 %v9838, %v10000
        %v10083 = vadd.f32 %v9839, %v10003
        %v10084 = vadd.f32 %v9840, %v10005
        %v10085 = vadd.f32 %v9841, %v10008
        %v10086 = vadd.f32 %v9842, %v10010
        %v10087 = vadd.f32 %v9843, %v10013
        %v10088 = vadd.f32 %v9844, %v10015
        %v10089 = vadd.f32 %v9845, %v10018
        %v10090 = vadd.f32 %v9846, %v10020
        %v10091 = vadd.f32 %v9847, %v10023
        %v10092 = vadd.f32 %v9848, %v10025
        %v10093 = vadd.f32 %v9849, %v10028
        %v10094 = vadd.f32 %v9850, %v10030
        %v10095 = vlaneseq
        %v10096 = vshrl.u32 %v10095, 7
        %v10097 = vsub.s32 4, %v10096
        %v10098 = vrot.slane %v583, %v10097
        %v10099 = vmul.f32 %v530, %v10098
        %v10100 = vmul.f32 %v531, %v10098
        %v10101 = vmul.f32 %v532, %v10098
        %v10102 = vmul.f32 %v533, %v10098
        %v10103 = vmul.f32 %v534, %v10098
        %v10104 = vmul.f32 %v535, %v10098
        %v10105 = vmul.f32 %v536, %v10098
        %v10106 = vmul.f32 %v537, %v10098
        %v10107 = vmul.f32 %v538, %v10098
        %v10108 = vmul.f32 %v539, %v10098
        %v10109 = vmul.f32 %v540, %v10098
        %v10110 = vmul.f32 %v541, %v10098
        %v10111 = vmul.f32 %v542, %v10098
        %v10112 = vmul.f32 %v543, %v10098
        %v10113 = vmul.f32 %v544, %v10098
        %v10114 = vmul.f32 %v545, %v10098
        %v10115 = vmul.f32 %v546, %v10098
        %v10116 = vmul.f32 %v547, %v10098
        %v10117 = vmul.f32 %v548, %v10098
        %v10118 = vmul.f32 %v549, %v10098
        %v10119 = vmul.f32 %v550, %v10098
        %v10120 = vmul.f32 %v551, %v10098
        %v10121 = vmul.f32 %v552, %v10098
        %v10122 = vmul.f32 %v553, %v10098
        %v10123 = vmul.f32 %v554, %v10098
        %v10124 = vmul.f32 %v555, %v10098
        %v10125 = vmul.f32 %v556, %v10098
        %v10126 = vmul.f32 %v557, %v10098
        %v10127 = vmul.f32 %v558, %v10098
        %v10128 = vmul.f32 %v559, %v10098
        %v10129 = vmul.f32 %v560, %v10098
        %v10130 = vmul.f32 %v561, %v10098
        %v10131 = vmul.f32 %v562, %v10098
        %v10132 = vmul.f32 %v563, %v10098
        %v10133 = vmul.f32 %v564, %v10098
        %v10134 = vmul.f32 %v565, %v10098
        %v10135 = vmul.f32 %v566, %v10098
        %v10136 = vmul.f32 %v567, %v10098
        %v10137 = vmul.f32 %v568, %v10098
        %v10138 = vmul.f32 %v569, %v10098
        %v10139 = vmul.f32 %v570, %v10098
        %v10140 = vmul.f32 %v571, %v10098
        %v10141 = vmul.f32 %v572, %v10098
        %v10142 = vmul.f32 %v573, %v10098
        %v10143 = vmul.f32 %v574, %v10098
        %v10144 = vmul.f32 %v575, %v10098
        %v10145 = vmul.f32 %v576, %v10098
        %v10146 = vmul.f32 %v577, %v10098
        %v10195 = vrot.slane %v10099, 2
        %v10196 = vrot.slane %v10100, 2
        %v10197 = vsel %vm998, %v10195, %v10196
        %v10198 = vrot.slane %v10101, 2
        %v10199 = vsel %vm998, %v10196, %v10198
        %v10200 = vrot.slane %v10102, 2
        %v10201 = vrot.slane %v10103, 2
        %v10202 = vsel %vm998, %v10200, %v10201
        %v10203 = vrot.slane %v10104, 2
        %v10204 = vsel %vm998, %v10201, %v10203
        %v10205 = vrot.slane %v10105, 2
        %v10206 = vrot.slane %v10106, 2
        %v10207 = vsel %vm998, %v10205, %v10206
        %v10208 = vrot.slane %v10107, 2
        %v10209 = vsel %vm998, %v10206, %v10208
        %v10210 = vrot.slane %v10108, 2
        %v10211 = vrot.slane %v10109, 2
        %v10212 = vsel %vm998, %v10210, %v10211
        %v10213 = vrot.slane %v10110, 2
        %v10214 = vsel %vm998, %v10211, %v10213
        %v10215 = vrot.slane %v10111, 2
        %v10216 = vrot.slane %v10112, 2
        %v10217 = vsel %vm998, %v10215, %v10216
        %v10218 = vrot.slane %v10113, 2
        %v10219 = vsel %vm998, %v10216, %v10218
        %v10220 = vrot.slane %v10114, 2
        %v10221 = vrot.slane %v10115, 2
        %v10222 = vsel %vm998, %v10220, %v10221
        %v10223 = vrot.slane %v10116, 2
        %v10224 = vsel %vm998, %v10221, %v10223
        %v10225 = vrot.slane %v10117, 2
        %v10226 = vrot.slane %v10118, 2
        %v10227 = vsel %vm998, %v10225, %v10226
        %v10228 = vrot.slane %v10119, 2
        %v10229 = vsel %vm998, %v10226, %v10228
        %v10230 = vrot.slane %v10120, 2
        %v10231 = vrot.slane %v10121, 2
        %v10232 = vsel %vm998, %v10230, %v10231
        %v10233 = vrot.slane %v10122, 2
        %v10234 = vsel %vm998, %v10231, %v10233
        %v10235 = vrot.slane %v10123, 2
        %v10236 = vrot.slane %v10124, 2
        %v10237 = vsel %vm998, %v10235, %v10236
        %v10238 = vrot.slane %v10125, 2
        %v10239 = vsel %vm998, %v10236, %v10238
        %v10240 = vrot.slane %v10126, 2
        %v10241 = vrot.slane %v10127, 2
        %v10242 = vsel %vm998, %v10240, %v10241
        %v10243 = vrot.slane %v10128, 2
        %v10244 = vsel %vm998, %v10241, %v10243
        %v10245 = vrot.slane %v10129, 2
        %v10246 = vrot.slane %v10130, 2
        %v10247 = vsel %vm998, %v10245, %v10246
        %v10248 = vrot.slane %v10131, 2
        %v10249 = vsel %vm998, %v10246, %v10248
        %v10250 = vrot.slane %v10132, 2
        %v10251 = vrot.slane %v10133, 2
        %v10252 = vsel %vm998, %v10250, %v10251
        %v10253 = vrot.slane %v10134, 2
        %v10254 = vsel %vm998, %v10251, %v10253
        %v10255 = vrot.slane %v10135, 2
        %v10256 = vrot.slane %v10136, 2
        %v10257 = vsel %vm998, %v10255, %v10256
        %v10258 = vrot.slane %v10137, 2
        %v10259 = vsel %vm998, %v10256, %v10258
        %v10260 = vrot.slane %v10138, 2
        %v10261 = vrot.slane %v10139, 2
        %v10262 = vsel %vm998, %v10260, %v10261
        %v10263 = vrot.slane %v10140, 2
        %v10264 = vsel %vm998, %v10261, %v10263
        %v10265 = vrot.slane %v10141, 2
        %v10266 = vrot.slane %v10142, 2
        %v10267 = vsel %vm998, %v10265, %v10266
        %v10268 = vrot.slane %v10143, 2
        %v10269 = vsel %vm998, %v10266, %v10268
        %v10270 = vrot.slane %v10144, 2
        %v10271 = vrot.slane %v10145, 2
        %v10272 = vsel %vm998, %v10270, %v10271
        %v10273 = vrot.slane %v10146, 2
        %v10274 = vsel %vm998, %v10271, %v10273
        %v10307 = vadd.f32 %v10063, %v10197
        %v10308 = vadd.f32 %v10064, %v10199
        %v10309 = vadd.f32 %v10065, %v10202
        %v10310 = vadd.f32 %v10066, %v10204
        %v10311 = vadd.f32 %v10067, %v10207
        %v10312 = vadd.f32 %v10068, %v10209
        %v10313 = vadd.f32 %v10069, %v10212
        %v10314 = vadd.f32 %v10070, %v10214
        %v10315 = vadd.f32 %v10071, %v10217
        %v10316 = vadd.f32 %v10072, %v10219
        %v10317 = vadd.f32 %v10073, %v10222
        %v10318 = vadd.f32 %v10074, %v10224
        %v10319 = vadd.f32 %v10075, %v10227
        %v10320 = vadd.f32 %v10076, %v10229
        %v10321 = vadd.f32 %v10077, %v10232
        %v10322 = vadd.f32 %v10078, %v10234
        %v10323 = vadd.f32 %v10079, %v10237
        %v10324 = vadd.f32 %v10080, %v10239
        %v10325 = vadd.f32 %v10081, %v10242
        %v10326 = vadd.f32 %v10082, %v10244
        %v10327 = vadd.f32 %v10083, %v10247
        %v10328 = vadd.f32 %v10084, %v10249
        %v10329 = vadd.f32 %v10085, %v10252
        %v10330 = vadd.f32 %v10086, %v10254
        %v10331 = vadd.f32 %v10087, %v10257
        %v10332 = vadd.f32 %v10088, %v10259
        %v10333 = vadd.f32 %v10089, %v10262
        %v10334 = vadd.f32 %v10090, %v10264
        %v10335 = vadd.f32 %v10091, %v10267
        %v10336 = vadd.f32 %v10092, %v10269
        %v10337 = vadd.f32 %v10093, %v10272
        %v10338 = vadd.f32 %v10094, %v10274
        %v10339 = vlaneseq
        %v10340 = vshrl.u32 %v10339, 7
        %v10341 = vsub.s32 5, %v10340
        %v10342 = vrot.slane %v583, %v10341
        %v10343 = vmul.f32 %v530, %v10342
        %v10344 = vmul.f32 %v531, %v10342
        %v10345 = vmul.f32 %v532, %v10342
        %v10346 = vmul.f32 %v533, %v10342
        %v10347 = vmul.f32 %v534, %v10342
        %v10348 = vmul.f32 %v535, %v10342
        %v10349 = vmul.f32 %v536, %v10342
        %v10350 = vmul.f32 %v537, %v10342
        %v10351 = vmul.f32 %v538, %v10342
        %v10352 = vmul.f32 %v539, %v10342
        %v10353 = vmul.f32 %v540, %v10342
        %v10354 = vmul.f32 %v541, %v10342
        %v10355 = vmul.f32 %v542, %v10342
        %v10356 = vmul.f32 %v543, %v10342
        %v10357 = vmul.f32 %v544, %v10342
        %v10358 = vmul.f32 %v545, %v10342
        %v10359 = vmul.f32 %v546, %v10342
        %v10360 = vmul.f32 %v547, %v10342
        %v10361 = vmul.f32 %v548, %v10342
        %v10362 = vmul.f32 %v549, %v10342
        %v10363 = vmul.f32 %v550, %v10342
        %v10364 = vmul.f32 %v551, %v10342
        %v10365 = vmul.f32 %v552, %v10342
        %v10366 = vmul.f32 %v553, %v10342
        %v10367 = vmul.f32 %v554, %v10342
        %v10368 = vmul.f32 %v555, %v10342
        %v10369 = vmul.f32 %v556, %v10342
        %v10370 = vmul.f32 %v557, %v10342
        %v10371 = vmul.f32 %v558, %v10342
        %v10372 = vmul.f32 %v559, %v10342
        %v10373 = vmul.f32 %v560, %v10342
        %v10374 = vmul.f32 %v561, %v10342
        %v10375 = vmul.f32 %v562, %v10342
        %v10376 = vmul.f32 %v563, %v10342
        %v10377 = vmul.f32 %v564, %v10342
        %v10378 = vmul.f32 %v565, %v10342
        %v10379 = vmul.f32 %v566, %v10342
        %v10380 = vmul.f32 %v567, %v10342
        %v10381 = vmul.f32 %v568, %v10342
        %v10382 = vmul.f32 %v569, %v10342
        %v10383 = vmul.f32 %v570, %v10342
        %v10384 = vmul.f32 %v571, %v10342
        %v10385 = vmul.f32 %v572, %v10342
        %v10386 = vmul.f32 %v573, %v10342
        %v10387 = vmul.f32 %v574, %v10342
        %v10388 = vmul.f32 %v575, %v10342
        %v10389 = vmul.f32 %v576, %v10342
        %v10390 = vmul.f32 %v577, %v10342
        %v10439 = vrot.slane %v10343, 3
        %v10440 = vrot.slane %v10344, 3
        %v10441 = vsel %vm1243, %v10439, %v10440
        %v10442 = vrot.slane %v10345, 3
        %v10443 = vsel %vm1243, %v10440, %v10442
        %v10444 = vrot.slane %v10346, 3
        %v10445 = vrot.slane %v10347, 3
        %v10446 = vsel %vm1243, %v10444, %v10445
        %v10447 = vrot.slane %v10348, 3
        %v10448 = vsel %vm1243, %v10445, %v10447
        %v10449 = vrot.slane %v10349, 3
        %v10450 = vrot.slane %v10350, 3
        %v10451 = vsel %vm1243, %v10449, %v10450
        %v10452 = vrot.slane %v10351, 3
        %v10453 = vsel %vm1243, %v10450, %v10452
        %v10454 = vrot.slane %v10352, 3
        %v10455 = vrot.slane %v10353, 3
        %v10456 = vsel %vm1243, %v10454, %v10455
        %v10457 = vrot.slane %v10354, 3
        %v10458 = vsel %vm1243, %v10455, %v10457
        %v10459 = vrot.slane %v10355, 3
        %v10460 = vrot.slane %v10356, 3
        %v10461 = vsel %vm1243, %v10459, %v10460
        %v10462 = vrot.slane %v10357, 3
        %v10463 = vsel %vm1243, %v10460, %v10462
        %v10464 = vrot.slane %v10358, 3
        %v10465 = vrot.slane %v10359, 3
        %v10466 = vsel %vm1243, %v10464, %v10465
        %v10467 = vrot.slane %v10360, 3
        %v10468 = vsel %vm1243, %v10465, %v10467
        %v10469 = vrot.slane %v10361, 3
        %v10470 = vrot.slane %v10362, 3
        %v10471 = vsel %vm1243, %v10469, %v10470
        %v10472 = vrot.slane %v10363, 3
        %v10473 = vsel %vm1243, %v10470, %v10472
        %v10474 = vrot.slane %v10364, 3
        %v10475 = vrot.slane %v10365, 3
        %v10476 = vsel %vm1243, %v10474, %v10475
        %v10477 = vrot.slane %v10366, 3
        %v10478 = vsel %vm1243, %v10475, %v10477
        %v10479 = vrot.slane %v10367, 3
        %v10480 = vrot.slane %v10368, 3
        %v10481 = vsel %vm1243, %v10479, %v10480
        %v10482 = vrot.slane %v10369, 3
        %v10483 = vsel %vm1243, %v10480, %v10482
        %v10484 = vrot.slane %v10370, 3
        %v10485 = vrot.slane %v10371, 3
        %v10486 = vsel %vm1243, %v10484, %v10485
        %v10487 = vrot.slane %v10372, 3
        %v10488 = vsel %vm1243, %v10485, %v10487
        %v10489 = vrot.slane %v10373, 3
        %v10490 = vrot.slane %v10374, 3
        %v10491 = vsel %vm1243, %v10489, %v10490
        %v10492 = vrot.slane %v10375, 3
        %v10493 = vsel %vm1243, %v10490, %v10492
        %v10494 = vrot.slane %v10376, 3
        %v10495 = vrot.slane %v10377, 3
        %v10496 = vsel %vm1243, %v10494, %v10495
        %v10497 = vrot.slane %v10378, 3
        %v10498 = vsel %vm1243, %v10495, %v10497
        %v10499 = vrot.slane %v10379, 3
        %v10500 = vrot.slane %v10380, 3
        %v10501 = vsel %vm1243, %v10499, %v10500
        %v10502 = vrot.slane %v10381, 3
        %v10503 = vsel %vm1243, %v10500, %v10502
        %v10504 = vrot.slane %v10382, 3
        %v10505 = vrot.slane %v10383, 3
        %v10506 = vsel %vm1243, %v10504, %v10505
        %v10507 = vrot.slane %v10384, 3
        %v10508 = vsel %vm1243, %v10505, %v10507
        %v10509 = vrot.slane %v10385, 3
        %v10510 = vrot.slane %v10386, 3
        %v10511 = vsel %vm1243, %v10509, %v10510
        %v10512 = vrot.slane %v10387, 3
        %v10513 = vsel %vm1243, %v10510, %v10512
        %v10514 = vrot.slane %v10388, 3
        %v10515 = vrot.slane %v10389, 3
        %v10516 = vsel %vm1243, %v10514, %v10515
        %v10517 = vrot.slane %v10390, 3
        %v10518 = vsel %vm1243, %v10515, %v10517
        %v10551 = vadd.f32 %v10307, %v10441
        %v10552 = vadd.f32 %v10308, %v10443
        %v10553 = vadd.f32 %v10309, %v10446
        %v10554 = vadd.f32 %v10310, %v10448
        %v10555 = vadd.f32 %v10311, %v10451
        %v10556 = vadd.f32 %v10312, %v10453
        %v10557 = vadd.f32 %v10313, %v10456
        %v10558 = vadd.f32 %v10314, %v10458
        %v10559 = vadd.f32 %v10315, %v10461
        %v10560 = vadd.f32 %v10316, %v10463
        %v10561 = vadd.f32 %v10317, %v10466
        %v10562 = vadd.f32 %v10318, %v10468
        %v10563 = vadd.f32 %v10319, %v10471
        %v10564 = vadd.f32 %v10320, %v10473
        %v10565 = vadd.f32 %v10321, %v10476
        %v10566 = vadd.f32 %v10322, %v10478
        %v10567 = vadd.f32 %v10323, %v10481
        %v10568 = vadd.f32 %v10324, %v10483
        %v10569 = vadd.f32 %v10325, %v10486
        %v10570 = vadd.f32 %v10326, %v10488
        %v10571 = vadd.f32 %v10327, %v10491
        %v10572 = vadd.f32 %v10328, %v10493
        %v10573 = vadd.f32 %v10329, %v10496
        %v10574 = vadd.f32 %v10330, %v10498
        %v10575 = vadd.f32 %v10331, %v10501
        %v10576 = vadd.f32 %v10332, %v10503
        %v10577 = vadd.f32 %v10333, %v10506
        %v10578 = vadd.f32 %v10334, %v10508
        %v10579 = vadd.f32 %v10335, %v10511
        %v10580 = vadd.f32 %v10336, %v10513
        %v10581 = vadd.f32 %v10337, %v10516
        %v10582 = vadd.f32 %v10338, %v10518
        %v10583 = vlaneseq
        %v10584 = vshrl.u32 %v10583, 7
        %v10585 = vsub.s32 6, %v10584
        %v10586 = vrot.slane %v583, %v10585
        %v10587 = vmul.f32 %v530, %v10586
        %v10588 = vmul.f32 %v531, %v10586
        %v10589 = vmul.f32 %v532, %v10586
        %v10590 = vmul.f32 %v533, %v10586
        %v10591 = vmul.f32 %v534, %v10586
        %v10592 = vmul.f32 %v535, %v10586
        %v10593 = vmul.f32 %v536, %v10586
        %v10594 = vmul.f32 %v537, %v10586
        %v10595 = vmul.f32 %v538, %v10586
        %v10596 = vmul.f32 %v539, %v10586
        %v10597 = vmul.f32 %v540, %v10586
        %v10598 = vmul.f32 %v541, %v10586
        %v10599 = vmul.f32 %v542, %v10586
        %v10600 = vmul.f32 %v543, %v10586
        %v10601 = vmul.f32 %v544, %v10586
        %v10602 = vmul.f32 %v545, %v10586
        %v10603 = vmul.f32 %v546, %v10586
        %v10604 = vmul.f32 %v547, %v10586
        %v10605 = vmul.f32 %v548, %v10586
        %v10606 = vmul.f32 %v549, %v10586
        %v10607 = vmul.f32 %v550, %v10586
        %v10608 = vmul.f32 %v551, %v10586
        %v10609 = vmul.f32 %v552, %v10586
        %v10610 = vmul.f32 %v553, %v10586
        %v10611 = vmul.f32 %v554, %v10586
        %v10612 = vmul.f32 %v555, %v10586
        %v10613 = vmul.f32 %v556, %v10586
        %v10614 = vmul.f32 %v557, %v10586
        %v10615 = vmul.f32 %v558, %v10586
        %v10616 = vmul.f32 %v559, %v10586
        %v10617 = vmul.f32 %v560, %v10586
        %v10618 = vmul.f32 %v561, %v10586
        %v10619 = vmul.f32 %v562, %v10586
        %v10620 = vmul.f32 %v563, %v10586
        %v10621 = vmul.f32 %v564, %v10586
        %v10622 = vmul.f32 %v565, %v10586
        %v10623 = vmul.f32 %v566, %v10586
        %v10624 = vmul.f32 %v567, %v10586
        %v10625 = vmul.f32 %v568, %v10586
        %v10626 = vmul.f32 %v569, %v10586
        %v10627 = vmul.f32 %v570, %v10586
        %v10628 = vmul.f32 %v571, %v10586
        %v10629 = vmul.f32 %v572, %v10586
        %v10630 = vmul.f32 %v573, %v10586
        %v10631 = vmul.f32 %v574, %v10586
        %v10632 = vmul.f32 %v575, %v10586
        %v10633 = vmul.f32 %v576, %v10586
        %v10634 = vmul.f32 %v577, %v10586
        %v10683 = vrot.slane %v10587, 4
        %v10684 = vrot.slane %v10588, 4
        %v10685 = vsel %vm1488, %v10683, %v10684
        %v10686 = vrot.slane %v10589, 4
        %v10687 = vsel %vm1488, %v10684, %v10686
        %v10688 = vrot.slane %v10590, 4
        %v10689 = vrot.slane %v10591, 4
        %v10690 = vsel %vm1488, %v10688, %v10689
        %v10691 = vrot.slane %v10592, 4
        %v10692 = vsel %vm1488, %v10689, %v10691
        %v10693 = vrot.slane %v10593, 4
        %v10694 = vrot.slane %v10594, 4
        %v10695 = vsel %vm1488, %v10693, %v10694
        %v10696 = vrot.slane %v10595, 4
        %v10697 = vsel %vm1488, %v10694, %v10696
        %v10698 = vrot.slane %v10596, 4
        %v10699 = vrot.slane %v10597, 4
        %v10700 = vsel %vm1488, %v10698, %v10699
        %v10701 = vrot.slane %v10598, 4
        %v10702 = vsel %vm1488, %v10699, %v10701
        %v10703 = vrot.slane %v10599, 4
        %v10704 = vrot.slane %v10600, 4
        %v10705 = vsel %vm1488, %v10703, %v10704
        %v10706 = vrot.slane %v10601, 4
        %v10707 = vsel %vm1488, %v10704, %v10706
        %v10708 = vrot.slane %v10602, 4
        %v10709 = vrot.slane %v10603, 4
        %v10710 = vsel %vm1488, %v10708, %v10709
        %v10711 = vrot.slane %v10604, 4
        %v10712 = vsel %vm1488, %v10709, %v10711
        %v10713 = vrot.slane %v10605, 4
        %v10714 = vrot.slane %v10606, 4
        %v10715 = vsel %vm1488, %v10713, %v10714
        %v10716 = vrot.slane %v10607, 4
        %v10717 = vsel %vm1488, %v10714, %v10716
        %v10718 = vrot.slane %v10608, 4
        %v10719 = vrot.slane %v10609, 4
        %v10720 = vsel %vm1488, %v10718, %v10719
        %v10721 = vrot.slane %v10610, 4
        %v10722 = vsel %vm1488, %v10719, %v10721
        %v10723 = vrot.slane %v10611, 4
        %v10724 = vrot.slane %v10612, 4
        %v10725 = vsel %vm1488, %v10723, %v10724
        %v10726 = vrot.slane %v10613, 4
        %v10727 = vsel %vm1488, %v10724, %v10726
        %v10728 = vrot.slane %v10614, 4
        %v10729 = vrot.slane %v10615, 4
        %v10730 = vsel %vm1488, %v10728, %v10729
        %v10731 = vrot.slane %v10616, 4
        %v10732 = vsel %vm1488, %v10729, %v10731
        %v10733 = vrot.slane %v10617, 4
        %v10734 = vrot.slane %v10618, 4
        %v10735 = vsel %vm1488, %v10733, %v10734
        %v10736 = vrot.slane %v10619, 4
        %v10737 = vsel %vm1488, %v10734, %v10736
        %v10738 = vrot.slane %v10620, 4
        %v10739 = vrot.slane %v10621, 4
        %v10740 = vsel %vm1488, %v10738, %v10739
        %v10741 = vrot.slane %v10622, 4
        %v10742 = vsel %vm1488, %v10739, %v10741
        %v10743 = vrot.slane %v10623, 4
        %v10744 = vrot.slane %v10624, 4
        %v10745 = vsel %vm1488, %v10743, %v10744
        %v10746 = vrot.slane %v10625, 4
        %v10747 = vsel %vm1488, %v10744, %v10746
        %v10748 = vrot.slane %v10626, 4
        %v10749 = vrot.slane %v10627, 4
        %v10750 = vsel %vm1488, %v10748, %v10749
        %v10751 = vrot.slane %v10628, 4
        %v10752 = vsel %vm1488, %v10749, %v10751
        %v10753 = vrot.slane %v10629, 4
        %v10754 = vrot.slane %v10630, 4
        %v10755 = vsel %vm1488, %v10753, %v10754
        %v10756 = vrot.slane %v10631, 4
        %v10757 = vsel %vm1488, %v10754, %v10756
        %v10758 = vrot.slane %v10632, 4
        %v10759 = vrot.slane %v10633, 4
        %v10760 = vsel %vm1488, %v10758, %v10759
        %v10761 = vrot.slane %v10634, 4
        %v10762 = vsel %vm1488, %v10759, %v10761
        %v10795 = vadd.f32 %v10551, %v10685
        %v10796 = vadd.f32 %v10552, %v10687
        %v10797 = vadd.f32 %v10553, %v10690
        %v10798 = vadd.f32 %v10554, %v10692
        %v10799 = vadd.f32 %v10555, %v10695
        %v10800 = vadd.f32 %v10556, %v10697
        %v10801 = vadd.f32 %v10557, %v10700
        %v10802 = vadd.f32 %v10558, %v10702
        %v10803 = vadd.f32 %v10559, %v10705
        %v10804 = vadd.f32 %v10560, %v10707
        %v10805 = vadd.f32 %v10561, %v10710
        %v10806 = vadd.f32 %v10562, %v10712
        %v10807 = vadd.f32 %v10563, %v10715
        %v10808 = vadd.f32 %v10564, %v10717
        %v10809 = vadd.f32 %v10565, %v10720
        %v10810 = vadd.f32 %v10566, %v10722
        %v10811 = vadd.f32 %v10567, %v10725
        %v10812 = vadd.f32 %v10568, %v10727
        %v10813 = vadd.f32 %v10569, %v10730
        %v10814 = vadd.f32 %v10570, %v10732
        %v10815 = vadd.f32 %v10571, %v10735
        %v10816 = vadd.f32 %v10572, %v10737
        %v10817 = vadd.f32 %v10573, %v10740
        %v10818 = vadd.f32 %v10574, %v10742
        %v10819 = vadd.f32 %v10575, %v10745
        %v10820 = vadd.f32 %v10576, %v10747
        %v10821 = vadd.f32 %v10577, %v10750
        %v10822 = vadd.f32 %v10578, %v10752
        %v10823 = vadd.f32 %v10579, %v10755
        %v10824 = vadd.f32 %v10580, %v10757
        %v10825 = vadd.f32 %v10581, %v10760
        %v10826 = vadd.f32 %v10582, %v10762
        %v10827 = vlaneseq
        %v10828 = vshrl.u32 %v10827, 7
        %v10829 = vsub.s32 7, %v10828
        %v10830 = vrot.slane %v583, %v10829
        %v10831 = vmul.f32 %v530, %v10830
        %v10832 = vmul.f32 %v531, %v10830
        %v10833 = vmul.f32 %v532, %v10830
        %v10834 = vmul.f32 %v533, %v10830
        %v10835 = vmul.f32 %v534, %v10830
        %v10836 = vmul.f32 %v535, %v10830
        %v10837 = vmul.f32 %v536, %v10830
        %v10838 = vmul.f32 %v537, %v10830
        %v10839 = vmul.f32 %v538, %v10830
        %v10840 = vmul.f32 %v539, %v10830
        %v10841 = vmul.f32 %v540, %v10830
        %v10842 = vmul.f32 %v541, %v10830
        %v10843 = vmul.f32 %v542, %v10830
        %v10844 = vmul.f32 %v543, %v10830
        %v10845 = vmul.f32 %v544, %v10830
        %v10846 = vmul.f32 %v545, %v10830
        %v10847 = vmul.f32 %v546, %v10830
        %v10848 = vmul.f32 %v547, %v10830
        %v10849 = vmul.f32 %v548, %v10830
        %v10850 = vmul.f32 %v549, %v10830
        %v10851 = vmul.f32 %v550, %v10830
        %v10852 = vmul.f32 %v551, %v10830
        %v10853 = vmul.f32 %v552, %v10830
        %v10854 = vmul.f32 %v553, %v10830
        %v10855 = vmul.f32 %v554, %v10830
        %v10856 = vmul.f32 %v555, %v10830
        %v10857 = vmul.f32 %v556, %v10830
        %v10858 = vmul.f32 %v557, %v10830
        %v10859 = vmul.f32 %v558, %v10830
        %v10860 = vmul.f32 %v559, %v10830
        %v10861 = vmul.f32 %v560, %v10830
        %v10862 = vmul.f32 %v561, %v10830
        %v10863 = vmul.f32 %v562, %v10830
        %v10864 = vmul.f32 %v563, %v10830
        %v10865 = vmul.f32 %v564, %v10830
        %v10866 = vmul.f32 %v565, %v10830
        %v10867 = vmul.f32 %v566, %v10830
        %v10868 = vmul.f32 %v567, %v10830
        %v10869 = vmul.f32 %v568, %v10830
        %v10870 = vmul.f32 %v569, %v10830
        %v10871 = vmul.f32 %v570, %v10830
        %v10872 = vmul.f32 %v571, %v10830
        %v10873 = vmul.f32 %v572, %v10830
        %v10874 = vmul.f32 %v573, %v10830
        %v10875 = vmul.f32 %v574, %v10830
        %v10876 = vmul.f32 %v575, %v10830
        %v10877 = vmul.f32 %v576, %v10830
        %v10878 = vmul.f32 %v577, %v10830
        %v10927 = vrot.slane %v10831, 5
        %v10928 = vrot.slane %v10832, 5
        %v10929 = vsel %vm1733, %v10927, %v10928
        %v10930 = vrot.slane %v10833, 5
        %v10931 = vsel %vm1733, %v10928, %v10930
        %v10932 = vrot.slane %v10834, 5
        %v10933 = vrot.slane %v10835, 5
        %v10934 = vsel %vm1733, %v10932, %v10933
        %v10935 = vrot.slane %v10836, 5
        %v10936 = vsel %vm1733, %v10933, %v10935
        %v10937 = vrot.slane %v10837, 5
        %v10938 = vrot.slane %v10838, 5
        %v10939 = vsel %vm1733, %v10937, %v10938
        %v10940 = vrot.slane %v10839, 5
        %v10941 = vsel %vm1733, %v10938, %v10940
        %v10942 = vrot.slane %v10840, 5
        %v10943 = vrot.slane %v10841, 5
        %v10944 = vsel %vm1733, %v10942, %v10943
        %v10945 = vrot.slane %v10842, 5
        %v10946 = vsel %vm1733, %v10943, %v10945
        %v10947 = vrot.slane %v10843, 5
        %v10948 = vrot.slane %v10844, 5
        %v10949 = vsel %vm1733, %v10947, %v10948
        %v10950 = vrot.slane %v10845, 5
        %v10951 = vsel %vm1733, %v10948, %v10950
        %v10952 = vrot.slane %v10846, 5
        %v10953 = vrot.slane %v10847, 5
        %v10954 = vsel %vm1733, %v10952, %v10953
        %v10955 = vrot.slane %v10848, 5
        %v10956 = vsel %vm1733, %v10953, %v10955
        %v10957 = vrot.slane %v10849, 5
        %v10958 = vrot.slane %v10850, 5
        %v10959 = vsel %vm1733, %v10957, %v10958
        %v10960 = vrot.slane %v10851, 5
        %v10961 = vsel %vm1733, %v10958, %v10960
        %v10962 = vrot.slane %v10852, 5
        %v10963 = vrot.slane %v10853, 5
        %v10964 = vsel %vm1733, %v10962, %v10963
        %v10965 = vrot.slane %v10854, 5
        %v10966 = vsel %vm1733, %v10963, %v10965
        %v10967 = vrot.slane %v10855, 5
        %v10968 = vrot.slane %v10856, 5
        %v10969 = vsel %vm1733, %v10967, %v10968
        %v10970 = vrot.slane %v10857, 5
        %v10971 = vsel %vm1733, %v10968, %v10970
        %v10972 = vrot.slane %v10858, 5
        %v10973 = vrot.slane %v10859, 5
        %v10974 = vsel %vm1733, %v10972, %v10973
        %v10975 = vrot.slane %v10860, 5
        %v10976 = vsel %vm1733, %v10973, %v10975
        %v10977 = vrot.slane %v10861, 5
        %v10978 = vrot.slane %v10862, 5
        %v10979 = vsel %vm1733, %v10977, %v10978
        %v10980 = vrot.slane %v10863, 5
        %v10981 = vsel %vm1733, %v10978, %v10980
        %v10982 = vrot.slane %v10864, 5
        %v10983 = vrot.slane %v10865, 5
        %v10984 = vsel %vm1733, %v10982, %v10983
        %v10985 = vrot.slane %v10866, 5
        %v10986 = vsel %vm1733, %v10983, %v10985
        %v10987 = vrot.slane %v10867, 5
        %v10988 = vrot.slane %v10868, 5
        %v10989 = vsel %vm1733, %v10987, %v10988
        %v10990 = vrot.slane %v10869, 5
        %v10991 = vsel %vm1733, %v10988, %v10990
        %v10992 = vrot.slane %v10870, 5
        %v10993 = vrot.slane %v10871, 5
        %v10994 = vsel %vm1733, %v10992, %v10993
        %v10995 = vrot.slane %v10872, 5
        %v10996 = vsel %vm1733, %v10993, %v10995
        %v10997 = vrot.slane %v10873, 5
        %v10998 = vrot.slane %v10874, 5
        %v10999 = vsel %vm1733, %v10997, %v10998
        %v11000 = vrot.slane %v10875, 5
        %v11001 = vsel %vm1733, %v10998, %v11000
        %v11002 = vrot.slane %v10876, 5
        %v11003 = vrot.slane %v10877, 5
        %v11004 = vsel %vm1733, %v11002, %v11003
        %v11005 = vrot.slane %v10878, 5
        %v11006 = vsel %vm1733, %v11003, %v11005
        %v11039 = vadd.f32 %v10795, %v10929
        %v11040 = vadd.f32 %v10796, %v10931
        %v11041 = vadd.f32 %v10797, %v10934
        %v11042 = vadd.f32 %v10798, %v10936
        %v11043 = vadd.f32 %v10799, %v10939
        %v11044 = vadd.f32 %v10800, %v10941
        %v11045 = vadd.f32 %v10801, %v10944
        %v11046 = vadd.f32 %v10802, %v10946
        %v11047 = vadd.f32 %v10803, %v10949
        %v11048 = vadd.f32 %v10804, %v10951
        %v11049 = vadd.f32 %v10805, %v10954
        %v11050 = vadd.f32 %v10806, %v10956
        %v11051 = vadd.f32 %v10807, %v10959
        %v11052 = vadd.f32 %v10808, %v10961
        %v11053 = vadd.f32 %v10809, %v10964
        %v11054 = vadd.f32 %v10810, %v10966
        %v11055 = vadd.f32 %v10811, %v10969
        %v11056 = vadd.f32 %v10812, %v10971
        %v11057 = vadd.f32 %v10813, %v10974
        %v11058 = vadd.f32 %v10814, %v10976
        %v11059 = vadd.f32 %v10815, %v10979
        %v11060 = vadd.f32 %v10816, %v10981
        %v11061 = vadd.f32 %v10817, %v10984
        %v11062 = vadd.f32 %v10818, %v10986
        %v11063 = vadd.f32 %v10819, %v10989
        %v11064 = vadd.f32 %v10820, %v10991
        %v11065 = vadd.f32 %v10821, %v10994
        %v11066 = vadd.f32 %v10822, %v10996
        %v11067 = vadd.f32 %v10823, %v10999
        %v11068 = vadd.f32 %v10824, %v11001
        %v11069 = vadd.f32 %v10825, %v11004
        %v11070 = vadd.f32 %v10826, %v11006
        %v11071 = vlaneseq
        %v11072 = vshrl.u32 %v11071, 7
        %v11073 = vsub.s32 0, %v11072
        %v11074 = vrot.slane %v584, %v11073
        %v11075 = vmul.f32 %v530, %v11074
        %v11076 = vmul.f32 %v531, %v11074
        %v11077 = vmul.f32 %v532, %v11074
        %v11078 = vmul.f32 %v533, %v11074
        %v11079 = vmul.f32 %v534, %v11074
        %v11080 = vmul.f32 %v535, %v11074
        %v11081 = vmul.f32 %v536, %v11074
        %v11082 = vmul.f32 %v537, %v11074
        %v11083 = vmul.f32 %v538, %v11074
        %v11084 = vmul.f32 %v539, %v11074
        %v11085 = vmul.f32 %v540, %v11074
        %v11086 = vmul.f32 %v541, %v11074
        %v11087 = vmul.f32 %v542, %v11074
        %v11088 = vmul.f32 %v543, %v11074
        %v11089 = vmul.f32 %v544, %v11074
        %v11090 = vmul.f32 %v545, %v11074
        %v11091 = vmul.f32 %v546, %v11074
        %v11092 = vmul.f32 %v547, %v11074
        %v11093 = vmul.f32 %v548, %v11074
        %v11094 = vmul.f32 %v549, %v11074
        %v11095 = vmul.f32 %v550, %v11074
        %v11096 = vmul.f32 %v551, %v11074
        %v11097 = vmul.f32 %v552, %v11074
        %v11098 = vmul.f32 %v553, %v11074
        %v11099 = vmul.f32 %v554, %v11074
        %v11100 = vmul.f32 %v555, %v11074
        %v11101 = vmul.f32 %v556, %v11074
        %v11102 = vmul.f32 %v557, %v11074
        %v11103 = vmul.f32 %v558, %v11074
        %v11104 = vmul.f32 %v559, %v11074
        %v11105 = vmul.f32 %v560, %v11074
        %v11106 = vmul.f32 %v561, %v11074
        %v11107 = vmul.f32 %v562, %v11074
        %v11108 = vmul.f32 %v563, %v11074
        %v11109 = vmul.f32 %v564, %v11074
        %v11110 = vmul.f32 %v565, %v11074
        %v11111 = vmul.f32 %v566, %v11074
        %v11112 = vmul.f32 %v567, %v11074
        %v11113 = vmul.f32 %v568, %v11074
        %v11114 = vmul.f32 %v569, %v11074
        %v11115 = vmul.f32 %v570, %v11074
        %v11116 = vmul.f32 %v571, %v11074
        %v11117 = vmul.f32 %v572, %v11074
        %v11118 = vmul.f32 %v573, %v11074
        %v11119 = vmul.f32 %v574, %v11074
        %v11120 = vmul.f32 %v575, %v11074
        %v11121 = vmul.f32 %v576, %v11074
        %v11122 = vmul.f32 %v577, %v11074
        %v11171 = vrot.slane %v11075, 6
        %v11172 = vrot.slane %v11076, 6
        %v11173 = vsel %vm1978, %v11171, %v11172
        %v11174 = vrot.slane %v11077, 6
        %v11175 = vsel %vm1978, %v11172, %v11174
        %v11176 = vrot.slane %v11078, 6
        %v11177 = vrot.slane %v11079, 6
        %v11178 = vsel %vm1978, %v11176, %v11177
        %v11179 = vrot.slane %v11080, 6
        %v11180 = vsel %vm1978, %v11177, %v11179
        %v11181 = vrot.slane %v11081, 6
        %v11182 = vrot.slane %v11082, 6
        %v11183 = vsel %vm1978, %v11181, %v11182
        %v11184 = vrot.slane %v11083, 6
        %v11185 = vsel %vm1978, %v11182, %v11184
        %v11186 = vrot.slane %v11084, 6
        %v11187 = vrot.slane %v11085, 6
        %v11188 = vsel %vm1978, %v11186, %v11187
        %v11189 = vrot.slane %v11086, 6
        %v11190 = vsel %vm1978, %v11187, %v11189
        %v11191 = vrot.slane %v11087, 6
        %v11192 = vrot.slane %v11088, 6
        %v11193 = vsel %vm1978, %v11191, %v11192
        %v11194 = vrot.slane %v11089, 6
        %v11195 = vsel %vm1978, %v11192, %v11194
        %v11196 = vrot.slane %v11090, 6
        %v11197 = vrot.slane %v11091, 6
        %v11198 = vsel %vm1978, %v11196, %v11197
        %v11199 = vrot.slane %v11092, 6
        %v11200 = vsel %vm1978, %v11197, %v11199
        %v11201 = vrot.slane %v11093, 6
        %v11202 = vrot.slane %v11094, 6
        %v11203 = vsel %vm1978, %v11201, %v11202
        %v11204 = vrot.slane %v11095, 6
        %v11205 = vsel %vm1978, %v11202, %v11204
        %v11206 = vrot.slane %v11096, 6
        %v11207 = vrot.slane %v11097, 6
        %v11208 = vsel %vm1978, %v11206, %v11207
        %v11209 = vrot.slane %v11098, 6
        %v11210 = vsel %vm1978, %v11207, %v11209
        %v11211 = vrot.slane %v11099, 6
        %v11212 = vrot.slane %v11100, 6
        %v11213 = vsel %vm1978, %v11211, %v11212
        %v11214 = vrot.slane %v11101, 6
        %v11215 = vsel %vm1978, %v11212, %v11214
        %v11216 = vrot.slane %v11102, 6
        %v11217 = vrot.slane %v11103, 6
        %v11218 = vsel %vm1978, %v11216, %v11217
        %v11219 = vrot.slane %v11104, 6
        %v11220 = vsel %vm1978, %v11217, %v11219
        %v11221 = vrot.slane %v11105, 6
        %v11222 = vrot.slane %v11106, 6
        %v11223 = vsel %vm1978, %v11221, %v11222
        %v11224 = vrot.slane %v11107, 6
        %v11225 = vsel %vm1978, %v11222, %v11224
        %v11226 = vrot.slane %v11108, 6
        %v11227 = vrot.slane %v11109, 6
        %v11228 = vsel %vm1978, %v11226, %v11227
        %v11229 = vrot.slane %v11110, 6
        %v11230 = vsel %vm1978, %v11227, %v11229
        %v11231 = vrot.slane %v11111, 6
        %v11232 = vrot.slane %v11112, 6
        %v11233 = vsel %vm1978, %v11231, %v11232
        %v11234 = vrot.slane %v11113, 6
        %v11235 = vsel %vm1978, %v11232, %v11234
        %v11236 = vrot.slane %v11114, 6
        %v11237 = vrot.slane %v11115, 6
        %v11238 = vsel %vm1978, %v11236, %v11237
        %v11239 = vrot.slane %v11116, 6
        %v11240 = vsel %vm1978, %v11237, %v11239
        %v11241 = vrot.slane %v11117, 6
        %v11242 = vrot.slane %v11118, 6
        %v11243 = vsel %vm1978, %v11241, %v11242
        %v11244 = vrot.slane %v11119, 6
        %v11245 = vsel %vm1978, %v11242, %v11244
        %v11246 = vrot.slane %v11120, 6
        %v11247 = vrot.slane %v11121, 6
        %v11248 = vsel %vm1978, %v11246, %v11247
        %v11249 = vrot.slane %v11122, 6
        %v11250 = vsel %vm1978, %v11247, %v11249
        %v11283 = vadd.f32 %v11039, %v11173
        %v11284 = vadd.f32 %v11040, %v11175
        %v11285 = vadd.f32 %v11041, %v11178
        %v11286 = vadd.f32 %v11042, %v11180
        %v11287 = vadd.f32 %v11043, %v11183
        %v11288 = vadd.f32 %v11044, %v11185
        %v11289 = vadd.f32 %v11045, %v11188
        %v11290 = vadd.f32 %v11046, %v11190
        %v11291 = vadd.f32 %v11047, %v11193
        %v11292 = vadd.f32 %v11048, %v11195
        %v11293 = vadd.f32 %v11049, %v11198
        %v11294 = vadd.f32 %v11050, %v11200
        %v11295 = vadd.f32 %v11051, %v11203
        %v11296 = vadd.f32 %v11052, %v11205
        %v11297 = vadd.f32 %v11053, %v11208
        %v11298 = vadd.f32 %v11054, %v11210
        %v11299 = vadd.f32 %v11055, %v11213
        %v11300 = vadd.f32 %v11056, %v11215
        %v11301 = vadd.f32 %v11057, %v11218
        %v11302 = vadd.f32 %v11058, %v11220
        %v11303 = vadd.f32 %v11059, %v11223
        %v11304 = vadd.f32 %v11060, %v11225
        %v11305 = vadd.f32 %v11061, %v11228
        %v11306 = vadd.f32 %v11062, %v11230
        %v11307 = vadd.f32 %v11063, %v11233
        %v11308 = vadd.f32 %v11064, %v11235
        %v11309 = vadd.f32 %v11065, %v11238
        %v11310 = vadd.f32 %v11066, %v11240
        %v11311 = vadd.f32 %v11067, %v11243
        %v11312 = vadd.f32 %v11068, %v11245
        %v11313 = vadd.f32 %v11069, %v11248
        %v11314 = vadd.f32 %v11070, %v11250
        %v11315 = vld [vmem:[%s2] sm:$0x1]
        %v11317 = vlaneseq
        %v11318 = vshrl.u32 %v11317, 7
        %v11319 = vsub.s32 0, %v11318
        %v11320 = vrot.slane %v11315, %v11319
        %v11322 = vadd.f32 %v11283, %v11320
        %v11323 = vadd.f32 %v11284, %v11320
        %v11324 = vadd.f32 %v11285, %v11320
        %v11325 = vadd.f32 %v11286, %v11320
        %v11326 = vadd.f32 %v11287, %v11320
        %v11327 = vadd.f32 %v11288, %v11320
        %v11328 = vadd.f32 %v11289, %v11320
        %v11329 = vadd.f32 %v11290, %v11320
        %v11330 = vadd.f32 %v11291, %v11320
        %v11331 = vadd.f32 %v11292, %v11320
        %v11332 = vadd.f32 %v11293, %v11320
        %v11333 = vadd.f32 %v11294, %v11320
        %v11334 = vadd.f32 %v11295, %v11320
        %v11335 = vadd.f32 %v11296, %v11320
        %v11336 = vadd.f32 %v11297, %v11320
        %v11337 = vadd.f32 %v11298, %v11320
        %v11338 = vadd.f32 %v11299, %v11320
        %v11339 = vadd.f32 %v11300, %v11320
        %v11340 = vadd.f32 %v11301, %v11320
        %v11341 = vadd.f32 %v11302, %v11320
        %v11342 = vadd.f32 %v11303, %v11320
        %v11343 = vadd.f32 %v11304, %v11320
        %v11344 = vadd.f32 %v11305, %v11320
        %v11345 = vadd.f32 %v11306, %v11320
        %v11346 = vadd.f32 %v11307, %v11320
        %v11347 = vadd.f32 %v11308, %v11320
        %v11348 = vadd.f32 %v11309, %v11320
        %v11349 = vadd.f32 %v11310, %v11320
        %v11350 = vadd.f32 %v11311, %v11320
        %v11351 = vadd.f32 %v11312, %v11320
        %v11352 = vadd.f32 %v11313, %v11320
        %v11353 = vadd.f32 %v11314, %v11320
        %v11354 = vsel %vm411, %v11322, 0.0
        %11355 = vadd.xlane.f32.xlu0 %v11354
        %v11356 = vpop.xlane.xlu0 %11355
        %v11357 = vsel %vm411, %v11323, 0.0
        %11358 = vadd.xlane.f32.xlu0 %v11357
        %v11359 = vpop.xlane.xlu0 %11358
        %v11360 = vsel %vm411, %v11324, 0.0
        %11361 = vadd.xlane.f32.xlu0 %v11360
        %v11362 = vpop.xlane.xlu0 %11361
        %v11363 = vsel %vm411, %v11325, 0.0
        %11364 = vadd.xlane.f32.xlu0 %v11363
        %v11365 = vpop.xlane.xlu0 %11364
        %v11366 = vsel %vm411, %v11326, 0.0
        %11367 = vadd.xlane.f32.xlu0 %v11366
        %v11368 = vpop.xlane.xlu0 %11367
        %v11369 = vsel %vm411, %v11327, 0.0
        %11370 = vadd.xlane.f32.xlu0 %v11369
        %v11371 = vpop.xlane.xlu0 %11370
        %v11372 = vsel %vm411, %v11328, 0.0
        %11373 = vadd.xlane.f32.xlu0 %v11372
        %v11374 = vpop.xlane.xlu0 %11373
        %v11375 = vsel %vm411, %v11329, 0.0
        %11376 = vadd.xlane.f32.xlu0 %v11375
        %v11377 = vpop.xlane.xlu0 %11376
        %v11378 = vsel %vm411, %v11330, 0.0
        %11379 = vadd.xlane.f32.xlu0 %v11378
        %v11380 = vpop.xlane.xlu0 %11379
        %v11381 = vsel %vm411, %v11331, 0.0
        %11382 = vadd.xlane.f32.xlu0 %v11381
        %v11383 = vpop.xlane.xlu0 %11382
        %v11384 = vsel %vm411, %v11332, 0.0
        %11385 = vadd.xlane.f32.xlu0 %v11384
        %v11386 = vpop.xlane.xlu0 %11385
        %v11387 = vsel %vm411, %v11333, 0.0
        %11388 = vadd.xlane.f32.xlu0 %v11387
        %v11389 = vpop.xlane.xlu0 %11388
        %v11390 = vsel %vm411, %v11334, 0.0
        %11391 = vadd.xlane.f32.xlu0 %v11390
        %v11392 = vpop.xlane.xlu0 %11391
        %v11393 = vsel %vm411, %v11335, 0.0
        %11394 = vadd.xlane.f32.xlu0 %v11393
        %v11395 = vpop.xlane.xlu0 %11394
        %v11396 = vsel %vm411, %v11336, 0.0
        %11397 = vadd.xlane.f32.xlu0 %v11396
        %v11398 = vpop.xlane.xlu0 %11397
        %v11399 = vsel %vm411, %v11337, 0.0
        %11400 = vadd.xlane.f32.xlu0 %v11399
        %v11401 = vpop.xlane.xlu0 %11400
        %v11402 = vsel %vm411, %v11338, 0.0
        %11403 = vadd.xlane.f32.xlu0 %v11402
        %v11404 = vpop.xlane.xlu0 %11403
        %v11405 = vsel %vm411, %v11339, 0.0
        %11406 = vadd.xlane.f32.xlu0 %v11405
        %v11407 = vpop.xlane.xlu0 %11406
        %v11408 = vsel %vm411, %v11340, 0.0
        %11409 = vadd.xlane.f32.xlu0 %v11408
        %v11410 = vpop.xlane.xlu0 %11409
        %v11411 = vsel %vm411, %v11341, 0.0
        %11412 = vadd.xlane.f32.xlu0 %v11411
        %v11413 = vpop.xlane.xlu0 %11412
        %v11414 = vsel %vm411, %v11342, 0.0
        %11415 = vadd.xlane.f32.xlu0 %v11414
        %v11416 = vpop.xlane.xlu0 %11415
        %v11417 = vsel %vm411, %v11343, 0.0
        %11418 = vadd.xlane.f32.xlu0 %v11417
        %v11419 = vpop.xlane.xlu0 %11418
        %v11420 = vsel %vm411, %v11344, 0.0
        %11421 = vadd.xlane.f32.xlu0 %v11420
        %v11422 = vpop.xlane.xlu0 %11421
        %v11423 = vsel %vm411, %v11345, 0.0
        %11424 = vadd.xlane.f32.xlu0 %v11423
        %v11425 = vpop.xlane.xlu0 %11424
        %v11426 = vsel %vm411, %v11346, 0.0
        %11427 = vadd.xlane.f32.xlu0 %v11426
        %v11428 = vpop.xlane.xlu0 %11427
        %v11429 = vsel %vm411, %v11347, 0.0
        %11430 = vadd.xlane.f32.xlu0 %v11429
        %v11431 = vpop.xlane.xlu0 %11430
        %v11432 = vsel %vm411, %v11348, 0.0
        %11433 = vadd.xlane.f32.xlu0 %v11432
        %v11434 = vpop.xlane.xlu0 %11433
        %v11435 = vsel %vm411, %v11349, 0.0
        %11436 = vadd.xlane.f32.xlu0 %v11435
        %v11437 = vpop.xlane.xlu0 %11436
        %v11438 = vsel %vm411, %v11350, 0.0
        %11439 = vadd.xlane.f32.xlu0 %v11438
        %v11440 = vpop.xlane.xlu0 %11439
        %v11441 = vsel %vm411, %v11351, 0.0
        %11442 = vadd.xlane.f32.xlu0 %v11441
        %v11443 = vpop.xlane.xlu0 %11442
        %v11444 = vsel %vm411, %v11352, 0.0
        %11445 = vadd.xlane.f32.xlu0 %v11444
        %v11446 = vpop.xlane.xlu0 %11445
        %v11447 = vsel %vm411, %v11353, 0.0
        %11448 = vadd.xlane.f32.xlu0 %v11447
        %v11449 = vpop.xlane.xlu0 %11448
        %v11450 = vrcp.pop 32.0
        %v11451 = vmul.f32 %v11356, %v11450
        %v11452 = vmul.f32 %v11359, %v11450
        %v11453 = vmul.f32 %v11362, %v11450
        %v11454 = vmul.f32 %v11365, %v11450
        %v11455 = vmul.f32 %v11368, %v11450
        %v11456 = vmul.f32 %v11371, %v11450
        %v11457 = vmul.f32 %v11374, %v11450
        %v11458 = vmul.f32 %v11377, %v11450
        %v11459 = vmul.f32 %v11380, %v11450
        %v11460 = vmul.f32 %v11383, %v11450
        %v11461 = vmul.f32 %v11386, %v11450
        %v11462 = vmul.f32 %v11389, %v11450
        %v11463 = vmul.f32 %v11392, %v11450
        %v11464 = vmul.f32 %v11395, %v11450
        %v11465 = vmul.f32 %v11398, %v11450
        %v11466 = vmul.f32 %v11401, %v11450
        %v11467 = vmul.f32 %v11404, %v11450
        %v11468 = vmul.f32 %v11407, %v11450
        %v11469 = vmul.f32 %v11410, %v11450
        %v11470 = vmul.f32 %v11413, %v11450
        %v11471 = vmul.f32 %v11416, %v11450
        %v11472 = vmul.f32 %v11419, %v11450
        %v11473 = vmul.f32 %v11422, %v11450
        %v11474 = vmul.f32 %v11425, %v11450
        %v11475 = vmul.f32 %v11428, %v11450
        %v11476 = vmul.f32 %v11431, %v11450
        %v11477 = vmul.f32 %v11434, %v11450
        %v11478 = vmul.f32 %v11437, %v11450
        %v11479 = vmul.f32 %v11440, %v11450
        %v11480 = vmul.f32 %v11443, %v11450
        %v11481 = vmul.f32 %v11446, %v11450
        %v11482 = vmul.f32 %v11449, %v11450
        %v11483 = vsub.f32 %v11322, %v11451
        %v11484 = vsub.f32 %v11323, %v11452
        %v11485 = vsub.f32 %v11324, %v11453
        %v11486 = vsub.f32 %v11325, %v11454
        %v11487 = vsub.f32 %v11326, %v11455
        %v11488 = vsub.f32 %v11327, %v11456
        %v11489 = vsub.f32 %v11328, %v11457
        %v11490 = vsub.f32 %v11329, %v11458
        %v11491 = vsub.f32 %v11330, %v11459
        %v11492 = vsub.f32 %v11331, %v11460
        %v11493 = vsub.f32 %v11332, %v11461
        %v11494 = vsub.f32 %v11333, %v11462
        %v11495 = vsub.f32 %v11334, %v11463
        %v11496 = vsub.f32 %v11335, %v11464
        %v11497 = vsub.f32 %v11336, %v11465
        %v11498 = vsub.f32 %v11337, %v11466
        %v11499 = vsub.f32 %v11338, %v11467
        %v11500 = vsub.f32 %v11339, %v11468
        %v11501 = vsub.f32 %v11340, %v11469
        %v11502 = vsub.f32 %v11341, %v11470
        %v11503 = vsub.f32 %v11342, %v11471
        %v11504 = vsub.f32 %v11343, %v11472
        %v11505 = vsub.f32 %v11344, %v11473
        %v11506 = vsub.f32 %v11345, %v11474
        %v11507 = vsub.f32 %v11346, %v11475
        %v11508 = vsub.f32 %v11347, %v11476
        %v11509 = vsub.f32 %v11348, %v11477
        %v11510 = vsub.f32 %v11349, %v11478
        %v11511 = vsub.f32 %v11350, %v11479
        %v11512 = vsub.f32 %v11351, %v11480
        %v11513 = vsub.f32 %v11352, %v11481
        %v11514 = vsub.f32 %v11353, %v11482
        %v11515 = vmul.f32 %v11483, %v11483
        %v11516 = vmul.f32 %v11484, %v11484
        %v11517 = vmul.f32 %v11485, %v11485
        %v11518 = vmul.f32 %v11486, %v11486
        %v11519 = vmul.f32 %v11487, %v11487
        %v11520 = vmul.f32 %v11488, %v11488
        %v11521 = vmul.f32 %v11489, %v11489
        %v11522 = vmul.f32 %v11490, %v11490
        %v11523 = vmul.f32 %v11491, %v11491
        %v11524 = vmul.f32 %v11492, %v11492
        %v11525 = vmul.f32 %v11493, %v11493
        %v11526 = vmul.f32 %v11494, %v11494
        %v11527 = vmul.f32 %v11495, %v11495
        %v11528 = vmul.f32 %v11496, %v11496
        %v11529 = vmul.f32 %v11497, %v11497
        %v11530 = vmul.f32 %v11498, %v11498
        %v11531 = vmul.f32 %v11499, %v11499
        %v11532 = vmul.f32 %v11500, %v11500
        %v11533 = vmul.f32 %v11501, %v11501
        %v11534 = vmul.f32 %v11502, %v11502
        %v11535 = vmul.f32 %v11503, %v11503
        %v11536 = vmul.f32 %v11504, %v11504
        %v11537 = vmul.f32 %v11505, %v11505
        %v11538 = vmul.f32 %v11506, %v11506
        %v11539 = vmul.f32 %v11507, %v11507
        %v11540 = vmul.f32 %v11508, %v11508
        %v11541 = vmul.f32 %v11509, %v11509
        %v11542 = vmul.f32 %v11510, %v11510
        %v11543 = vmul.f32 %v11511, %v11511
        %v11544 = vmul.f32 %v11512, %v11512
        %v11545 = vmul.f32 %v11513, %v11513
        %v11546 = vmul.f32 %v11514, %v11514
        %v11547 = vsel %vm411, %v11515, 0.0
        %11548 = vadd.xlane.f32.xlu0 %v11547
        %v11549 = vpop.xlane.xlu0 %11548
        %v11550 = vsel %vm411, %v11516, 0.0
        %11551 = vadd.xlane.f32.xlu0 %v11550
        %v11552 = vpop.xlane.xlu0 %11551
        %v11553 = vsel %vm411, %v11517, 0.0
        %11554 = vadd.xlane.f32.xlu0 %v11553
        %v11555 = vpop.xlane.xlu0 %11554
        %v11556 = vsel %vm411, %v11518, 0.0
        %11557 = vadd.xlane.f32.xlu0 %v11556
        %v11558 = vpop.xlane.xlu0 %11557
        %v11559 = vsel %vm411, %v11519, 0.0
        %11560 = vadd.xlane.f32.xlu0 %v11559
        %v11561 = vpop.xlane.xlu0 %11560
        %v11562 = vsel %vm411, %v11520, 0.0
        %11563 = vadd.xlane.f32.xlu0 %v11562
        %v11564 = vpop.xlane.xlu0 %11563
        %v11565 = vsel %vm411, %v11521, 0.0
        %11566 = vadd.xlane.f32.xlu0 %v11565
        %v11567 = vpop.xlane.xlu0 %11566
        %v11568 = vsel %vm411, %v11522, 0.0
        %11569 = vadd.xlane.f32.xlu0 %v11568
        %v11570 = vpop.xlane.xlu0 %11569
        %v11571 = vsel %vm411, %v11523, 0.0
        %11572 = vadd.xlane.f32.xlu0 %v11571
        %v11573 = vpop.xlane.xlu0 %11572
        %v11574 = vsel %vm411, %v11524, 0.0
        %11575 = vadd.xlane.f32.xlu0 %v11574
        %v11576 = vpop.xlane.xlu0 %11575
        %v11577 = vsel %vm411, %v11525, 0.0
        %11578 = vadd.xlane.f32.xlu0 %v11577
        %v11579 = vpop.xlane.xlu0 %11578
        %v11580 = vsel %vm411, %v11526, 0.0
        %11581 = vadd.xlane.f32.xlu0 %v11580
        %v11582 = vpop.xlane.xlu0 %11581
        %v11583 = vsel %vm411, %v11527, 0.0
        %11584 = vadd.xlane.f32.xlu0 %v11583
        %v11585 = vpop.xlane.xlu0 %11584
        %v11586 = vsel %vm411, %v11528, 0.0
        %11587 = vadd.xlane.f32.xlu0 %v11586
        %v11588 = vpop.xlane.xlu0 %11587
        %v11589 = vsel %vm411, %v11529, 0.0
        %11590 = vadd.xlane.f32.xlu0 %v11589
        %v11591 = vpop.xlane.xlu0 %11590
        %v11592 = vsel %vm411, %v11530, 0.0
        %11593 = vadd.xlane.f32.xlu0 %v11592
        %v11594 = vpop.xlane.xlu0 %11593
        %v11595 = vsel %vm411, %v11531, 0.0
        %11596 = vadd.xlane.f32.xlu0 %v11595
        %v11597 = vpop.xlane.xlu0 %11596
        %v11598 = vsel %vm411, %v11532, 0.0
        %11599 = vadd.xlane.f32.xlu0 %v11598
        %v11600 = vpop.xlane.xlu0 %11599
        %v11601 = vsel %vm411, %v11533, 0.0
        %11602 = vadd.xlane.f32.xlu0 %v11601
        %v11603 = vpop.xlane.xlu0 %11602
        %v11604 = vsel %vm411, %v11534, 0.0
        %11605 = vadd.xlane.f32.xlu0 %v11604
        %v11606 = vpop.xlane.xlu0 %11605
        %v11607 = vsel %vm411, %v11535, 0.0
        %11608 = vadd.xlane.f32.xlu0 %v11607
        %v11609 = vpop.xlane.xlu0 %11608
        %v11610 = vsel %vm411, %v11536, 0.0
        %11611 = vadd.xlane.f32.xlu0 %v11610
        %v11612 = vpop.xlane.xlu0 %11611
        %v11613 = vsel %vm411, %v11537, 0.0
        %11614 = vadd.xlane.f32.xlu0 %v11613
        %v11615 = vpop.xlane.xlu0 %11614
        %v11616 = vsel %vm411, %v11538, 0.0
        %11617 = vadd.xlane.f32.xlu0 %v11616
        %v11618 = vpop.xlane.xlu0 %11617
        %v11619 = vsel %vm411, %v11539, 0.0
        %11620 = vadd.xlane.f32.xlu0 %v11619
        %v11621 = vpop.xlane.xlu0 %11620
        %v11622 = vsel %vm411, %v11540, 0.0
        %11623 = vadd.xlane.f32.xlu0 %v11622
        %v11624 = vpop.xlane.xlu0 %11623
        %v11625 = vsel %vm411, %v11541, 0.0
        %11626 = vadd.xlane.f32.xlu0 %v11625
        %v11627 = vpop.xlane.xlu0 %11626
        %v11628 = vsel %vm411, %v11542, 0.0
        %11629 = vadd.xlane.f32.xlu0 %v11628
        %v11630 = vpop.xlane.xlu0 %11629
        %v11631 = vsel %vm411, %v11543, 0.0
        %11632 = vadd.xlane.f32.xlu0 %v11631
        %v11633 = vpop.xlane.xlu0 %11632
        %v11634 = vsel %vm411, %v11544, 0.0
        %11635 = vadd.xlane.f32.xlu0 %v11634
        %v11636 = vpop.xlane.xlu0 %11635
        %v11637 = vsel %vm411, %v11545, 0.0
        %11638 = vadd.xlane.f32.xlu0 %v11637
        %v11639 = vpop.xlane.xlu0 %11638
        %v11640 = vsel %vm411, %v11546, 0.0
        %11641 = vadd.xlane.f32.xlu0 %v11640
        %v11642 = vpop.xlane.xlu0 %11641
        %v11643 = vmul.f32 %v11549, %v11450
        %v11644 = vmul.f32 %v11552, %v11450
        %v11645 = vmul.f32 %v11555, %v11450
        %v11646 = vmul.f32 %v11558, %v11450
        %v11647 = vmul.f32 %v11561, %v11450
        %v11648 = vmul.f32 %v11564, %v11450
        %v11649 = vmul.f32 %v11567, %v11450
        %v11650 = vmul.f32 %v11570, %v11450
        %v11651 = vmul.f32 %v11573, %v11450
        %v11652 = vmul.f32 %v11576, %v11450
        %v11653 = vmul.f32 %v11579, %v11450
        %v11654 = vmul.f32 %v11582, %v11450
        %v11655 = vmul.f32 %v11585, %v11450
        %v11656 = vmul.f32 %v11588, %v11450
        %v11657 = vmul.f32 %v11591, %v11450
        %v11658 = vmul.f32 %v11594, %v11450
        %v11659 = vmul.f32 %v11597, %v11450
        %v11660 = vmul.f32 %v11600, %v11450
        %v11661 = vmul.f32 %v11603, %v11450
        %v11662 = vmul.f32 %v11606, %v11450
        %v11663 = vmul.f32 %v11609, %v11450
        %v11664 = vmul.f32 %v11612, %v11450
        %v11665 = vmul.f32 %v11615, %v11450
        %v11666 = vmul.f32 %v11618, %v11450
        %v11667 = vmul.f32 %v11621, %v11450
        %v11668 = vmul.f32 %v11624, %v11450
        %v11669 = vmul.f32 %v11627, %v11450
        %v11670 = vmul.f32 %v11630, %v11450
        %v11671 = vmul.f32 %v11633, %v11450
        %v11672 = vmul.f32 %v11636, %v11450
        %v11673 = vmul.f32 %v11639, %v11450
        %v11674 = vmul.f32 %v11642, %v11450
        %v11675 = vadd.f32 %v11643, 1e-06
        %v11676 = vadd.f32 %v11644, 1e-06
        %v11677 = vadd.f32 %v11645, 1e-06
        %v11678 = vadd.f32 %v11646, 1e-06
        %v11679 = vadd.f32 %v11647, 1e-06
        %v11680 = vadd.f32 %v11648, 1e-06
        %v11681 = vadd.f32 %v11649, 1e-06
        %v11682 = vadd.f32 %v11650, 1e-06
        %v11683 = vadd.f32 %v11651, 1e-06
        %v11684 = vadd.f32 %v11652, 1e-06
        %v11685 = vadd.f32 %v11653, 1e-06
        %v11686 = vadd.f32 %v11654, 1e-06
        %v11687 = vadd.f32 %v11655, 1e-06
        %v11688 = vadd.f32 %v11656, 1e-06
        %v11689 = vadd.f32 %v11657, 1e-06
        %v11690 = vadd.f32 %v11658, 1e-06
        %v11691 = vadd.f32 %v11659, 1e-06
        %v11692 = vadd.f32 %v11660, 1e-06
        %v11693 = vadd.f32 %v11661, 1e-06
        %v11694 = vadd.f32 %v11662, 1e-06
        %v11695 = vadd.f32 %v11663, 1e-06
        %v11696 = vadd.f32 %v11664, 1e-06
        %v11697 = vadd.f32 %v11665, 1e-06
        %v11698 = vadd.f32 %v11666, 1e-06
        %v11699 = vadd.f32 %v11667, 1e-06
        %v11700 = vadd.f32 %v11668, 1e-06
        %v11701 = vadd.f32 %v11669, 1e-06
        %v11702 = vadd.f32 %v11670, 1e-06
        %v11703 = vadd.f32 %v11671, 1e-06
        %v11704 = vadd.f32 %v11672, 1e-06
        %v11705 = vadd.f32 %v11673, 1e-06
        %v11706 = vadd.f32 %v11674, 1e-06
        %v11707 = vrsqrt.pop %v11675
        %v11708 = vrsqrt.pop %v11676
        %v11709 = vrsqrt.pop %v11677
        %v11710 = vrsqrt.pop %v11678
        %v11711 = vrsqrt.pop %v11679
        %v11712 = vrsqrt.pop %v11680
        %v11713 = vrsqrt.pop %v11681
        %v11714 = vrsqrt.pop %v11682
        %v11715 = vrsqrt.pop %v11683
        %v11716 = vrsqrt.pop %v11684
        %v11717 = vrsqrt.pop %v11685
        %v11718 = vrsqrt.pop %v11686
        %v11719 = vrsqrt.pop %v11687
        %v11720 = vrsqrt.pop %v11688
        %v11721 = vrsqrt.pop %v11689
        %v11722 = vrsqrt.pop %v11690
        %v11723 = vrsqrt.pop %v11691
        %v11724 = vrsqrt.pop %v11692
        %v11725 = vrsqrt.pop %v11693
        %v11726 = vrsqrt.pop %v11694
        %v11727 = vrsqrt.pop %v11695
        %v11728 = vrsqrt.pop %v11696
        %v11729 = vrsqrt.pop %v11697
        %v11730 = vrsqrt.pop %v11698
        %v11731 = vrsqrt.pop %v11699
        %v11732 = vrsqrt.pop %v11700
        %v11733 = vrsqrt.pop %v11701
        %v11734 = vrsqrt.pop %v11702
        %v11735 = vrsqrt.pop %v11703
        %v11736 = vrsqrt.pop %v11704
        %v11737 = vrsqrt.pop %v11705
        %v11738 = vrsqrt.pop %v11706
        %v11739 = vmul.f32 %v11483, %v11707
        %v11740 = vmul.f32 %v11484, %v11708
        %v11741 = vmul.f32 %v11485, %v11709
        %v11742 = vmul.f32 %v11486, %v11710
        %v11743 = vmul.f32 %v11487, %v11711
        %v11744 = vmul.f32 %v11488, %v11712
        %v11745 = vmul.f32 %v11489, %v11713
        %v11746 = vmul.f32 %v11490, %v11714
        %v11747 = vmul.f32 %v11491, %v11715
        %v11748 = vmul.f32 %v11492, %v11716
        %v11749 = vmul.f32 %v11493, %v11717
        %v11750 = vmul.f32 %v11494, %v11718
        %v11751 = vmul.f32 %v11495, %v11719
        %v11752 = vmul.f32 %v11496, %v11720
        %v11753 = vmul.f32 %v11497, %v11721
        %v11754 = vmul.f32 %v11498, %v11722
        %v11755 = vmul.f32 %v11499, %v11723
        %v11756 = vmul.f32 %v11500, %v11724
        %v11757 = vmul.f32 %v11501, %v11725
        %v11758 = vmul.f32 %v11502, %v11726
        %v11759 = vmul.f32 %v11503, %v11727
        %v11760 = vmul.f32 %v11504, %v11728
        %v11761 = vmul.f32 %v11505, %v11729
        %v11762 = vmul.f32 %v11506, %v11730
        %v11763 = vmul.f32 %v11507, %v11731
        %v11764 = vmul.f32 %v11508, %v11732
        %v11765 = vmul.f32 %v11509, %v11733
        %v11766 = vmul.f32 %v11510, %v11734
        %v11767 = vmul.f32 %v11511, %v11735
        %v11768 = vmul.f32 %v11512, %v11736
        %v11769 = vmul.f32 %v11513, %v11737
        %v11770 = vmul.f32 %v11514, %v11738
        %v11771 = vld [vmem:[%s3] sm:$0x1]
        %v11773 = vlaneseq
        %v11774 = vshrl.u32 %v11773, 7
        %v11775 = vsub.s32 0, %v11774
        %v11776 = vrot.slane %v11771, %v11775
        %v11778 = vmul.f32 %v11739, %v11776
        %v11779 = vmul.f32 %v11740, %v11776
        %v11780 = vmul.f32 %v11741, %v11776
        %v11781 = vmul.f32 %v11742, %v11776
        %v11782 = vmul.f32 %v11743, %v11776
        %v11783 = vmul.f32 %v11744, %v11776
        %v11784 = vmul.f32 %v11745, %v11776
        %v11785 = vmul.f32 %v11746, %v11776
        %v11786 = vmul.f32 %v11747, %v11776
        %v11787 = vmul.f32 %v11748, %v11776
        %v11788 = vmul.f32 %v11749, %v11776
        %v11789 = vmul.f32 %v11750, %v11776
        %v11790 = vmul.f32 %v11751, %v11776
        %v11791 = vmul.f32 %v11752, %v11776
        %v11792 = vmul.f32 %v11753, %v11776
        %v11793 = vmul.f32 %v11754, %v11776
        %v11794 = vmul.f32 %v11755, %v11776
        %v11795 = vmul.f32 %v11756, %v11776
        %v11796 = vmul.f32 %v11757, %v11776
        %v11797 = vmul.f32 %v11758, %v11776
        %v11798 = vmul.f32 %v11759, %v11776
        %v11799 = vmul.f32 %v11760, %v11776
        %v11800 = vmul.f32 %v11761, %v11776
        %v11801 = vmul.f32 %v11762, %v11776
        %v11802 = vmul.f32 %v11763, %v11776
        %v11803 = vmul.f32 %v11764, %v11776
        %v11804 = vmul.f32 %v11765, %v11776
        %v11805 = vmul.f32 %v11766, %v11776
        %v11806 = vmul.f32 %v11767, %v11776
        %v11807 = vmul.f32 %v11768, %v11776
        %v11808 = vmul.f32 %v11769, %v11776
        %v11809 = vmul.f32 %v11770, %v11776
        %v11810 = vld [vmem:[%s4] sm:$0x1]
        %v11812 = vlaneseq
        %v11813 = vshrl.u32 %v11812, 7
        %v11814 = vsub.s32 0, %v11813
        %v11815 = vrot.slane %v11810, %v11814
        %v11817 = vadd.f32 %v11778, %v11815
        %v11818 = vadd.f32 %v11779, %v11815
        %v11819 = vadd.f32 %v11780, %v11815
        %v11820 = vadd.f32 %v11781, %v11815
        %v11821 = vadd.f32 %v11782, %v11815
        %v11822 = vadd.f32 %v11783, %v11815
        %v11823 = vadd.f32 %v11784, %v11815
        %v11824 = vadd.f32 %v11785, %v11815
        %v11825 = vadd.f32 %v11786, %v11815
        %v11826 = vadd.f32 %v11787, %v11815
        %v11827 = vadd.f32 %v11788, %v11815
        %v11828 = vadd.f32 %v11789, %v11815
        %v11829 = vadd.f32 %v11790, %v11815
        %v11830 = vadd.f32 %v11791, %v11815
        %v11831 = vadd.f32 %v11792, %v11815
        %v11832 = vadd.f32 %v11793, %v11815
        %v11833 = vadd.f32 %v11794, %v11815
        %v11834 = vadd.f32 %v11795, %v11815
        %v11835 = vadd.f32 %v11796, %v11815
        %v11836 = vadd.f32 %v11797, %v11815
        %v11837 = vadd.f32 %v11798, %v11815
        %v11838 = vadd.f32 %v11799, %v11815
        %v11839 = vadd.f32 %v11800, %v11815
        %v11840 = vadd.f32 %v11801, %v11815
        %v11841 = vadd.f32 %v11802, %v11815
        %v11842 = vadd.f32 %v11803, %v11815
        %v11843 = vadd.f32 %v11804, %v11815
        %v11844 = vadd.f32 %v11805, %v11815
        %v11845 = vadd.f32 %v11806, %v11815
        %v11846 = vadd.f32 %v11807, %v11815
        %v11847 = vadd.f32 %v11808, %v11815
        %v11848 = vadd.f32 %v11809, %v11815
        %v11849 = vpack.c.bf16 %v11818, %v11817
        %v11850 = vpack.c.bf16 %v11820, %v11819
        %v11851 = vpack.c.bf16 %v11822, %v11821
        %v11852 = vpack.c.bf16 %v11824, %v11823
        %v11853 = vpack.c.bf16 %v11826, %v11825
        %v11854 = vpack.c.bf16 %v11828, %v11827
        %v11855 = vpack.c.bf16 %v11830, %v11829
        %v11856 = vpack.c.bf16 %v11832, %v11831
        %v11857 = vpack.c.bf16 %v11834, %v11833
        %v11858 = vpack.c.bf16 %v11836, %v11835
        %v11859 = vpack.c.bf16 %v11838, %v11837
        %v11860 = vpack.c.bf16 %v11840, %v11839
        %v11861 = vpack.c.bf16 %v11842, %v11841
        %v11862 = vpack.c.bf16 %v11844, %v11843
        %v11863 = vpack.c.bf16 %v11846, %v11845
        %v11864 = vpack.c.bf16 %v11848, %v11847
        %v11865 = vld [vmem:[%s5] sm:$0xf]
        %v11866 = vld [vmem:[%s5 + $0x4] sm:$0xf]
        %v11867 = vld [vmem:[%s5 + $0x8] sm:$0xf]
        %v11868 = vld [vmem:[%s5 + $0xc] sm:$0xf]
        %v11869 = vld [vmem:[%s6] sm:$0x1]
        %v11871 = vlaneseq
        %v11872 = vshrl.u32 %v11871, 7
        %v11873 = vsub.s32 0, %v11872
        %v11874 = vrot.slane %v11869, %v11873
        %v11880 = vunpack.c.l.b16 %v11865
        %v11881 = vunpack.c.l.b16 %v11866
        %v11882 = vunpack.c.l.b16 %v11867
        %v11883 = vunpack.c.l.b16 %v11868
        %v11884 = vpack.c.b16 %v11881, %v11880
        %v11885 = vpack.c.b16 %v11883, %v11882
        %v11889 = vsel %vm411, %v11849, 0
        %v11892 = vsel %vm411, %v11850, 0
        %v11895 = vsel %vm411, %v11851, 0
        %v11898 = vsel %vm411, %v11852, 0
        %v11901 = vsel %vm411, %v11853, 0
        %v11904 = vsel %vm411, %v11854, 0
        %v11907 = vsel %vm411, %v11855, 0
        %v11910 = vsel %vm411, %v11856, 0
        %v11913 = vsel %vm411, %v11857, 0
        %v11916 = vsel %vm411, %v11858, 0
        %v11919 = vsel %vm411, %v11859, 0
        %v11922 = vsel %vm411, %v11860, 0
        %v11925 = vsel %vm411, %v11861, 0
        %v11928 = vsel %vm411, %v11862, 0
        %v11931 = vsel %vm411, %v11863, 0
        %v11934 = vsel %vm411, %v11864, 0
        %11936 = vmatprep.subr.bf16.mxu0 0
        %11937 = vmatpush1.bf16.msra.mxu0 %v11884
        %11938 = vmatprep.subr.bf16.mxu0 0
        %11939 = vmatpush1.bf16.msra.mxu0 %v11885
        %11940 = vmatprep.subr.bf16.mxu0 0
        %11941 = vmatpush1.bf16.msra.mxu0 0
        %11942 = vmatprep.subr.bf16.mxu0 0
        %11943 = vmatpush1.bf16.msra.mxu0 0
        %11944 = vmatprep.subr.bf16.mxu0 0
        %11945 = vmatpush1.bf16.msra.mxu0 0
        %11946 = vmatprep.subr.bf16.mxu0 0
        %11947 = vmatpush1.bf16.msra.mxu0 0
        %11948 = vmatprep.subr.bf16.mxu0 0
        %11949 = vmatpush1.bf16.msra.mxu0 0
        %11950 = vmatprep.subr.bf16.mxu0 0
        %11951 = vmatpush1.bf16.msra.mxu0 0
        %11952 = vmatprep.subr.bf16.mxu0 0
        %11953 = vmatpush1.bf16.msra.mxu0 0
        %11954 = vmatprep.subr.bf16.mxu0 0
        %11955 = vmatpush1.bf16.msra.mxu0 0
        %11956 = vmatprep.subr.bf16.mxu0 0
        %11957 = vmatpush1.bf16.msra.mxu0 0
        %11958 = vmatprep.subr.bf16.mxu0 0
        %11959 = vmatpush1.bf16.msra.mxu0 0
        %11960 = vmatprep.subr.bf16.mxu0 0
        %11961 = vmatpush1.bf16.msra.mxu0 0
        %11962 = vmatprep.subr.bf16.mxu0 0
        %11963 = vmatpush1.bf16.msra.mxu0 0
        %11964 = vmatprep.subr.bf16.mxu0 0
        %11965 = vmatpush1.bf16.msra.mxu0 0
        %11966 = vmatprep.subr.bf16.mxu0 0
        %11967 = vmatpush1.bf16.msra.mxu0 0
        %11968 = vmatprep.mubr.bf16.mxu0 0
        %11969 = vmatmul.mubr.bf16.gmra.mrb[0].mxu0 %v11889
        %v11970 = vpop.f32.mrb[0].mxu0
        %v11971 = vadd.f32 %v11874, %v11970
        %v11972 = vpop.f32.mrb[0].mxu0
        %v11973 = vpop.f32.mrb[0].mxu0
        %v11974 = vadd.f32 %v11874, %v11973
        %v11975 = vpop.f32.mrb[0].mxu0
        %11976 = vmatprep.mubr.bf16.mxu0 0
        %11977 = vmatmul.mubr.bf16.gmra.mrb[0].mxu0 %v11892
        %v11978 = vpop.f32.mrb[0].mxu0
        %v11979 = vadd.f32 %v11874, %v11978
        %v11980 = vpop.f32.mrb[0].mxu0
        %v11981 = vpop.f32.mrb[0].mxu0
        %v11982 = vadd.f32 %v11874, %v11981
        %v11983 = vpop.f32.mrb[0].mxu0
        %11984 = vmatprep.mubr.bf16.mxu0 0
        %11985 = vmatmul.mubr.bf16.gmra.mrb[0].mxu0 %v11895
        %v11986 = vpop.f32.mrb[0].mxu0
        %v11987 = vadd.f32 %v11874, %v11986
        %v11988 = vpop.f32.mrb[0].mxu0
        %v11989 = vpop.f32.mrb[0].mxu0
        %v11990 = vadd.f32 %v11874, %v11989
        %v11991 = vpop.f32.mrb[0].mxu0
        %11992 = vmatprep.mubr.bf16.mxu0 0
        %11993 = vmatmul.mubr.bf16.gmra.mrb[0].mxu0 %v11898
        %v11994 = vpop.f32.mrb[0].mxu0
        %v11995 = vadd.f32 %v11874, %v11994
        %v11996 = vpop.f32.mrb[0].mxu0
        %v11997 = vpop.f32.mrb[0].mxu0
        %v11998 = vadd.f32 %v11874, %v11997
        %v11999 = vpop.f32.mrb[0].mxu0
        %12000 = vmatprep.mubr.bf16.mxu0 0
        %12001 = vmatmul.mubr.bf16.gmra.mrb[0].mxu0 %v11901
        %v12002 = vpop.f32.mrb[0].mxu0
        %v12003 = vadd.f32 %v11874, %v12002
        %v12004 = vpop.f32.mrb[0].mxu0
        %v12005 = vpop.f32.mrb[0].mxu0
        %v12006 = vadd.f32 %v11874, %v12005
        %v12007 = vpop.f32.mrb[0].mxu0
        %12008 = vmatprep.mubr.bf16.mxu0 0
        %12009 = vmatmul.mubr.bf16.gmra.mrb[0].mxu0 %v11904
        %v12010 = vpop.f32.mrb[0].mxu0
        %v12011 = vadd.f32 %v11874, %v12010
        %v12012 = vpop.f32.mrb[0].mxu0
        %v12013 = vpop.f32.mrb[0].mxu0
        %v12014 = vadd.f32 %v11874, %v12013
        %v12015 = vpop.f32.mrb[0].mxu0
        %12016 = vmatprep.mubr.bf16.mxu0 0
        %12017 = vmatmul.mubr.bf16.gmra.mrb[0].mxu0 %v11907
        %v12018 = vpop.f32.mrb[0].mxu0
        %v12019 = vadd.f32 %v11874, %v12018
        %v12020 = vpop.f32.mrb[0].mxu0
        %v12021 = vpop.f32.mrb[0].mxu0
        %v12022 = vadd.f32 %v11874, %v12021
        %v12023 = vpop.f32.mrb[0].mxu0
        %12024 = vmatprep.mubr.bf16.mxu0 0
        %12025 = vmatmul.mubr.bf16.gmra.mrb[0].mxu0 %v11910
        %v12026 = vpop.f32.mrb[0].mxu0
        %v12027 = vadd.f32 %v11874, %v12026
        %v12028 = vpop.f32.mrb[0].mxu0
        %v12029 = vpop.f32.mrb[0].mxu0
        %v12030 = vadd.f32 %v11874, %v12029
        %v12031 = vpop.f32.mrb[0].mxu0
        %12032 = vmatprep.mubr.bf16.mxu0 0
        %12033 = vmatmul.mubr.bf16.gmra.mrb[0].mxu0 %v11913
        %v12034 = vpop.f32.mrb[0].mxu0
        %v12035 = vadd.f32 %v11874, %v12034
        %v12036 = vpop.f32.mrb[0].mxu0
        %v12037 = vpop.f32.mrb[0].mxu0
        %v12038 = vadd.f32 %v11874, %v12037
        %v12039 = vpop.f32.mrb[0].mxu0
        %12040 = vmatprep.mubr.bf16.mxu0 0
        %12041 = vmatmul.mubr.bf16.gmra.mrb[0].mxu0 %v11916
        %v12042 = vpop.f32.mrb[0].mxu0
        %v12043 = vadd.f32 %v11874, %v12042
        %v12044 = vpop.f32.mrb[0].mxu0
        %v12045 = vpop.f32.mrb[0].mxu0
        %v12046 = vadd.f32 %v11874, %v12045
        %v12047 = vpop.f32.mrb[0].mxu0
        %12048 = vmatprep.mubr.bf16.mxu0 0
        %12049 = vmatmul.mubr.bf16.gmra.mrb[0].mxu0 %v11919
        %v12050 = vpop.f32.mrb[0].mxu0
        %v12051 = vadd.f32 %v11874, %v12050
        %v12052 = vpop.f32.mrb[0].mxu0
        %v12053 = vpop.f32.mrb[0].mxu0
        %v12054 = vadd.f32 %v11874, %v12053
        %v12055 = vpop.f32.mrb[0].mxu0
        %12056 = vmatprep.mubr.bf16.mxu0 0
        %12057 = vmatmul.mubr.bf16.gmra.mrb[0].mxu0 %v11922
        %v12058 = vpop.f32.mrb[0].mxu0
        %v12059 = vadd.f32 %v11874, %v12058
        %v12060 = vpop.f32.mrb[0].mxu0
        %v12061 = vpop.f32.mrb[0].mxu0
        %v12062 = vadd.f32 %v11874, %v12061
        %v12063 = vpop.f32.mrb[0].mxu0
        %12064 = vmatprep.mubr.bf16.mxu0 0
        %12065 = vmatmul.mubr.bf16.gmra.mrb[0].mxu0 %v11925
        %v12066 = vpop.f32.mrb[0].mxu0
        %v12067 = vadd.f32 %v11874, %v12066
        %v12068 = vpop.f32.mrb[0].mxu0
        %v12069 = vpop.f32.mrb[0].mxu0
        %v12070 = vadd.f32 %v11874, %v12069
        %v12071 = vpop.f32.mrb[0].mxu0
        %12072 = vmatprep.mubr.bf16.mxu0 0
        %12073 = vmatmul.mubr.bf16.gmra.mrb[0].mxu0 %v11928
        %v12074 = vpop.f32.mrb[0].mxu0
        %v12075 = vadd.f32 %v11874, %v12074
        %v12076 = vpop.f32.mrb[0].mxu0
        %v12077 = vpop.f32.mrb[0].mxu0
        %v12078 = vadd.f32 %v11874, %v12077
        %v12079 = vpop.f32.mrb[0].mxu0
        %12080 = vmatprep.mubr.bf16.mxu0 0
        %12081 = vmatmul.mubr.bf16.gmra.mrb[0].mxu0 %v11931
        %v12082 = vpop.f32.mrb[0].mxu0
        %v12083 = vadd.f32 %v11874, %v12082
        %v12084 = vpop.f32.mrb[0].mxu0
        %v12085 = vpop.f32.mrb[0].mxu0
        %v12086 = vadd.f32 %v11874, %v12085
        %v12087 = vpop.f32.mrb[0].mxu0
        %12088 = vmatprep.mubr.bf16.mxu0 0
        %12089 = vmatmul.mubr.bf16.gmra.mrb[0].mxu0 %v11934
        %v12090 = vpop.f32.mrb[0].mxu0
        %v12091 = vadd.f32 %v11874, %v12090
        %v12092 = vpop.f32.mrb[0].mxu0
        %v12093 = vpop.f32.mrb[0].mxu0
        %v12094 = vadd.f32 %v11874, %v12093
        %v12095 = vpop.f32.mrb[0].mxu0
        %12096 = vdwg.mxu0
        %v12097 = vmul.f32 %v11971, 0.5
        %v12098 = vmul.f32 %v11974, 0.5
        %v12099 = vmul.f32 %v11979, 0.5
        %v12100 = vmul.f32 %v11982, 0.5
        %v12101 = vmul.f32 %v11987, 0.5
        %v12102 = vmul.f32 %v11990, 0.5
        %v12103 = vmul.f32 %v11995, 0.5
        %v12104 = vmul.f32 %v11998, 0.5
        %v12105 = vmul.f32 %v12003, 0.5
        %v12106 = vmul.f32 %v12006, 0.5
        %v12107 = vmul.f32 %v12011, 0.5
        %v12108 = vmul.f32 %v12014, 0.5
        %v12109 = vmul.f32 %v12019, 0.5
        %v12110 = vmul.f32 %v12022, 0.5
        %v12111 = vmul.f32 %v12027, 0.5
        %v12112 = vmul.f32 %v12030, 0.5
        %v12113 = vmul.f32 %v12035, 0.5
        %v12114 = vmul.f32 %v12038, 0.5
        %v12115 = vmul.f32 %v12043, 0.5
        %v12116 = vmul.f32 %v12046, 0.5
        %v12117 = vmul.f32 %v12051, 0.5
        %v12118 = vmul.f32 %v12054, 0.5
        %v12119 = vmul.f32 %v12059, 0.5
        %v12120 = vmul.f32 %v12062, 0.5
        %v12121 = vmul.f32 %v12067, 0.5
        %v12122 = vmul.f32 %v12070, 0.5
        %v12123 = vmul.f32 %v12075, 0.5
        %v12124 = vmul.f32 %v12078, 0.5
        %v12125 = vmul.f32 %v12083, 0.5
        %v12126 = vmul.f32 %v12086, 0.5
        %v12127 = vmul.f32 %v12091, 0.5
        %v12128 = vmul.f32 %v12094, 0.5
        %v12129 = vmul.f32 %v11971, 0.044715
        %v12130 = vmul.f32 %v11974, 0.044715
        %v12131 = vmul.f32 %v11979, 0.044715
        %v12132 = vmul.f32 %v11982, 0.044715
        %v12133 = vmul.f32 %v11987, 0.044715
        %v12134 = vmul.f32 %v11990, 0.044715
        %v12135 = vmul.f32 %v11995, 0.044715
        %v12136 = vmul.f32 %v11998, 0.044715
        %v12137 = vmul.f32 %v12003, 0.044715
        %v12138 = vmul.f32 %v12006, 0.044715
        %v12139 = vmul.f32 %v12011, 0.044715
        %v12140 = vmul.f32 %v12014, 0.044715
        %v12141 = vmul.f32 %v12019, 0.044715
        %v12142 = vmul.f32 %v12022, 0.044715
        %v12143 = vmul.f32 %v12027, 0.044715
        %v12144 = vmul.f32 %v12030, 0.044715
        %v12145 = vmul.f32 %v12035, 0.044715
        %v12146 = vmul.f32 %v12038, 0.044715
        %v12147 = vmul.f32 %v12043, 0.044715
        %v12148 = vmul.f32 %v12046, 0.044715
        %v12149 = vmul.f32 %v12051, 0.044715
        %v12150 = vmul.f32 %v12054, 0.044715
        %v12151 = vmul.f32 %v12059, 0.044715
        %v12152 = vmul.f32 %v12062, 0.044715
        %v12153 = vmul.f32 %v12067, 0.044715
        %v12154 = vmul.f32 %v12070, 0.044715
        %v12155 = vmul.f32 %v12075, 0.044715
        %v12156 = vmul.f32 %v12078, 0.044715
        %v12157 = vmul.f32 %v12083, 0.044715
        %v12158 = vmul.f32 %v12086, 0.044715
        %v12159 = vmul.f32 %v12091, 0.044715
        %v12160 = vmul.f32 %v12094, 0.044715
        %v12161 = vmul.f32 %v12129, %v11971
        %v12162 = vmul.f32 %v12130, %v11974
        %v12163 = vmul.f32 %v12131, %v11979
        %v12164 = vmul.f32 %v12132, %v11982
        %v12165 = vmul.f32 %v12133, %v11987
        %v12166 = vmul.f32 %v12134, %v11990
        %v12167 = vmul.f32 %v12135, %v11995
        %v12168 = vmul.f32 %v12136, %v11998
        %v12169 = vmul.f32 %v12137, %v12003
        %v12170 = vmul.f32 %v12138, %v12006
        %v12171 = vmul.f32 %v12139, %v12011
        %v12172 = vmul.f32 %v12140, %v12014
        %v12173 = vmul.f32 %v12141, %v12019
        %v12174 = vmul.f32 %v12142, %v12022
        %v12175 = vmul.f32 %v12143, %v12027
        %v12176 = vmul.f32 %v12144, %v12030
        %v12177 = vmul.f32 %v12145, %v12035
        %v12178 = vmul.f32 %v12146, %v12038
        %v12179 = vmul.f32 %v12147, %v12043
        %v12180 = vmul.f32 %v12148, %v12046
        %v12181 = vmul.f32 %v12149, %v12051
        %v12182 = vmul.f32 %v12150, %v12054
        %v12183 = vmul.f32 %v12151, %v12059
        %v12184 = vmul.f32 %v12152, %v12062
        %v12185 = vmul.f32 %v12153, %v12067
        %v12186 = vmul.f32 %v12154, %v12070
        %v12187 = vmul.f32 %v12155, %v12075
        %v12188 = vmul.f32 %v12156, %v12078
        %v12189 = vmul.f32 %v12157, %v12083
        %v12190 = vmul.f32 %v12158, %v12086
        %v12191 = vmul.f32 %v12159, %v12091
        %v12192 = vmul.f32 %v12160, %v12094
        %v12193 = vmul.f32 %v12161, %v11971
        %v12194 = vmul.f32 %v12162, %v11974
        %v12195 = vmul.f32 %v12163, %v11979
        %v12196 = vmul.f32 %v12164, %v11982
        %v12197 = vmul.f32 %v12165, %v11987
        %v12198 = vmul.f32 %v12166, %v11990
        %v12199 = vmul.f32 %v12167, %v11995
        %v12200 = vmul.f32 %v12168, %v11998
        %v12201 = vmul.f32 %v12169, %v12003
        %v12202 = vmul.f32 %v12170, %v12006
        %v12203 = vmul.f32 %v12171, %v12011
        %v12204 = vmul.f32 %v12172, %v12014
        %v12205 = vmul.f32 %v12173, %v12019
        %v12206 = vmul.f32 %v12174, %v12022
        %v12207 = vmul.f32 %v12175, %v12027
        %v12208 = vmul.f32 %v12176, %v12030
        %v12209 = vmul.f32 %v12177, %v12035
        %v12210 = vmul.f32 %v12178, %v12038
        %v12211 = vmul.f32 %v12179, %v12043
        %v12212 = vmul.f32 %v12180, %v12046
        %v12213 = vmul.f32 %v12181, %v12051
        %v12214 = vmul.f32 %v12182, %v12054
        %v12215 = vmul.f32 %v12183, %v12059
        %v12216 = vmul.f32 %v12184, %v12062
        %v12217 = vmul.f32 %v12185, %v12067
        %v12218 = vmul.f32 %v12186, %v12070
        %v12219 = vmul.f32 %v12187, %v12075
        %v12220 = vmul.f32 %v12188, %v12078
        %v12221 = vmul.f32 %v12189, %v12083
        %v12222 = vmul.f32 %v12190, %v12086
        %v12223 = vmul.f32 %v12191, %v12091
        %v12224 = vmul.f32 %v12192, %v12094
        %v12225 = vadd.f32 %v11971, %v12193
        %v12226 = vadd.f32 %v11974, %v12194
        %v12227 = vadd.f32 %v11979, %v12195
        %v12228 = vadd.f32 %v11982, %v12196
        %v12229 = vadd.f32 %v11987, %v12197
        %v12230 = vadd.f32 %v11990, %v12198
        %v12231 = vadd.f32 %v11995, %v12199
        %v12232 = vadd.f32 %v11998, %v12200
        %v12233 = vadd.f32 %v12003, %v12201
        %v12234 = vadd.f32 %v12006, %v12202
        %v12235 = vadd.f32 %v12011, %v12203
        %v12236 = vadd.f32 %v12014, %v12204
        %v12237 = vadd.f32 %v12019, %v12205
        %v12238 = vadd.f32 %v12022, %v12206
        %v12239 = vadd.f32 %v12027, %v12207
        %v12240 = vadd.f32 %v12030, %v12208
        %v12241 = vadd.f32 %v12035, %v12209
        %v12242 = vadd.f32 %v12038, %v12210
        %v12243 = vadd.f32 %v12043, %v12211
        %v12244 = vadd.f32 %v12046, %v12212
        %v12245 = vadd.f32 %v12051, %v12213
        %v12246 = vadd.f32 %v12054, %v12214
        %v12247 = vadd.f32 %v12059, %v12215
        %v12248 = vadd.f32 %v12062, %v12216
        %v12249 = vadd.f32 %v12067, %v12217
        %v12250 = vadd.f32 %v12070, %v12218
        %v12251 = vadd.f32 %v12075, %v12219
        %v12252 = vadd.f32 %v12078, %v12220
        %v12253 = vadd.f32 %v12083, %v12221
        %v12254 = vadd.f32 %v12086, %v12222
        %v12255 = vadd.f32 %v12091, %v12223
        %v12256 = vadd.f32 %v12094, %v12224
        %v12257 = vmul.f32 %v12225, 0.7978846
        %v12258 = vmul.f32 %v12226, 0.7978846
        %v12259 = vmul.f32 %v12227, 0.7978846
        %v12260 = vmul.f32 %v12228, 0.7978846
        %v12261 = vmul.f32 %v12229, 0.7978846
        %v12262 = vmul.f32 %v12230, 0.7978846
        %v12263 = vmul.f32 %v12231, 0.7978846
        %v12264 = vmul.f32 %v12232, 0.7978846
        %v12265 = vmul.f32 %v12233, 0.7978846
        %v12266 = vmul.f32 %v12234, 0.7978846
        %v12267 = vmul.f32 %v12235, 0.7978846
        %v12268 = vmul.f32 %v12236, 0.7978846
        %v12269 = vmul.f32 %v12237, 0.7978846
        %v12270 = vmul.f32 %v12238, 0.7978846
        %v12271 = vmul.f32 %v12239, 0.7978846
        %v12272 = vmul.f32 %v12240, 0.7978846
        %v12273 = vmul.f32 %v12241, 0.7978846
        %v12274 = vmul.f32 %v12242, 0.7978846
        %v12275 = vmul.f32 %v12243, 0.7978846
        %v12276 = vmul.f32 %v12244, 0.7978846
        %v12277 = vmul.f32 %v12245, 0.7978846
        %v12278 = vmul.f32 %v12246, 0.7978846
        %v12279 = vmul.f32 %v12247, 0.7978846
        %v12280 = vmul.f32 %v12248, 0.7978846
        %v12281 = vmul.f32 %v12249, 0.7978846
        %v12282 = vmul.f32 %v12250, 0.7978846
        %v12283 = vmul.f32 %v12251, 0.7978846
        %v12284 = vmul.f32 %v12252, 0.7978846
        %v12285 = vmul.f32 %v12253, 0.7978846
        %v12286 = vmul.f32 %v12254, 0.7978846
        %v12287 = vmul.f32 %v12255, 0.7978846
        %v12288 = vmul.f32 %v12256, 0.7978846
        %v12289 = vtanh.pop %v12257
        %v12290 = vtanh.pop %v12258
        %v12291 = vtanh.pop %v12259
        %v12292 = vtanh.pop %v12260
        %v12293 = vtanh.pop %v12261
        %v12294 = vtanh.pop %v12262
        %v12295 = vtanh.pop %v12263
        %v12296 = vtanh.pop %v12264
        %v12297 = vtanh.pop %v12265
        %v12298 = vtanh.pop %v12266
        %v12299 = vtanh.pop %v12267
        %v12300 = vtanh.pop %v12268
        %v12301 = vtanh.pop %v12269
        %v12302 = vtanh.pop %v12270
        %v12303 = vtanh.pop %v12271
        %v12304 = vtanh.pop %v12272
        %v12305 = vtanh.pop %v12273
        %v12306 = vtanh.pop %v12274
        %v12307 = vtanh.pop %v12275
        %v12308 = vtanh.pop %v12276
        %v12309 = vtanh.pop %v12277
        %v12310 = vtanh.pop %v12278
        %v12311 = vtanh.pop %v12279
        %v12312 = vtanh.pop %v12280
        %v12313 = vtanh.pop %v12281
        %v12314 = vtanh.pop %v12282
        %v12315 = vtanh.pop %v12283
        %v12316 = vtanh.pop %v12284
        %v12317 = vtanh.pop %v12285
        %v12318 = vtanh.pop %v12286
        %v12319 = vtanh.pop %v12287
        %v12320 = vtanh.pop %v12288
        %v12321 = vadd.f32 %v12289, 1.0
        %v12322 = vadd.f32 %v12290, 1.0
        %v12323 = vadd.f32 %v12291, 1.0
        %v12324 = vadd.f32 %v12292, 1.0
        %v12325 = vadd.f32 %v12293, 1.0
        %v12326 = vadd.f32 %v12294, 1.0
        %v12327 = vadd.f32 %v12295, 1.0
        %v12328 = vadd.f32 %v12296, 1.0
        %v12329 = vadd.f32 %v12297, 1.0
        %v12330 = vadd.f32 %v12298, 1.0
        %v12331 = vadd.f32 %v12299, 1.0
        %v12332 = vadd.f32 %v12300, 1.0
        %v12333 = vadd.f32 %v12301, 1.0
        %v12334 = vadd.f32 %v12302, 1.0
        %v12335 = vadd.f32 %v12303, 1.0
        %v12336 = vadd.f32 %v12304, 1.0
        %v12337 = vadd.f32 %v12305, 1.0
        %v12338 = vadd.f32 %v12306, 1.0
        %v12339 = vadd.f32 %v12307, 1.0
        %v12340 = vadd.f32 %v12308, 1.0
        %v12341 = vadd.f32 %v12309, 1.0
        %v12342 = vadd.f32 %v12310, 1.0
        %v12343 = vadd.f32 %v12311, 1.0
        %v12344 = vadd.f32 %v12312, 1.0
        %v12345 = vadd.f32 %v12313, 1.0
        %v12346 = vadd.f32 %v12314, 1.0
        %v12347 = vadd.f32 %v12315, 1.0
        %v12348 = vadd.f32 %v12316, 1.0
        %v12349 = vadd.f32 %v12317, 1.0
        %v12350 = vadd.f32 %v12318, 1.0
        %v12351 = vadd.f32 %v12319, 1.0
        %v12352 = vadd.f32 %v12320, 1.0
        %v12353 = vmul.f32 %v12097, %v12321
        %v12354 = vmul.f32 %v12098, %v12322
        %v12355 = vmul.f32 %v12099, %v12323
        %v12356 = vmul.f32 %v12100, %v12324
        %v12357 = vmul.f32 %v12101, %v12325
        %v12358 = vmul.f32 %v12102, %v12326
        %v12359 = vmul.f32 %v12103, %v12327
        %v12360 = vmul.f32 %v12104, %v12328
        %v12361 = vmul.f32 %v12105, %v12329
        %v12362 = vmul.f32 %v12106, %v12330
        %v12363 = vmul.f32 %v12107, %v12331
        %v12364 = vmul.f32 %v12108, %v12332
        %v12365 = vmul.f32 %v12109, %v12333
        %v12366 = vmul.f32 %v12110, %v12334
        %v12367 = vmul.f32 %v12111, %v12335
        %v12368 = vmul.f32 %v12112, %v12336
        %v12369 = vmul.f32 %v12113, %v12337
        %v12370 = vmul.f32 %v12114, %v12338
        %v12371 = vmul.f32 %v12115, %v12339
        %v12372 = vmul.f32 %v12116, %v12340
        %v12373 = vmul.f32 %v12117, %v12341
        %v12374 = vmul.f32 %v12118, %v12342
        %v12375 = vmul.f32 %v12119, %v12343
        %v12376 = vmul.f32 %v12120, %v12344
        %v12377 = vmul.f32 %v12121, %v12345
        %v12378 = vmul.f32 %v12122, %v12346
        %v12379 = vmul.f32 %v12123, %v12347
        %v12380 = vmul.f32 %v12124, %v12348
        %v12381 = vmul.f32 %v12125, %v12349
        %v12382 = vmul.f32 %v12126, %v12350
        %v12383 = vmul.f32 %v12127, %v12351
        %v12384 = vmul.f32 %v12128, %v12352
        %v12385 = vpack.c.bf16 %v12354, %v12353
        %v12386 = vpack.c.bf16 %v12356, %v12355
        %v12387 = vpack.c.bf16 %v12358, %v12357
        %v12388 = vpack.c.bf16 %v12360, %v12359
        %v12389 = vpack.c.bf16 %v12362, %v12361
        %v12390 = vpack.c.bf16 %v12364, %v12363
        %v12391 = vpack.c.bf16 %v12366, %v12365
        %v12392 = vpack.c.bf16 %v12368, %v12367
        %v12393 = vpack.c.bf16 %v12370, %v12369
        %v12394 = vpack.c.bf16 %v12372, %v12371
        %v12395 = vpack.c.bf16 %v12374, %v12373
        %v12396 = vpack.c.bf16 %v12376, %v12375
        %v12397 = vpack.c.bf16 %v12378, %v12377
        %v12398 = vpack.c.bf16 %v12380, %v12379
        %v12399 = vpack.c.bf16 %v12382, %v12381
        %v12400 = vpack.c.bf16 %v12384, %v12383
        %v12401 = vld [vmem:[%s7] sm:$0xf]
        %v12402 = vld [vmem:[%s7 + $0x4] sm:$0xf]
        %v12403 = vld [vmem:[%s7 + $0x8] sm:$0xf]
        %v12404 = vld [vmem:[%s7 + $0xc] sm:$0xf]
        %v12405 = vld [vmem:[%s7 + $0x10] sm:$0xf]
        %v12406 = vld [vmem:[%s7 + $0x14] sm:$0xf]
        %v12407 = vld [vmem:[%s7 + $0x18] sm:$0xf]
        %v12408 = vld [vmem:[%s7 + $0x1c] sm:$0xf]
        %v12409 = vld [vmem:[%s7 + $0x20] sm:$0xf]
        %v12410 = vld [vmem:[%s7 + $0x24] sm:$0xf]
        %v12411 = vld [vmem:[%s7 + $0x28] sm:$0xf]
        %v12412 = vld [vmem:[%s7 + $0x2c] sm:$0xf]
        %v12413 = vld [vmem:[%s7 + $0x30] sm:$0xf]
        %v12414 = vld [vmem:[%s7 + $0x34] sm:$0xf]
        %v12415 = vld [vmem:[%s7 + $0x38] sm:$0xf]
        %v12416 = vld [vmem:[%s7 + $0x3c] sm:$0xf]
        %v12417 = vld [vmem:[%s8] sm:$0x1]
        %v12419 = vlaneseq
        %v12420 = vshrl.u32 %v12419, 7
        %v12421 = vsub.s32 0, %v12420
        %v12422 = vrot.slane %v12417, %v12421
        %v12440 = vunpack.c.l.b16 %v12401
        %v12441 = vunpack.c.l.b16 %v12402
        %v12442 = vunpack.c.l.b16 %v12403
        %v12443 = vunpack.c.l.b16 %v12404
        %v12444 = vunpack.c.l.b16 %v12405
        %v12445 = vunpack.c.l.b16 %v12406
        %v12446 = vunpack.c.l.b16 %v12407
        %v12447 = vunpack.c.l.b16 %v12408
        %v12448 = vunpack.c.l.b16 %v12409
        %v12449 = vunpack.c.l.b16 %v12410
        %v12450 = vunpack.c.l.b16 %v12411
        %v12451 = vunpack.c.l.b16 %v12412
        %v12452 = vunpack.c.l.b16 %v12413
        %v12453 = vunpack.c.l.b16 %v12414
        %v12454 = vunpack.c.l.b16 %v12415
        %v12455 = vunpack.c.l.b16 %v12416
        %v12456 = vpack.c.b16 %v12441, %v12440
        %v12457 = vpack.c.b16 %v12443, %v12442
        %v12458 = vpack.c.b16 %v12445, %v12444
        %v12459 = vpack.c.b16 %v12447, %v12446
        %v12460 = vpack.c.b16 %v12449, %v12448
        %v12461 = vpack.c.b16 %v12451, %v12450
        %v12462 = vpack.c.b16 %v12453, %v12452
        %v12463 = vpack.c.b16 %v12455, %v12454
        %12472 = vmatprep.subr.bf16.mxu0 0
        %12473 = vmatpush1.bf16.msra.mxu0 %v12456
        %12474 = vmatprep.subr.bf16.mxu0 0
        %12475 = vmatpush1.bf16.msra.mxu0 %v12457
        %12476 = vmatprep.subr.bf16.mxu0 0
        %12477 = vmatpush1.bf16.msra.mxu0 %v12458
        %12478 = vmatprep.subr.bf16.mxu0 0
        %12479 = vmatpush1.bf16.msra.mxu0 %v12459
        %12480 = vmatprep.subr.bf16.mxu0 0
        %12481 = vmatpush1.bf16.msra.mxu0 %v12460
        %12482 = vmatprep.subr.bf16.mxu0 0
        %12483 = vmatpush1.bf16.msra.mxu0 %v12461
        %12484 = vmatprep.subr.bf16.mxu0 0
        %12485 = vmatpush1.bf16.msra.mxu0 %v12462
        %12486 = vmatprep.subr.bf16.mxu0 0
        %12487 = vmatpush1.bf16.msra.mxu0 %v12463
        %12488 = vmatprep.subr.bf16.mxu0 0
        %12489 = vmatpush1.bf16.msra.mxu0 0
        %12490 = vmatprep.subr.bf16.mxu0 0
        %12491 = vmatpush1.bf16.msra.mxu0 0
        %12492 = vmatprep.subr.bf16.mxu0 0
        %12493 = vmatpush1.bf16.msra.mxu0 0
        %12494 = vmatprep.subr.bf16.mxu0 0
        %12495 = vmatpush1.bf16.msra.mxu0 0
        %12496 = vmatprep.subr.bf16.mxu0 0
        %12497 = vmatpush1.bf16.msra.mxu0 0
        %12498 = vmatprep.subr.bf16.mxu0 0
        %12499 = vmatpush1.bf16.msra.mxu0 0
        %12500 = vmatprep.subr.bf16.mxu0 0
        %12501 = vmatpush1.bf16.msra.mxu0 0
        %12502 = vmatprep.subr.bf16.mxu0 0
        %12503 = vmatpush1.bf16.msra.mxu0 0
        %12504 = vmatprep.mubr.bf16.mxu0 0
        %12505 = vmatmul.mubr.bf16.gmra.mrb[0].mxu0 %v12385
        %v12506 = vpop.f32.mrb[0].mxu0
        %v12507 = vadd.f32 %v12422, %v12506
        %v12508 = vpop.f32.mrb[0].mxu0
        %v12509 = vpop.f32.mrb[0].mxu0
        %v12510 = vadd.f32 %v12422, %v12509
        %v12511 = vpop.f32.mrb[0].mxu0
        %12512 = vmatprep.mubr.bf16.mxu0 0
        %12513 = vmatmul.mubr.bf16.gmra.mrb[0].mxu0 %v12386
        %v12514 = vpop.f32.mrb[0].mxu0
        %v12515 = vadd.f32 %v12422, %v12514
        %v12516 = vpop.f32.mrb[0].mxu0
        %v12517 = vpop.f32.mrb[0].mxu0
        %v12518 = vadd.f32 %v12422, %v12517
        %v12519 = vpop.f32.mrb[0].mxu0
        %12520 = vmatprep.mubr.bf16.mxu0 0
        %12521 = vmatmul.mubr.bf16.gmra.mrb[0].mxu0 %v12387
        %v12522 = vpop.f32.mrb[0].mxu0
        %v12523 = vadd.f32 %v12422, %v12522
        %v12524 = vpop.f32.mrb[0].mxu0
        %v12525 = vpop.f32.mrb[0].mxu0
        %v12526 = vadd.f32 %v12422, %v12525
        %v12527 = vpop.f32.mrb[0].mxu0
        %12528 = vmatprep.mubr.bf16.mxu0 0
        %12529 = vmatmul.mubr.bf16.gmra.mrb[0].mxu0 %v12388
        %v12530 = vpop.f32.mrb[0].mxu0
        %v12531 = vadd.f32 %v12422, %v12530
        %v12532 = vpop.f32.mrb[0].mxu0
        %v12533 = vpop.f32.mrb[0].mxu0
        %v12534 = vadd.f32 %v12422, %v12533
        %v12535 = vpop.f32.mrb[0].mxu0
        %12536 = vmatprep.mubr.bf16.mxu0 0
        %12537 = vmatmul.mubr.bf16.gmra.mrb[0].mxu0 %v12389
        %v12538 = vpop.f32.mrb[0].mxu0
        %v12539 = vadd.f32 %v12422, %v12538
        %v12540 = vpop.f32.mrb[0].mxu0
        %v12541 = vpop.f32.mrb[0].mxu0
        %v12542 = vadd.f32 %v12422, %v12541
        %v12543 = vpop.f32.mrb[0].mxu0
        %12544 = vmatprep.mubr.bf16.mxu0 0
        %12545 = vmatmul.mubr.bf16.gmra.mrb[0].mxu0 %v12390
        %v12546 = vpop.f32.mrb[0].mxu0
        %v12547 = vadd.f32 %v12422, %v12546
        %v12548 = vpop.f32.mrb[0].mxu0
        %v12549 = vpop.f32.mrb[0].mxu0
        %v12550 = vadd.f32 %v12422, %v12549
        %v12551 = vpop.f32.mrb[0].mxu0
        %12552 = vmatprep.mubr.bf16.mxu0 0
        %12553 = vmatmul.mubr.bf16.gmra.mrb[0].mxu0 %v12391
        %v12554 = vpop.f32.mrb[0].mxu0
        %v12555 = vadd.f32 %v12422, %v12554
        %v12556 = vpop.f32.mrb[0].mxu0
        %v12557 = vpop.f32.mrb[0].mxu0
        %v12558 = vadd.f32 %v12422, %v12557
        %v12559 = vpop.f32.mrb[0].mxu0
        %12560 = vmatprep.mubr.bf16.mxu0 0
        %12561 = vmatmul.mubr.bf16.gmra.mrb[0].mxu0 %v12392
        %v12562 = vpop.f32.mrb[0].mxu0
        %v12563 = vadd.f32 %v12422, %v12562
        %v12564 = vpop.f32.mrb[0].mxu0
        %v12565 = vpop.f32.mrb[0].mxu0
        %v12566 = vadd.f32 %v12422, %v12565
        %v12567 = vpop.f32.mrb[0].mxu0
        %12568 = vmatprep.mubr.bf16.mxu0 0
        %12569 = vmatmul.mubr.bf16.gmra.mrb[0].mxu0 %v12393
        %v12570 = vpop.f32.mrb[0].mxu0
        %v12571 = vadd.f32 %v12422, %v12570
        %v12572 = vpop.f32.mrb[0].mxu0
        %v12573 = vpop.f32.mrb[0].mxu0
        %v12574 = vadd.f32 %v12422, %v12573
        %v12575 = vpop.f32.mrb[0].mxu0
        %12576 = vmatprep.mubr.bf16.mxu0 0
        %12577 = vmatmul.mubr.bf16.gmra.mrb[0].mxu0 %v12394
        %v12578 = vpop.f32.mrb[0].mxu0
        %v12579 = vadd.f32 %v12422, %v12578
        %v12580 = vpop.f32.mrb[0].mxu0
        %v12581 = vpop.f32.mrb[0].mxu0
        %v12582 = vadd.f32 %v12422, %v12581
        %v12583 = vpop.f32.mrb[0].mxu0
        %12584 = vmatprep.mubr.bf16.mxu0 0
        %12585 = vmatmul.mubr.bf16.gmra.mrb[0].mxu0 %v12395
        %v12586 = vpop.f32.mrb[0].mxu0
        %v12587 = vadd.f32 %v12422, %v12586
        %v12588 = vpop.f32.mrb[0].mxu0
        %v12589 = vpop.f32.mrb[0].mxu0
        %v12590 = vadd.f32 %v12422, %v12589
        %v12591 = vpop.f32.mrb[0].mxu0
        %12592 = vmatprep.mubr.bf16.mxu0 0
        %12593 = vmatmul.mubr.bf16.gmra.mrb[0].mxu0 %v12396
        %v12594 = vpop.f32.mrb[0].mxu0
        %v12595 = vadd.f32 %v12422, %v12594
        %v12596 = vpop.f32.mrb[0].mxu0
        %v12597 = vpop.f32.mrb[0].mxu0
        %v12598 = vadd.f32 %v12422, %v12597
        %v12599 = vpop.f32.mrb[0].mxu0
        %12600 = vmatprep.mubr.bf16.mxu0 0
        %12601 = vmatmul.mubr.bf16.gmra.mrb[0].mxu0 %v12397
        %v12602 = vpop.f32.mrb[0].mxu0
        %v12603 = vadd.f32 %v12422, %v12602
        %v12604 = vpop.f32.mrb[0].mxu0
        %v12605 = vpop.f32.mrb[0].mxu0
        %v12606 = vadd.f32 %v12422, %v12605
        %v12607 = vpop.f32.mrb[0].mxu0
        %12608 = vmatprep.mubr.bf16.mxu0 0
        %12609 = vmatmul.mubr.bf16.gmra.mrb[0].mxu0 %v12398
        %v12610 = vpop.f32.mrb[0].mxu0
        %v12611 = vadd.f32 %v12422, %v12610
        %v12612 = vpop.f32.mrb[0].mxu0
        %v12613 = vpop.f32.mrb[0].mxu0
        %v12614 = vadd.f32 %v12422, %v12613
        %v12615 = vpop.f32.mrb[0].mxu0
        %12616 = vmatprep.mubr.bf16.mxu0 0
        %12617 = vmatmul.mubr.bf16.gmra.mrb[0].mxu0 %v12399
        %v12618 = vpop.f32.mrb[0].mxu0
        %v12619 = vadd.f32 %v12422, %v12618
        %v12620 = vpop.f32.mrb[0].mxu0
        %v12621 = vpop.f32.mrb[0].mxu0
        %v12622 = vadd.f32 %v12422, %v12621
        %v12623 = vpop.f32.mrb[0].mxu0
        %12624 = vmatprep.mubr.bf16.mxu0 0
        %12625 = vmatmul.mubr.bf16.gmra.mrb[0].mxu0 %v12400
        %v12626 = vpop.f32.mrb[0].mxu0
        %v12627 = vadd.f32 %v12422, %v12626
        %v12628 = vpop.f32.mrb[0].mxu0
        %v12629 = vpop.f32.mrb[0].mxu0
        %v12630 = vadd.f32 %v12422, %v12629
        %v12631 = vpop.f32.mrb[0].mxu0
        %12632 = vdwg.mxu0
        %v12633 = vld [vmem:[%s9] sm:$0x1]
        %v12635 = vlaneseq
        %v12636 = vshrl.u32 %v12635, 7
        %v12637 = vsub.s32 0, %v12636
        %v12638 = vrot.slane %v12633, %v12637
        %v12640 = vmul.f32 %v12507, %v12638
        %v12641 = vmul.f32 %v12510, %v12638
        %v12642 = vmul.f32 %v12515, %v12638
        %v12643 = vmul.f32 %v12518, %v12638
        %v12644 = vmul.f32 %v12523, %v12638
        %v12645 = vmul.f32 %v12526, %v12638
        %v12646 = vmul.f32 %v12531, %v12638
        %v12647 = vmul.f32 %v12534, %v12638
        %v12648 = vmul.f32 %v12539, %v12638
        %v12649 = vmul.f32 %v12542, %v12638
        %v12650 = vmul.f32 %v12547, %v12638
        %v12651 = vmul.f32 %v12550, %v12638
        %v12652 = vmul.f32 %v12555, %v12638
        %v12653 = vmul.f32 %v12558, %v12638
        %v12654 = vmul.f32 %v12563, %v12638
        %v12655 = vmul.f32 %v12566, %v12638
        %v12656 = vmul.f32 %v12571, %v12638
        %v12657 = vmul.f32 %v12574, %v12638
        %v12658 = vmul.f32 %v12579, %v12638
        %v12659 = vmul.f32 %v12582, %v12638
        %v12660 = vmul.f32 %v12587, %v12638
        %v12661 = vmul.f32 %v12590, %v12638
        %v12662 = vmul.f32 %v12595, %v12638
        %v12663 = vmul.f32 %v12598, %v12638
        %v12664 = vmul.f32 %v12603, %v12638
        %v12665 = vmul.f32 %v12606, %v12638
        %v12666 = vmul.f32 %v12611, %v12638
        %v12667 = vmul.f32 %v12614, %v12638
        %v12668 = vmul.f32 %v12619, %v12638
        %v12669 = vmul.f32 %v12622, %v12638
        %v12670 = vmul.f32 %v12627, %v12638
        %v12671 = vmul.f32 %v12630, %v12638
        %v12672 = vadd.f32 %v379, %v12640
        %v12673 = vadd.f32 %v380, %v12641
        %v12674 = vadd.f32 %v381, %v12642
        %v12675 = vadd.f32 %v382, %v12643
        %v12676 = vadd.f32 %v383, %v12644
        %v12677 = vadd.f32 %v384, %v12645
        %v12678 = vadd.f32 %v385, %v12646
        %v12679 = vadd.f32 %v386, %v12647
        %v12680 = vadd.f32 %v387, %v12648
        %v12681 = vadd.f32 %v388, %v12649
        %v12682 = vadd.f32 %v389, %v12650
        %v12683 = vadd.f32 %v390, %v12651
        %v12684 = vadd.f32 %v391, %v12652
        %v12685 = vadd.f32 %v392, %v12653
        %v12686 = vadd.f32 %v393, %v12654
        %v12687 = vadd.f32 %v394, %v12655
        %v12688 = vadd.f32 %v395, %v12656
        %v12689 = vadd.f32 %v396, %v12657
        %v12690 = vadd.f32 %v397, %v12658
        %v12691 = vadd.f32 %v398, %v12659
        %v12692 = vadd.f32 %v399, %v12660
        %v12693 = vadd.f32 %v400, %v12661
        %v12694 = vadd.f32 %v401, %v12662
        %v12695 = vadd.f32 %v402, %v12663
        %v12696 = vadd.f32 %v403, %v12664
        %v12697 = vadd.f32 %v404, %v12665
        %v12698 = vadd.f32 %v405, %v12666
        %v12699 = vadd.f32 %v406, %v12667
        %v12700 = vadd.f32 %v407, %v12668
        %v12701 = vadd.f32 %v408, %v12669
        %v12702 = vadd.f32 %v409, %v12670
        %v12703 = vadd.f32 %v410, %v12671
        %12704 = vst.msk [vmem:[%s377] sm:$0xff] %vm411, %v12672
        %12705 = vst.msk [vmem:[%s377 + $0x8] sm:$0xff] %vm411, %v12673
        %12706 = vst.msk [vmem:[%s377 + $0x10] sm:$0xff] %vm411, %v12674
        %12707 = vst.msk [vmem:[%s377 + $0x18] sm:$0xff] %vm411, %v12675
        %12708 = vst.msk [vmem:[%s377 + $0x20] sm:$0xff] %vm411, %v12676
        %12709 = vst.msk [vmem:[%s377 + $0x28] sm:$0xff] %vm411, %v12677
        %12710 = vst.msk [vmem:[%s377 + $0x30] sm:$0xff] %vm411, %v12678
        %12711 = vst.msk [vmem:[%s377 + $0x38] sm:$0xff] %vm411, %v12679
        %12712 = vst.msk [vmem:[%s377 + $0x40] sm:$0xff] %vm411, %v12680
        %12713 = vst.msk [vmem:[%s377 + $0x48] sm:$0xff] %vm411, %v12681
        %12714 = vst.msk [vmem:[%s377 + $0x50] sm:$0xff] %vm411, %v12682
        %12715 = vst.msk [vmem:[%s377 + $0x58] sm:$0xff] %vm411, %v12683
        %12716 = vst.msk [vmem:[%s377 + $0x60] sm:$0xff] %vm411, %v12684
        %12717 = vst.msk [vmem:[%s377 + $0x68] sm:$0xff] %vm411, %v12685
        %12718 = vst.msk [vmem:[%s377 + $0x70] sm:$0xff] %vm411, %v12686
        %12719 = vst.msk [vmem:[%s377 + $0x78] sm:$0xff] %vm411, %v12687
        %12720 = vst.msk [vmem:[%s377 + $0x80] sm:$0xff] %vm411, %v12688
        %12721 = vst.msk [vmem:[%s377 + $0x88] sm:$0xff] %vm411, %v12689
        %12722 = vst.msk [vmem:[%s377 + $0x90] sm:$0xff] %vm411, %v12690
        %12723 = vst.msk [vmem:[%s377 + $0x98] sm:$0xff] %vm411, %v12691
        %12724 = vst.msk [vmem:[%s377 + $0xa0] sm:$0xff] %vm411, %v12692
        %12725 = vst.msk [vmem:[%s377 + $0xa8] sm:$0xff] %vm411, %v12693
        %12726 = vst.msk [vmem:[%s377 + $0xb0] sm:$0xff] %vm411, %v12694
        %12727 = vst.msk [vmem:[%s377 + $0xb8] sm:$0xff] %vm411, %v12695
        %12728 = vst.msk [vmem:[%s377 + $0xc0] sm:$0xff] %vm411, %v12696
        %12729 = vst.msk [vmem:[%s377 + $0xc8] sm:$0xff] %vm411, %v12697
        %12730 = vst.msk [vmem:[%s377 + $0xd0] sm:$0xff] %vm411, %v12698
        %12731 = vst.msk [vmem:[%s377 + $0xd8] sm:$0xff] %vm411, %v12699
        %12732 = vst.msk [vmem:[%s377 + $0xe0] sm:$0xff] %vm411, %v12700
        %12733 = vst.msk [vmem:[%s377 + $0xe8] sm:$0xff] %vm411, %v12701
        %12734 = vst.msk [vmem:[%s377 + $0xf0] sm:$0xff] %vm411, %v12702
        %12735 = vst.msk [vmem:[%s377 + $0xf8] sm:$0xff] %vm411, %v12703
        %s12736 = sand.u32 %s250, 1
        %s12737 = scalar_lea.sflag [#allocation5], %s12736
        %s12738 = sand.u32 %s250, 1
        %s12739 = smul.addr %s12738, 256
        %s12740 = scalar_lea.vmem [#allocation6], %s12739
        // Predicated region
        $region65: #{tpu_custom_call.1} parent=59 // pred_check
          %p12741 = pneg %p260
        $region66: #{tpu_custom_call.1} parent=59 // pred_check_branch
          %12743 = sbr.rel (%p12741) target = $region68
        $region67: #{tpu_custom_call.1} parent=59 // pred_region
          %s12745 = ssub.s32 4096, 4096
          %12746 = vsyncadd %s12737, %s12745
          %s12747 = smul.addr %s27, 32
          %s12748 = smul.addr %s12747, 128
          %s12749 = scalar_lea.hbm %s10, %s12748
          %s12750 = sshll.u32 %s12740, 4
          %s12751 = int_to_ptr.vmem [resolvable:$true] %s12750
          %12756 = dma.vmem_to_hbm [thread:$0]  %s12751, 4096, %s12749, %s12737, 128, 128, 8
        $region68: #{tpu_custom_call.1} parent=59 // pred_fallthru
          _
      $region60: #{tpu_custom_call.1} parent=5 // pred_fallthru
        _
      %p12757 = scmp.le.s32.totalorder 2, %s22
      // Predicated region
      $region69: #{tpu_custom_call.1} parent=5 // pred_check
        %p12758 = pneg %p12757
      $region70: #{tpu_custom_call.1} parent=5 // pred_check_branch
        %12760 = sbr.rel (%p12758) target = $region72
      $region71: #{tpu_custom_call.1} parent=5 // pred_region
        %s12761 = ssub.s32 %s22, 2
        // Predicated region
        $region73: #{tpu_custom_call.1} parent=71 // pred_check
          %p12762 = pneg %p266
        $region74: #{tpu_custom_call.1} parent=71 // pred_check_branch
          %12764 = sbr.rel (%p12762) target = $region76
        $region75: #{tpu_custom_call.1} parent=71 // pred_region
          %s12765 = sand.u32 %s251, 1
          %s12766 = scalar_lea.sflag [#allocation5], %s12765
          %s12767 = sand.u32 %s251, 1
          %s12768 = smul.addr %s12767, 256
          %s12769 = scalar_lea.vmem [#allocation6], %s12768
          %12770 = dma.done %s12766, 4096
        $region76: #{tpu_custom_call.1} parent=71 // pred_fallthru
          _
      $region72: #{tpu_custom_call.1} parent=5 // pred_fallthru
        _
    $region6: #{tpu_custom_call.1} parent=1 // loop_footer
      %s26 = sadd.s32 1, %s22
    $region7: #{tpu_custom_call.1} parent=1 // loop_footer_branch
      %21 = sbr.rel target = $region3
    $region8: #{tpu_custom_call.1} parent=1 // loop_exit
      _
    %12771 = vsyncpa [#allocation4], 1
    %s12772 = scalar_lea.sflag [#allocation4], 1
    %12773 = vsyncpa %s12772, 1
    %12774 = vsyncpa [#allocation5], 1
    %s12775 = scalar_lea.sflag [#allocation5], 1
    %12776 = vsyncpa %s12775, 1

</llo_original>
